<compile_context>
chip_gen: v5e
topology: v5e:2x2
jax: 0.10.0
libtpu: 0.0.40
codegen_flags: <defaults>
</compile_context>

<pallas_src>
import jax
import jax.numpy as jnp
from jax.experimental import pallas as pl
from jax.experimental.pallas import tpu as pltpu

EPS = 1e-5
LEAKY_SLOPE = 0.01
_WPAD = 8        # sublane-aligned column where the image starts inside the halo scratch


def _vmem_limit_bytes():
    try:
        cap = int(pltpu.get_tpu_info().vmem_capacity_bytes)   # 128 MiB v5e/v6e, 64 MiB v7x
    except Exception:
        cap = 64 * 1024 * 1024                                 # conservative (v7x-sized) fallback
    return max(32 * 1024 * 1024, min(cap // 2, 64 * 1024 * 1024))


VMEM_LIMIT = _vmem_limit_bytes()


def _cparams(sem):
    return pltpu.CompilerParams(dimension_semantics=sem, vmem_limit_bytes=VMEM_LIMIT)


# ----------------------------------------------------------------------------- tile selection
def _pick_h_tile(H, W, Cin, Cout, budget):
    """Largest row tile TH (divisor of H, <=64) whose fused-kernel VMEM footprint fits budget."""
    cands = [t for t in range(min(H, 64), 7, -1) if H % t == 0] or [H]

    def est(th):
        wp = W + 16
        b = 2 * th * W * Cin * 4                 # x input block (f32, double-buffered)
        b += 2 * 4 * W * Cin * 4                 # row-halo input block
        b += 2 * 9 * Cin * Cout * 2              # folded bottleneck weight (bf16, db)
        b += 2 * 9 * Cout * 128 * 2              # conv_offset weight (lane-padded, db)
        b += 2 * th * W * Cout * 2               # y output block (bf16, db)
        b += 2 * th * W * 128 * 4                # offset output block (lane-padded f32, db)
        b += (th + 4) * wp * Cin * 4             # x halo scratch (f32)
        b += (th + 2) * wp * Cout * 4            # y halo scratch (f32)
        b += (th + 2) * W * 9 * Cin * 2          # bottleneck im2col temp (bf16)
        b += th * W * 9 * Cout * 2               # conv_offset im2col temp (bf16)
        b += (th + 2) * W * Cout * 4             # f32 conv accumulator temp
        b += 2 * th * W * Cout * 4               # headroom for relayout copies
        return b

    for th in cands:
        if est(th) <= budget:
            return th
    return cands[-1]


def _pick_row_tile(M, per_row_bytes, fixed_bytes, budget):
    for t in (4096, 2048, 1024, 512, 256, 128):
        if t <= max(M, 128) and fixed_bytes + t * per_row_bytes <= budget:
            return t
    return 128


# ----------------------------------------------------------------------------- in-kernel helpers
def _conv3x3_matmul(xpad, w, b, R):
    """3x3 stride-1 same-conv via im2col from a zero-padded slab.

    xpad: (R+2, W+16, C) f32 value, image columns at [_WPAD, _WPAD+W), zero columns either side.
    w:    (9*C, Co) bf16 value, rows tap-major (k*C + c, k = kh*3 + kw).
    b:    (1, Co) f32 value.  Returns (R*W, Co) f32.
    """
    Wd = xpad.shape[1] - 16
    C = xpad.shape[2]
    Co = w.shape[1]
    patches = []
    for kh in range(3):
        for kw in range(3):
            p = xpad[kh:kh + R, _WPAD - 1 + kw:_WPAD - 1 + kw + Wd, :]
            patches.append(p.reshape(R * Wd, C).astype(jnp.bfloat16))
    if C % 128 == 0:
        # lane-aligned concat -> single MXU dot with K = 9*C (best systolic-array fill)
        cols = jnp.concatenate(patches, axis=1)
        acc = jnp.dot(cols, w, preferred_element_type=jnp.float32)
    else:
        # TODO(synk): for C not a multiple of 128 a lane-packed im2col would need unaligned lane
        # concatenation; fall back to 9 accumulated K=C dots (MXU is underfilled either way).
        acc = jnp.zeros((R * Wd, Co), jnp.float32)
        for k in range(9):
            acc = acc + jnp.dot(patches[k], w[k * C:(k + 1) * C, :],
                                preferred_element_type=jnp.float32)
    return acc + b


# ----------------------------------------------------------------------------- kernels
def bottleneck_offset_kernel(x_ref, xh_ref, cw_ref, cb_ref, ow_ref, ob_ref,
                             y_ref, off_ref, xs, ys):
    """Row tile of: folded depthwise-separable 3x3 conv + conv_offset of deform-conv 1."""
    t = pl.program_id(1)
    nt = pl.num_programs(1)
    _, TH, W, Cout = y_ref.shape
    Cin = x_ref.shape[3]

    # zero only the 8-wide column-halo blocks that are read as zeros (cheap, megacore-safe)
    xs[:, 0:_WPAD, :] = jnp.zeros((TH + 4, _WPAD, Cin), xs.dtype)
    xs[:, _WPAD + W:_WPAD + W + 8, :] = jnp.zeros((TH + 4, 8, Cin), xs.dtype)
    ys[:, 0:_WPAD, :] = jnp.zeros((TH + 2, _WPAD, Cout), ys.dtype)
    ys[:, _WPAD + W:_WPAD + W + 8, :] = jnp.zeros((TH + 2, 8, Cout), ys.dtype)

    xh = xh_ref[0]                                        # (4, W, Cin): rows r0-2, r0-1, r1, r1+1
    xs[0:2, _WPAD:_WPAD + W, :] = xh[0:2].astype(xs.dtype)
    xs[2:TH + 2, _WPAD:_WPAD + W, :] = x_ref[0].astype(xs.dtype)
    xs[TH + 2:TH + 4, _WPAD:_WPAD + W, :] = xh[2:4].astype(xs.dtype)

    # bottleneck (folded dw+pw) on rows [r0-1, r1] -> TH+2 rows of y (halo rows for the next conv)
    y_ext = _conv3x3_matmul(xs[...], cw_ref[...], cb_ref[...], TH + 2).reshape(TH + 2, W, Cout)
    y_ref[0] = y_ext[1:TH + 1].astype(y_ref.dtype)

    # conv_offset of deform-conv 1 consumes y zero-padded outside the image -> mask halo rows
    y_top = jnp.where(t > 0, y_ext[0:1], 0.0)
    y_bot = jnp.where(t < nt - 1, y_ext[TH + 1:TH + 2], 0.0)
    ys[0:1, _WPAD:_WPAD + W, :] = y_top.astype(ys.dtype)
    ys[1:TH + 1, _WPAD:_WPAD + W, :] = y_ext[1:TH + 1].astype(ys.dtype)
    ys[TH + 1:TH + 2, _WPAD:_WPAD + W, :] = y_bot.astype(ys.dtype)

    off = _conv3x3_matmul(ys[...], ow_ref[...], ob_ref[...], TH)
    off_ref[0] = off.reshape(TH, W, 18)


def norm_offset_kernel(z_ref, zh_ref, sc_ref, sh_ref, ow_ref, ob_ref,
                       a_ref, off_ref, as_):
    """Row tile of: ABN normalize (folded scale/shift) + LeakyReLU, fused with next conv_offset."""
    t = pl.program_id(1)
    nt = pl.num_programs(1)
    _, TH, W, Cout = a_ref.shape

    as_[:, 0:_WPAD, :] = jnp.zeros((TH + 2, _WPAD, Cout), as_.dtype)
    as_[:, _WPAD + W:_WPAD + W + 8, :] = jnp.zeros((TH + 2, 8, Cout), as_.dtype)

    def act(v):
        u = v.astype(jnp.float32) * sc_ref[...] + sh_ref[...]
        return jnp.where(u >= 0.0, u, LEAKY_SLOPE * u)

    zh = zh_ref[0]                                        # (2, W, Cout): rows r0-1, r1
    a_mid = act(z_ref[0])
    a_ref[0] = a_mid.astype(a_ref.dtype)

    # out-of-image halo rows of the activation are zero for the conv's padding
    a_top = jnp.where(t > 0, act(zh[0:1]), 0.0)
    a_bot = jnp.where(t < nt - 1, act(zh[1:2]), 0.0)
    as_[0:1, _WPAD:_WPAD + W, :] = a_top.astype(as_.dtype)
    as_[1:TH + 1, _WPAD:_WPAD + W, :] = a_mid.astype(as_.dtype)
    as_[TH + 1:TH + 2, _WPAD:_WPAD + W, :] = a_bot.astype(as_.dtype)

    off = _conv3x3_matmul(as_[...], ow_ref[...], ob_ref[...], TH)
    off_ref[0] = off.reshape(TH, W, 18)


def dcn_matmul_stats_kernel(cols_ref, w_ref, y_ref, psum_ref, psq_ref):
    """Deformable-conv im2col matmul row-tile (bf16 -> f32 acc) + per-tile BatchNorm stats."""
    y = jnp.dot(cols_ref[...], w_ref[...], preferred_element_type=jnp.float32)
    y_ref[...] = y.astype(y_ref.dtype)
    psum_ref[0] = jnp.sum(y, axis=0, keepdims=True)
    psq_ref[0] = jnp.sum(y * y, axis=0, keepdims=True)


def norm_kernel(z_ref, sc_ref, sh_ref, a_ref):
    """Row-tiled ABN normalize (folded scale/shift) + LeakyReLU."""
    u = z_ref[...].astype(jnp.float32) * sc_ref[...] + sh_ref[...]
    a_ref[...] = jnp.where(u >= 0.0, u, LEAKY_SLOPE * u)


# ----------------------------------------------------------------------------- XLA glue
def _row_halos(x, th, pad):
    """Per-tile top/bottom halo rows (`pad` rows each side), zero outside the image.

    x: (N, H, W, C) -> (N * (H//th), 2*pad, W, C); rows ordered [top..., bottom...]."""
    N, H, W, C = x.shape
    nt = H // th
    xp = jnp.pad(x, ((0, 0), (pad, pad), (0, 0), (0, 0)))
    tops = xp[:, :H].reshape(N, nt, th, W, C)[:, :, :pad]
    bots = xp[:, 2 * pad:2 * pad + H].reshape(N, nt, th, W, C)[:, :, th - pad:]
    return jnp.concatenate([tops, bots], axis=2).reshape(N * nt, 2 * pad, W, C)


def _bilinear_sample(x, ys, xs):
    """Bilinear sampling with zeros outside the image (mmcv deform-conv semantics).

    x: (N, H, W, C); ys/xs: (N, H, W, 9) f32.  Returns (N, H, W, 9, C) f32."""
    N, H, W, C = x.shape
    y0 = jnp.floor(ys)
    x0 = jnp.floor(xs)
    wy1 = ys - y0
    wy0 = 1.0 - wy1
    wx1 = xs - x0
    wx0 = 1.0 - wx1
    flat = x.reshape(N, H * W, C)

    def gather_one(flat_n, idx_n):
        return jnp.take(flat_n, idx_n, axis=0)

    def gather(yf, xf):
        valid = (yf >= 0.0) & (yf <= H - 1.0) & (xf >= 0.0) & (xf <= W - 1.0)
        yi = jnp.clip(yf, 0.0, H - 1.0).astype(jnp.int32)
        xi = jnp.clip(xf, 0.0, W - 1.0).astype(jnp.int32)
        idx = (yi * W + xi).reshape(N, H * W * 9)
        g = jax.vmap(gather_one)(flat, idx).reshape(N, H, W, 9, C).astype(jnp.float32)
        return g * valid[..., None].astype(jnp.float32)

    v00 = gather(y0, x0)
    v01 = gather(y0, x0 + 1.0)
    v10 = gather(y0 + 1.0, x0)
    v11 = gather(y0 + 1.0, x0 + 1.0)
    return (v00 * (wy0 * wx0)[..., None] + v01 * (wy0 * wx1)[..., None]
            + v10 * (wy1 * wx0)[..., None] + v11 * (wy1 * wx1)[..., None])


def _deform_cols(x, offsets):
    """Sampling coordinates + bilinear gather + im2col; emits bf16 columns for the MXU kernel."""
    # TODO(synk): the data-dependent bilinear gather has no robust Pallas TPU lowering
    # (arbitrary per-pixel indices); it stays in XLA glue with exact zero-padding semantics.
    N, H, W, C = x.shape
    off = offsets.reshape(N, H, W, 9, 2)      # mmcv layout: per tap [dy, dx]
    dy, dx = off[..., 0], off[..., 1]
    hh = jnp.arange(H, dtype=jnp.float32)[None, :, None, None]
    ww = jnp.arange(W, dtype=jnp.float32)[None, None, :, None]
    kidx = jnp.arange(3, dtype=jnp.float32)
    kgy = jnp.repeat(kidx, 3)[None, None, None, :]   # kernel row per tap
    kgx = jnp.tile(kidx, 3)[None, None, None, :]     # kernel col per tap
    ys = hh - 1.0 + kgy + dy
    xs = ww - 1.0 + kgx + dx
    sampled = _bilinear_sample(x, ys, xs)             # (N, H, W, 9, C) f32
    return sampled.reshape(N * H * W, 9 * C).astype(jnp.bfloat16)


def _deform_conv_abn_stats(x_nhwc, offsets, dcn_w_bf16, gamma, beta):
    """DeformConv2d (tiled im2col matmul) + ABN batch stats folded to per-channel scale/shift."""
    N, H, W, C = x_nhwc.shape
    Cout = dcn_w_bf16.shape[1]
    M = N * H * W
    K = 9 * C
    cols = _deform_cols(x_nhwc, offsets)                 # (M, 9C) bf16

    per_row = 2 * K * 2 + 2 * Cout * 2 + Cout * 4        # cols(db) + bf16 out(db) + f32 dot temp
    fixed = 2 * K * Cout * 2 + (1 << 17)                 # resident weight (db) + slack
    tm = _pick_row_tile(M, per_row, fixed, int(VMEM_LIMIT * 0.8))
    Mp = -(-M // tm) * tm
    if Mp != M:
        cols = jnp.pad(cols, ((0, Mp - M), (0, 0)))      # zero rows contribute 0 to the BN sums
    ntile = Mp // tm

    z, psum, psq = pl.pallas_call(
        dcn_matmul_stats_kernel,
        out_shape=(jax.ShapeDtypeStruct((Mp, Cout), jnp.bfloat16),
                   jax.ShapeDtypeStruct((ntile, 1, Cout), jnp.float32),
                   jax.ShapeDtypeStruct((ntile, 1, Cout), jnp.float32)),
        grid=(ntile,),
        in_specs=[pl.BlockSpec((tm, K), lambda i: (i, 0)),
                  pl.BlockSpec((K, Cout), lambda i: (0, 0))],
        out_specs=(pl.BlockSpec((tm, Cout), lambda i: (i, 0)),
                   pl.BlockSpec((1, 1, Cout), lambda i: (i, 0, 0)),
                   pl.BlockSpec((1, 1, Cout), lambda i: (i, 0, 0))),
        compiler_params=_cparams(("parallel",)),
    )(cols, dcn_w_bf16)

    total = jnp.sum(psum, axis=(0, 1))
    total_sq = jnp.sum(psq, axis=(0, 1))
    mean = total / M
    # TODO(synk): E[x^2]-E[x]^2 in f32 can cancel for large means; clamp keeps rsqrt well-defined.
    var = jnp.maximum(total_sq / M - mean * mean, 0.0)   # biased variance (training-mode BN)
    inv = jax.lax.rsqrt(var + EPS)
    g = gamma.reshape(-1)
    scale = (g * inv).reshape(1, Cout)
    shift = (beta.reshape(-1) - mean * g * inv).reshape(1, Cout)
    return z, scale, shift, tm                            # z has Mp (>= M) rows


# ----------------------------------------------------------------------------- module
def init_params(key, in_channels, out_channels):
    ks = jax.random.split(key, 6)

    def w(k, shape, fan_in):
        return jax.random.normal(k, shape, jnp.float32) / jnp.sqrt(float(fan_in))

    return dict(
        # bottleneck: depthwise (per-channel 3x3, tap-major rows) + pointwise 1x1
        dw_w=w(ks[0], (9, in_channels), 9),
        dw_b=0.01 * jax.random.normal(ks[1], (1, in_channels), jnp.float32),
        pw_w=w(ks[2], (in_channels, out_channels), in_channels),
        pw_b=0.01 * jax.random.normal(ks[3], (1, out_channels), jnp.float32),
        # DeformConv2dPack 1: conv_offset is zero-initialized in mmcv; main weight tap-major rows
        off1_w=jnp.zeros((9 * out_channels, 18), jnp.float32),
        off1_b=jnp.zeros((1, 18), jnp.float32),
        dcn1_w=w(ks[4], (9 * out_channels, out_channels), 9 * out_channels),
        abn1_g=jnp.ones((1, out_channels), jnp.float32),
        abn1_b=jnp.zeros((1, out_channels), jnp.float32),
        # DeformConv2dPack 2
        off2_w=jnp.zeros((9 * out_channels, 18), jnp.float32),
        off2_b=jnp.zeros((1, 18), jnp.float32),
        dcn2_w=w(ks[5], (9 * out_channels, out_channels), 9 * out_channels),
        abn2_g=jnp.ones((1, out_channels), jnp.float32),
        abn2_b=jnp.zeros((1, out_channels), jnp.float32),
    )


@jax.jit
def dc_unet_block_forward(x_nchw, params):
    # NCHW (PyTorch) -> NHWC for the TPU kernels
    x = jnp.transpose(x_nchw, (0, 2, 3, 1)).astype(jnp.float32)
    N, H, W, Cin = x.shape
    Cout = params["pw_w"].shape[1]
    M = N * H * W

    # Fold depthwise 3x3 (+bias) and pointwise 1x1 (+bias) into one dense 3x3 conv:
    #   W_k = diag(dw_w[k]) @ pw_w    ,    b = dw_b @ pw_w + pw_b
    comb_w = (params["dw_w"][:, :, None] * params["pw_w"][None, :, :]
              ).reshape(9 * Cin, Cout).astype(jnp.bfloat16)
    comb_b = params["dw_b"] @ params["pw_w"] + params["pw_b"]          # (1, Cout) f32

    off1_w = params["off1_w"].astype(jnp.bfloat16)
    off2_w = params["off2_w"].astype(jnp.bfloat16)
    dcn1_w = params["dcn1_w"].astype(jnp.bfloat16)
    dcn2_w = params["dcn2_w"].astype(jnp.bfloat16)

    th = _pick_h_tile(H, W, Cin, Cout, int(VMEM_LIMIT * 0.8))
    nt = H // th

    # ---- bottleneck conv fused with conv_offset of deform-conv 1 (row-tiled over H) ------------
    xh = _row_halos(x, th, 2)                              # (N*nt, 4, W, Cin)
    y0, off1 = pl.pallas_call(
        bottleneck_offset_kernel,
        out_shape=(jax.ShapeDtypeStruct((N, H, W, Cout), jnp.bfloat16),
                   jax.ShapeDtypeStruct((N, H, W, 18), jnp.float32)),
        grid=(N, nt),
        in_specs=[pl.BlockSpec((1, th, W, Cin), lambda n, t: (n, t, 0, 0)),
                  pl.BlockSpec((1, 4, W, Cin), lambda n, t: (n * nt + t, 0, 0, 0)),
                  pl.BlockSpec((9 * Cin, Cout), lambda n, t: (0, 0)),
                  pl.BlockSpec((1, Cout), lambda n, t: (0, 0)),
                  pl.BlockSpec((9 * Cout, 18), lambda n, t: (0, 0)),
                  pl.BlockSpec((1, 18), lambda n, t: (0, 0))],
        out_specs=(pl.BlockSpec((1, th, W, Cout), lambda n, t: (n, t, 0, 0)),
                   pl.BlockSpec((1, th, W, 18), lambda n, t: (n, t, 0, 0))),
        scratch_shapes=[pltpu.VMEM((th + 4, W + 16, Cin), jnp.float32),
                        pltpu.VMEM((th + 2, W + 16, Cout), jnp.float32)],
        compiler_params=_cparams(("parallel", "parallel")),
    )(x, xh, comb_w, comb_b, off1_w, params["off1_b"])

    # ---- deform-conv 1 (tiled bf16 im2col matmul) + ABN1 batch statistics ------------------------
    z1p, scale1, shift1, _ = _deform_conv_abn_stats(
        y0, off1, dcn1_w, params["abn1_g"], params["abn1_b"])
    z1 = z1p[:M].reshape(N, H, W, Cout)

    # ---- ABN1 normalize + LeakyReLU fused with conv_offset of deform-conv 2 (row-tiled) ---------
    zh1 = _row_halos(z1, th, 1)                            # (N*nt, 2, W, Cout)
    a1, off2 = pl.pallas_call(
        norm_offset_kernel,
        out_shape=(jax.ShapeDtypeStruct((N, H, W, Cout), jnp.bfloat16),
                   jax.ShapeDtypeStruct((N, H, W, 18), jnp.float32)),
        grid=(N, nt),
        in_specs=[pl.BlockSpec((1, th, W, Cout), lambda n, t: (n, t, 0, 0)),
                  pl.BlockSpec((1, 2, W, Cout), lambda n, t: (n * nt + t, 0, 0, 0)),
                  pl.BlockSpec((1, Cout), lambda n, t: (0, 0)),
                  pl.BlockSpec((1, Cout), lambda n, t: (0, 0)),
                  pl.BlockSpec((9 * Cout, 18), lambda n, t: (0, 0)),
                  pl.BlockSpec((1, 18), lambda n, t: (0, 0))],
        out_specs=(pl.BlockSpec((1, th, W, Cout), lambda n, t: (n, t, 0, 0)),
                   pl.BlockSpec((1, th, W, 18), lambda n, t: (n, t, 0, 0))),
        scratch_shapes=[pltpu.VMEM((th + 2, W + 16, Cout), jnp.float32)],
        compiler_params=_cparams(("parallel", "parallel")),
    )(z1, zh1, scale1, shift1, off2_w, params["off2_b"])

    # ---- deform-conv 2 + ABN2 batch statistics ---------------------------------------------------
    z2p, scale2, shift2, tm2 = _deform_conv_abn_stats(
        a1, off2, dcn2_w, params["abn2_g"], params["abn2_b"])

    # ---- final ABN2 normalize + LeakyReLU (row-tiled, channels lane-resident) --------------------
    Mp2 = z2p.shape[0]
    a2 = pl.pallas_call(
        norm_kernel,
        out_shape=jax.ShapeDtypeStruct((Mp2, Cout), jnp.float32),
        grid=(Mp2 // tm2,),
        in_specs=[pl.BlockSpec((tm2, Cout), lambda i: (i, 0)),
                  pl.BlockSpec((1, Cout), lambda i: (0, 0)),
                  pl.BlockSpec((1, Cout), lambda i: (0, 0))],
        out_specs=pl.BlockSpec((tm2, Cout), lambda i: (i, 0)),
        compiler_params=_cparams(("parallel",)),
    )(z2p, scale2, shift2)

    # NOTE: when stacking blocks, keep NHWC across blocks and drop this transpose (pure HBM cost).
    return jnp.transpose(a2[:M].reshape(N, H, W, Cout), (0, 3, 1, 2))


if __name__ == "__main__":
    key = jax.random.PRNGKey(0)
    kx, kp = jax.random.split(key)

    N, Cin, Cout, H, W = 2, 4, 8, 16, 16
    x = jax.random.normal(kx, (N, Cin, H, W), jnp.float32)   # NCHW like PyTorch
    params = init_params(kp, Cin, Cout)

    out = dc_unet_block_forward(x, params)
    out = jax.block_until_ready(out)

    assert out.shape == (N, Cout, H, W), out.shape
    assert bool(jnp.all(jnp.isfinite(out)))
    print("KERNEL_OK")
</pallas_src>

<mosaic_0001>
module attributes {stable_mosaic.version = 11 : i64} {
  func.func @bottleneck_offset_kernel(%arg0: i32, %arg1: i32, %arg2: memref<1x16x16x4xf32, #tpu.memory_space<vmem>>, %arg3: memref<1x4x16x4xf32, #tpu.memory_space<vmem>>, %arg4: memref<36x8xbf16, #tpu.memory_space<vmem>>, %arg5: memref<1x8xf32, #tpu.memory_space<vmem>>, %arg6: memref<72x18xbf16, #tpu.memory_space<vmem>>, %arg7: memref<1x18xf32, #tpu.memory_space<vmem>>, %arg8: memref<1x16x16x8xbf16, #tpu.memory_space<vmem>>, %arg9: memref<1x16x16x18xf32, #tpu.memory_space<vmem>>, %arg10: memref<20x32x4xf32, #tpu.memory_space<vmem>>, %arg11: memref<18x32x8xf32, #tpu.memory_space<vmem>>) attributes {dimension_semantics = [#tpu.dimension_semantics<parallel>, #tpu.dimension_semantics<parallel>], iteration_bounds = array<i64: 2, 1>, scalar_prefetch = 0 : i64, scratch_operands = 2 : i64, tpu.core_type = #tpu.core_type<tc>, window_params = [{transform_indices = @transform_0, window_bounds = array<i64: 1, 16, 16, 4>}, {transform_indices = @transform_1, window_bounds = array<i64: 1, 4, 16, 4>}, {pipeline_mode = #tpu.pipeline_mode<synchronous>, transform_indices = @transform_2, window_bounds = array<i64: 36, 8>}, {pipeline_mode = #tpu.pipeline_mode<synchronous>, transform_indices = @transform_3, window_bounds = array<i64: 1, 8>}, {pipeline_mode = #tpu.pipeline_mode<synchronous>, transform_indices = @transform_4, window_bounds = array<i64: 72, 18>}, {pipeline_mode = #tpu.pipeline_mode<synchronous>, transform_indices = @transform_5, window_bounds = array<i64: 1, 18>}, {transform_indices = @transform_6, window_bounds = array<i64: 1, 16, 16, 8>}, {transform_indices = @transform_7, window_bounds = array<i64: 1, 16, 16, 18>}]} {
    %cst = arith.constant 0.000000e+00 : f32
    %0 = vector.broadcast %cst : f32 to vector<20x8x4xf32>
    %c0 = arith.constant 0 : index
    %c0_0 = arith.constant 0 : index
    %c0_1 = arith.constant 0 : index
    %1 = vector.load %arg10[%c0, %c0_0, %c0_1] : memref<20x32x4xf32, #tpu.memory_space<vmem>>, vector<20x8x4xf32>
    tpu.vector_store %arg10[%c0, %c0_0, %c0_1], %0 {strides = array<i32>} : memref<20x32x4xf32, #tpu.memory_space<vmem>>, vector<20x8x4xf32>,
    %cst_2 = arith.constant 0.000000e+00 : f32
    %2 = vector.broadcast %cst_2 : f32 to vector<20x8x4xf32>
    %c0_3 = arith.constant 0 : index
    %c24 = arith.constant 24 : index
    %c0_4 = arith.constant 0 : index
    %3 = vector.load %arg10[%c0_3, %c24, %c0_4] : memref<20x32x4xf32, #tpu.memory_space<vmem>>, vector<20x8x4xf32>
    tpu.vector_store %arg10[%c0_3, %c24, %c0_4], %2 {strides = array<i32>} : memref<20x32x4xf32, #tpu.memory_space<vmem>>, vector<20x8x4xf32>,
    %cst_5 = arith.constant 0.000000e+00 : f32
    %4 = vector.broadcast %cst_5 : f32 to vector<18x8x8xf32>
    %c0_6 = arith.constant 0 : index
    %c0_7 = arith.constant 0 : index
    %c0_8 = arith.constant 0 : index
    %5 = vector.load %arg11[%c0_6, %c0_7, %c0_8] : memref<18x32x8xf32, #tpu.memory_space<vmem>>, vector<18x8x8xf32>
    tpu.vector_store %arg11[%c0_6, %c0_7, %c0_8], %4 {strides = array<i32>} : memref<18x32x8xf32, #tpu.memory_space<vmem>>, vector<18x8x8xf32>,
    %cst_9 = arith.constant 0.000000e+00 : f32
    %6 = vector.broadcast %cst_9 : f32 to vector<18x8x8xf32>
    %c0_10 = arith.constant 0 : index
    %c24_11 = arith.constant 24 : index
    %c0_12 = arith.constant 0 : index
    %7 = vector.load %arg11[%c0_10, %c24_11, %c0_12] : memref<18x32x8xf32, #tpu.memory_space<vmem>>, vector<18x8x8xf32>
    tpu.vector_store %arg11[%c0_10, %c24_11, %c0_12], %6 {strides = array<i32>} : memref<18x32x8xf32, #tpu.memory_space<vmem>>, vector<18x8x8xf32>,
    %c0_13 = arith.constant 0 : index
    %c0_14 = arith.constant 0 : index
    %c0_15 = arith.constant 0 : index
    %c0_16 = arith.constant 0 : index
    %8 = vector.load %arg3[%c0_13, %c0_14, %c0_15, %c0_16] : memref<1x4x16x4xf32, #tpu.memory_space<vmem>>, vector<1x4x16x4xf32>
    %9 = vector.shape_cast %8 : vector<1x4x16x4xf32> to vector<4x16x4xf32>
    %10 = vector.extract_strided_slice %9 {offsets = [0, 0, 0], sizes = [2, 16, 4], strides = [1, 1, 1]} : vector<4x16x4xf32> to vector<2x16x4xf32>
    %c0_17 = arith.constant 0 : index
    %c8 = arith.constant 8 : index
    %c0_18 = arith.constant 0 : index
    %11 = vector.load %arg10[%c0_17, %c8, %c0_18] : memref<20x32x4xf32, #tpu.memory_space<vmem>>, vector<2x16x4xf32>
    tpu.vector_store %arg10[%c0_17, %c8, %c0_18], %10 {strides = array<i32>} : memref<20x32x4xf32, #tpu.memory_space<vmem>>, vector<2x16x4xf32>,
    %c0_19 = arith.constant 0 : index
    %c0_20 = arith.constant 0 : index
    %c0_21 = arith.constant 0 : index
    %c0_22 = arith.constant 0 : index
    %12 = vector.load %arg2[%c0_19, %c0_20, %c0_21, %c0_22] : memref<1x16x16x4xf32, #tpu.memory_space<vmem>>, vector<1x16x16x4xf32>
    %13 = vector.shape_cast %12 : vector<1x16x16x4xf32> to vector<16x16x4xf32>
    %c2 = arith.constant 2 : index
    %c8_23 = arith.constant 8 : index
    %c0_24 = arith.constant 0 : index
    %14 = vector.load %arg10[%c2, %c8_23, %c0_24] : memref<20x32x4xf32, #tpu.memory_space<vmem>>, vector<16x16x4xf32>
    tpu.vector_store %arg10[%c2, %c8_23, %c0_24], %13 {strides = array<i32>} : memref<20x32x4xf32, #tpu.memory_space<vmem>>, vector<16x16x4xf32>,
    %15 = vector.extract_strided_slice %9 {offsets = [2, 0, 0], sizes = [2, 16, 4], strides = [1, 1, 1]} : vector<4x16x4xf32> to vector<2x16x4xf32>
    %c18 = arith.constant 18 : index
    %c8_25 = arith.constant 8 : index
    %c0_26 = arith.constant 0 : index
    %16 = vector.load %arg10[%c18, %c8_25, %c0_26] : memref<20x32x4xf32, #tpu.memory_space<vmem>>, vector<2x16x4xf32>
    tpu.vector_store %arg10[%c18, %c8_25, %c0_26], %15 {strides = array<i32>} : memref<20x32x4xf32, #tpu.memory_space<vmem>>, vector<2x16x4xf32>,
    %c0_27 = arith.constant 0 : index
    %c0_28 = arith.constant 0 : index
    %c0_29 = arith.constant 0 : index
    %17 = vector.load %arg10[%c0_27, %c0_28, %c0_29] : memref<20x32x4xf32, #tpu.memory_space<vmem>>, vector<20x32x4xf32>
    %c0_30 = arith.constant 0 : index
    %c0_31 = arith.constant 0 : index
    %18 = vector.load %arg4[%c0_30, %c0_31] : memref<36x8xbf16, #tpu.memory_space<vmem>>, vector<36x8xbf16>
    %c0_32 = arith.constant 0 : index
    %c0_33 = arith.constant 0 : index
    %19 = vector.load %arg5[%c0_32, %c0_33] : memref<1x8xf32, #tpu.memory_space<vmem>>, vector<1x8xf32>
    %20 = vector.extract_strided_slice %17 {offsets = [0, 7, 0], sizes = [18, 16, 4], strides = [1, 1, 1]} : vector<20x32x4xf32> to vector<18x16x4xf32>
    %21 = vector.shape_cast %20 : vector<18x16x4xf32> to vector<288x4xf32>
    %22 = arith.truncf %21 : vector<288x4xf32> to vector<288x4xbf16>
    %23 = vector.extract_strided_slice %17 {offsets = [0, 8, 0], sizes = [18, 16, 4], strides = [1, 1, 1]} : vector<20x32x4xf32> to vector<18x16x4xf32>
    %24 = vector.shape_cast %23 : vector<18x16x4xf32> to vector<288x4xf32>
    %25 = arith.truncf %24 : vector<288x4xf32> to vector<288x4xbf16>
    %26 = vector.extract_strided_slice %17 {offsets = [0, 9, 0], sizes = [18, 16, 4], strides = [1, 1, 1]} : vector<20x32x4xf32> to vector<18x16x4xf32>
    %27 = vector.shape_cast %26 : vector<18x16x4xf32> to vector<288x4xf32>
    %28 = arith.truncf %27 : vector<288x4xf32> to vector<288x4xbf16>
    %29 = vector.extract_strided_slice %17 {offsets = [1, 7, 0], sizes = [18, 16, 4], strides = [1, 1, 1]} : vector<20x32x4xf32> to vector<18x16x4xf32>
    %30 = vector.shape_cast %29 : vector<18x16x4xf32> to vector<288x4xf32>
    %31 = arith.truncf %30 : vector<288x4xf32> to vector<288x4xbf16>
    %32 = vector.extract_strided_slice %17 {offsets = [1, 8, 0], sizes = [18, 16, 4], strides = [1, 1, 1]} : vector<20x32x4xf32> to vector<18x16x4xf32>
    %33 = vector.shape_cast %32 : vector<18x16x4xf32> to vector<288x4xf32>
    %34 = arith.truncf %33 : vector<288x4xf32> to vector<288x4xbf16>
    %35 = vector.extract_strided_slice %17 {offsets = [1, 9, 0], sizes = [18, 16, 4], strides = [1, 1, 1]} : vector<20x32x4xf32> to vector<18x16x4xf32>
    %36 = vector.shape_cast %35 : vector<18x16x4xf32> to vector<288x4xf32>
    %37 = arith.truncf %36 : vector<288x4xf32> to vector<288x4xbf16>
    %38 = vector.extract_strided_slice %17 {offsets = [2, 7, 0], sizes = [18, 16, 4], strides = [1, 1, 1]} : vector<20x32x4xf32> to vector<18x16x4xf32>
    %39 = vector.shape_cast %38 : vector<18x16x4xf32> to vector<288x4xf32>
    %40 = arith.truncf %39 : vector<288x4xf32> to vector<288x4xbf16>
    %41 = vector.extract_strided_slice %17 {offsets = [2, 8, 0], sizes = [18, 16, 4], strides = [1, 1, 1]} : vector<20x32x4xf32> to vector<18x16x4xf32>
    %42 = vector.shape_cast %41 : vector<18x16x4xf32> to vector<288x4xf32>
    %43 = arith.truncf %42 : vector<288x4xf32> to vector<288x4xbf16>
    %44 = vector.extract_strided_slice %17 {offsets = [2, 9, 0], sizes = [18, 16, 4], strides = [1, 1, 1]} : vector<20x32x4xf32> to vector<18x16x4xf32>
    %45 = vector.shape_cast %44 : vector<18x16x4xf32> to vector<288x4xf32>
    %46 = arith.truncf %45 : vector<288x4xf32> to vector<288x4xbf16>
    %cst_34 = arith.constant 0.000000e+00 : f32
    %47 = vector.broadcast %cst_34 : f32 to vector<288x8xf32>
    %48 = vector.extract_strided_slice %18 {offsets = [0, 0], sizes = [4, 8], strides = [1, 1]} : vector<36x8xbf16> to vector<4x8xbf16>
    %cst_35 = arith.constant dense<0.000000e+00> : vector<288x8xf32>
    %49 = tpu.matmul %22, %48, %cst_35 {dimension_numbers = #tpu.dot_dimension_numbers<[1], [0], [0], [1], [0, 0, 1, 1], [], []>} : vector<288x4xbf16>, vector<4x8xbf16>, vector<288x8xf32> -> vector<288x8xf32>
    %50 = arith.addf %47, %49 : vector<288x8xf32>
    %51 = vector.extract_strided_slice %18 {offsets = [4, 0], sizes = [4, 8], strides = [1, 1]} : vector<36x8xbf16> to vector<4x8xbf16>
    %cst_36 = arith.constant dense<0.000000e+00> : vector<288x8xf32>
    %52 = tpu.matmul %25, %51, %cst_36 {dimension_numbers = #tpu.dot_dimension_numbers<[1], [0], [0], [1], [0, 0, 1, 1], [], []>} : vector<288x4xbf16>, vector<4x8xbf16>, vector<288x8xf32> -> vector<288x8xf32>
    %53 = arith.addf %50, %52 : vector<288x8xf32>
    %54 = vector.extract_strided_slice %18 {offsets = [8, 0], sizes = [4, 8], strides = [1, 1]} : vector<36x8xbf16> to vector<4x8xbf16>
    %cst_37 = arith.constant dense<0.000000e+00> : vector<288x8xf32>
    %55 = tpu.matmul %28, %54, %cst_37 {dimension_numbers = #tpu.dot_dimension_numbers<[1], [0], [0], [1], [0, 0, 1, 1], [], []>} : vector<288x4xbf16>, vector<4x8xbf16>, vector<288x8xf32> -> vector<288x8xf32>
    %56 = arith.addf %53, %55 : vector<288x8xf32>
    %57 = vector.extract_strided_slice %18 {offsets = [12, 0], sizes = [4, 8], strides = [1, 1]} : vector<36x8xbf16> to vector<4x8xbf16>
    %cst_38 = arith.constant dense<0.000000e+00> : vector<288x8xf32>
    %58 = tpu.matmul %31, %57, %cst_38 {dimension_numbers = #tpu.dot_dimension_numbers<[1], [0], [0], [1], [0, 0, 1, 1], [], []>} : vector<288x4xbf16>, vector<4x8xbf16>, vector<288x8xf32> -> vector<288x8xf32>
    %59 = arith.addf %56, %58 : vector<288x8xf32>
    %60 = vector.extract_strided_slice %18 {offsets = [16, 0], sizes = [4, 8], strides = [1, 1]} : vector<36x8xbf16> to vector<4x8xbf16>
    %cst_39 = arith.constant dense<0.000000e+00> : vector<288x8xf32>
    %61 = tpu.matmul %34, %60, %cst_39 {dimension_numbers = #tpu.dot_dimension_numbers<[1], [0], [0], [1], [0, 0, 1, 1], [], []>} : vector<288x4xbf16>, vector<4x8xbf16>, vector<288x8xf32> -> vector<288x8xf32>
    %62 = arith.addf %59, %61 : vector<288x8xf32>
    %63 = vector.extract_strided_slice %18 {offsets = [20, 0], sizes = [4, 8], strides = [1, 1]} : vector<36x8xbf16> to vector<4x8xbf16>
    %cst_40 = arith.constant dense<0.000000e+00> : vector<288x8xf32>
    %64 = tpu.matmul %37, %63, %cst_40 {dimension_numbers = #tpu.dot_dimension_numbers<[1], [0], [0], [1], [0, 0, 1, 1], [], []>} : vector<288x4xbf16>, vector<4x8xbf16>, vector<288x8xf32> -> vector<288x8xf32>
    %65 = arith.addf %62, %64 : vector<288x8xf32>
    %66 = vector.extract_strided_slice %18 {offsets = [24, 0], sizes = [4, 8], strides = [1, 1]} : vector<36x8xbf16> to vector<4x8xbf16>
    %cst_41 = arith.constant dense<0.000000e+00> : vector<288x8xf32>
    %67 = tpu.matmul %40, %66, %cst_41 {dimension_numbers = #tpu.dot_dimension_numbers<[1], [0], [0], [1], [0, 0, 1, 1], [], []>} : vector<288x4xbf16>, vector<4x8xbf16>, vector<288x8xf32> -> vector<288x8xf32>
    %68 = arith.addf %65, %67 : vector<288x8xf32>
    %69 = vector.extract_strided_slice %18 {offsets = [28, 0], sizes = [4, 8], strides = [1, 1]} : vector<36x8xbf16> to vector<4x8xbf16>
    %cst_42 = arith.constant dense<0.000000e+00> : vector<288x8xf32>
    %70 = tpu.matmul %43, %69, %cst_42 {dimension_numbers = #tpu.dot_dimension_numbers<[1], [0], [0], [1], [0, 0, 1, 1], [], []>} : vector<288x4xbf16>, vector<4x8xbf16>, vector<288x8xf32> -> vector<288x8xf32>
    %71 = arith.addf %68, %70 : vector<288x8xf32>
    %72 = vector.extract_strided_slice %18 {offsets = [32, 0], sizes = [4, 8], strides = [1, 1]} : vector<36x8xbf16> to vector<4x8xbf16>
    %cst_43 = arith.constant dense<0.000000e+00> : vector<288x8xf32>
    %73 = tpu.matmul %46, %72, %cst_43 {dimension_numbers = #tpu.dot_dimension_numbers<[1], [0], [0], [1], [0, 0, 1, 1], [], []>} : vector<288x4xbf16>, vector<4x8xbf16>, vector<288x8xf32> -> vector<288x8xf32>
    %74 = arith.addf %71, %73 : vector<288x8xf32>
    %75 = vector.broadcast %19 : vector<1x8xf32> to vector<288x8xf32>
    %76 = arith.addf %74, %75 : vector<288x8xf32>
    %77 = vector.shape_cast %76 : vector<288x8xf32> to vector<18x16x8xf32>
    %78 = vector.extract_strided_slice %77 {offsets = [1, 0, 0], sizes = [16, 16, 8], strides = [1, 1, 1]} : vector<18x16x8xf32> to vector<16x16x8xf32>
    %79 = arith.truncf %78 : vector<16x16x8xf32> to vector<16x16x8xbf16>
    %c0_44 = arith.constant 0 : index
    %c0_45 = arith.constant 0 : index
    %c0_46 = arith.constant 0 : index
    %c0_47 = arith.constant 0 : index
    %80 = vector.load %arg8[%c0_44, %c0_45, %c0_46, %c0_47] : memref<1x16x16x8xbf16, #tpu.memory_space<vmem>>, vector<1x16x16x8xbf16>
    %81 = vector.shape_cast %80 : vector<1x16x16x8xbf16> to vector<16x16x8xbf16>
    %82 = vector.shape_cast %79 : vector<16x16x8xbf16> to vector<1x16x16x8xbf16>
    tpu.vector_store %arg8[%c0_44, %c0_45, %c0_46, %c0_47], %82 {strides = array<i32>} : memref<1x16x16x8xbf16, #tpu.memory_space<vmem>>, vector<1x16x16x8xbf16>,
    %c0_i32 = arith.constant 0 : i32
    %83 = arith.cmpi sgt, %arg1, %c0_i32 : i32
    %84 = vector.extract_strided_slice %77 {offsets = [0, 0, 0], sizes = [1, 16, 8], strides = [1, 1, 1]} : vector<18x16x8xf32> to vector<1x16x8xf32>
    %cst_48 = arith.constant 0.000000e+00 : f32
    %85 = vector.broadcast %cst_48 : f32 to vector<1x16x8xf32>
    %86 = arith.select %83, %84, %85 : vector<1x16x8xf32>
    %c0_i32_49 = arith.constant 0 : i32
    %87 = arith.cmpi slt, %arg1, %c0_i32_49 : i32
    %88 = vector.extract_strided_slice %77 {offsets = [17, 0, 0], sizes = [1, 16, 8], strides = [1, 1, 1]} : vector<18x16x8xf32> to vector<1x16x8xf32>
    %cst_50 = arith.constant 0.000000e+00 : f32
    %89 = vector.broadcast %cst_50 : f32 to vector<1x16x8xf32>
    %90 = arith.select %87, %88, %89 : vector<1x16x8xf32>
    %c0_51 = arith.constant 0 : index
    %c8_52 = arith.constant 8 : index
    %c0_53 = arith.constant 0 : index
    %91 = vector.load %arg11[%c0_51, %c8_52, %c0_53] : memref<18x32x8xf32, #tpu.memory_space<vmem>>, vector<1x16x8xf32>
    tpu.vector_store %arg11[%c0_51, %c8_52, %c0_53], %86 {strides = array<i32>} : memref<18x32x8xf32, #tpu.memory_space<vmem>>, vector<1x16x8xf32>,
    %92 = vector.extract_strided_slice %77 {offsets = [1, 0, 0], sizes = [16, 16, 8], strides = [1, 1, 1]} : vector<18x16x8xf32> to vector<16x16x8xf32>
    %c1 = arith.constant 1 : index
    %c8_54 = arith.constant 8 : index
    %c0_55 = arith.constant 0 : index
    %93 = vector.load %arg11[%c1, %c8_54, %c0_55] : memref<18x32x8xf32, #tpu.memory_space<vmem>>, vector<16x16x8xf32>
    tpu.vector_store %arg11[%c1, %c8_54, %c0_55], %92 {strides = array<i32>} : memref<18x32x8xf32, #tpu.memory_space<vmem>>, vector<16x16x8xf32>,
    %c17 = arith.constant 17 : index
    %c8_56 = arith.constant 8 : index
    %c0_57 = arith.constant 0 : index
    %94 = vector.load %arg11[%c17, %c8_56, %c0_57] : memref<18x32x8xf32, #tpu.memory_space<vmem>>, vector<1x16x8xf32>
    tpu.vector_store %arg11[%c17, %c8_56, %c0_57], %90 {strides = array<i32>} : memref<18x32x8xf32, #tpu.memory_space<vmem>>, vector<1x16x8xf32>,
    %c0_58 = arith.constant 0 : index
    %c0_59 = arith.constant 0 : index
    %c0_60 = arith.constant 0 : index
    %95 = vector.load %arg11[%c0_58, %c0_59, %c0_60] : memref<18x32x8xf32, #tpu.memory_space<vmem>>, vector<18x32x8xf32>
    %c0_61 = arith.constant 0 : index
    %c0_62 = arith.constant 0 : index
    %96 = vector.load %arg6[%c0_61, %c0_62] : memref<72x18xbf16, #tpu.memory_space<vmem>>, vector<72x18xbf16>
    %c0_63 = arith.constant 0 : index
    %c0_64 = arith.constant 0 : index
    %97 = vector.load %arg7[%c0_63, %c0_64] : memref<1x18xf32, #tpu.memory_space<vmem>>, vector<1x18xf32>
    %98 = vector.extract_strided_slice %95 {offsets = [0, 7, 0], sizes = [16, 16, 8], strides = [1, 1, 1]} : vector<18x32x8xf32> to vector<16x16x8xf32>
    %99 = vector.shape_cast %98 : vector<16x16x8xf32> to vector<256x8xf32>
    %100 = arith.truncf %99 : vector<256x8xf32> to vector<256x8xbf16>
    %101 = vector.extract_strided_slice %95 {offsets = [0, 8, 0], sizes = [16, 16, 8], strides = [1, 1, 1]} : vector<18x32x8xf32> to vector<16x16x8xf32>
    %102 = vector.shape_cast %101 : vector<16x16x8xf32> to vector<256x8xf32>
    %103 = arith.truncf %102 : vector<256x8xf32> to vector<256x8xbf16>
    %104 = vector.extract_strided_slice %95 {offsets = [0, 9, 0], sizes = [16, 16, 8], strides = [1, 1, 1]} : vector<18x32x8xf32> to vector<16x16x8xf32>
    %105 = vector.shape_cast %104 : vector<16x16x8xf32> to vector<256x8xf32>
    %106 = arith.truncf %105 : vector<256x8xf32> to vector<256x8xbf16>
    %107 = vector.extract_strided_slice %95 {offsets = [1, 7, 0], sizes = [16, 16, 8], strides = [1, 1, 1]} : vector<18x32x8xf32> to vector<16x16x8xf32>
    %108 = vector.shape_cast %107 : vector<16x16x8xf32> to vector<256x8xf32>
    %109 = arith.truncf %108 : vector<256x8xf32> to vector<256x8xbf16>
    %110 = vector.extract_strided_slice %95 {offsets = [1, 8, 0], sizes = [16, 16, 8], strides = [1, 1, 1]} : vector<18x32x8xf32> to vector<16x16x8xf32>
    %111 = vector.shape_cast %110 : vector<16x16x8xf32> to vector<256x8xf32>
    %112 = arith.truncf %111 : vector<256x8xf32> to vector<256x8xbf16>
    %113 = vector.extract_strided_slice %95 {offsets = [1, 9, 0], sizes = [16, 16, 8], strides = [1, 1, 1]} : vector<18x32x8xf32> to vector<16x16x8xf32>
    %114 = vector.shape_cast %113 : vector<16x16x8xf32> to vector<256x8xf32>
    %115 = arith.truncf %114 : vector<256x8xf32> to vector<256x8xbf16>
    %116 = vector.extract_strided_slice %95 {offsets = [2, 7, 0], sizes = [16, 16, 8], strides = [1, 1, 1]} : vector<18x32x8xf32> to vector<16x16x8xf32>
    %117 = vector.shape_cast %116 : vector<16x16x8xf32> to vector<256x8xf32>
    %118 = arith.truncf %117 : vector<256x8xf32> to vector<256x8xbf16>
    %119 = vector.extract_strided_slice %95 {offsets = [2, 8, 0], sizes = [16, 16, 8], strides = [1, 1, 1]} : vector<18x32x8xf32> to vector<16x16x8xf32>
    %120 = vector.shape_cast %119 : vector<16x16x8xf32> to vector<256x8xf32>
    %121 = arith.truncf %120 : vector<256x8xf32> to vector<256x8xbf16>
    %122 = vector.extract_strided_slice %95 {offsets = [2, 9, 0], sizes = [16, 16, 8], strides = [1, 1, 1]} : vector<18x32x8xf32> to vector<16x16x8xf32>
    %123 = vector.shape_cast %122 : vector<16x16x8xf32> to vector<256x8xf32>
    %124 = arith.truncf %123 : vector<256x8xf32> to vector<256x8xbf16>
    %cst_65 = arith.constant 0.000000e+00 : f32
    %125 = vector.broadcast %cst_65 : f32 to vector<256x18xf32>
    %126 = vector.extract_strided_slice %96 {offsets = [0, 0], sizes = [8, 18], strides = [1, 1]} : vector<72x18xbf16> to vector<8x18xbf16>
    %cst_66 = arith.constant dense<0.000000e+00> : vector<256x18xf32>
    %127 = tpu.matmul %100, %126, %cst_66 {dimension_numbers = #tpu.dot_dimension_numbers<[1], [0], [0], [1], [0, 0, 1, 1], [], []>} : vector<256x8xbf16>, vector<8x18xbf16>, vector<256x18xf32> -> vector<256x18xf32>
    %128 = arith.addf %125, %127 : vector<256x18xf32>
    %129 = vector.extract_strided_slice %96 {offsets = [8, 0], sizes = [8, 18], strides = [1, 1]} : vector<72x18xbf16> to vector<8x18xbf16>
    %cst_67 = arith.constant dense<0.000000e+00> : vector<256x18xf32>
    %130 = tpu.matmul %103, %129, %cst_67 {dimension_numbers = #tpu.dot_dimension_numbers<[1], [0], [0], [1], [0, 0, 1, 1], [], []>} : vector<256x8xbf16>, vector<8x18xbf16>, vector<256x18xf32> -> vector<256x18xf32>
    %131 = arith.addf %128, %130 : vector<256x18xf32>
    %132 = vector.extract_strided_slice %96 {offsets = [16, 0], sizes = [8, 18], strides = [1, 1]} : vector<72x18xbf16> to vector<8x18xbf16>
    %cst_68 = arith.constant dense<0.000000e+00> : vector<256x18xf32>
    %133 = tpu.matmul %106, %132, %cst_68 {dimension_numbers = #tpu.dot_dimension_numbers<[1], [0], [0], [1], [0, 0, 1, 1], [], []>} : vector<256x8xbf16>, vector<8x18xbf16>, vector<256x18xf32> -> vector<256x18xf32>
    %134 = arith.addf %131, %133 : vector<256x18xf32>
    %135 = vector.extract_strided_slice %96 {offsets = [24, 0], sizes = [8, 18], strides = [1, 1]} : vector<72x18xbf16> to vector<8x18xbf16>
    %cst_69 = arith.constant dense<0.000000e+00> : vector<256x18xf32>
    %136 = tpu.matmul %109, %135, %cst_69 {dimension_numbers = #tpu.dot_dimension_numbers<[1], [0], [0], [1], [0, 0, 1, 1], [], []>} : vector<256x8xbf16>, vector<8x18xbf16>, vector<256x18xf32> -> vector<256x18xf32>
    %137 = arith.addf %134, %136 : vector<256x18xf32>
    %138 = vector.extract_strided_slice %96 {offsets = [32, 0], sizes = [8, 18], strides = [1, 1]} : vector<72x18xbf16> to vector<8x18xbf16>
    %cst_70 = arith.constant dense<0.000000e+00> : vector<256x18xf32>
    %139 = tpu.matmul %112, %138, %cst_70 {dimension_numbers = #tpu.dot_dimension_numbers<[1], [0], [0], [1], [0, 0, 1, 1], [], []>} : vector<256x8xbf16>, vector<8x18xbf16>, vector<256x18xf32> -> vector<256x18xf32>
    %140 = arith.addf %137, %139 : vector<256x18xf32>
    %141 = vector.extract_strided_slice %96 {offsets = [40, 0], sizes = [8, 18], strides = [1, 1]} : vector<72x18xbf16> to vector<8x18xbf16>
    %cst_71 = arith.constant dense<0.000000e+00> : vector<256x18xf32>
    %142 = tpu.matmul %115, %141, %cst_71 {dimension_numbers = #tpu.dot_dimension_numbers<[1], [0], [0], [1], [0, 0, 1, 1], [], []>} : vector<256x8xbf16>, vector<8x18xbf16>, vector<256x18xf32> -> vector<256x18xf32>
    %143 = arith.addf %140, %142 : vector<256x18xf32>
    %144 = vector.extract_strided_slice %96 {offsets = [48, 0], sizes = [8, 18], strides = [1, 1]} : vector<72x18xbf16> to vector<8x18xbf16>
    %cst_72 = arith.constant dense<0.000000e+00> : vector<256x18xf32>
    %145 = tpu.matmul %118, %144, %cst_72 {dimension_numbers = #tpu.dot_dimension_numbers<[1], [0], [0], [1], [0, 0, 1, 1], [], []>} : vector<256x8xbf16>, vector<8x18xbf16>, vector<256x18xf32> -> vector<256x18xf32>
    %146 = arith.addf %143, %145 : vector<256x18xf32>
    %147 = vector.extract_strided_slice %96 {offsets = [56, 0], sizes = [8, 18], strides = [1, 1]} : vector<72x18xbf16> to vector<8x18xbf16>
    %cst_73 = arith.constant dense<0.000000e+00> : vector<256x18xf32>
    %148 = tpu.matmul %121, %147, %cst_73 {dimension_numbers = #tpu.dot_dimension_numbers<[1], [0], [0], [1], [0, 0, 1, 1], [], []>} : vector<256x8xbf16>, vector<8x18xbf16>, vector<256x18xf32> -> vector<256x18xf32>
    %149 = arith.addf %146, %148 : vector<256x18xf32>
    %150 = vector.extract_strided_slice %96 {offsets = [64, 0], sizes = [8, 18], strides = [1, 1]} : vector<72x18xbf16> to vector<8x18xbf16>
    %cst_74 = arith.constant dense<0.000000e+00> : vector<256x18xf32>
    %151 = tpu.matmul %124, %150, %cst_74 {dimension_numbers = #tpu.dot_dimension_numbers<[1], [0], [0], [1], [0, 0, 1, 1], [], []>} : vector<256x8xbf16>, vector<8x18xbf16>, vector<256x18xf32> -> vector<256x18xf32>
    %152 = arith.addf %149, %151 : vector<256x18xf32>
    %153 = vector.broadcast %97 : vector<1x18xf32> to vector<256x18xf32>
    %154 = arith.addf %152, %153 : vector<256x18xf32>
    %155 = vector.shape_cast %154 : vector<256x18xf32> to vector<16x16x18xf32>
    %c0_75 = arith.constant 0 : index
    %c0_76 = arith.constant 0 : index
    %c0_77 = arith.constant 0 : index
    %c0_78 = arith.constant 0 : index
    %156 = vector.load %arg9[%c0_75, %c0_76, %c0_77, %c0_78] : memref<1x16x16x18xf32, #tpu.memory_space<vmem>>, vector<1x16x16x18xf32>
    %157 = vector.shape_cast %156 : vector<1x16x16x18xf32> to vector<16x16x18xf32>
    %158 = vector.shape_cast %155 : vector<16x16x18xf32> to vector<1x16x16x18xf32>
    tpu.vector_store %arg9[%c0_75, %c0_76, %c0_77, %c0_78], %158 {strides = array<i32>} : memref<1x16x16x18xf32, #tpu.memory_space<vmem>>, vector<1x16x16x18xf32>,
    return
  }
  func.func @transform_0(%arg0: i32, %arg1: i32) -> (i32, i32, i32, i32) {
    %c0_i32 = arith.constant 0 : i32
    %c0_i32_0 = arith.constant 0 : i32
    %c0_i32_1 = arith.constant 0 : i32
    return %arg0, %arg1, %c0_i32, %c0_i32_0 : i32, i32, i32, i32
  }
  func.func @transform_1(%arg0: i32, %arg1: i32) -> (i32, i32, i32, i32) {
    %c1_i32 = arith.constant 1 : i32
    %0 = arith.muli %arg0, %c1_i32 : i32
    %1 = arith.addi %0, %arg1 : i32
    %c0_i32 = arith.constant 0 : i32
    %c0_i32_0 = arith.constant 0 : i32
    %c0_i32_1 = arith.constant 0 : i32
    %c0_i32_2 = arith.constant 0 : i32
    return %1, %c0_i32, %c0_i32_0, %c0_i32_1 : i32, i32, i32, i32
  }
  func.func @transform_2(%arg0: i32, %arg1: i32) -> (i32, i32) {
    %c0_i32 = arith.constant 0 : i32
    %c0_i32_0 = arith.constant 0 : i32
    %c0_i32_1 = arith.constant 0 : i32
    return %c0_i32, %c0_i32_0 : i32, i32
  }
  func.func @transform_3(%arg0: i32, %arg1: i32) -> (i32, i32) {
    %c0_i32 = arith.constant 0 : i32
    %c0_i32_0 = arith.constant 0 : i32
    %c0_i32_1 = arith.constant 0 : i32
    return %c0_i32, %c0_i32_0 : i32, i32
  }
  func.func @transform_4(%arg0: i32, %arg1: i32) -> (i32, i32) {
    %c0_i32 = arith.constant 0 : i32
    %c0_i32_0 = arith.constant 0 : i32
    %c0_i32_1 = arith.constant 0 : i32
    return %c0_i32, %c0_i32_0 : i32, i32
  }
  func.func @transform_5(%arg0: i32, %arg1: i32) -> (i32, i32) {
    %c0_i32 = arith.constant 0 : i32
    %c0_i32_0 = arith.constant 0 : i32
    %c0_i32_1 = arith.constant 0 : i32
    return %c0_i32, %c0_i32_0 : i32, i32
  }
  func.func @transform_6(%arg0: i32, %arg1: i32) -> (i32, i32, i32, i32) {
    %c0_i32 = arith.constant 0 : i32
    %c0_i32_0 = arith.constant 0 : i32
    %c0_i32_1 = arith.constant 0 : i32
    return %arg0, %arg1, %c0_i32, %c0_i32_0 : i32, i32, i32, i32
  }
  func.func @transform_7(%arg0: i32, %arg1: i32) -> (i32, i32, i32, i32) {
    %c0_i32 = arith.constant 0 : i32
    %c0_i32_0 = arith.constant 0 : i32
    %c0_i32_1 = arith.constant 0 : i32
    return %arg0, %arg1, %c0_i32, %c0_i32_0 : i32, i32, i32, i32
  }
}

module attributes {stable_mosaic.version = 11 : i64} {
  func.func @dcn_matmul_stats_kernel(%arg0: i32, %arg1: memref<512x72xbf16, #tpu.memory_space<vmem>>, %arg2: memref<72x8xbf16, #tpu.memory_space<vmem>>, %arg3: memref<512x8xbf16, #tpu.memory_space<vmem>>, %arg4: memref<1x1x8xf32, #tpu.memory_space<vmem>>, %arg5: memref<1x1x8xf32, #tpu.memory_space<vmem>>) attributes {dimension_semantics = [#tpu.dimension_semantics<parallel>], iteration_bounds = array<i64: 1>, scalar_prefetch = 0 : i64, scratch_operands = 0 : i64, tpu.core_type = #tpu.core_type<tc>, window_params = [{transform_indices = @transform_0, window_bounds = array<i64: 512, 72>}, {pipeline_mode = #tpu.pipeline_mode<synchronous>, transform_indices = @transform_1, window_bounds = array<i64: 72, 8>}, {transform_indices = @transform_2, window_bounds = array<i64: 512, 8>}, {transform_indices = @transform_3, window_bounds = array<i64: 1, 1, 8>}, {transform_indices = @transform_4, window_bounds = array<i64: 1, 1, 8>}]} {
    %c0 = arith.constant 0 : index
    %c0_0 = arith.constant 0 : index
    %0 = vector.load %arg1[%c0, %c0_0] : memref<512x72xbf16, #tpu.memory_space<vmem>>, vector<512x72xbf16>
    %c0_1 = arith.constant 0 : index
    %c0_2 = arith.constant 0 : index
    %1 = vector.load %arg2[%c0_1, %c0_2] : memref<72x8xbf16, #tpu.memory_space<vmem>>, vector<72x8xbf16>
    %cst = arith.constant dense<0.000000e+00> : vector<512x8xf32>
    %2 = tpu.matmul %0, %1, %cst {dimension_numbers = #tpu.dot_dimension_numbers<[1], [0], [0], [1], [0, 0, 1, 1], [], []>} : vector<512x72xbf16>, vector<72x8xbf16>, vector<512x8xf32> -> vector<512x8xf32>
    %3 = arith.truncf %2 : vector<512x8xf32> to vector<512x8xbf16>
    %c0_3 = arith.constant 0 : index
    %c0_4 = arith.constant 0 : index
    %4 = vector.load %arg3[%c0_3, %c0_4] : memref<512x8xbf16, #tpu.memory_space<vmem>>, vector<512x8xbf16>
    tpu.vector_store %arg3[%c0_3, %c0_4], %3 {strides = array<i32>} : memref<512x8xbf16, #tpu.memory_space<vmem>>, vector<512x8xbf16>,
    %cst_5 = arith.constant dense<0.000000e+00> : vector<8xf32>
    %5 = vector.multi_reduction <add>, %2, %cst_5 [0] : vector<512x8xf32> to vector<8xf32>
    %6 = vector.shape_cast %5 : vector<8xf32> to vector<1x8xf32>
    %c0_6 = arith.constant 0 : index
    %c0_7 = arith.constant 0 : index
    %c0_8 = arith.constant 0 : index
    %7 = vector.load %arg4[%c0_6, %c0_7, %c0_8] : memref<1x1x8xf32, #tpu.memory_space<vmem>>, vector<1x1x8xf32>
    %8 = vector.shape_cast %7 : vector<1x1x8xf32> to vector<1x8xf32>
    %9 = vector.shape_cast %6 : vector<1x8xf32> to vector<1x1x8xf32>
    tpu.vector_store %arg4[%c0_6, %c0_7, %c0_8], %9 {strides = array<i32>} : memref<1x1x8xf32, #tpu.memory_space<vmem>>, vector<1x1x8xf32>,
    %10 = arith.mulf %2, %2 : vector<512x8xf32>
    %cst_9 = arith.constant dense<0.000000e+00> : vector<8xf32>
    %11 = vector.multi_reduction <add>, %10, %cst_9 [0] : vector<512x8xf32> to vector<8xf32>
    %12 = vector.shape_cast %11 : vector<8xf32> to vector<1x8xf32>
    %c0_10 = arith.constant 0 : index
    %c0_11 = arith.constant 0 : index
    %c0_12 = arith.constant 0 : index
    %13 = vector.load %arg5[%c0_10, %c0_11, %c0_12] : memref<1x1x8xf32, #tpu.memory_space<vmem>>, vector<1x1x8xf32>
    %14 = vector.shape_cast %13 : vector<1x1x8xf32> to vector<1x8xf32>
    %15 = vector.shape_cast %12 : vector<1x8xf32> to vector<1x1x8xf32>
    tpu.vector_store %arg5[%c0_10, %c0_11, %c0_12], %15 {strides = array<i32>} : memref<1x1x8xf32, #tpu.memory_space<vmem>>, vector<1x1x8xf32>,
    return
  }
  func.func @transform_0(%arg0: i32) -> (i32, i32) {
    %c0_i32 = arith.constant 0 : i32
    %c0_i32_0 = arith.constant 0 : i32
    return %arg0, %c0_i32 : i32, i32
  }
  func.func @transform_1(%arg0: i32) -> (i32, i32) {
    %c0_i32 = arith.constant 0 : i32
    %c0_i32_0 = arith.constant 0 : i32
    %c0_i32_1 = arith.constant 0 : i32
    return %c0_i32, %c0_i32_0 : i32, i32
  }
  func.func @transform_2(%arg0: i32) -> (i32, i32) {
    %c0_i32 = arith.constant 0 : i32
    %c0_i32_0 = arith.constant 0 : i32
    return %arg0, %c0_i32 : i32, i32
  }
  func.func @transform_3(%arg0: i32) -> (i32, i32, i32) {
    %c0_i32 = arith.constant 0 : i32
    %c0_i32_0 = arith.constant 0 : i32
    %c0_i32_1 = arith.constant 0 : i32
    return %arg0, %c0_i32, %c0_i32_0 : i32, i32, i32
  }
  func.func @transform_4(%arg0: i32) -> (i32, i32, i32) {
    %c0_i32 = arith.constant 0 : i32
    %c0_i32_0 = arith.constant 0 : i32
    %c0_i32_1 = arith.constant 0 : i32
    return %arg0, %c0_i32, %c0_i32_0 : i32, i32, i32
  }
}

module attributes {stable_mosaic.version = 11 : i64} {
  func.func @norm_offset_kernel(%arg0: i32, %arg1: i32, %arg2: memref<1x16x16x8xbf16, #tpu.memory_space<vmem>>, %arg3: memref<1x2x16x8xbf16, #tpu.memory_space<vmem>>, %arg4: memref<1x8xf32, #tpu.memory_space<vmem>>, %arg5: memref<1x8xf32, #tpu.memory_space<vmem>>, %arg6: memref<72x18xbf16, #tpu.memory_space<vmem>>, %arg7: memref<1x18xf32, #tpu.memory_space<vmem>>, %arg8: memref<1x16x16x8xbf16, #tpu.memory_space<vmem>>, %arg9: memref<1x16x16x18xf32, #tpu.memory_space<vmem>>, %arg10: memref<18x32x8xf32, #tpu.memory_space<vmem>>) attributes {dimension_semantics = [#tpu.dimension_semantics<parallel>, #tpu.dimension_semantics<parallel>], iteration_bounds = array<i64: 2, 1>, scalar_prefetch = 0 : i64, scratch_operands = 1 : i64, tpu.core_type = #tpu.core_type<tc>, window_params = [{transform_indices = @transform_0, window_bounds = array<i64: 1, 16, 16, 8>}, {transform_indices = @transform_1, window_bounds = array<i64: 1, 2, 16, 8>}, {pipeline_mode = #tpu.pipeline_mode<synchronous>, transform_indices = @transform_2, window_bounds = array<i64: 1, 8>}, {pipeline_mode = #tpu.pipeline_mode<synchronous>, transform_indices = @transform_3, window_bounds = array<i64: 1, 8>}, {pipeline_mode = #tpu.pipeline_mode<synchronous>, transform_indices = @transform_4, window_bounds = array<i64: 72, 18>}, {pipeline_mode = #tpu.pipeline_mode<synchronous>, transform_indices = @transform_5, window_bounds = array<i64: 1, 18>}, {transform_indices = @transform_6, window_bounds = array<i64: 1, 16, 16, 8>}, {transform_indices = @transform_7, window_bounds = array<i64: 1, 16, 16, 18>}]} {
    %cst = arith.constant 0.000000e+00 : f32
    %0 = vector.broadcast %cst : f32 to vector<18x8x8xf32>
    %c0 = arith.constant 0 : index
    %c0_0 = arith.constant 0 : index
    %c0_1 = arith.constant 0 : index
    %1 = vector.load %arg10[%c0, %c0_0, %c0_1] : memref<18x32x8xf32, #tpu.memory_space<vmem>>, vector<18x8x8xf32>
    tpu.vector_store %arg10[%c0, %c0_0, %c0_1], %0 {strides = array<i32>} : memref<18x32x8xf32, #tpu.memory_space<vmem>>, vector<18x8x8xf32>,
    %cst_2 = arith.constant 0.000000e+00 : f32
    %2 = vector.broadcast %cst_2 : f32 to vector<18x8x8xf32>
    %c0_3 = arith.constant 0 : index
    %c24 = arith.constant 24 : index
    %c0_4 = arith.constant 0 : index
    %3 = vector.load %arg10[%c0_3, %c24, %c0_4] : memref<18x32x8xf32, #tpu.memory_space<vmem>>, vector<18x8x8xf32>
    tpu.vector_store %arg10[%c0_3, %c24, %c0_4], %2 {strides = array<i32>} : memref<18x32x8xf32, #tpu.memory_space<vmem>>, vector<18x8x8xf32>,
    %c0_5 = arith.constant 0 : index
    %c0_6 = arith.constant 0 : index
    %c0_7 = arith.constant 0 : index
    %c0_8 = arith.constant 0 : index
    %4 = vector.load %arg3[%c0_5, %c0_6, %c0_7, %c0_8] : memref<1x2x16x8xbf16, #tpu.memory_space<vmem>>, vector<1x2x16x8xbf16>
    %5 = vector.shape_cast %4 : vector<1x2x16x8xbf16> to vector<2x16x8xbf16>
    %c0_9 = arith.constant 0 : index
    %c0_10 = arith.constant 0 : index
    %c0_11 = arith.constant 0 : index
    %c0_12 = arith.constant 0 : index
    %6 = vector.load %arg2[%c0_9, %c0_10, %c0_11, %c0_12] : memref<1x16x16x8xbf16, #tpu.memory_space<vmem>>, vector<1x16x16x8xbf16>
    %7 = vector.shape_cast %6 : vector<1x16x16x8xbf16> to vector<16x16x8xbf16>
    %8 = arith.extf %7 : vector<16x16x8xbf16> to vector<16x16x8xf32>
    %c0_13 = arith.constant 0 : index
    %c0_14 = arith.constant 0 : index
    %9 = vector.load %arg4[%c0_13, %c0_14] : memref<1x8xf32, #tpu.memory_space<vmem>>, vector<1x8xf32>
    %10 = vector.shape_cast %9 : vector<1x8xf32> to vector<1x1x8xf32>
    %11 = vector.broadcast %10 : vector<1x1x8xf32> to vector<16x16x8xf32>
    %12 = arith.mulf %8, %11 : vector<16x16x8xf32>
    %c0_15 = arith.constant 0 : index
    %c0_16 = arith.constant 0 : index
    %13 = vector.load %arg5[%c0_15, %c0_16] : memref<1x8xf32, #tpu.memory_space<vmem>>, vector<1x8xf32>
    %14 = vector.shape_cast %13 : vector<1x8xf32> to vector<1x1x8xf32>
    %15 = vector.broadcast %14 : vector<1x1x8xf32> to vector<16x16x8xf32>
    %16 = arith.addf %12, %15 : vector<16x16x8xf32>
    %cst_17 = arith.constant 0.000000e+00 : f32
    %17 = vector.broadcast %cst_17 : f32 to vector<16x16x8xf32>
    %18 = arith.cmpf oge, %16, %17 : vector<16x16x8xf32>
    %cst_18 = arith.constant 0.00999999977 : f32
    %19 = vector.broadcast %cst_18 : f32 to vector<16x16x8xf32>
    %20 = arith.mulf %19, %16 : vector<16x16x8xf32>
    %21 = arith.select %18, %16, %20 : vector<16x16x8xi1>, vector<16x16x8xf32>
    %22 = arith.truncf %21 : vector<16x16x8xf32> to vector<16x16x8xbf16>
    %c0_19 = arith.constant 0 : index
    %c0_20 = arith.constant 0 : index
    %c0_21 = arith.constant 0 : index
    %c0_22 = arith.constant 0 : index
    %23 = vector.load %arg8[%c0_19, %c0_20, %c0_21, %c0_22] : memref<1x16x16x8xbf16, #tpu.memory_space<vmem>>, vector<1x16x16x8xbf16>
    %24 = vector.shape_cast %23 : vector<1x16x16x8xbf16> to vector<16x16x8xbf16>
    %25 = vector.shape_cast %22 : vector<16x16x8xbf16> to vector<1x16x16x8xbf16>
    tpu.vector_store %arg8[%c0_19, %c0_20, %c0_21, %c0_22], %25 {strides = array<i32>} : memref<1x16x16x8xbf16, #tpu.memory_space<vmem>>, vector<1x16x16x8xbf16>,
    %c0_i32 = arith.constant 0 : i32
    %26 = arith.cmpi sgt, %arg1, %c0_i32 : i32
    %27 = vector.extract_strided_slice %5 {offsets = [0, 0, 0], sizes = [1, 16, 8], strides = [1, 1, 1]} : vector<2x16x8xbf16> to vector<1x16x8xbf16>
    %28 = arith.extf %27 : vector<1x16x8xbf16> to vector<1x16x8xf32>
    %c0_23 = arith.constant 0 : index
    %c0_24 = arith.constant 0 : index
    %29 = vector.load %arg4[%c0_23, %c0_24] : memref<1x8xf32, #tpu.memory_space<vmem>>, vector<1x8xf32>
    %30 = vector.shape_cast %29 : vector<1x8xf32> to vector<1x1x8xf32>
    %31 = vector.broadcast %30 : vector<1x1x8xf32> to vector<1x16x8xf32>
    %32 = arith.mulf %28, %31 : vector<1x16x8xf32>
    %c0_25 = arith.constant 0 : index
    %c0_26 = arith.constant 0 : index
    %33 = vector.load %arg5[%c0_25, %c0_26] : memref<1x8xf32, #tpu.memory_space<vmem>>, vector<1x8xf32>
    %34 = vector.shape_cast %33 : vector<1x8xf32> to vector<1x1x8xf32>
    %35 = vector.broadcast %34 : vector<1x1x8xf32> to vector<1x16x8xf32>
    %36 = arith.addf %32, %35 : vector<1x16x8xf32>
    %cst_27 = arith.constant 0.000000e+00 : f32
    %37 = vector.broadcast %cst_27 : f32 to vector<1x16x8xf32>
    %38 = arith.cmpf oge, %36, %37 : vector<1x16x8xf32>
    %cst_28 = arith.constant 0.00999999977 : f32
    %39 = vector.broadcast %cst_28 : f32 to vector<1x16x8xf32>
    %40 = arith.mulf %39, %36 : vector<1x16x8xf32>
    %41 = arith.select %38, %36, %40 : vector<1x16x8xi1>, vector<1x16x8xf32>
    %cst_29 = arith.constant 0.000000e+00 : f32
    %42 = vector.broadcast %cst_29 : f32 to vector<1x16x8xf32>
    %43 = arith.select %26, %41, %42 : vector<1x16x8xf32>
    %c0_i32_30 = arith.constant 0 : i32
    %44 = arith.cmpi slt, %arg1, %c0_i32_30 : i32
    %45 = vector.extract_strided_slice %5 {offsets = [1, 0, 0], sizes = [1, 16, 8], strides = [1, 1, 1]} : vector<2x16x8xbf16> to vector<1x16x8xbf16>
    %46 = arith.extf %45 : vector<1x16x8xbf16> to vector<1x16x8xf32>
    %c0_31 = arith.constant 0 : index
    %c0_32 = arith.constant 0 : index
    %47 = vector.load %arg4[%c0_31, %c0_32] : memref<1x8xf32, #tpu.memory_space<vmem>>, vector<1x8xf32>
    %48 = vector.shape_cast %47 : vector<1x8xf32> to vector<1x1x8xf32>
    %49 = vector.broadcast %48 : vector<1x1x8xf32> to vector<1x16x8xf32>
    %50 = arith.mulf %46, %49 : vector<1x16x8xf32>
    %c0_33 = arith.constant 0 : index
    %c0_34 = arith.constant 0 : index
    %51 = vector.load %arg5[%c0_33, %c0_34] : memref<1x8xf32, #tpu.memory_space<vmem>>, vector<1x8xf32>
    %52 = vector.shape_cast %51 : vector<1x8xf32> to vector<1x1x8xf32>
    %53 = vector.broadcast %52 : vector<1x1x8xf32> to vector<1x16x8xf32>
    %54 = arith.addf %50, %53 : vector<1x16x8xf32>
    %cst_35 = arith.constant 0.000000e+00 : f32
    %55 = vector.broadcast %cst_35 : f32 to vector<1x16x8xf32>
    %56 = arith.cmpf oge, %54, %55 : vector<1x16x8xf32>
    %cst_36 = arith.constant 0.00999999977 : f32
    %57 = vector.broadcast %cst_36 : f32 to vector<1x16x8xf32>
    %58 = arith.mulf %57, %54 : vector<1x16x8xf32>
    %59 = arith.select %56, %54, %58 : vector<1x16x8xi1>, vector<1x16x8xf32>
    %cst_37 = arith.constant 0.000000e+00 : f32
    %60 = vector.broadcast %cst_37 : f32 to vector<1x16x8xf32>
    %61 = arith.select %44, %59, %60 : vector<1x16x8xf32>
    %c0_38 = arith.constant 0 : index
    %c8 = arith.constant 8 : index
    %c0_39 = arith.constant 0 : index
    %62 = vector.load %arg10[%c0_38, %c8, %c0_39] : memref<18x32x8xf32, #tpu.memory_space<vmem>>, vector<1x16x8xf32>
    tpu.vector_store %arg10[%c0_38, %c8, %c0_39], %43 {strides = array<i32>} : memref<18x32x8xf32, #tpu.memory_space<vmem>>, vector<1x16x8xf32>,
    %c1 = arith.constant 1 : index
    %c8_40 = arith.constant 8 : index
    %c0_41 = arith.constant 0 : index
    %63 = vector.load %arg10[%c1, %c8_40, %c0_41] : memref<18x32x8xf32, #tpu.memory_space<vmem>>, vector<16x16x8xf32>
    tpu.vector_store %arg10[%c1, %c8_40, %c0_41], %21 {strides = array<i32>} : memref<18x32x8xf32, #tpu.memory_space<vmem>>, vector<16x16x8xf32>,
    %c17 = arith.constant 17 : index
    %c8_42 = arith.constant 8 : index
    %c0_43 = arith.constant 0 : index
    %64 = vector.load %arg10[%c17, %c8_42, %c0_43] : memref<18x32x8xf32, #tpu.memory_space<vmem>>, vector<1x16x8xf32>
    tpu.vector_store %arg10[%c17, %c8_42, %c0_43], %61 {strides = array<i32>} : memref<18x32x8xf32, #tpu.memory_space<vmem>>, vector<1x16x8xf32>,
    %c0_44 = arith.constant 0 : index
    %c0_45 = arith.constant 0 : index
    %c0_46 = arith.constant 0 : index
    %65 = vector.load %arg10[%c0_44, %c0_45, %c0_46] : memref<18x32x8xf32, #tpu.memory_space<vmem>>, vector<18x32x8xf32>
    %c0_47 = arith.constant 0 : index
    %c0_48 = arith.constant 0 : index
    %66 = vector.load %arg6[%c0_47, %c0_48] : memref<72x18xbf16, #tpu.memory_space<vmem>>, vector<72x18xbf16>
    %c0_49 = arith.constant 0 : index
    %c0_50 = arith.constant 0 : index
    %67 = vector.load %arg7[%c0_49, %c0_50] : memref<1x18xf32, #tpu.memory_space<vmem>>, vector<1x18xf32>
    %68 = vector.extract_strided_slice %65 {offsets = [0, 7, 0], sizes = [16, 16, 8], strides = [1, 1, 1]} : vector<18x32x8xf32> to vector<16x16x8xf32>
    %69 = vector.shape_cast %68 : vector<16x16x8xf32> to vector<256x8xf32>
    %70 = arith.truncf %69 : vector<256x8xf32> to vector<256x8xbf16>
    %71 = vector.extract_strided_slice %65 {offsets = [0, 8, 0], sizes = [16, 16, 8], strides = [1, 1, 1]} : vector<18x32x8xf32> to vector<16x16x8xf32>
    %72 = vector.shape_cast %71 : vector<16x16x8xf32> to vector<256x8xf32>
    %73 = arith.truncf %72 : vector<256x8xf32> to vector<256x8xbf16>
    %74 = vector.extract_strided_slice %65 {offsets = [0, 9, 0], sizes = [16, 16, 8], strides = [1, 1, 1]} : vector<18x32x8xf32> to vector<16x16x8xf32>
    %75 = vector.shape_cast %74 : vector<16x16x8xf32> to vector<256x8xf32>
    %76 = arith.truncf %75 : vector<256x8xf32> to vector<256x8xbf16>
    %77 = vector.extract_strided_slice %65 {offsets = [1, 7, 0], sizes = [16, 16, 8], strides = [1, 1, 1]} : vector<18x32x8xf32> to vector<16x16x8xf32>
    %78 = vector.shape_cast %77 : vector<16x16x8xf32> to vector<256x8xf32>
    %79 = arith.truncf %78 : vector<256x8xf32> to vector<256x8xbf16>
    %80 = vector.extract_strided_slice %65 {offsets = [1, 8, 0], sizes = [16, 16, 8], strides = [1, 1, 1]} : vector<18x32x8xf32> to vector<16x16x8xf32>
    %81 = vector.shape_cast %80 : vector<16x16x8xf32> to vector<256x8xf32>
    %82 = arith.truncf %81 : vector<256x8xf32> to vector<256x8xbf16>
    %83 = vector.extract_strided_slice %65 {offsets = [1, 9, 0], sizes = [16, 16, 8], strides = [1, 1, 1]} : vector<18x32x8xf32> to vector<16x16x8xf32>
    %84 = vector.shape_cast %83 : vector<16x16x8xf32> to vector<256x8xf32>
    %85 = arith.truncf %84 : vector<256x8xf32> to vector<256x8xbf16>
    %86 = vector.extract_strided_slice %65 {offsets = [2, 7, 0], sizes = [16, 16, 8], strides = [1, 1, 1]} : vector<18x32x8xf32> to vector<16x16x8xf32>
    %87 = vector.shape_cast %86 : vector<16x16x8xf32> to vector<256x8xf32>
    %88 = arith.truncf %87 : vector<256x8xf32> to vector<256x8xbf16>
    %89 = vector.extract_strided_slice %65 {offsets = [2, 8, 0], sizes = [16, 16, 8], strides = [1, 1, 1]} : vector<18x32x8xf32> to vector<16x16x8xf32>
    %90 = vector.shape_cast %89 : vector<16x16x8xf32> to vector<256x8xf32>
    %91 = arith.truncf %90 : vector<256x8xf32> to vector<256x8xbf16>
    %92 = vector.extract_strided_slice %65 {offsets = [2, 9, 0], sizes = [16, 16, 8], strides = [1, 1, 1]} : vector<18x32x8xf32> to vector<16x16x8xf32>
    %93 = vector.shape_cast %92 : vector<16x16x8xf32> to vector<256x8xf32>
    %94 = arith.truncf %93 : vector<256x8xf32> to vector<256x8xbf16>
    %cst_51 = arith.constant 0.000000e+00 : f32
    %95 = vector.broadcast %cst_51 : f32 to vector<256x18xf32>
    %96 = vector.extract_strided_slice %66 {offsets = [0, 0], sizes = [8, 18], strides = [1, 1]} : vector<72x18xbf16> to vector<8x18xbf16>
    %cst_52 = arith.constant dense<0.000000e+00> : vector<256x18xf32>
    %97 = tpu.matmul %70, %96, %cst_52 {dimension_numbers = #tpu.dot_dimension_numbers<[1], [0], [0], [1], [0, 0, 1, 1], [], []>} : vector<256x8xbf16>, vector<8x18xbf16>, vector<256x18xf32> -> vector<256x18xf32>
    %98 = arith.addf %95, %97 : vector<256x18xf32>
    %99 = vector.extract_strided_slice %66 {offsets = [8, 0], sizes = [8, 18], strides = [1, 1]} : vector<72x18xbf16> to vector<8x18xbf16>
    %cst_53 = arith.constant dense<0.000000e+00> : vector<256x18xf32>
    %100 = tpu.matmul %73, %99, %cst_53 {dimension_numbers = #tpu.dot_dimension_numbers<[1], [0], [0], [1], [0, 0, 1, 1], [], []>} : vector<256x8xbf16>, vector<8x18xbf16>, vector<256x18xf32> -> vector<256x18xf32>
    %101 = arith.addf %98, %100 : vector<256x18xf32>
    %102 = vector.extract_strided_slice %66 {offsets = [16, 0], sizes = [8, 18], strides = [1, 1]} : vector<72x18xbf16> to vector<8x18xbf16>
    %cst_54 = arith.constant dense<0.000000e+00> : vector<256x18xf32>
    %103 = tpu.matmul %76, %102, %cst_54 {dimension_numbers = #tpu.dot_dimension_numbers<[1], [0], [0], [1], [0, 0, 1, 1], [], []>} : vector<256x8xbf16>, vector<8x18xbf16>, vector<256x18xf32> -> vector<256x18xf32>
    %104 = arith.addf %101, %103 : vector<256x18xf32>
    %105 = vector.extract_strided_slice %66 {offsets = [24, 0], sizes = [8, 18], strides = [1, 1]} : vector<72x18xbf16> to vector<8x18xbf16>
    %cst_55 = arith.constant dense<0.000000e+00> : vector<256x18xf32>
    %106 = tpu.matmul %79, %105, %cst_55 {dimension_numbers = #tpu.dot_dimension_numbers<[1], [0], [0], [1], [0, 0, 1, 1], [], []>} : vector<256x8xbf16>, vector<8x18xbf16>, vector<256x18xf32> -> vector<256x18xf32>
    %107 = arith.addf %104, %106 : vector<256x18xf32>
    %108 = vector.extract_strided_slice %66 {offsets = [32, 0], sizes = [8, 18], strides = [1, 1]} : vector<72x18xbf16> to vector<8x18xbf16>
    %cst_56 = arith.constant dense<0.000000e+00> : vector<256x18xf32>
    %109 = tpu.matmul %82, %108, %cst_56 {dimension_numbers = #tpu.dot_dimension_numbers<[1], [0], [0], [1], [0, 0, 1, 1], [], []>} : vector<256x8xbf16>, vector<8x18xbf16>, vector<256x18xf32> -> vector<256x18xf32>
    %110 = arith.addf %107, %109 : vector<256x18xf32>
    %111 = vector.extract_strided_slice %66 {offsets = [40, 0], sizes = [8, 18], strides = [1, 1]} : vector<72x18xbf16> to vector<8x18xbf16>
    %cst_57 = arith.constant dense<0.000000e+00> : vector<256x18xf32>
    %112 = tpu.matmul %85, %111, %cst_57 {dimension_numbers = #tpu.dot_dimension_numbers<[1], [0], [0], [1], [0, 0, 1, 1], [], []>} : vector<256x8xbf16>, vector<8x18xbf16>, vector<256x18xf32> -> vector<256x18xf32>
    %113 = arith.addf %110, %112 : vector<256x18xf32>
    %114 = vector.extract_strided_slice %66 {offsets = [48, 0], sizes = [8, 18], strides = [1, 1]} : vector<72x18xbf16> to vector<8x18xbf16>
    %cst_58 = arith.constant dense<0.000000e+00> : vector<256x18xf32>
    %115 = tpu.matmul %88, %114, %cst_58 {dimension_numbers = #tpu.dot_dimension_numbers<[1], [0], [0], [1], [0, 0, 1, 1], [], []>} : vector<256x8xbf16>, vector<8x18xbf16>, vector<256x18xf32> -> vector<256x18xf32>
    %116 = arith.addf %113, %115 : vector<256x18xf32>
    %117 = vector.extract_strided_slice %66 {offsets = [56, 0], sizes = [8, 18], strides = [1, 1]} : vector<72x18xbf16> to vector<8x18xbf16>
    %cst_59 = arith.constant dense<0.000000e+00> : vector<256x18xf32>
    %118 = tpu.matmul %91, %117, %cst_59 {dimension_numbers = #tpu.dot_dimension_numbers<[1], [0], [0], [1], [0, 0, 1, 1], [], []>} : vector<256x8xbf16>, vector<8x18xbf16>, vector<256x18xf32> -> vector<256x18xf32>
    %119 = arith.addf %116, %118 : vector<256x18xf32>
    %120 = vector.extract_strided_slice %66 {offsets = [64, 0], sizes = [8, 18], strides = [1, 1]} : vector<72x18xbf16> to vector<8x18xbf16>
    %cst_60 = arith.constant dense<0.000000e+00> : vector<256x18xf32>
    %121 = tpu.matmul %94, %120, %cst_60 {dimension_numbers = #tpu.dot_dimension_numbers<[1], [0], [0], [1], [0, 0, 1, 1], [], []>} : vector<256x8xbf16>, vector<8x18xbf16>, vector<256x18xf32> -> vector<256x18xf32>
    %122 = arith.addf %119, %121 : vector<256x18xf32>
    %123 = vector.broadcast %67 : vector<1x18xf32> to vector<256x18xf32>
    %124 = arith.addf %122, %123 : vector<256x18xf32>
    %125 = vector.shape_cast %124 : vector<256x18xf32> to vector<16x16x18xf32>
    %c0_61 = arith.constant 0 : index
    %c0_62 = arith.constant 0 : index
    %c0_63 = arith.constant 0 : index
    %c0_64 = arith.constant 0 : index
    %126 = vector.load %arg9[%c0_61, %c0_62, %c0_63, %c0_64] : memref<1x16x16x18xf32, #tpu.memory_space<vmem>>, vector<1x16x16x18xf32>
    %127 = vector.shape_cast %126 : vector<1x16x16x18xf32> to vector<16x16x18xf32>
    %128 = vector.shape_cast %125 : vector<16x16x18xf32> to vector<1x16x16x18xf32>
    tpu.vector_store %arg9[%c0_61, %c0_62, %c0_63, %c0_64], %128 {strides = array<i32>} : memref<1x16x16x18xf32, #tpu.memory_space<vmem>>, vector<1x16x16x18xf32>,
    return
  }
  func.func @transform_0(%arg0: i32, %arg1: i32) -> (i32, i32, i32, i32) {
    %c0_i32 = arith.constant 0 : i32
    %c0_i32_0 = arith.constant 0 : i32
    %c0_i32_1 = arith.constant 0 : i32
    return %arg0, %arg1, %c0_i32, %c0_i32_0 : i32, i32, i32, i32
  }
  func.func @transform_1(%arg0: i32, %arg1: i32) -> (i32, i32, i32, i32) {
    %c1_i32 = arith.constant 1 : i32
    %0 = arith.muli %arg0, %c1_i32 : i32
    %1 = arith.addi %0, %arg1 : i32
    %c0_i32 = arith.constant 0 : i32
    %c0_i32_0 = arith.constant 0 : i32
    %c0_i32_1 = arith.constant 0 : i32
    %c0_i32_2 = arith.constant 0 : i32
    return %1, %c0_i32, %c0_i32_0, %c0_i32_1 : i32, i32, i32, i32
  }
  func.func @transform_2(%arg0: i32, %arg1: i32) -> (i32, i32) {
    %c0_i32 = arith.constant 0 : i32
    %c0_i32_0 = arith.constant 0 : i32
    %c0_i32_1 = arith.constant 0 : i32
    return %c0_i32, %c0_i32_0 : i32, i32
  }
  func.func @transform_3(%arg0: i32, %arg1: i32) -> (i32, i32) {
    %c0_i32 = arith.constant 0 : i32
    %c0_i32_0 = arith.constant 0 : i32
    %c0_i32_1 = arith.constant 0 : i32
    return %c0_i32, %c0_i32_0 : i32, i32
  }
  func.func @transform_4(%arg0: i32, %arg1: i32) -> (i32, i32) {
    %c0_i32 = arith.constant 0 : i32
    %c0_i32_0 = arith.constant 0 : i32
    %c0_i32_1 = arith.constant 0 : i32
    return %c0_i32, %c0_i32_0 : i32, i32
  }
  func.func @transform_5(%arg0: i32, %arg1: i32) -> (i32, i32) {
    %c0_i32 = arith.constant 0 : i32
    %c0_i32_0 = arith.constant 0 : i32
    %c0_i32_1 = arith.constant 0 : i32
    return %c0_i32, %c0_i32_0 : i32, i32
  }
  func.func @transform_6(%arg0: i32, %arg1: i32) -> (i32, i32, i32, i32) {
    %c0_i32 = arith.constant 0 : i32
    %c0_i32_0 = arith.constant 0 : i32
    %c0_i32_1 = arith.constant 0 : i32
    return %arg0, %arg1, %c0_i32, %c0_i32_0 : i32, i32, i32, i32
  }
  func.func @transform_7(%arg0: i32, %arg1: i32) -> (i32, i32, i32, i32) {
    %c0_i32 = arith.constant 0 : i32
    %c0_i32_0 = arith.constant 0 : i32
    %c0_i32_1 = arith.constant 0 : i32
    return %arg0, %arg1, %c0_i32, %c0_i32_0 : i32, i32, i32, i32
  }
}

module attributes {stable_mosaic.version = 11 : i64} {
  func.func @norm_kernel(%arg0: i32, %arg1: memref<512x8xbf16, #tpu.memory_space<vmem>>, %arg2: memref<1x8xf32, #tpu.memory_space<vmem>>, %arg3: memref<1x8xf32, #tpu.memory_space<vmem>>, %arg4: memref<512x8xf32, #tpu.memory_space<vmem>>) attributes {dimension_semantics = [#tpu.dimension_semantics<parallel>], iteration_bounds = array<i64: 1>, scalar_prefetch = 0 : i64, scratch_operands = 0 : i64, tpu.core_type = #tpu.core_type<tc>, window_params = [{transform_indices = @transform_0, window_bounds = array<i64: 512, 8>}, {pipeline_mode = #tpu.pipeline_mode<synchronous>, transform_indices = @transform_1, window_bounds = array<i64: 1, 8>}, {pipeline_mode = #tpu.pipeline_mode<synchronous>, transform_indices = @transform_2, window_bounds = array<i64: 1, 8>}, {transform_indices = @transform_3, window_bounds = array<i64: 512, 8>}]} {
    %c0 = arith.constant 0 : index
    %c0_0 = arith.constant 0 : index
    %0 = vector.load %arg1[%c0, %c0_0] : memref<512x8xbf16, #tpu.memory_space<vmem>>, vector<512x8xbf16>
    %1 = arith.extf %0 : vector<512x8xbf16> to vector<512x8xf32>
    %c0_1 = arith.constant 0 : index
    %c0_2 = arith.constant 0 : index
    %2 = vector.load %arg2[%c0_1, %c0_2] : memref<1x8xf32, #tpu.memory_space<vmem>>, vector<1x8xf32>
    %3 = vector.broadcast %2 : vector<1x8xf32> to vector<512x8xf32>
    %4 = arith.mulf %1, %3 : vector<512x8xf32>
    %c0_3 = arith.constant 0 : index
    %c0_4 = arith.constant 0 : index
    %5 = vector.load %arg3[%c0_3, %c0_4] : memref<1x8xf32, #tpu.memory_space<vmem>>, vector<1x8xf32>
    %6 = vector.broadcast %5 : vector<1x8xf32> to vector<512x8xf32>
    %7 = arith.addf %4, %6 : vector<512x8xf32>
    %cst = arith.constant 0.000000e+00 : f32
    %8 = vector.broadcast %cst : f32 to vector<512x8xf32>
    %9 = arith.cmpf oge, %7, %8 : vector<512x8xf32>
    %cst_5 = arith.constant 0.00999999977 : f32
    %10 = vector.broadcast %cst_5 : f32 to vector<512x8xf32>
    %11 = arith.mulf %10, %7 : vector<512x8xf32>
    %12 = arith.select %9, %7, %11 : vector<512x8xi1>, vector<512x8xf32>
    %c0_6 = arith.constant 0 : index
    %c0_7 = arith.constant 0 : index
    %13 = vector.load %arg4[%c0_6, %c0_7] : memref<512x8xf32, #tpu.memory_space<vmem>>, vector<512x8xf32>
    tpu.vector_store %arg4[%c0_6, %c0_7], %12 {strides = array<i32>} : memref<512x8xf32, #tpu.memory_space<vmem>>, vector<512x8xf32>,
    return
  }
  func.func @transform_0(%arg0: i32) -> (i32, i32) {
    %c0_i32 = arith.constant 0 : i32
    %c0_i32_0 = arith.constant 0 : i32
    return %arg0, %c0_i32 : i32, i32
  }
  func.func @transform_1(%arg0: i32) -> (i32, i32) {
    %c0_i32 = arith.constant 0 : i32
    %c0_i32_0 = arith.constant 0 : i32
    %c0_i32_1 = arith.constant 0 : i32
    return %c0_i32, %c0_i32_0 : i32, i32
  }
  func.func @transform_2(%arg0: i32) -> (i32, i32) {
    %c0_i32 = arith.constant 0 : i32
    %c0_i32_0 = arith.constant 0 : i32
    %c0_i32_1 = arith.constant 0 : i32
    return %c0_i32, %c0_i32_0 : i32, i32
  }
  func.func @transform_3(%arg0: i32) -> (i32, i32) {
    %c0_i32 = arith.constant 0 : i32
    %c0_i32_0 = arith.constant 0 : i32
    return %arg0, %c0_i32 : i32, i32
  }
}

</mosaic_0001>

<llo_original>
// kernel: dc_unet_block_forward.5
$region0: #{dc_unet_block_forward.5}
  #allocation0 [shape = 'u32[]', space=smem, size = 0x4, offset = 0x4, fixed_abs, tag = 'smem constant byte address 0x4 - core index']
  #allocation1 [shape = 'u32[72,128]{1,0:T(1,128)}', space=vmem, size = 0x9000, scoped, tag = 'internal scratch']
  #allocation2 [shape = 'f32[20,32,4]{2,1,0:T(8,128)}', space=vmem, size = 0x50000, scoped, tag = 'scratch operand']
  #allocation3 [shape = 'f32[18,32,8]{2,1,0:T(8,128)}', space=vmem, size = 0x48000, scoped, tag = 'scratch operand']
  %s0 = inlined_call_operand.vmem [shape: f32[2,16,16,4], index: 0, kind: input, shape index: {}]
  %s1 = inlined_call_operand.vmem [shape: f32[2,4,16,4], index: 1, kind: input, shape index: {}]
  %s2 = inlined_call_operand.vmem [shape: bf16[36,8], index: 2, kind: input, shape index: {}]
  %s3 = inlined_call_operand.vmem [shape: f32[1,8], index: 3, kind: input, shape index: {}]
  %s4 = inlined_call_operand.vmem [shape: bf16[72,18], index: 4, kind: input, shape index: {}]
  %s5 = inlined_call_operand.hbm [shape: f32[1,18], index: 5, kind: input, shape index: {}]
  %s6 = inlined_call_operand.vmem [shape: bf16[2,16,16,8], index: 6, kind: output, shape index: {0}]
  %s7 = inlined_call_operand.vmem [shape: f32[2,16,16,18], index: 7, kind: output, shape index: {1}]
  %8 = xla_tuple %s6, %s7
  %s9 = sld [smem:[#allocation0]]
  $region69: #{dc_unet_block_forward.5} parent=0
    _
  %s11 = ssub.s32 1, %s9
  %s12 = scalar_select 0, %s11, %s9
  $region1: #{dc_unet_block_forward.5} parent=0
    #allocation4 [shape = 'u8[512]{0}', space=vmem, size = 0x400, scoped, tag = 'input window, operand 5, single buffered']
    #allocation5 [shape = 's32[2]{0}', space=sflag, size = 0x8, scoped, tag = 'scoped memory for dc_unet_block_forward.5']
    %13 = vsyncpa [#allocation5], 0
    loop: start=0, step=1, limit=4
    $region2: #{dc_unet_block_forward.5} parent=1 // loop_pre_header
      _
    $region3: #{dc_unet_block_forward.5} parent=1 // loop_header
      %s15 = sphi 0, %s19
      %p16 = scmp.ge.s32.totalorder %s15, 4
      %s22 = sphi 0, %s34
      %s23 = sphi 0, %s30
      %s24 = sphi 0, %s22
      %s25 = sphi 0, %s23
      %s26 = sphi 0, %s24
      %s27 = sphi 0, %s25
      %s39 = sphi 0, %s41
      %s42 = sphi 0, %s39
      %s43 = sphi 0, %s42
      %s59 = sphi 0, %s43
      %s67 = sphi 0, %s69
      %s70 = sphi 0, %s67
      %s71 = sphi 0, %s70
      %s87 = sphi 0, %s71
      %s91 = sphi 0, %s91
      %s93 = sphi 0, %s91
      %s94 = sphi 0, %s93
      %s108 = sphi 0, %s94
      %s112 = sphi 0, %s112
      %s114 = sphi 0, %s112
      %s115 = sphi 0, %s114
      %s129 = sphi 0, %s115
      %s133 = sphi 0, %s133
      %s135 = sphi 0, %s133
      %s136 = sphi 0, %s135
      %s150 = sphi 0, %s136
      %s154 = sphi 0, %s154
      %s156 = sphi 0, %s154
      %s157 = sphi 0, %s156
      %s171 = sphi 0, %s157
      %s179 = sphi 0, %s181
      %s182 = sphi 0, %s179
      %s183 = sphi 0, %s182
      %s199 = sphi 0, %s183
      %s207 = sphi 0, %s209
      %s210 = sphi 0, %s207
      %s211 = sphi 0, %s210
      %s227 = sphi 0, %s211
    $region4: #{dc_unet_block_forward.5} parent=1 // loop_header_branch
      %18 = sbr.rel (%p16) target = $region8
    $region5: #{dc_unet_block_forward.5} parent=1 // loop_body
      %s20 = ssub.s32 %s15, 1
      %s21 = ssub.s32 %s15, 2
      %s28 = sadd.s32 1, %s23
      %p29 = scmp.ge.s32.totalorder %s28, 1
      %s30 = scalar_select %p29, 0, %s28
      %s31 = sadd.s32 1, %s22
      %s32 = scalar_select %p29, %s31, %s22
      %p33 = scmp.ge.s32.totalorder %s32, 2
      %s34 = scalar_select %p33, 0, %s32
      %s35 = ssub.s32 %s22, %s34
      %s36 = ssub.s32 %s23, %s30
      %s37 = sor.u32 %s35, %s36
      %p38 = scmp.eq.s32.totalorder %s37, 0
      %s40 = sadd.s32 %s39, 1
      %s41 = scalar_select %p38, %s39, %s40
      %p44 = pneg %p38
      %p45 = scmp.eq.s32.totalorder %s15, 1
      %p46 = por %p44, %p45
      %p47 = scmp.ne.s32.totalorder %s39, %s42
      %p48 = scmp.eq.s32.totalorder %s15, 0
      %p49 = por %p47, %p48
      %p50 = scmp.ne.s32.totalorder %s39, %s42
      %p51 = scmp.eq.s32.totalorder %s20, 1
      %p52 = por %p50, %p51
      %p53 = scmp.ne.s32.totalorder %s42, %s43
      %p54 = scmp.eq.s32.totalorder %s20, 0
      %p55 = por %p53, %p54
      %p56 = scmp.ne.s32.totalorder %s42, %s43
      %p57 = scmp.eq.s32.totalorder %s21, 1
      %p58 = por %p56, %p57
      %p60 = scmp.ne.s32.totalorder %s43, %s59
      %p61 = scmp.eq.s32.totalorder %s21, 0
      %p62 = por %p60, %p61
      %s63 = sadd.s32 %s22, %s23
      %s64 = sadd.s32 %s34, %s30
      %s65 = ssub.s32 %s63, %s64
      %p66 = scmp.eq.s32.totalorder %s65, 0
      %s68 = sadd.s32 %s67, 1
      %s69 = scalar_select %p66, %s67, %s68
      %p72 = pneg %p66
      %p73 = scmp.eq.s32.totalorder %s15, 1
      %p74 = por %p72, %p73
      %p75 = scmp.ne.s32.totalorder %s67, %s70
      %p76 = scmp.eq.s32.totalorder %s15, 0
      %p77 = por %p75, %p76
      %p78 = scmp.ne.s32.totalorder %s67, %s70
      %p79 = scmp.eq.s32.totalorder %s20, 1
      %p80 = por %p78, %p79
      %p81 = scmp.ne.s32.totalorder %s70, %s71
      %p82 = scmp.eq.s32.totalorder %s20, 0
      %p83 = por %p81, %p82
      %p84 = scmp.ne.s32.totalorder %s70, %s71
      %p85 = scmp.eq.s32.totalorder %s21, 1
      %p86 = por %p84, %p85
      %p88 = scmp.ne.s32.totalorder %s71, %s87
      %p89 = scmp.eq.s32.totalorder %s21, 0
      %p90 = por %p88, %p89
      %s92 = sadd.s32 %s91, 1
      %p95 = scmp.eq.s32.totalorder %s15, 1
      %p96 = scmp.ne.s32.totalorder %s91, %s93
      %p97 = scmp.eq.s32.totalorder %s15, 0
      %p98 = por %p96, %p97
      %p99 = scmp.ne.s32.totalorder %s91, %s93
      %p100 = scmp.eq.s32.totalorder %s20, 1
      %p101 = por %p99, %p100
      %p102 = scmp.ne.s32.totalorder %s93, %s94
      %p103 = scmp.eq.s32.totalorder %s20, 0
      %p104 = por %p102, %p103
      %p105 = scmp.ne.s32.totalorder %s93, %s94
      %p106 = scmp.eq.s32.totalorder %s21, 1
      %p107 = por %p105, %p106
      %p109 = scmp.ne.s32.totalorder %s94, %s108
      %p110 = scmp.eq.s32.totalorder %s21, 0
      %p111 = por %p109, %p110
      %s113 = sadd.s32 %s112, 1
      %p116 = scmp.eq.s32.totalorder %s15, 1
      %p117 = scmp.ne.s32.totalorder %s112, %s114
      %p118 = scmp.eq.s32.totalorder %s15, 0
      %p119 = por %p117, %p118
      %p120 = scmp.ne.s32.totalorder %s112, %s114
      %p121 = scmp.eq.s32.totalorder %s20, 1
      %p122 = por %p120, %p121
      %p123 = scmp.ne.s32.totalorder %s114, %s115
      %p124 = scmp.eq.s32.totalorder %s20, 0
      %p125 = por %p123, %p124
      %p126 = scmp.ne.s32.totalorder %s114, %s115
      %p127 = scmp.eq.s32.totalorder %s21, 1
      %p128 = por %p126, %p127
      %p130 = scmp.ne.s32.totalorder %s115, %s129
      %p131 = scmp.eq.s32.totalorder %s21, 0
      %p132 = por %p130, %p131
      %s134 = sadd.s32 %s133, 1
      %p137 = scmp.eq.s32.totalorder %s15, 1
      %p138 = scmp.ne.s32.totalorder %s133, %s135
      %p139 = scmp.eq.s32.totalorder %s15, 0
      %p140 = por %p138, %p139
      %p141 = scmp.ne.s32.totalorder %s133, %s135
      %p142 = scmp.eq.s32.totalorder %s20, 1
      %p143 = por %p141, %p142
      %p144 = scmp.ne.s32.totalorder %s135, %s136
      %p145 = scmp.eq.s32.totalorder %s20, 0
      %p146 = por %p144, %p145
      %p147 = scmp.ne.s32.totalorder %s135, %s136
      %p148 = scmp.eq.s32.totalorder %s21, 1
      %p149 = por %p147, %p148
      %p151 = scmp.ne.s32.totalorder %s136, %s150
      %p152 = scmp.eq.s32.totalorder %s21, 0
      %p153 = por %p151, %p152
      %s155 = sadd.s32 %s154, 1
      %p158 = scmp.eq.s32.totalorder %s15, 1
      %p159 = scmp.ne.s32.totalorder %s154, %s156
      %p160 = scmp.eq.s32.totalorder %s15, 0
      %p161 = por %p159, %p160
      %p162 = scmp.ne.s32.totalorder %s154, %s156
      %p163 = scmp.eq.s32.totalorder %s20, 1
      %p164 = por %p162, %p163
      %p165 = scmp.ne.s32.totalorder %s156, %s157
      %p166 = scmp.eq.s32.totalorder %s20, 0
      %p167 = por %p165, %p166
      %p168 = scmp.ne.s32.totalorder %s156, %s157
      %p169 = scmp.eq.s32.totalorder %s21, 1
      %p170 = por %p168, %p169
      %p172 = scmp.ne.s32.totalorder %s157, %s171
      %p173 = scmp.eq.s32.totalorder %s21, 0
      %p174 = por %p172, %p173
      %s175 = ssub.s32 %s22, %s34
      %s176 = ssub.s32 %s23, %s30
      %s177 = sor.u32 %s175, %s176
      %p178 = scmp.eq.s32.totalorder %s177, 0
      %s180 = sadd.s32 %s179, 1
      %s181 = scalar_select %p178, %s179, %s180
      %p184 = pneg %p178
      %p185 = scmp.eq.s32.totalorder %s15, 1
      %p186 = por %p184, %p185
      %p187 = scmp.ne.s32.totalorder %s179, %s182
      %p188 = scmp.eq.s32.totalorder %s15, 0
      %p189 = por %p187, %p188
      %p190 = scmp.ne.s32.totalorder %s179, %s182
      %p191 = scmp.eq.s32.totalorder %s20, 1
      %p192 = por %p190, %p191
      %p193 = scmp.ne.s32.totalorder %s182, %s183
      %p194 = scmp.eq.s32.totalorder %s20, 0
      %p195 = por %p193, %p194
      %p196 = scmp.ne.s32.totalorder %s182, %s183
      %p197 = scmp.eq.s32.totalorder %s21, 1
      %p198 = por %p196, %p197
      %p200 = scmp.ne.s32.totalorder %s183, %s199
      %p201 = scmp.eq.s32.totalorder %s21, 0
      %p202 = por %p200, %p201
      %s203 = ssub.s32 %s22, %s34
      %s204 = ssub.s32 %s23, %s30
      %s205 = sor.u32 %s203, %s204
      %p206 = scmp.eq.s32.totalorder %s205, 0
      %s208 = sadd.s32 %s207, 1
      %s209 = scalar_select %p206, %s207, %s208
      %p212 = pneg %p206
      %p213 = scmp.eq.s32.totalorder %s15, 1
      %p214 = por %p212, %p213
      %p215 = scmp.ne.s32.totalorder %s207, %s210
      %p216 = scmp.eq.s32.totalorder %s15, 0
      %p217 = por %p215, %p216
      %p218 = scmp.ne.s32.totalorder %s207, %s210
      %p219 = scmp.eq.s32.totalorder %s20, 1
      %p220 = por %p218, %p219
      %p221 = scmp.ne.s32.totalorder %s210, %s211
      %p222 = scmp.eq.s32.totalorder %s20, 0
      %p223 = por %p221, %p222
      %p224 = scmp.ne.s32.totalorder %s210, %s211
      %p225 = scmp.eq.s32.totalorder %s21, 1
      %p226 = por %p224, %p225
      %p228 = scmp.ne.s32.totalorder %s211, %s227
      %p229 = scmp.eq.s32.totalorder %s21, 0
      %p230 = por %p228, %p229
      %p231 = scmp.le.s32.totalorder 1, %s15
      %p232 = scmp.lt.s32.totalorder %s15, 3
      %p233 = pnand %p231, %p232
      %p234 = pneg %p233
      // Predicated region
      $region9: #{dc_unet_block_forward.5} parent=5 // pred_check
        _
      $region10: #{dc_unet_block_forward.5} parent=5 // pred_check_branch
        %236 = sbr.rel (%p233) target = $region12
      $region11: #{dc_unet_block_forward.5} parent=5 // pred_region
        %s237 = ssub.s32 %s15, 1
        // Predicated region
        $region13: #{dc_unet_block_forward.5} parent=11 // pred_check
          %p238 = pneg %p104
        $region14: #{dc_unet_block_forward.5} parent=11 // pred_check_branch
          %240 = sbr.rel (%p238) target = $region16
        $region15: #{dc_unet_block_forward.5} parent=11 // pred_region
          _
        $region16: #{dc_unet_block_forward.5} parent=11 // pred_fallthru
          _
        // Predicated region
        $region17: #{dc_unet_block_forward.5} parent=11 // pred_check
          %p241 = pneg %p125
        $region18: #{dc_unet_block_forward.5} parent=11 // pred_check_branch
          %243 = sbr.rel (%p241) target = $region20
        $region19: #{dc_unet_block_forward.5} parent=11 // pred_region
          _
        $region20: #{dc_unet_block_forward.5} parent=11 // pred_fallthru
          _
        // Predicated region
        $region21: #{dc_unet_block_forward.5} parent=11 // pred_check
          %p244 = pneg %p146
        $region22: #{dc_unet_block_forward.5} parent=11 // pred_check_branch
          %246 = sbr.rel (%p244) target = $region24
        $region23: #{dc_unet_block_forward.5} parent=11 // pred_region
          _
        $region24: #{dc_unet_block_forward.5} parent=11 // pred_fallthru
          _
        // Predicated region
        $region25: #{dc_unet_block_forward.5} parent=11 // pred_check
          %p247 = pneg %p167
        $region26: #{dc_unet_block_forward.5} parent=11 // pred_check_branch
          %249 = sbr.rel (%p247) target = $region28
        $region27: #{dc_unet_block_forward.5} parent=11 // pred_region
          %251 = vsyncadd [#allocation5], 0
          %s253 = sshll.u32 %s5, 4
          %s254 = int_to_ptr.hbm [resolvable:$true] %s253
          %s255 = sshll.u32 [#allocation4], 4
          %s256 = int_to_ptr.vmem [resolvable:$true] %s255
          %258 = dma.hbm_to_vmem [thread:$0]  %s254, 16, %s256, [#allocation5]
        $region28: #{dc_unet_block_forward.5} parent=11 // pred_fallthru
          _
      $region12: #{dc_unet_block_forward.5} parent=5 // pred_fallthru
        _
      %p259 = scmp.lt.s32.totalorder %s15, 2
      // Predicated region
      $region29: #{dc_unet_block_forward.5} parent=5 // pred_check
        %p260 = pneg %p259
      $region30: #{dc_unet_block_forward.5} parent=5 // pred_check_branch
        %262 = sbr.rel (%p260) target = $region32
      $region31: #{dc_unet_block_forward.5} parent=5 // pred_region
        // Predicated region
        $region33: #{dc_unet_block_forward.5} parent=31 // pred_check
          %p263 = pneg %p49
        $region34: #{dc_unet_block_forward.5} parent=31 // pred_check_branch
          %265 = sbr.rel (%p263) target = $region36
        $region35: #{dc_unet_block_forward.5} parent=31 // pred_region
          %s266 = smul.u32 16, %s23
          %p267 = scmp.lt.s32.totalorder %s22, 1
          %s268 = scalar_select %p267, %s22, 1
          %p269 = scmp.lt.s32.totalorder %s266, 15
          %s270 = scalar_select %p269, %s266, 15
          %s271 = smul.addr %s270, 2
          %s272 = smul.addr %s268, 32
          %s273 = sadd.s32 %s271, %s272
          %s274 = smul.addr %s273, 8
          %s275 = scalar_lea.vmem %s0, %s274
          %s276 = smul.u32 16, %s23
        $region36: #{dc_unet_block_forward.5} parent=31 // pred_fallthru
          _
        // Predicated region
        $region37: #{dc_unet_block_forward.5} parent=31 // pred_check
          %p277 = pneg %p77
        $region38: #{dc_unet_block_forward.5} parent=31 // pred_check_branch
          %279 = sbr.rel (%p277) target = $region40
        $region39: #{dc_unet_block_forward.5} parent=31 // pred_region
          %s280 = sadd.s32 %s22, %s23
          %p281 = scmp.lt.s32.totalorder %s280, 1
          %s282 = scalar_select %p281, %s280, 1
          %s283 = smul.addr %s282, 8
          %s284 = smul.addr %s283, 8
          %s285 = scalar_lea.vmem %s1, %s284
          %s286 = sadd.s32 %s22, %s23
        $region40: #{dc_unet_block_forward.5} parent=31 // pred_fallthru
          _
      $region32: #{dc_unet_block_forward.5} parent=5 // pred_fallthru
        _
      %p287 = scmp.le.s32.totalorder 1, %s15
      %p288 = scmp.lt.s32.totalorder %s15, 3
      %p289 = pnand %p287, %p288
      %p290 = pneg %p289
      // Predicated region
      $region41: #{dc_unet_block_forward.5} parent=5 // pred_check
        _
      $region42: #{dc_unet_block_forward.5} parent=5 // pred_check_branch
        %292 = sbr.rel (%p289) target = $region44
      $region43: #{dc_unet_block_forward.5} parent=5 // pred_region
        %s293 = ssub.s32 %s15, 1
        // Predicated region
        $region45: #{dc_unet_block_forward.5} parent=43 // pred_check
          %p294 = pneg %p167
        $region46: #{dc_unet_block_forward.5} parent=43 // pred_check_branch
          %296 = sbr.rel (%p294) target = $region48
        $region47: #{dc_unet_block_forward.5} parent=43 // pred_region
          %298 = dma.done [#allocation5], 16
        $region48: #{dc_unet_block_forward.5} parent=43 // pred_fallthru
          _
        %s299 = smul.u32 16, %s25
        %p300 = scmp.lt.s32.totalorder %s24, 1
        %s301 = scalar_select %p300, %s24, 1
        %p302 = scmp.lt.s32.totalorder %s299, 15
        %s303 = scalar_select %p302, %s299, 15
        %s304 = smul.addr %s303, 2
        %s305 = smul.addr %s301, 32
        %s306 = sadd.s32 %s304, %s305
        %s307 = smul.addr %s306, 8
        %s308 = scalar_lea.vmem %s0, %s307
        %p309 = pneg %p55
        %p310 = pneg %p52
        %s311 = sadd.s32 %s24, %s25
        %p312 = scmp.lt.s32.totalorder %s311, 1
        %s313 = scalar_select %p312, %s311, 1
        %s314 = smul.addr %s313, 8
        %s315 = smul.addr %s314, 8
        %s316 = scalar_lea.vmem %s1, %s315
        %p317 = pneg %p83
        %p318 = pneg %p80
        %p319 = pneg %p104
        %p320 = pneg %p101
        %p321 = pneg %p125
        %p322 = pneg %p122
        %p323 = pneg %p146
        %p324 = pneg %p143
        %p325 = pneg %p167
        %p326 = pneg %p164
        %p327 = pneg %p195
        %p328 = pneg %p192
        %s329 = smul.u32 16, %s25
        %p330 = scmp.lt.s32.totalorder %s24, 1
        %s331 = scalar_select %p330, %s24, 1
        %p332 = scmp.lt.s32.totalorder %s329, 15
        %s333 = scalar_select %p332, %s329, 15
        %s334 = smul.addr %s333, 2
        %s335 = smul.addr %s331, 32
        %s336 = sadd.s32 %s334, %s335
        %s337 = smul.addr %s336, 4
        %s338 = scalar_lea.vmem %s6, %s337
        %p339 = pneg %p223
        %p340 = pneg %p220
        %s341 = smul.u32 16, %s25
        %p342 = scmp.lt.s32.totalorder %s24, 1
        %s343 = scalar_select %p342, %s24, 1
        %p344 = scmp.lt.s32.totalorder %s341, 15
        %s345 = scalar_select %p344, %s341, 15
        %s346 = smul.addr %s345, 2
        %s347 = smul.addr %s343, 32
        %s348 = sadd.s32 %s346, %s347
        %s349 = smul.addr %s348, 8
        %s350 = scalar_lea.vmem %s7, %s349
        %s351 = smul.u32 16, %s25
        %p352 = scmp.lt.s32.totalorder %s24, 1
        %s353 = scalar_select %p352, %s24, 1
        %p354 = scmp.lt.s32.totalorder %s351, 15
        %s355 = scalar_select %p354, %s351, 15
        %s356 = smul.addr %s355, 2
        %s357 = smul.addr %s353, 32
        %s358 = sadd.s32 %s356, %s357
        %s359 = smul.addr %s358, 8
        %s360 = scalar_lea.vmem %s0, %s359
        %s361 = smul.u32 16, %s25
        %s362 = sadd.s32 %s24, %s25
        %p363 = scmp.lt.s32.totalorder %s362, 1
        %s364 = scalar_select %p363, %s362, 1
        %s365 = smul.addr %s364, 8
        %s366 = smul.addr %s365, 8
        %s367 = scalar_lea.vmem %s1, %s366
        %s368 = sadd.s32 %s24, %s25
        %s369 = smul.u32 16, %s25
        %p370 = scmp.lt.s32.totalorder %s24, 1
        %s371 = scalar_select %p370, %s24, 1
        %p372 = scmp.lt.s32.totalorder %s369, 15
        %s373 = scalar_select %p372, %s369, 15
        %s374 = smul.addr %s373, 2
        %s375 = smul.addr %s371, 32
        %s376 = sadd.s32 %s374, %s375
        %s377 = smul.addr %s376, 4
        %s378 = scalar_lea.vmem %s6, %s377
        %s379 = smul.u32 16, %s25
        %s380 = smul.u32 16, %s25
        %p381 = scmp.lt.s32.totalorder %s24, 1
        %s382 = scalar_select %p381, %s24, 1
        %p383 = scmp.lt.s32.totalorder %s380, 15
        %s384 = scalar_select %p383, %s380, 15
        %s385 = smul.addr %s384, 2
        %s386 = smul.addr %s382, 32
        %s387 = sadd.s32 %s385, %s386
        %s388 = smul.addr %s387, 8
        %s389 = scalar_lea.vmem %s7, %s388
        %s390 = smul.u32 16, %s25
        %vm392 = vcmask 31744
        %393 = vst.msk [vmem:[#allocation2] sm:$0xff] %vm392, 0.0
        %394 = vst.msk [vmem:[#allocation2 + $0x20] sm:$0xff] %vm392, 0.0
        %395 = vst.msk [vmem:[#allocation2 + $0x40] sm:$0xff] %vm392, 0.0
        %396 = vst.msk [vmem:[#allocation2 + $0x60] sm:$0xff] %vm392, 0.0
        %397 = vst.msk [vmem:[#allocation2 + $0x80] sm:$0xff] %vm392, 0.0
        %398 = vst.msk [vmem:[#allocation2 + $0xa0] sm:$0xff] %vm392, 0.0
        %399 = vst.msk [vmem:[#allocation2 + $0xc0] sm:$0xff] %vm392, 0.0
        %400 = vst.msk [vmem:[#allocation2 + $0xe0] sm:$0xff] %vm392, 0.0
        %401 = vst.msk [vmem:[#allocation2 + $0x100] sm:$0xff] %vm392, 0.0
        %402 = vst.msk [vmem:[#allocation2 + $0x120] sm:$0xff] %vm392, 0.0
        %403 = vst.msk [vmem:[#allocation2 + $0x140] sm:$0xff] %vm392, 0.0
        %404 = vst.msk [vmem:[#allocation2 + $0x160] sm:$0xff] %vm392, 0.0
        %405 = vst.msk [vmem:[#allocation2 + $0x180] sm:$0xff] %vm392, 0.0
        %406 = vst.msk [vmem:[#allocation2 + $0x1a0] sm:$0xff] %vm392, 0.0
        %407 = vst.msk [vmem:[#allocation2 + $0x1c0] sm:$0xff] %vm392, 0.0
        %408 = vst.msk [vmem:[#allocation2 + $0x1e0] sm:$0xff] %vm392, 0.0
        %409 = vst.msk [vmem:[#allocation2 + $0x200] sm:$0xff] %vm392, 0.0
        %410 = vst.msk [vmem:[#allocation2 + $0x220] sm:$0xff] %vm392, 0.0
        %411 = vst.msk [vmem:[#allocation2 + $0x240] sm:$0xff] %vm392, 0.0
        %412 = vst.msk [vmem:[#allocation2 + $0x260] sm:$0xff] %vm392, 0.0
        %413 = vst.msk [vmem:[#allocation2 + $0x18] sm:$0xff] %vm392, 0.0
        %414 = vst.msk [vmem:[#allocation2 + $0x38] sm:$0xff] %vm392, 0.0
        %415 = vst.msk [vmem:[#allocation2 + $0x58] sm:$0xff] %vm392, 0.0
        %416 = vst.msk [vmem:[#allocation2 + $0x78] sm:$0xff] %vm392, 0.0
        %417 = vst.msk [vmem:[#allocation2 + $0x98] sm:$0xff] %vm392, 0.0
        %418 = vst.msk [vmem:[#allocation2 + $0xb8] sm:$0xff] %vm392, 0.0
        %419 = vst.msk [vmem:[#allocation2 + $0xd8] sm:$0xff] %vm392, 0.0
        %420 = vst.msk [vmem:[#allocation2 + $0xf8] sm:$0xff] %vm392, 0.0
        %421 = vst.msk [vmem:[#allocation2 + $0x118] sm:$0xff] %vm392, 0.0
        %422 = vst.msk [vmem:[#allocation2 + $0x138] sm:$0xff] %vm392, 0.0
        %423 = vst.msk [vmem:[#allocation2 + $0x158] sm:$0xff] %vm392, 0.0
        %424 = vst.msk [vmem:[#allocation2 + $0x178] sm:$0xff] %vm392, 0.0
        %425 = vst.msk [vmem:[#allocation2 + $0x198] sm:$0xff] %vm392, 0.0
        %426 = vst.msk [vmem:[#allocation2 + $0x1b8] sm:$0xff] %vm392, 0.0
        %427 = vst.msk [vmem:[#allocation2 + $0x1d8] sm:$0xff] %vm392, 0.0
        %428 = vst.msk [vmem:[#allocation2 + $0x1f8] sm:$0xff] %vm392, 0.0
        %429 = vst.msk [vmem:[#allocation2 + $0x218] sm:$0xff] %vm392, 0.0
        %430 = vst.msk [vmem:[#allocation2 + $0x238] sm:$0xff] %vm392, 0.0
        %431 = vst.msk [vmem:[#allocation2 + $0x258] sm:$0xff] %vm392, 0.0
        %432 = vst.msk [vmem:[#allocation2 + $0x278] sm:$0xff] %vm392, 0.0
        %vm433 = vcmask 64512
        %434 = vst.msk [vmem:[#allocation3] sm:$0xff] %vm433, 0.0
        %435 = vst.msk [vmem:[#allocation3 + $0x20] sm:$0xff] %vm433, 0.0
        %436 = vst.msk [vmem:[#allocation3 + $0x40] sm:$0xff] %vm433, 0.0
        %437 = vst.msk [vmem:[#allocation3 + $0x60] sm:$0xff] %vm433, 0.0
        %438 = vst.msk [vmem:[#allocation3 + $0x80] sm:$0xff] %vm433, 0.0
        %439 = vst.msk [vmem:[#allocation3 + $0xa0] sm:$0xff] %vm433, 0.0
        %440 = vst.msk [vmem:[#allocation3 + $0xc0] sm:$0xff] %vm433, 0.0
        %441 = vst.msk [vmem:[#allocation3 + $0xe0] sm:$0xff] %vm433, 0.0
        %442 = vst.msk [vmem:[#allocation3 + $0x100] sm:$0xff] %vm433, 0.0
        %443 = vst.msk [vmem:[#allocation3 + $0x120] sm:$0xff] %vm433, 0.0
        %444 = vst.msk [vmem:[#allocation3 + $0x140] sm:$0xff] %vm433, 0.0
        %445 = vst.msk [vmem:[#allocation3 + $0x160] sm:$0xff] %vm433, 0.0
        %446 = vst.msk [vmem:[#allocation3 + $0x180] sm:$0xff] %vm433, 0.0
        %447 = vst.msk [vmem:[#allocation3 + $0x1a0] sm:$0xff] %vm433, 0.0
        %448 = vst.msk [vmem:[#allocation3 + $0x1c0] sm:$0xff] %vm433, 0.0
        %449 = vst.msk [vmem:[#allocation3 + $0x1e0] sm:$0xff] %vm433, 0.0
        %450 = vst.msk [vmem:[#allocation3 + $0x200] sm:$0xff] %vm433, 0.0
        %451 = vst.msk [vmem:[#allocation3 + $0x220] sm:$0xff] %vm433, 0.0
        %452 = vst.msk [vmem:[#allocation3 + $0x18] sm:$0xff] %vm433, 0.0
        %453 = vst.msk [vmem:[#allocation3 + $0x38] sm:$0xff] %vm433, 0.0
        %454 = vst.msk [vmem:[#allocation3 + $0x58] sm:$0xff] %vm433, 0.0
        %455 = vst.msk [vmem:[#allocation3 + $0x78] sm:$0xff] %vm433, 0.0
        %456 = vst.msk [vmem:[#allocation3 + $0x98] sm:$0xff] %vm433, 0.0
        %457 = vst.msk [vmem:[#allocation3 + $0xb8] sm:$0xff] %vm433, 0.0
        %458 = vst.msk [vmem:[#allocation3 + $0xd8] sm:$0xff] %vm433, 0.0
        %459 = vst.msk [vmem:[#allocation3 + $0xf8] sm:$0xff] %vm433, 0.0
        %460 = vst.msk [vmem:[#allocation3 + $0x118] sm:$0xff] %vm433, 0.0
        %461 = vst.msk [vmem:[#allocation3 + $0x138] sm:$0xff] %vm433, 0.0
        %462 = vst.msk [vmem:[#allocation3 + $0x158] sm:$0xff] %vm433, 0.0
        %463 = vst.msk [vmem:[#allocation3 + $0x178] sm:$0xff] %vm433, 0.0
        %464 = vst.msk [vmem:[#allocation3 + $0x198] sm:$0xff] %vm433, 0.0
        %465 = vst.msk [vmem:[#allocation3 + $0x1b8] sm:$0xff] %vm433, 0.0
        %466 = vst.msk [vmem:[#allocation3 + $0x1d8] sm:$0xff] %vm433, 0.0
        %467 = vst.msk [vmem:[#allocation3 + $0x1f8] sm:$0xff] %vm433, 0.0
        %468 = vst.msk [vmem:[#allocation3 + $0x218] sm:$0xff] %vm433, 0.0
        %469 = vst.msk [vmem:[#allocation3 + $0x238] sm:$0xff] %vm433, 0.0
        %v470 = vld [vmem:[%s367] sm:$0xff]
        %v471 = vld [vmem:[%s367 + $0x8] sm:$0xff]
        %v472 = vld [vmem:[%s367 + $0x10] sm:$0xff]
        %v473 = vld [vmem:[%s367 + $0x18] sm:$0xff]
        %v474 = vld [vmem:[%s367 + $0x20] sm:$0xff]
        %v475 = vld [vmem:[%s367 + $0x28] sm:$0xff]
        %v476 = vld [vmem:[%s367 + $0x30] sm:$0xff]
        %v477 = vld [vmem:[%s367 + $0x38] sm:$0xff]
        %478 = vst.msk [vmem:[#allocation2 + $0x8] sm:$0xff] %vm392, %v470
        %479 = vst.msk [vmem:[#allocation2 + $0x10] sm:$0xff] %vm392, %v471
        %480 = vst.msk [vmem:[#allocation2 + $0x28] sm:$0xff] %vm392, %v472
        %481 = vst.msk [vmem:[#allocation2 + $0x30] sm:$0xff] %vm392, %v473
        %v482 = vld [vmem:[%s360] sm:$0xff]
        %v483 = vld [vmem:[%s360 + $0x8] sm:$0xff]
        %v484 = vld [vmem:[%s360 + $0x10] sm:$0xff]
        %v485 = vld [vmem:[%s360 + $0x18] sm:$0xff]
        %v486 = vld [vmem:[%s360 + $0x20] sm:$0xff]
        %v487 = vld [vmem:[%s360 + $0x28] sm:$0xff]
        %v488 = vld [vmem:[%s360 + $0x30] sm:$0xff]
        %v489 = vld [vmem:[%s360 + $0x38] sm:$0xff]
        %v490 = vld [vmem:[%s360 + $0x40] sm:$0xff]
        %v491 = vld [vmem:[%s360 + $0x48] sm:$0xff]
        %v492 = vld [vmem:[%s360 + $0x50] sm:$0xff]
        %v493 = vld [vmem:[%s360 + $0x58] sm:$0xff]
        %v494 = vld [vmem:[%s360 + $0x60] sm:$0xff]
        %v495 = vld [vmem:[%s360 + $0x68] sm:$0xff]
        %v496 = vld [vmem:[%s360 + $0x70] sm:$0xff]
        %v497 = vld [vmem:[%s360 + $0x78] sm:$0xff]
        %v498 = vld [vmem:[%s360 + $0x80] sm:$0xff]
        %v499 = vld [vmem:[%s360 + $0x88] sm:$0xff]
        %v500 = vld [vmem:[%s360 + $0x90] sm:$0xff]
        %v501 = vld [vmem:[%s360 + $0x98] sm:$0xff]
        %v502 = vld [vmem:[%s360 + $0xa0] sm:$0xff]
        %v503 = vld [vmem:[%s360 + $0xa8] sm:$0xff]
        %v504 = vld [vmem:[%s360 + $0xb0] sm:$0xff]
        %v505 = vld [vmem:[%s360 + $0xb8] sm:$0xff]
        %v506 = vld [vmem:[%s360 + $0xc0] sm:$0xff]
        %v507 = vld [vmem:[%s360 + $0xc8] sm:$0xff]
        %v508 = vld [vmem:[%s360 + $0xd0] sm:$0xff]
        %v509 = vld [vmem:[%s360 + $0xd8] sm:$0xff]
        %v510 = vld [vmem:[%s360 + $0xe0] sm:$0xff]
        %v511 = vld [vmem:[%s360 + $0xe8] sm:$0xff]
        %v512 = vld [vmem:[%s360 + $0xf0] sm:$0xff]
        %v513 = vld [vmem:[%s360 + $0xf8] sm:$0xff]
        %s514 = scalar_lea.vmem [#allocation2], 64
        %515 = vst.msk [vmem:[%s514 + $0x8] sm:$0xff] %vm392, %v482
        %516 = vst.msk [vmem:[%s514 + $0x10] sm:$0xff] %vm392, %v483
        %517 = vst.msk [vmem:[%s514 + $0x28] sm:$0xff] %vm392, %v484
        %518 = vst.msk [vmem:[%s514 + $0x30] sm:$0xff] %vm392, %v485
        %519 = vst.msk [vmem:[%s514 + $0x48] sm:$0xff] %vm392, %v486
        %520 = vst.msk [vmem:[%s514 + $0x50] sm:$0xff] %vm392, %v487
        %521 = vst.msk [vmem:[%s514 + $0x68] sm:$0xff] %vm392, %v488
        %522 = vst.msk [vmem:[%s514 + $0x70] sm:$0xff] %vm392, %v489
        %523 = vst.msk [vmem:[%s514 + $0x88] sm:$0xff] %vm392, %v490
        %524 = vst.msk [vmem:[%s514 + $0x90] sm:$0xff] %vm392, %v491
        %525 = vst.msk [vmem:[%s514 + $0xa8] sm:$0xff] %vm392, %v492
        %526 = vst.msk [vmem:[%s514 + $0xb0] sm:$0xff] %vm392, %v493
        %527 = vst.msk [vmem:[%s514 + $0xc8] sm:$0xff] %vm392, %v494
        %528 = vst.msk [vmem:[%s514 + $0xd0] sm:$0xff] %vm392, %v495
        %529 = vst.msk [vmem:[%s514 + $0xe8] sm:$0xff] %vm392, %v496
        %530 = vst.msk [vmem:[%s514 + $0xf0] sm:$0xff] %vm392, %v497
        %531 = vst.msk [vmem:[%s514 + $0x108] sm:$0xff] %vm392, %v498
        %532 = vst.msk [vmem:[%s514 + $0x110] sm:$0xff] %vm392, %v499
        %533 = vst.msk [vmem:[%s514 + $0x128] sm:$0xff] %vm392, %v500
        %534 = vst.msk [vmem:[%s514 + $0x130] sm:$0xff] %vm392, %v501
        %535 = vst.msk [vmem:[%s514 + $0x148] sm:$0xff] %vm392, %v502
        %536 = vst.msk [vmem:[%s514 + $0x150] sm:$0xff] %vm392, %v503
        %537 = vst.msk [vmem:[%s514 + $0x168] sm:$0xff] %vm392, %v504
        %538 = vst.msk [vmem:[%s514 + $0x170] sm:$0xff] %vm392, %v505
        %539 = vst.msk [vmem:[%s514 + $0x188] sm:$0xff] %vm392, %v506
        %540 = vst.msk [vmem:[%s514 + $0x190] sm:$0xff] %vm392, %v507
        %541 = vst.msk [vmem:[%s514 + $0x1a8] sm:$0xff] %vm392, %v508
        %542 = vst.msk [vmem:[%s514 + $0x1b0] sm:$0xff] %vm392, %v509
        %543 = vst.msk [vmem:[%s514 + $0x1c8] sm:$0xff] %vm392, %v510
        %544 = vst.msk [vmem:[%s514 + $0x1d0] sm:$0xff] %vm392, %v511
        %545 = vst.msk [vmem:[%s514 + $0x1e8] sm:$0xff] %vm392, %v512
        %546 = vst.msk [vmem:[%s514 + $0x1f0] sm:$0xff] %vm392, %v513
        %s547 = scalar_lea.vmem [#allocation2], 576
        %548 = vst.msk [vmem:[%s547 + $0x8] sm:$0xff] %vm392, %v474
        %549 = vst.msk [vmem:[%s547 + $0x10] sm:$0xff] %vm392, %v475
        %550 = vst.msk [vmem:[%s547 + $0x28] sm:$0xff] %vm392, %v476
        %551 = vst.msk [vmem:[%s547 + $0x30] sm:$0xff] %vm392, %v477
        %v552 = vld [vmem:[#allocation2] sm:$0xff]
        %v553 = vld [vmem:[#allocation2 + $0x8] sm:$0xff]
        %v554 = vld [vmem:[#allocation2 + $0x10] sm:$0xff]
        %v555 = vld [vmem:[#allocation2 + $0x18] sm:$0xff]
        %v556 = vld [vmem:[#allocation2 + $0x20] sm:$0xff]
        %v557 = vld [vmem:[#allocation2 + $0x28] sm:$0xff]
        %v558 = vld [vmem:[#allocation2 + $0x30] sm:$0xff]
        %v559 = vld [vmem:[#allocation2 + $0x38] sm:$0xff]
        %v560 = vld [vmem:[#allocation2 + $0x40] sm:$0xff]
        %v561 = vld [vmem:[#allocation2 + $0x48] sm:$0xff]
        %v562 = vld [vmem:[#allocation2 + $0x50] sm:$0xff]
        %v563 = vld [vmem:[#allocation2 + $0x58] sm:$0xff]
        %v564 = vld [vmem:[#allocation2 + $0x60] sm:$0xff]
        %v565 = vld [vmem:[#allocation2 + $0x68] sm:$0xff]
        %v566 = vld [vmem:[#allocation2 + $0x70] sm:$0xff]
        %v567 = vld [vmem:[#allocation2 + $0x78] sm:$0xff]
        %v568 = vld [vmem:[#allocation2 + $0x80] sm:$0xff]
        %v569 = vld [vmem:[#allocation2 + $0x88] sm:$0xff]
        %v570 = vld [vmem:[#allocation2 + $0x90] sm:$0xff]
        %v571 = vld [vmem:[#allocation2 + $0x98] sm:$0xff]
        %v572 = vld [vmem:[#allocation2 + $0xa0] sm:$0xff]
        %v573 = vld [vmem:[#allocation2 + $0xa8] sm:$0xff]
        %v574 = vld [vmem:[#allocation2 + $0xb0] sm:$0xff]
        %v575 = vld [vmem:[#allocation2 + $0xb8] sm:$0xff]
        %v576 = vld [vmem:[#allocation2 + $0xc0] sm:$0xff]
        %v577 = vld [vmem:[#allocation2 + $0xc8] sm:$0xff]
        %v578 = vld [vmem:[#allocation2 + $0xd0] sm:$0xff]
        %v579 = vld [vmem:[#allocation2 + $0xd8] sm:$0xff]
        %v580 = vld [vmem:[#allocation2 + $0xe0] sm:$0xff]
        %v581 = vld [vmem:[#allocation2 + $0xe8] sm:$0xff]
        %v582 = vld [vmem:[#allocation2 + $0xf0] sm:$0xff]
        %v583 = vld [vmem:[#allocation2 + $0xf8] sm:$0xff]
        %v584 = vld [vmem:[#allocation2 + $0x100] sm:$0xff]
        %v585 = vld [vmem:[#allocation2 + $0x108] sm:$0xff]
        %v586 = vld [vmem:[#allocation2 + $0x110] sm:$0xff]
        %v587 = vld [vmem:[#allocation2 + $0x118] sm:$0xff]
        %v588 = vld [vmem:[#allocation2 + $0x120] sm:$0xff]
        %v589 = vld [vmem:[#allocation2 + $0x128] sm:$0xff]
        %v590 = vld [vmem:[#allocation2 + $0x130] sm:$0xff]
        %v591 = vld [vmem:[#allocation2 + $0x138] sm:$0xff]
        %v592 = vld [vmem:[#allocation2 + $0x140] sm:$0xff]
        %v593 = vld [vmem:[#allocation2 + $0x148] sm:$0xff]
        %v594 = vld [vmem:[#allocation2 + $0x150] sm:$0xff]
        %v595 = vld [vmem:[#allocation2 + $0x158] sm:$0xff]
        %v596 = vld [vmem:[#allocation2 + $0x160] sm:$0xff]
        %v597 = vld [vmem:[#allocation2 + $0x168] sm:$0xff]
        %v598 = vld [vmem:[#allocation2 + $0x170] sm:$0xff]
        %v599 = vld [vmem:[#allocation2 + $0x178] sm:$0xff]
        %v600 = vld [vmem:[#allocation2 + $0x180] sm:$0xff]
        %v601 = vld [vmem:[#allocation2 + $0x188] sm:$0xff]
        %v602 = vld [vmem:[#allocation2 + $0x190] sm:$0xff]
        %v603 = vld [vmem:[#allocation2 + $0x198] sm:$0xff]
        %v604 = vld [vmem:[#allocation2 + $0x1a0] sm:$0xff]
        %v605 = vld [vmem:[#allocation2 + $0x1a8] sm:$0xff]
        %v606 = vld [vmem:[#allocation2 + $0x1b0] sm:$0xff]
        %v607 = vld [vmem:[#allocation2 + $0x1b8] sm:$0xff]
        %v608 = vld [vmem:[#allocation2 + $0x1c0] sm:$0xff]
        %v609 = vld [vmem:[#allocation2 + $0x1c8] sm:$0xff]
        %v610 = vld [vmem:[#allocation2 + $0x1d0] sm:$0xff]
        %v611 = vld [vmem:[#allocation2 + $0x1d8] sm:$0xff]
        %v612 = vld [vmem:[#allocation2 + $0x1e0] sm:$0xff]
        %v613 = vld [vmem:[#allocation2 + $0x1e8] sm:$0xff]
        %v614 = vld [vmem:[#allocation2 + $0x1f0] sm:$0xff]
        %v615 = vld [vmem:[#allocation2 + $0x1f8] sm:$0xff]
        %v616 = vld [vmem:[#allocation2 + $0x200] sm:$0xff]
        %v617 = vld [vmem:[#allocation2 + $0x208] sm:$0xff]
        %v618 = vld [vmem:[#allocation2 + $0x210] sm:$0xff]
        %v619 = vld [vmem:[#allocation2 + $0x218] sm:$0xff]
        %v620 = vld [vmem:[#allocation2 + $0x220] sm:$0xff]
        %v621 = vld [vmem:[#allocation2 + $0x228] sm:$0xff]
        %v622 = vld [vmem:[#allocation2 + $0x230] sm:$0xff]
        %v623 = vld [vmem:[#allocation2 + $0x238] sm:$0xff]
        %v624 = vld [vmem:[#allocation2 + $0x240] sm:$0xff]
        %v625 = vld [vmem:[#allocation2 + $0x248] sm:$0xff]
        %v626 = vld [vmem:[#allocation2 + $0x250] sm:$0xff]
        %v627 = vld [vmem:[#allocation2 + $0x258] sm:$0xff]
        %v628 = vld [vmem:[#allocation2 + $0x260] sm:$0xff]
        %v629 = vld [vmem:[#allocation2 + $0x268] sm:$0xff]
        %v630 = vld [vmem:[#allocation2 + $0x270] sm:$0xff]
        %v631 = vld [vmem:[#allocation2 + $0x278] sm:$0xff]
        %v632 = vld [vmem:[%s2] sm:$0xf]
        %v633 = vld [vmem:[%s2 + $0x4] sm:$0xf]
        %v634 = vld [vmem:[%s2 + $0x8] sm:$0xf]
        %v635 = vld [vmem:[%s2 + $0xc] sm:$0xf]
        %v636 = vld [vmem:[%s2 + $0x10] sm:$0x3]
        %v637 = vld [vmem:[%s3] sm:$0x1]
        %vm692 = vcmask 1040384
        %v693 = vrot.slane %v552, 7
        %v694 = vrot.slane %v553, 7
        %v695 = vsel %vm692, %v693, %v694
        %v696 = vrot.slane %v554, 7
        %v697 = vsel %vm692, %v694, %v696
        %v698 = vrot.slane %v556, 7
        %v699 = vrot.slane %v557, 7
        %v700 = vsel %vm692, %v698, %v699
        %v701 = vrot.slane %v558, 7
        %v702 = vsel %vm692, %v699, %v701
        %v703 = vrot.slane %v560, 7
        %v704 = vrot.slane %v561, 7
        %v705 = vsel %vm692, %v703, %v704
        %v706 = vrot.slane %v562, 7
        %v707 = vsel %vm692, %v704, %v706
        %v708 = vrot.slane %v564, 7
        %v709 = vrot.slane %v565, 7
        %v710 = vsel %vm692, %v708, %v709
        %v711 = vrot.slane %v566, 7
        %v712 = vsel %vm692, %v709, %v711
        %v713 = vrot.slane %v568, 7
        %v714 = vrot.slane %v569, 7
        %v715 = vsel %vm692, %v713, %v714
        %v716 = vrot.slane %v570, 7
        %v717 = vsel %vm692, %v714, %v716
        %v718 = vrot.slane %v572, 7
        %v719 = vrot.slane %v573, 7
        %v720 = vsel %vm692, %v718, %v719
        %v721 = vrot.slane %v574, 7
        %v722 = vsel %vm692, %v719, %v721
        %v723 = vrot.slane %v576, 7
        %v724 = vrot.slane %v577, 7
        %v725 = vsel %vm692, %v723, %v724
        %v726 = vrot.slane %v578, 7
        %v727 = vsel %vm692, %v724, %v726
        %v728 = vrot.slane %v580, 7
        %v729 = vrot.slane %v581, 7
        %v730 = vsel %vm692, %v728, %v729
        %v731 = vrot.slane %v582, 7
        %v732 = vsel %vm692, %v729, %v731
        %v733 = vrot.slane %v584, 7
        %v734 = vrot.slane %v585, 7
        %v735 = vsel %vm692, %v733, %v734
        %v736 = vrot.slane %v586, 7
        %v737 = vsel %vm692, %v734, %v736
        %v738 = vrot.slane %v588, 7
        %v739 = vrot.slane %v589, 7
        %v740 = vsel %vm692, %v738, %v739
        %v741 = vrot.slane %v590, 7
        %v742 = vsel %vm692, %v739, %v741
        %v743 = vrot.slane %v592, 7
        %v744 = vrot.slane %v593, 7
        %v745 = vsel %vm692, %v743, %v744
        %v746 = vrot.slane %v594, 7
        %v747 = vsel %vm692, %v744, %v746
        %v748 = vrot.slane %v596, 7
        %v749 = vrot.slane %v597, 7
        %v750 = vsel %vm692, %v748, %v749
        %v751 = vrot.slane %v598, 7
        %v752 = vsel %vm692, %v749, %v751
        %v753 = vrot.slane %v600, 7
        %v754 = vrot.slane %v601, 7
        %v755 = vsel %vm692, %v753, %v754
        %v756 = vrot.slane %v602, 7
        %v757 = vsel %vm692, %v754, %v756
        %v758 = vrot.slane %v604, 7
        %v759 = vrot.slane %v605, 7
        %v760 = vsel %vm692, %v758, %v759
        %v761 = vrot.slane %v606, 7
        %v762 = vsel %vm692, %v759, %v761
        %v763 = vrot.slane %v608, 7
        %v764 = vrot.slane %v609, 7
        %v765 = vsel %vm692, %v763, %v764
        %v766 = vrot.slane %v610, 7
        %v767 = vsel %vm692, %v764, %v766
        %v768 = vrot.slane %v612, 7
        %v769 = vrot.slane %v613, 7
        %v770 = vsel %vm692, %v768, %v769
        %v771 = vrot.slane %v614, 7
        %v772 = vsel %vm692, %v769, %v771
        %v773 = vrot.slane %v616, 7
        %v774 = vrot.slane %v617, 7
        %v775 = vsel %vm692, %v773, %v774
        %v776 = vrot.slane %v618, 7
        %v777 = vsel %vm692, %v774, %v776
        %v778 = vrot.slane %v620, 7
        %v779 = vrot.slane %v621, 7
        %v780 = vsel %vm692, %v778, %v779
        %v781 = vrot.slane %v622, 7
        %v782 = vsel %vm692, %v779, %v781
        %v819 = vpack.c.bf16 %v697, %v695
        %v820 = vpack.c.bf16 %v702, %v700
        %v821 = vpack.c.bf16 %v707, %v705
        %v822 = vpack.c.bf16 %v712, %v710
        %v823 = vpack.c.bf16 %v717, %v715
        %v824 = vpack.c.bf16 %v722, %v720
        %v825 = vpack.c.bf16 %v727, %v725
        %v826 = vpack.c.bf16 %v732, %v730
        %v827 = vpack.c.bf16 %v737, %v735
        %v828 = vpack.c.bf16 %v742, %v740
        %v829 = vpack.c.bf16 %v747, %v745
        %v830 = vpack.c.bf16 %v752, %v750
        %v831 = vpack.c.bf16 %v757, %v755
        %v832 = vpack.c.bf16 %v762, %v760
        %v833 = vpack.c.bf16 %v767, %v765
        %v834 = vpack.c.bf16 %v772, %v770
        %v835 = vpack.c.bf16 %v777, %v775
        %v836 = vpack.c.bf16 %v782, %v780
        %v837 = vpack.c.bf16 %v554, %v553
        %v838 = vpack.c.bf16 %v558, %v557
        %v839 = vpack.c.bf16 %v562, %v561
        %v840 = vpack.c.bf16 %v566, %v565
        %v841 = vpack.c.bf16 %v570, %v569
        %v842 = vpack.c.bf16 %v574, %v573
        %v843 = vpack.c.bf16 %v578, %v577
        %v844 = vpack.c.bf16 %v582, %v581
        %v845 = vpack.c.bf16 %v586, %v585
        %v846 = vpack.c.bf16 %v590, %v589
        %v847 = vpack.c.bf16 %v594, %v593
        %v848 = vpack.c.bf16 %v598, %v597
        %v849 = vpack.c.bf16 %v602, %v601
        %v850 = vpack.c.bf16 %v606, %v605
        %v851 = vpack.c.bf16 %v610, %v609
        %v852 = vpack.c.bf16 %v614, %v613
        %v853 = vpack.c.bf16 %v618, %v617
        %v854 = vpack.c.bf16 %v622, %v621
        %vm873 = vcmask 1046528
        %v874 = vrot.slane %v553, 1
        %v875 = vrot.slane %v554, 1
        %v876 = vsel %vm873, %v874, %v875
        %v877 = vrot.slane %v555, 1
        %v878 = vsel %vm873, %v875, %v877
        %v879 = vrot.slane %v557, 1
        %v880 = vrot.slane %v558, 1
        %v881 = vsel %vm873, %v879, %v880
        %v882 = vrot.slane %v559, 1
        %v883 = vsel %vm873, %v880, %v882
        %v884 = vrot.slane %v561, 1
        %v885 = vrot.slane %v562, 1
        %v886 = vsel %vm873, %v884, %v885
        %v887 = vrot.slane %v563, 1
        %v888 = vsel %vm873, %v885, %v887
        %v889 = vrot.slane %v565, 1
        %v890 = vrot.slane %v566, 1
        %v891 = vsel %vm873, %v889, %v890
        %v892 = vrot.slane %v567, 1
        %v893 = vsel %vm873, %v890, %v892
        %v894 = vrot.slane %v569, 1
        %v895 = vrot.slane %v570, 1
        %v896 = vsel %vm873, %v894, %v895
        %v897 = vrot.slane %v571, 1
        %v898 = vsel %vm873, %v895, %v897
        %v899 = vrot.slane %v573, 1
        %v900 = vrot.slane %v574, 1
        %v901 = vsel %vm873, %v899, %v900
        %v902 = vrot.slane %v575, 1
        %v903 = vsel %vm873, %v900, %v902
        %v904 = vrot.slane %v577, 1
        %v905 = vrot.slane %v578, 1
        %v906 = vsel %vm873, %v904, %v905
        %v907 = vrot.slane %v579, 1
        %v908 = vsel %vm873, %v905, %v907
        %v909 = vrot.slane %v581, 1
        %v910 = vrot.slane %v582, 1
        %v911 = vsel %vm873, %v909, %v910
        %v912 = vrot.slane %v583, 1
        %v913 = vsel %vm873, %v910, %v912
        %v914 = vrot.slane %v585, 1
        %v915 = vrot.slane %v586, 1
        %v916 = vsel %vm873, %v914, %v915
        %v917 = vrot.slane %v587, 1
        %v918 = vsel %vm873, %v915, %v917
        %v919 = vrot.slane %v589, 1
        %v920 = vrot.slane %v590, 1
        %v921 = vsel %vm873, %v919, %v920
        %v922 = vrot.slane %v591, 1
        %v923 = vsel %vm873, %v920, %v922
        %v924 = vrot.slane %v593, 1
        %v925 = vrot.slane %v594, 1
        %v926 = vsel %vm873, %v924, %v925
        %v927 = vrot.slane %v595, 1
        %v928 = vsel %vm873, %v925, %v927
        %v929 = vrot.slane %v597, 1
        %v930 = vrot.slane %v598, 1
        %v931 = vsel %vm873, %v929, %v930
        %v932 = vrot.slane %v599, 1
        %v933 = vsel %vm873, %v930, %v932
        %v934 = vrot.slane %v601, 1
        %v935 = vrot.slane %v602, 1
        %v936 = vsel %vm873, %v934, %v935
        %v937 = vrot.slane %v603, 1
        %v938 = vsel %vm873, %v935, %v937
        %v939 = vrot.slane %v605, 1
        %v940 = vrot.slane %v606, 1
        %v941 = vsel %vm873, %v939, %v940
        %v942 = vrot.slane %v607, 1
        %v943 = vsel %vm873, %v940, %v942
        %v944 = vrot.slane %v609, 1
        %v945 = vrot.slane %v610, 1
        %v946 = vsel %vm873, %v944, %v945
        %v947 = vrot.slane %v611, 1
        %v948 = vsel %vm873, %v945, %v947
        %v949 = vrot.slane %v613, 1
        %v950 = vrot.slane %v614, 1
        %v951 = vsel %vm873, %v949, %v950
        %v952 = vrot.slane %v615, 1
        %v953 = vsel %vm873, %v950, %v952
        %v954 = vrot.slane %v617, 1
        %v955 = vrot.slane %v618, 1
        %v956 = vsel %vm873, %v954, %v955
        %v957 = vrot.slane %v619, 1
        %v958 = vsel %vm873, %v955, %v957
        %v959 = vrot.slane %v621, 1
        %v960 = vrot.slane %v622, 1
        %v961 = vsel %vm873, %v959, %v960
        %v962 = vrot.slane %v623, 1
        %v963 = vsel %vm873, %v960, %v962
        %v1000 = vpack.c.bf16 %v878, %v876
        %v1001 = vpack.c.bf16 %v883, %v881
        %v1002 = vpack.c.bf16 %v888, %v886
        %v1003 = vpack.c.bf16 %v893, %v891
        %v1004 = vpack.c.bf16 %v898, %v896
        %v1005 = vpack.c.bf16 %v903, %v901
        %v1006 = vpack.c.bf16 %v908, %v906
        %v1007 = vpack.c.bf16 %v913, %v911
        %v1008 = vpack.c.bf16 %v918, %v916
        %v1009 = vpack.c.bf16 %v923, %v921
        %v1010 = vpack.c.bf16 %v928, %v926
        %v1011 = vpack.c.bf16 %v933, %v931
        %v1012 = vpack.c.bf16 %v938, %v936
        %v1013 = vpack.c.bf16 %v943, %v941
        %v1014 = vpack.c.bf16 %v948, %v946
        %v1015 = vpack.c.bf16 %v953, %v951
        %v1016 = vpack.c.bf16 %v958, %v956
        %v1017 = vpack.c.bf16 %v963, %v961
        %v1021 = vrot.slane %v624, 7
        %v1022 = vrot.slane %v625, 7
        %v1023 = vsel %vm692, %v1021, %v1022
        %v1024 = vrot.slane %v626, 7
        %v1025 = vsel %vm692, %v1022, %v1024
        %v1028 = vpack.c.bf16 %v1025, %v1023
        %v1029 = vpack.c.bf16 %v626, %v625
        %v1031 = vrot.slane %v625, 1
        %v1032 = vrot.slane %v626, 1
        %v1033 = vsel %vm873, %v1031, %v1032
        %v1034 = vrot.slane %v627, 1
        %v1035 = vsel %vm873, %v1032, %v1034
        %v1038 = vpack.c.bf16 %v1035, %v1033
        %v1042 = vrot.slane %v628, 7
        %v1043 = vrot.slane %v629, 7
        %v1044 = vsel %vm692, %v1042, %v1043
        %v1045 = vrot.slane %v630, 7
        %v1046 = vsel %vm692, %v1043, %v1045
        %v1049 = vpack.c.bf16 %v1046, %v1044
        %v1050 = vpack.c.bf16 %v630, %v629
        %v1052 = vrot.slane %v629, 1
        %v1053 = vrot.slane %v630, 1
        %v1054 = vsel %vm873, %v1052, %v1053
        %v1055 = vrot.slane %v631, 1
        %v1056 = vsel %vm873, %v1053, %v1055
        %v1059 = vpack.c.bf16 %v1056, %v1054
        %v1061 = vunpack.c.l.b16 %v632
        %v1062 = vpack.c.b16 %v1061, %v1061
        %v1063 = vrot.slane %v1062, 2
        %v1065 = vsel %vm392, %v837, 0
        %v1068 = vsel %vm392, %v838, 0
        %v1071 = vsel %vm392, %v839, 0
        %v1074 = vsel %vm392, %v840, 0
        %v1077 = vsel %vm392, %v841, 0
        %v1080 = vsel %vm392, %v842, 0
        %v1083 = vsel %vm392, %v843, 0
        %v1086 = vsel %vm392, %v844, 0
        %v1089 = vsel %vm392, %v845, 0
        %v1092 = vsel %vm392, %v846, 0
        %v1095 = vsel %vm392, %v847, 0
        %v1098 = vsel %vm392, %v848, 0
        %v1101 = vsel %vm392, %v849, 0
        %v1104 = vsel %vm392, %v850, 0
        %v1107 = vsel %vm392, %v851, 0
        %v1110 = vsel %vm392, %v852, 0
        %v1113 = vsel %vm392, %v853, 0
        %v1116 = vsel %vm392, %v854, 0
        %vm1118 = vcmask 1041408
        %v1120 = vsel %vm1118, %v1063, 0
        %1122 = vmatpush.bf16.msra.mxu0 0
        %1123 = vmatpush.bf16.msra.mxu0 0
        %1124 = vmatpush.bf16.msra.mxu0 0
        %1125 = vmatpush.bf16.msra.mxu0 0
        %1126 = vmatpush.bf16.msra.mxu0 0
        %1127 = vmatpush.bf16.msra.mxu0 0
        %1128 = vmatpush.bf16.msra.mxu0 0
        %1129 = vmatpush.bf16.msra.mxu0 %v1120
        %1130 = vmatmul.bf16.gmra.mxu0 %v1065
        %v1131 = vpop.f32.mrf.mxu0
        %v1132 = vadd.f32 0.0, %v1131
        %v1133 = vpop.f32.mrf.mxu0
        %v1134 = vadd.f32 0.0, %v1133
        %1135 = vmatmul.bf16.gmra.mxu0 %v1068
        %v1136 = vpop.f32.mrf.mxu0
        %v1137 = vadd.f32 0.0, %v1136
        %v1138 = vpop.f32.mrf.mxu0
        %v1139 = vadd.f32 0.0, %v1138
        %1140 = vmatmul.bf16.gmra.mxu0 %v1071
        %v1141 = vpop.f32.mrf.mxu0
        %v1142 = vadd.f32 0.0, %v1141
        %v1143 = vpop.f32.mrf.mxu0
        %v1144 = vadd.f32 0.0, %v1143
        %1145 = vmatmul.bf16.gmra.mxu0 %v1074
        %v1146 = vpop.f32.mrf.mxu0
        %v1147 = vadd.f32 0.0, %v1146
        %v1148 = vpop.f32.mrf.mxu0
        %v1149 = vadd.f32 0.0, %v1148
        %1150 = vmatmul.bf16.gmra.mxu0 %v1077
        %v1151 = vpop.f32.mrf.mxu0
        %v1152 = vadd.f32 0.0, %v1151
        %v1153 = vpop.f32.mrf.mxu0
        %v1154 = vadd.f32 0.0, %v1153
        %1155 = vmatmul.bf16.gmra.mxu0 %v1080
        %v1156 = vpop.f32.mrf.mxu0
        %v1157 = vadd.f32 0.0, %v1156
        %v1158 = vpop.f32.mrf.mxu0
        %v1159 = vadd.f32 0.0, %v1158
        %1160 = vmatmul.bf16.gmra.mxu0 %v1083
        %v1161 = vpop.f32.mrf.mxu0
        %v1162 = vadd.f32 0.0, %v1161
        %v1163 = vpop.f32.mrf.mxu0
        %v1164 = vadd.f32 0.0, %v1163
        %1165 = vmatmul.bf16.gmra.mxu0 %v1086
        %v1166 = vpop.f32.mrf.mxu0
        %v1167 = vadd.f32 0.0, %v1166
        %v1168 = vpop.f32.mrf.mxu0
        %v1169 = vadd.f32 0.0, %v1168
        %1170 = vmatmul.bf16.gmra.mxu0 %v1089
        %v1171 = vpop.f32.mrf.mxu0
        %v1172 = vadd.f32 0.0, %v1171
        %v1173 = vpop.f32.mrf.mxu0
        %v1174 = vadd.f32 0.0, %v1173
        %1175 = vmatmul.bf16.gmra.mxu0 %v1092
        %v1176 = vpop.f32.mrf.mxu0
        %v1177 = vadd.f32 0.0, %v1176
        %v1178 = vpop.f32.mrf.mxu0
        %v1179 = vadd.f32 0.0, %v1178
        %1180 = vmatmul.bf16.gmra.mxu0 %v1095
        %v1181 = vpop.f32.mrf.mxu0
        %v1182 = vadd.f32 0.0, %v1181
        %v1183 = vpop.f32.mrf.mxu0
        %v1184 = vadd.f32 0.0, %v1183
        %1185 = vmatmul.bf16.gmra.mxu0 %v1098
        %v1186 = vpop.f32.mrf.mxu0
        %v1187 = vadd.f32 0.0, %v1186
        %v1188 = vpop.f32.mrf.mxu0
        %v1189 = vadd.f32 0.0, %v1188
        %1190 = vmatmul.bf16.gmra.mxu0 %v1101
        %v1191 = vpop.f32.mrf.mxu0
        %v1192 = vadd.f32 0.0, %v1191
        %v1193 = vpop.f32.mrf.mxu0
        %v1194 = vadd.f32 0.0, %v1193
        %1195 = vmatmul.bf16.gmra.mxu0 %v1104
        %v1196 = vpop.f32.mrf.mxu0
        %v1197 = vadd.f32 0.0, %v1196
        %v1198 = vpop.f32.mrf.mxu0
        %v1199 = vadd.f32 0.0, %v1198
        %1200 = vmatmul.bf16.gmra.mxu0 %v1107
        %v1201 = vpop.f32.mrf.mxu0
        %v1202 = vadd.f32 0.0, %v1201
        %v1203 = vpop.f32.mrf.mxu0
        %v1204 = vadd.f32 0.0, %v1203
        %1205 = vmatmul.bf16.gmra.mxu0 %v1110
        %v1206 = vpop.f32.mrf.mxu0
        %v1207 = vadd.f32 0.0, %v1206
        %v1208 = vpop.f32.mrf.mxu0
        %v1209 = vadd.f32 0.0, %v1208
        %1210 = vmatmul.bf16.gmra.mxu0 %v1113
        %v1211 = vpop.f32.mrf.mxu0
        %v1212 = vadd.f32 0.0, %v1211
        %v1213 = vpop.f32.mrf.mxu0
        %v1214 = vadd.f32 0.0, %v1213
        %1215 = vmatmul.bf16.gmra.mxu0 %v1116
        %v1216 = vpop.f32.mrf.mxu0
        %v1217 = vadd.f32 0.0, %v1216
        %v1218 = vpop.f32.mrf.mxu0
        %v1219 = vadd.f32 0.0, %v1218
        %1220 = vdwg.mxu0
        %v1222 = vsel %vm392, %v819, 0
        %v1225 = vsel %vm392, %v820, 0
        %v1228 = vsel %vm392, %v821, 0
        %v1231 = vsel %vm392, %v822, 0
        %v1234 = vsel %vm392, %v823, 0
        %v1237 = vsel %vm392, %v824, 0
        %v1240 = vsel %vm392, %v825, 0
        %v1243 = vsel %vm392, %v826, 0
        %v1246 = vsel %vm392, %v827, 0
        %v1249 = vsel %vm392, %v828, 0
        %v1252 = vsel %vm392, %v829, 0
        %v1255 = vsel %vm392, %v830, 0
        %v1258 = vsel %vm392, %v831, 0
        %v1261 = vsel %vm392, %v832, 0
        %v1264 = vsel %vm392, %v833, 0
        %v1267 = vsel %vm392, %v834, 0
        %v1270 = vsel %vm392, %v835, 0
        %v1273 = vsel %vm392, %v836, 0
        %v1276 = vsel %vm1118, %v632, 0
        %1278 = vmatpush.bf16.msra.mxu0 0
        %1279 = vmatpush.bf16.msra.mxu0 0
        %1280 = vmatpush.bf16.msra.mxu0 0
        %1281 = vmatpush.bf16.msra.mxu0 0
        %1282 = vmatpush.bf16.msra.mxu0 0
        %1283 = vmatpush.bf16.msra.mxu0 0
        %1284 = vmatpush.bf16.msra.mxu0 0
        %1285 = vmatpush.bf16.msra.mxu0 %v1276
        %1286 = vmatmul.bf16.gmra.mxu0 %v1222
        %v1287 = vpop.f32.mrf.mxu0
        %v1288 = vadd.f32 %v1132, %v1287
        %v1289 = vpop.f32.mrf.mxu0
        %v1290 = vadd.f32 %v1134, %v1289
        %1291 = vmatmul.bf16.gmra.mxu0 %v1225
        %v1292 = vpop.f32.mrf.mxu0
        %v1293 = vadd.f32 %v1137, %v1292
        %v1294 = vpop.f32.mrf.mxu0
        %v1295 = vadd.f32 %v1139, %v1294
        %1296 = vmatmul.bf16.gmra.mxu0 %v1228
        %v1297 = vpop.f32.mrf.mxu0
        %v1298 = vadd.f32 %v1142, %v1297
        %v1299 = vpop.f32.mrf.mxu0
        %v1300 = vadd.f32 %v1144, %v1299
        %1301 = vmatmul.bf16.gmra.mxu0 %v1231
        %v1302 = vpop.f32.mrf.mxu0
        %v1303 = vadd.f32 %v1147, %v1302
        %v1304 = vpop.f32.mrf.mxu0
        %v1305 = vadd.f32 %v1149, %v1304
        %1306 = vmatmul.bf16.gmra.mxu0 %v1234
        %v1307 = vpop.f32.mrf.mxu0
        %v1308 = vadd.f32 %v1152, %v1307
        %v1309 = vpop.f32.mrf.mxu0
        %v1310 = vadd.f32 %v1154, %v1309
        %1311 = vmatmul.bf16.gmra.mxu0 %v1237
        %v1312 = vpop.f32.mrf.mxu0
        %v1313 = vadd.f32 %v1157, %v1312
        %v1314 = vpop.f32.mrf.mxu0
        %v1315 = vadd.f32 %v1159, %v1314
        %1316 = vmatmul.bf16.gmra.mxu0 %v1240
        %v1317 = vpop.f32.mrf.mxu0
        %v1318 = vadd.f32 %v1162, %v1317
        %v1319 = vpop.f32.mrf.mxu0
        %v1320 = vadd.f32 %v1164, %v1319
        %1321 = vmatmul.bf16.gmra.mxu0 %v1243
        %v1322 = vpop.f32.mrf.mxu0
        %v1323 = vadd.f32 %v1167, %v1322
        %v1324 = vpop.f32.mrf.mxu0
        %v1325 = vadd.f32 %v1169, %v1324
        %1326 = vmatmul.bf16.gmra.mxu0 %v1246
        %v1327 = vpop.f32.mrf.mxu0
        %v1328 = vadd.f32 %v1172, %v1327
        %v1329 = vpop.f32.mrf.mxu0
        %v1330 = vadd.f32 %v1174, %v1329
        %1331 = vmatmul.bf16.gmra.mxu0 %v1249
        %v1332 = vpop.f32.mrf.mxu0
        %v1333 = vadd.f32 %v1177, %v1332
        %v1334 = vpop.f32.mrf.mxu0
        %v1335 = vadd.f32 %v1179, %v1334
        %1336 = vmatmul.bf16.gmra.mxu0 %v1252
        %v1337 = vpop.f32.mrf.mxu0
        %v1338 = vadd.f32 %v1182, %v1337
        %v1339 = vpop.f32.mrf.mxu0
        %v1340 = vadd.f32 %v1184, %v1339
        %1341 = vmatmul.bf16.gmra.mxu0 %v1255
        %v1342 = vpop.f32.mrf.mxu0
        %v1343 = vadd.f32 %v1187, %v1342
        %v1344 = vpop.f32.mrf.mxu0
        %v1345 = vadd.f32 %v1189, %v1344
        %1346 = vmatmul.bf16.gmra.mxu0 %v1258
        %v1347 = vpop.f32.mrf.mxu0
        %v1348 = vadd.f32 %v1192, %v1347
        %v1349 = vpop.f32.mrf.mxu0
        %v1350 = vadd.f32 %v1194, %v1349
        %1351 = vmatmul.bf16.gmra.mxu0 %v1261
        %v1352 = vpop.f32.mrf.mxu0
        %v1353 = vadd.f32 %v1197, %v1352
        %v1354 = vpop.f32.mrf.mxu0
        %v1355 = vadd.f32 %v1199, %v1354
        %1356 = vmatmul.bf16.gmra.mxu0 %v1264
        %v1357 = vpop.f32.mrf.mxu0
        %v1358 = vadd.f32 %v1202, %v1357
        %v1359 = vpop.f32.mrf.mxu0
        %v1360 = vadd.f32 %v1204, %v1359
        %1361 = vmatmul.bf16.gmra.mxu0 %v1267
        %v1362 = vpop.f32.mrf.mxu0
        %v1363 = vadd.f32 %v1207, %v1362
        %v1364 = vpop.f32.mrf.mxu0
        %v1365 = vadd.f32 %v1209, %v1364
        %1366 = vmatmul.bf16.gmra.mxu0 %v1270
        %v1367 = vpop.f32.mrf.mxu0
        %v1368 = vadd.f32 %v1212, %v1367
        %v1369 = vpop.f32.mrf.mxu0
        %v1370 = vadd.f32 %v1214, %v1369
        %1371 = vmatmul.bf16.gmra.mxu0 %v1273
        %v1372 = vpop.f32.mrf.mxu0
        %v1373 = vadd.f32 %v1217, %v1372
        %v1374 = vpop.f32.mrf.mxu0
        %v1375 = vadd.f32 %v1219, %v1374
        %1376 = vdwg.mxu0
        %v1378 = vsel %vm392, %v1000, 0
        %v1381 = vsel %vm392, %v1001, 0
        %v1384 = vsel %vm392, %v1002, 0
        %v1387 = vsel %vm392, %v1003, 0
        %v1390 = vsel %vm392, %v1004, 0
        %v1393 = vsel %vm392, %v1005, 0
        %v1396 = vsel %vm392, %v1006, 0
        %v1399 = vsel %vm392, %v1007, 0
        %v1402 = vsel %vm392, %v1008, 0
        %v1405 = vsel %vm392, %v1009, 0
        %v1408 = vsel %vm392, %v1010, 0
        %v1411 = vsel %vm392, %v1011, 0
        %v1414 = vsel %vm392, %v1012, 0
        %v1417 = vsel %vm392, %v1013, 0
        %v1420 = vsel %vm392, %v1014, 0
        %v1423 = vsel %vm392, %v1015, 0
        %v1426 = vsel %vm392, %v1016, 0
        %v1429 = vsel %vm392, %v1017, 0
        %v1432 = vsel %vm1118, %v633, 0
        %1434 = vmatpush.bf16.msra.mxu0 0
        %1435 = vmatpush.bf16.msra.mxu0 0
        %1436 = vmatpush.bf16.msra.mxu0 0
        %1437 = vmatpush.bf16.msra.mxu0 0
        %1438 = vmatpush.bf16.msra.mxu0 0
        %1439 = vmatpush.bf16.msra.mxu0 0
        %1440 = vmatpush.bf16.msra.mxu0 0
        %1441 = vmatpush.bf16.msra.mxu0 %v1432
        %1442 = vmatmul.bf16.gmra.mxu0 %v1378
        %v1443 = vpop.f32.mrf.mxu0
        %v1444 = vadd.f32 0.0, %v1443
        %v1445 = vpop.f32.mrf.mxu0
        %v1446 = vadd.f32 0.0, %v1445
        %1447 = vmatmul.bf16.gmra.mxu0 %v1381
        %v1448 = vpop.f32.mrf.mxu0
        %v1449 = vadd.f32 0.0, %v1448
        %v1450 = vpop.f32.mrf.mxu0
        %v1451 = vadd.f32 0.0, %v1450
        %1452 = vmatmul.bf16.gmra.mxu0 %v1384
        %v1453 = vpop.f32.mrf.mxu0
        %v1454 = vadd.f32 0.0, %v1453
        %v1455 = vpop.f32.mrf.mxu0
        %v1456 = vadd.f32 0.0, %v1455
        %1457 = vmatmul.bf16.gmra.mxu0 %v1387
        %v1458 = vpop.f32.mrf.mxu0
        %v1459 = vadd.f32 0.0, %v1458
        %v1460 = vpop.f32.mrf.mxu0
        %v1461 = vadd.f32 0.0, %v1460
        %1462 = vmatmul.bf16.gmra.mxu0 %v1390
        %v1463 = vpop.f32.mrf.mxu0
        %v1464 = vadd.f32 0.0, %v1463
        %v1465 = vpop.f32.mrf.mxu0
        %v1466 = vadd.f32 0.0, %v1465
        %1467 = vmatmul.bf16.gmra.mxu0 %v1393
        %v1468 = vpop.f32.mrf.mxu0
        %v1469 = vadd.f32 0.0, %v1468
        %v1470 = vpop.f32.mrf.mxu0
        %v1471 = vadd.f32 0.0, %v1470
        %1472 = vmatmul.bf16.gmra.mxu0 %v1396
        %v1473 = vpop.f32.mrf.mxu0
        %v1474 = vadd.f32 0.0, %v1473
        %v1475 = vpop.f32.mrf.mxu0
        %v1476 = vadd.f32 0.0, %v1475
        %1477 = vmatmul.bf16.gmra.mxu0 %v1399
        %v1478 = vpop.f32.mrf.mxu0
        %v1479 = vadd.f32 0.0, %v1478
        %v1480 = vpop.f32.mrf.mxu0
        %v1481 = vadd.f32 0.0, %v1480
        %1482 = vmatmul.bf16.gmra.mxu0 %v1402
        %v1483 = vpop.f32.mrf.mxu0
        %v1484 = vadd.f32 0.0, %v1483
        %v1485 = vpop.f32.mrf.mxu0
        %v1486 = vadd.f32 0.0, %v1485
        %1487 = vmatmul.bf16.gmra.mxu0 %v1405
        %v1488 = vpop.f32.mrf.mxu0
        %v1489 = vadd.f32 0.0, %v1488
        %v1490 = vpop.f32.mrf.mxu0
        %v1491 = vadd.f32 0.0, %v1490
        %1492 = vmatmul.bf16.gmra.mxu0 %v1408
        %v1493 = vpop.f32.mrf.mxu0
        %v1494 = vadd.f32 0.0, %v1493
        %v1495 = vpop.f32.mrf.mxu0
        %v1496 = vadd.f32 0.0, %v1495
        %1497 = vmatmul.bf16.gmra.mxu0 %v1411
        %v1498 = vpop.f32.mrf.mxu0
        %v1499 = vadd.f32 0.0, %v1498
        %v1500 = vpop.f32.mrf.mxu0
        %v1501 = vadd.f32 0.0, %v1500
        %1502 = vmatmul.bf16.gmra.mxu0 %v1414
        %v1503 = vpop.f32.mrf.mxu0
        %v1504 = vadd.f32 0.0, %v1503
        %v1505 = vpop.f32.mrf.mxu0
        %v1506 = vadd.f32 0.0, %v1505
        %1507 = vmatmul.bf16.gmra.mxu0 %v1417
        %v1508 = vpop.f32.mrf.mxu0
        %v1509 = vadd.f32 0.0, %v1508
        %v1510 = vpop.f32.mrf.mxu0
        %v1511 = vadd.f32 0.0, %v1510
        %1512 = vmatmul.bf16.gmra.mxu0 %v1420
        %v1513 = vpop.f32.mrf.mxu0
        %v1514 = vadd.f32 0.0, %v1513
        %v1515 = vpop.f32.mrf.mxu0
        %v1516 = vadd.f32 0.0, %v1515
        %1517 = vmatmul.bf16.gmra.mxu0 %v1423
        %v1518 = vpop.f32.mrf.mxu0
        %v1519 = vadd.f32 0.0, %v1518
        %v1520 = vpop.f32.mrf.mxu0
        %v1521 = vadd.f32 0.0, %v1520
        %1522 = vmatmul.bf16.gmra.mxu0 %v1426
        %v1523 = vpop.f32.mrf.mxu0
        %v1524 = vadd.f32 0.0, %v1523
        %v1525 = vpop.f32.mrf.mxu0
        %v1526 = vadd.f32 0.0, %v1525
        %1527 = vmatmul.bf16.gmra.mxu0 %v1429
        %v1528 = vpop.f32.mrf.mxu0
        %v1529 = vadd.f32 0.0, %v1528
        %v1530 = vpop.f32.mrf.mxu0
        %v1531 = vadd.f32 0.0, %v1530
        %1532 = vdwg.mxu0
        %v1533 = vadd.f32 %v1288, %v1444
        %v1534 = vadd.f32 %v1290, %v1446
        %v1535 = vadd.f32 %v1293, %v1449
        %v1536 = vadd.f32 %v1295, %v1451
        %v1537 = vadd.f32 %v1298, %v1454
        %v1538 = vadd.f32 %v1300, %v1456
        %v1539 = vadd.f32 %v1303, %v1459
        %v1540 = vadd.f32 %v1305, %v1461
        %v1541 = vadd.f32 %v1308, %v1464
        %v1542 = vadd.f32 %v1310, %v1466
        %v1543 = vadd.f32 %v1313, %v1469
        %v1544 = vadd.f32 %v1315, %v1471
        %v1545 = vadd.f32 %v1318, %v1474
        %v1546 = vadd.f32 %v1320, %v1476
        %v1547 = vadd.f32 %v1323, %v1479
        %v1548 = vadd.f32 %v1325, %v1481
        %v1549 = vadd.f32 %v1328, %v1484
        %v1550 = vadd.f32 %v1330, %v1486
        %v1551 = vadd.f32 %v1333, %v1489
        %v1552 = vadd.f32 %v1335, %v1491
        %v1553 = vadd.f32 %v1338, %v1494
        %v1554 = vadd.f32 %v1340, %v1496
        %v1555 = vadd.f32 %v1343, %v1499
        %v1556 = vadd.f32 %v1345, %v1501
        %v1557 = vadd.f32 %v1348, %v1504
        %v1558 = vadd.f32 %v1350, %v1506
        %v1559 = vadd.f32 %v1353, %v1509
        %v1560 = vadd.f32 %v1355, %v1511
        %v1561 = vadd.f32 %v1358, %v1514
        %v1562 = vadd.f32 %v1360, %v1516
        %v1563 = vadd.f32 %v1363, %v1519
        %v1564 = vadd.f32 %v1365, %v1521
        %v1565 = vadd.f32 %v1368, %v1524
        %v1566 = vadd.f32 %v1370, %v1526
        %v1567 = vadd.f32 %v1373, %v1529
        %v1568 = vadd.f32 %v1375, %v1531
        %v1570 = vunpack.c.l.b16 %v633
        %v1571 = vpack.c.b16 %v1570, %v1570
        %v1572 = vrot.slane %v1571, 2
        %v1574 = vsel %vm392, %v1028, 0
        %v1577 = vsel %vm1118, %v1572, 0
        %1579 = vmatpush.bf16.msra.mxu0 0
        %1580 = vmatpush.bf16.msra.mxu0 0
        %1581 = vmatpush.bf16.msra.mxu0 0
        %1582 = vmatpush.bf16.msra.mxu0 0
        %1583 = vmatpush.bf16.msra.mxu0 0
        %1584 = vmatpush.bf16.msra.mxu0 0
        %1585 = vmatpush.bf16.msra.mxu0 0
        %1586 = vmatpush.bf16.msra.mxu0 %v1577
        %1587 = vmatmul.bf16.gmra.mxu0 %v1225
        %v1588 = vpop.f32.mrf.mxu0
        %v1589 = vadd.f32 0.0, %v1588
        %v1590 = vpop.f32.mrf.mxu0
        %v1591 = vadd.f32 0.0, %v1590
        %1592 = vmatmul.bf16.gmra.mxu0 %v1228
        %v1593 = vpop.f32.mrf.mxu0
        %v1594 = vadd.f32 0.0, %v1593
        %v1595 = vpop.f32.mrf.mxu0
        %v1596 = vadd.f32 0.0, %v1595
        %1597 = vmatmul.bf16.gmra.mxu0 %v1231
        %v1598 = vpop.f32.mrf.mxu0
        %v1599 = vadd.f32 0.0, %v1598
        %v1600 = vpop.f32.mrf.mxu0
        %v1601 = vadd.f32 0.0, %v1600
        %1602 = vmatmul.bf16.gmra.mxu0 %v1234
        %v1603 = vpop.f32.mrf.mxu0
        %v1604 = vadd.f32 0.0, %v1603
        %v1605 = vpop.f32.mrf.mxu0
        %v1606 = vadd.f32 0.0, %v1605
        %1607 = vmatmul.bf16.gmra.mxu0 %v1237
        %v1608 = vpop.f32.mrf.mxu0
        %v1609 = vadd.f32 0.0, %v1608
        %v1610 = vpop.f32.mrf.mxu0
        %v1611 = vadd.f32 0.0, %v1610
        %1612 = vmatmul.bf16.gmra.mxu0 %v1240
        %v1613 = vpop.f32.mrf.mxu0
        %v1614 = vadd.f32 0.0, %v1613
        %v1615 = vpop.f32.mrf.mxu0
        %v1616 = vadd.f32 0.0, %v1615
        %1617 = vmatmul.bf16.gmra.mxu0 %v1243
        %v1618 = vpop.f32.mrf.mxu0
        %v1619 = vadd.f32 0.0, %v1618
        %v1620 = vpop.f32.mrf.mxu0
        %v1621 = vadd.f32 0.0, %v1620
        %1622 = vmatmul.bf16.gmra.mxu0 %v1246
        %v1623 = vpop.f32.mrf.mxu0
        %v1624 = vadd.f32 0.0, %v1623
        %v1625 = vpop.f32.mrf.mxu0
        %v1626 = vadd.f32 0.0, %v1625
        %1627 = vmatmul.bf16.gmra.mxu0 %v1249
        %v1628 = vpop.f32.mrf.mxu0
        %v1629 = vadd.f32 0.0, %v1628
        %v1630 = vpop.f32.mrf.mxu0
        %v1631 = vadd.f32 0.0, %v1630
        %1632 = vmatmul.bf16.gmra.mxu0 %v1252
        %v1633 = vpop.f32.mrf.mxu0
        %v1634 = vadd.f32 0.0, %v1633
        %v1635 = vpop.f32.mrf.mxu0
        %v1636 = vadd.f32 0.0, %v1635
        %1637 = vmatmul.bf16.gmra.mxu0 %v1255
        %v1638 = vpop.f32.mrf.mxu0
        %v1639 = vadd.f32 0.0, %v1638
        %v1640 = vpop.f32.mrf.mxu0
        %v1641 = vadd.f32 0.0, %v1640
        %1642 = vmatmul.bf16.gmra.mxu0 %v1258
        %v1643 = vpop.f32.mrf.mxu0
        %v1644 = vadd.f32 0.0, %v1643
        %v1645 = vpop.f32.mrf.mxu0
        %v1646 = vadd.f32 0.0, %v1645
        %1647 = vmatmul.bf16.gmra.mxu0 %v1261
        %v1648 = vpop.f32.mrf.mxu0
        %v1649 = vadd.f32 0.0, %v1648
        %v1650 = vpop.f32.mrf.mxu0
        %v1651 = vadd.f32 0.0, %v1650
        %1652 = vmatmul.bf16.gmra.mxu0 %v1264
        %v1653 = vpop.f32.mrf.mxu0
        %v1654 = vadd.f32 0.0, %v1653
        %v1655 = vpop.f32.mrf.mxu0
        %v1656 = vadd.f32 0.0, %v1655
        %1657 = vmatmul.bf16.gmra.mxu0 %v1267
        %v1658 = vpop.f32.mrf.mxu0
        %v1659 = vadd.f32 0.0, %v1658
        %v1660 = vpop.f32.mrf.mxu0
        %v1661 = vadd.f32 0.0, %v1660
        %1662 = vmatmul.bf16.gmra.mxu0 %v1270
        %v1663 = vpop.f32.mrf.mxu0
        %v1664 = vadd.f32 0.0, %v1663
        %v1665 = vpop.f32.mrf.mxu0
        %v1666 = vadd.f32 0.0, %v1665
        %1667 = vmatmul.bf16.gmra.mxu0 %v1273
        %v1668 = vpop.f32.mrf.mxu0
        %v1669 = vadd.f32 0.0, %v1668
        %v1670 = vpop.f32.mrf.mxu0
        %v1671 = vadd.f32 0.0, %v1670
        %1672 = vmatmul.bf16.gmra.mxu0 %v1574
        %v1673 = vpop.f32.mrf.mxu0
        %v1674 = vadd.f32 0.0, %v1673
        %v1675 = vpop.f32.mrf.mxu0
        %v1676 = vadd.f32 0.0, %v1675
        %1677 = vdwg.mxu0
        %v1678 = vadd.f32 %v1533, %v1589
        %v1679 = vadd.f32 %v1534, %v1591
        %v1680 = vadd.f32 %v1535, %v1594
        %v1681 = vadd.f32 %v1536, %v1596
        %v1682 = vadd.f32 %v1537, %v1599
        %v1683 = vadd.f32 %v1538, %v1601
        %v1684 = vadd.f32 %v1539, %v1604
        %v1685 = vadd.f32 %v1540, %v1606
        %v1686 = vadd.f32 %v1541, %v1609
        %v1687 = vadd.f32 %v1542, %v1611
        %v1688 = vadd.f32 %v1543, %v1614
        %v1689 = vadd.f32 %v1544, %v1616
        %v1690 = vadd.f32 %v1545, %v1619
        %v1691 = vadd.f32 %v1546, %v1621
        %v1692 = vadd.f32 %v1547, %v1624
        %v1693 = vadd.f32 %v1548, %v1626
        %v1694 = vadd.f32 %v1549, %v1629
        %v1695 = vadd.f32 %v1550, %v1631
        %v1696 = vadd.f32 %v1551, %v1634
        %v1697 = vadd.f32 %v1552, %v1636
        %v1698 = vadd.f32 %v1553, %v1639
        %v1699 = vadd.f32 %v1554, %v1641
        %v1700 = vadd.f32 %v1555, %v1644
        %v1701 = vadd.f32 %v1556, %v1646
        %v1702 = vadd.f32 %v1557, %v1649
        %v1703 = vadd.f32 %v1558, %v1651
        %v1704 = vadd.f32 %v1559, %v1654
        %v1705 = vadd.f32 %v1560, %v1656
        %v1706 = vadd.f32 %v1561, %v1659
        %v1707 = vadd.f32 %v1562, %v1661
        %v1708 = vadd.f32 %v1563, %v1664
        %v1709 = vadd.f32 %v1564, %v1666
        %v1710 = vadd.f32 %v1565, %v1669
        %v1711 = vadd.f32 %v1566, %v1671
        %v1712 = vadd.f32 %v1567, %v1674
        %v1713 = vadd.f32 %v1568, %v1676
        %v1715 = vsel %vm392, %v1029, 0
        %v1718 = vsel %vm1118, %v634, 0
        %1720 = vmatpush.bf16.msra.mxu0 0
        %1721 = vmatpush.bf16.msra.mxu0 0
        %1722 = vmatpush.bf16.msra.mxu0 0
        %1723 = vmatpush.bf16.msra.mxu0 0
        %1724 = vmatpush.bf16.msra.mxu0 0
        %1725 = vmatpush.bf16.msra.mxu0 0
        %1726 = vmatpush.bf16.msra.mxu0 0
        %1727 = vmatpush.bf16.msra.mxu0 %v1718
        %1728 = vmatmul.bf16.gmra.mxu0 %v1068
        %v1729 = vpop.f32.mrf.mxu0
        %v1730 = vadd.f32 0.0, %v1729
        %v1731 = vpop.f32.mrf.mxu0
        %v1732 = vadd.f32 0.0, %v1731
        %1733 = vmatmul.bf16.gmra.mxu0 %v1071
        %v1734 = vpop.f32.mrf.mxu0
        %v1735 = vadd.f32 0.0, %v1734
        %v1736 = vpop.f32.mrf.mxu0
        %v1737 = vadd.f32 0.0, %v1736
        %1738 = vmatmul.bf16.gmra.mxu0 %v1074
        %v1739 = vpop.f32.mrf.mxu0
        %v1740 = vadd.f32 0.0, %v1739
        %v1741 = vpop.f32.mrf.mxu0
        %v1742 = vadd.f32 0.0, %v1741
        %1743 = vmatmul.bf16.gmra.mxu0 %v1077
        %v1744 = vpop.f32.mrf.mxu0
        %v1745 = vadd.f32 0.0, %v1744
        %v1746 = vpop.f32.mrf.mxu0
        %v1747 = vadd.f32 0.0, %v1746
        %1748 = vmatmul.bf16.gmra.mxu0 %v1080
        %v1749 = vpop.f32.mrf.mxu0
        %v1750 = vadd.f32 0.0, %v1749
        %v1751 = vpop.f32.mrf.mxu0
        %v1752 = vadd.f32 0.0, %v1751
        %1753 = vmatmul.bf16.gmra.mxu0 %v1083
        %v1754 = vpop.f32.mrf.mxu0
        %v1755 = vadd.f32 0.0, %v1754
        %v1756 = vpop.f32.mrf.mxu0
        %v1757 = vadd.f32 0.0, %v1756
        %1758 = vmatmul.bf16.gmra.mxu0 %v1086
        %v1759 = vpop.f32.mrf.mxu0
        %v1760 = vadd.f32 0.0, %v1759
        %v1761 = vpop.f32.mrf.mxu0
        %v1762 = vadd.f32 0.0, %v1761
        %1763 = vmatmul.bf16.gmra.mxu0 %v1089
        %v1764 = vpop.f32.mrf.mxu0
        %v1765 = vadd.f32 0.0, %v1764
        %v1766 = vpop.f32.mrf.mxu0
        %v1767 = vadd.f32 0.0, %v1766
        %1768 = vmatmul.bf16.gmra.mxu0 %v1092
        %v1769 = vpop.f32.mrf.mxu0
        %v1770 = vadd.f32 0.0, %v1769
        %v1771 = vpop.f32.mrf.mxu0
        %v1772 = vadd.f32 0.0, %v1771
        %1773 = vmatmul.bf16.gmra.mxu0 %v1095
        %v1774 = vpop.f32.mrf.mxu0
        %v1775 = vadd.f32 0.0, %v1774
        %v1776 = vpop.f32.mrf.mxu0
        %v1777 = vadd.f32 0.0, %v1776
        %1778 = vmatmul.bf16.gmra.mxu0 %v1098
        %v1779 = vpop.f32.mrf.mxu0
        %v1780 = vadd.f32 0.0, %v1779
        %v1781 = vpop.f32.mrf.mxu0
        %v1782 = vadd.f32 0.0, %v1781
        %1783 = vmatmul.bf16.gmra.mxu0 %v1101
        %v1784 = vpop.f32.mrf.mxu0
        %v1785 = vadd.f32 0.0, %v1784
        %v1786 = vpop.f32.mrf.mxu0
        %v1787 = vadd.f32 0.0, %v1786
        %1788 = vmatmul.bf16.gmra.mxu0 %v1104
        %v1789 = vpop.f32.mrf.mxu0
        %v1790 = vadd.f32 0.0, %v1789
        %v1791 = vpop.f32.mrf.mxu0
        %v1792 = vadd.f32 0.0, %v1791
        %1793 = vmatmul.bf16.gmra.mxu0 %v1107
        %v1794 = vpop.f32.mrf.mxu0
        %v1795 = vadd.f32 0.0, %v1794
        %v1796 = vpop.f32.mrf.mxu0
        %v1797 = vadd.f32 0.0, %v1796
        %1798 = vmatmul.bf16.gmra.mxu0 %v1110
        %v1799 = vpop.f32.mrf.mxu0
        %v1800 = vadd.f32 0.0, %v1799
        %v1801 = vpop.f32.mrf.mxu0
        %v1802 = vadd.f32 0.0, %v1801
        %1803 = vmatmul.bf16.gmra.mxu0 %v1113
        %v1804 = vpop.f32.mrf.mxu0
        %v1805 = vadd.f32 0.0, %v1804
        %v1806 = vpop.f32.mrf.mxu0
        %v1807 = vadd.f32 0.0, %v1806
        %1808 = vmatmul.bf16.gmra.mxu0 %v1116
        %v1809 = vpop.f32.mrf.mxu0
        %v1810 = vadd.f32 0.0, %v1809
        %v1811 = vpop.f32.mrf.mxu0
        %v1812 = vadd.f32 0.0, %v1811
        %1813 = vmatmul.bf16.gmra.mxu0 %v1715
        %v1814 = vpop.f32.mrf.mxu0
        %v1815 = vadd.f32 0.0, %v1814
        %v1816 = vpop.f32.mrf.mxu0
        %v1817 = vadd.f32 0.0, %v1816
        %1818 = vdwg.mxu0
        %v1819 = vadd.f32 %v1678, %v1730
        %v1820 = vadd.f32 %v1679, %v1732
        %v1821 = vadd.f32 %v1680, %v1735
        %v1822 = vadd.f32 %v1681, %v1737
        %v1823 = vadd.f32 %v1682, %v1740
        %v1824 = vadd.f32 %v1683, %v1742
        %v1825 = vadd.f32 %v1684, %v1745
        %v1826 = vadd.f32 %v1685, %v1747
        %v1827 = vadd.f32 %v1686, %v1750
        %v1828 = vadd.f32 %v1687, %v1752
        %v1829 = vadd.f32 %v1688, %v1755
        %v1830 = vadd.f32 %v1689, %v1757
        %v1831 = vadd.f32 %v1690, %v1760
        %v1832 = vadd.f32 %v1691, %v1762
        %v1833 = vadd.f32 %v1692, %v1765
        %v1834 = vadd.f32 %v1693, %v1767
        %v1835 = vadd.f32 %v1694, %v1770
        %v1836 = vadd.f32 %v1695, %v1772
        %v1837 = vadd.f32 %v1696, %v1775
        %v1838 = vadd.f32 %v1697, %v1777
        %v1839 = vadd.f32 %v1698, %v1780
        %v1840 = vadd.f32 %v1699, %v1782
        %v1841 = vadd.f32 %v1700, %v1785
        %v1842 = vadd.f32 %v1701, %v1787
        %v1843 = vadd.f32 %v1702, %v1790
        %v1844 = vadd.f32 %v1703, %v1792
        %v1845 = vadd.f32 %v1704, %v1795
        %v1846 = vadd.f32 %v1705, %v1797
        %v1847 = vadd.f32 %v1706, %v1800
        %v1848 = vadd.f32 %v1707, %v1802
        %v1849 = vadd.f32 %v1708, %v1805
        %v1850 = vadd.f32 %v1709, %v1807
        %v1851 = vadd.f32 %v1710, %v1810
        %v1852 = vadd.f32 %v1711, %v1812
        %v1853 = vadd.f32 %v1712, %v1815
        %v1854 = vadd.f32 %v1713, %v1817
        %v1856 = vunpack.c.l.b16 %v634
        %v1857 = vpack.c.b16 %v1856, %v1856
        %v1858 = vrot.slane %v1857, 2
        %v1860 = vsel %vm392, %v1038, 0
        %v1863 = vsel %vm1118, %v1858, 0
        %1865 = vmatpush.bf16.msra.mxu0 0
        %1866 = vmatpush.bf16.msra.mxu0 0
        %1867 = vmatpush.bf16.msra.mxu0 0
        %1868 = vmatpush.bf16.msra.mxu0 0
        %1869 = vmatpush.bf16.msra.mxu0 0
        %1870 = vmatpush.bf16.msra.mxu0 0
        %1871 = vmatpush.bf16.msra.mxu0 0
        %1872 = vmatpush.bf16.msra.mxu0 %v1863
        %1873 = vmatmul.bf16.gmra.mxu0 %v1381
        %v1874 = vpop.f32.mrf.mxu0
        %v1875 = vadd.f32 0.0, %v1874
        %v1876 = vpop.f32.mrf.mxu0
        %v1877 = vadd.f32 0.0, %v1876
        %1878 = vmatmul.bf16.gmra.mxu0 %v1384
        %v1879 = vpop.f32.mrf.mxu0
        %v1880 = vadd.f32 0.0, %v1879
        %v1881 = vpop.f32.mrf.mxu0
        %v1882 = vadd.f32 0.0, %v1881
        %1883 = vmatmul.bf16.gmra.mxu0 %v1387
        %v1884 = vpop.f32.mrf.mxu0
        %v1885 = vadd.f32 0.0, %v1884
        %v1886 = vpop.f32.mrf.mxu0
        %v1887 = vadd.f32 0.0, %v1886
        %1888 = vmatmul.bf16.gmra.mxu0 %v1390
        %v1889 = vpop.f32.mrf.mxu0
        %v1890 = vadd.f32 0.0, %v1889
        %v1891 = vpop.f32.mrf.mxu0
        %v1892 = vadd.f32 0.0, %v1891
        %1893 = vmatmul.bf16.gmra.mxu0 %v1393
        %v1894 = vpop.f32.mrf.mxu0
        %v1895 = vadd.f32 0.0, %v1894
        %v1896 = vpop.f32.mrf.mxu0
        %v1897 = vadd.f32 0.0, %v1896
        %1898 = vmatmul.bf16.gmra.mxu0 %v1396
        %v1899 = vpop.f32.mrf.mxu0
        %v1900 = vadd.f32 0.0, %v1899
        %v1901 = vpop.f32.mrf.mxu0
        %v1902 = vadd.f32 0.0, %v1901
        %1903 = vmatmul.bf16.gmra.mxu0 %v1399
        %v1904 = vpop.f32.mrf.mxu0
        %v1905 = vadd.f32 0.0, %v1904
        %v1906 = vpop.f32.mrf.mxu0
        %v1907 = vadd.f32 0.0, %v1906
        %1908 = vmatmul.bf16.gmra.mxu0 %v1402
        %v1909 = vpop.f32.mrf.mxu0
        %v1910 = vadd.f32 0.0, %v1909
        %v1911 = vpop.f32.mrf.mxu0
        %v1912 = vadd.f32 0.0, %v1911
        %1913 = vmatmul.bf16.gmra.mxu0 %v1405
        %v1914 = vpop.f32.mrf.mxu0
        %v1915 = vadd.f32 0.0, %v1914
        %v1916 = vpop.f32.mrf.mxu0
        %v1917 = vadd.f32 0.0, %v1916
        %1918 = vmatmul.bf16.gmra.mxu0 %v1408
        %v1919 = vpop.f32.mrf.mxu0
        %v1920 = vadd.f32 0.0, %v1919
        %v1921 = vpop.f32.mrf.mxu0
        %v1922 = vadd.f32 0.0, %v1921
        %1923 = vmatmul.bf16.gmra.mxu0 %v1411
        %v1924 = vpop.f32.mrf.mxu0
        %v1925 = vadd.f32 0.0, %v1924
        %v1926 = vpop.f32.mrf.mxu0
        %v1927 = vadd.f32 0.0, %v1926
        %1928 = vmatmul.bf16.gmra.mxu0 %v1414
        %v1929 = vpop.f32.mrf.mxu0
        %v1930 = vadd.f32 0.0, %v1929
        %v1931 = vpop.f32.mrf.mxu0
        %v1932 = vadd.f32 0.0, %v1931
        %1933 = vmatmul.bf16.gmra.mxu0 %v1417
        %v1934 = vpop.f32.mrf.mxu0
        %v1935 = vadd.f32 0.0, %v1934
        %v1936 = vpop.f32.mrf.mxu0
        %v1937 = vadd.f32 0.0, %v1936
        %1938 = vmatmul.bf16.gmra.mxu0 %v1420
        %v1939 = vpop.f32.mrf.mxu0
        %v1940 = vadd.f32 0.0, %v1939
        %v1941 = vpop.f32.mrf.mxu0
        %v1942 = vadd.f32 0.0, %v1941
        %1943 = vmatmul.bf16.gmra.mxu0 %v1423
        %v1944 = vpop.f32.mrf.mxu0
        %v1945 = vadd.f32 0.0, %v1944
        %v1946 = vpop.f32.mrf.mxu0
        %v1947 = vadd.f32 0.0, %v1946
        %1948 = vmatmul.bf16.gmra.mxu0 %v1426
        %v1949 = vpop.f32.mrf.mxu0
        %v1950 = vadd.f32 0.0, %v1949
        %v1951 = vpop.f32.mrf.mxu0
        %v1952 = vadd.f32 0.0, %v1951
        %1953 = vmatmul.bf16.gmra.mxu0 %v1429
        %v1954 = vpop.f32.mrf.mxu0
        %v1955 = vadd.f32 0.0, %v1954
        %v1956 = vpop.f32.mrf.mxu0
        %v1957 = vadd.f32 0.0, %v1956
        %1958 = vmatmul.bf16.gmra.mxu0 %v1860
        %v1959 = vpop.f32.mrf.mxu0
        %v1960 = vadd.f32 0.0, %v1959
        %v1961 = vpop.f32.mrf.mxu0
        %v1962 = vadd.f32 0.0, %v1961
        %1963 = vdwg.mxu0
        %v1964 = vadd.f32 %v1819, %v1875
        %v1965 = vadd.f32 %v1820, %v1877
        %v1966 = vadd.f32 %v1821, %v1880
        %v1967 = vadd.f32 %v1822, %v1882
        %v1968 = vadd.f32 %v1823, %v1885
        %v1969 = vadd.f32 %v1824, %v1887
        %v1970 = vadd.f32 %v1825, %v1890
        %v1971 = vadd.f32 %v1826, %v1892
        %v1972 = vadd.f32 %v1827, %v1895
        %v1973 = vadd.f32 %v1828, %v1897
        %v1974 = vadd.f32 %v1829, %v1900
        %v1975 = vadd.f32 %v1830, %v1902
        %v1976 = vadd.f32 %v1831, %v1905
        %v1977 = vadd.f32 %v1832, %v1907
        %v1978 = vadd.f32 %v1833, %v1910
        %v1979 = vadd.f32 %v1834, %v1912
        %v1980 = vadd.f32 %v1835, %v1915
        %v1981 = vadd.f32 %v1836, %v1917
        %v1982 = vadd.f32 %v1837, %v1920
        %v1983 = vadd.f32 %v1838, %v1922
        %v1984 = vadd.f32 %v1839, %v1925
        %v1985 = vadd.f32 %v1840, %v1927
        %v1986 = vadd.f32 %v1841, %v1930
        %v1987 = vadd.f32 %v1842, %v1932
        %v1988 = vadd.f32 %v1843, %v1935
        %v1989 = vadd.f32 %v1844, %v1937
        %v1990 = vadd.f32 %v1845, %v1940
        %v1991 = vadd.f32 %v1846, %v1942
        %v1992 = vadd.f32 %v1847, %v1945
        %v1993 = vadd.f32 %v1848, %v1947
        %v1994 = vadd.f32 %v1849, %v1950
        %v1995 = vadd.f32 %v1850, %v1952
        %v1996 = vadd.f32 %v1851, %v1955
        %v1997 = vadd.f32 %v1852, %v1957
        %v1998 = vadd.f32 %v1853, %v1960
        %v1999 = vadd.f32 %v1854, %v1962
        %v2001 = vsel %vm392, %v1049, 0
        %v2004 = vsel %vm1118, %v635, 0
        %2006 = vmatpush.bf16.msra.mxu0 0
        %2007 = vmatpush.bf16.msra.mxu0 0
        %2008 = vmatpush.bf16.msra.mxu0 0
        %2009 = vmatpush.bf16.msra.mxu0 0
        %2010 = vmatpush.bf16.msra.mxu0 0
        %2011 = vmatpush.bf16.msra.mxu0 0
        %2012 = vmatpush.bf16.msra.mxu0 0
        %2013 = vmatpush.bf16.msra.mxu0 %v2004
        %2014 = vmatmul.bf16.gmra.mxu0 %v1228
        %v2015 = vpop.f32.mrf.mxu0
        %v2016 = vadd.f32 0.0, %v2015
        %v2017 = vpop.f32.mrf.mxu0
        %v2018 = vadd.f32 0.0, %v2017
        %2019 = vmatmul.bf16.gmra.mxu0 %v1231
        %v2020 = vpop.f32.mrf.mxu0
        %v2021 = vadd.f32 0.0, %v2020
        %v2022 = vpop.f32.mrf.mxu0
        %v2023 = vadd.f32 0.0, %v2022
        %2024 = vmatmul.bf16.gmra.mxu0 %v1234
        %v2025 = vpop.f32.mrf.mxu0
        %v2026 = vadd.f32 0.0, %v2025
        %v2027 = vpop.f32.mrf.mxu0
        %v2028 = vadd.f32 0.0, %v2027
        %2029 = vmatmul.bf16.gmra.mxu0 %v1237
        %v2030 = vpop.f32.mrf.mxu0
        %v2031 = vadd.f32 0.0, %v2030
        %v2032 = vpop.f32.mrf.mxu0
        %v2033 = vadd.f32 0.0, %v2032
        %2034 = vmatmul.bf16.gmra.mxu0 %v1240
        %v2035 = vpop.f32.mrf.mxu0
        %v2036 = vadd.f32 0.0, %v2035
        %v2037 = vpop.f32.mrf.mxu0
        %v2038 = vadd.f32 0.0, %v2037
        %2039 = vmatmul.bf16.gmra.mxu0 %v1243
        %v2040 = vpop.f32.mrf.mxu0
        %v2041 = vadd.f32 0.0, %v2040
        %v2042 = vpop.f32.mrf.mxu0
        %v2043 = vadd.f32 0.0, %v2042
        %2044 = vmatmul.bf16.gmra.mxu0 %v1246
        %v2045 = vpop.f32.mrf.mxu0
        %v2046 = vadd.f32 0.0, %v2045
        %v2047 = vpop.f32.mrf.mxu0
        %v2048 = vadd.f32 0.0, %v2047
        %2049 = vmatmul.bf16.gmra.mxu0 %v1249
        %v2050 = vpop.f32.mrf.mxu0
        %v2051 = vadd.f32 0.0, %v2050
        %v2052 = vpop.f32.mrf.mxu0
        %v2053 = vadd.f32 0.0, %v2052
        %2054 = vmatmul.bf16.gmra.mxu0 %v1252
        %v2055 = vpop.f32.mrf.mxu0
        %v2056 = vadd.f32 0.0, %v2055
        %v2057 = vpop.f32.mrf.mxu0
        %v2058 = vadd.f32 0.0, %v2057
        %2059 = vmatmul.bf16.gmra.mxu0 %v1255
        %v2060 = vpop.f32.mrf.mxu0
        %v2061 = vadd.f32 0.0, %v2060
        %v2062 = vpop.f32.mrf.mxu0
        %v2063 = vadd.f32 0.0, %v2062
        %2064 = vmatmul.bf16.gmra.mxu0 %v1258
        %v2065 = vpop.f32.mrf.mxu0
        %v2066 = vadd.f32 0.0, %v2065
        %v2067 = vpop.f32.mrf.mxu0
        %v2068 = vadd.f32 0.0, %v2067
        %2069 = vmatmul.bf16.gmra.mxu0 %v1261
        %v2070 = vpop.f32.mrf.mxu0
        %v2071 = vadd.f32 0.0, %v2070
        %v2072 = vpop.f32.mrf.mxu0
        %v2073 = vadd.f32 0.0, %v2072
        %2074 = vmatmul.bf16.gmra.mxu0 %v1264
        %v2075 = vpop.f32.mrf.mxu0
        %v2076 = vadd.f32 0.0, %v2075
        %v2077 = vpop.f32.mrf.mxu0
        %v2078 = vadd.f32 0.0, %v2077
        %2079 = vmatmul.bf16.gmra.mxu0 %v1267
        %v2080 = vpop.f32.mrf.mxu0
        %v2081 = vadd.f32 0.0, %v2080
        %v2082 = vpop.f32.mrf.mxu0
        %v2083 = vadd.f32 0.0, %v2082
        %2084 = vmatmul.bf16.gmra.mxu0 %v1270
        %v2085 = vpop.f32.mrf.mxu0
        %v2086 = vadd.f32 0.0, %v2085
        %v2087 = vpop.f32.mrf.mxu0
        %v2088 = vadd.f32 0.0, %v2087
        %2089 = vmatmul.bf16.gmra.mxu0 %v1273
        %v2090 = vpop.f32.mrf.mxu0
        %v2091 = vadd.f32 0.0, %v2090
        %v2092 = vpop.f32.mrf.mxu0
        %v2093 = vadd.f32 0.0, %v2092
        %2094 = vmatmul.bf16.gmra.mxu0 %v1574
        %v2095 = vpop.f32.mrf.mxu0
        %v2096 = vadd.f32 0.0, %v2095
        %v2097 = vpop.f32.mrf.mxu0
        %v2098 = vadd.f32 0.0, %v2097
        %2099 = vmatmul.bf16.gmra.mxu0 %v2001
        %v2100 = vpop.f32.mrf.mxu0
        %v2101 = vadd.f32 0.0, %v2100
        %v2102 = vpop.f32.mrf.mxu0
        %v2103 = vadd.f32 0.0, %v2102
        %2104 = vdwg.mxu0
        %v2105 = vadd.f32 %v1964, %v2016
        %v2106 = vadd.f32 %v1965, %v2018
        %v2107 = vadd.f32 %v1966, %v2021
        %v2108 = vadd.f32 %v1967, %v2023
        %v2109 = vadd.f32 %v1968, %v2026
        %v2110 = vadd.f32 %v1969, %v2028
        %v2111 = vadd.f32 %v1970, %v2031
        %v2112 = vadd.f32 %v1971, %v2033
        %v2113 = vadd.f32 %v1972, %v2036
        %v2114 = vadd.f32 %v1973, %v2038
        %v2115 = vadd.f32 %v1974, %v2041
        %v2116 = vadd.f32 %v1975, %v2043
        %v2117 = vadd.f32 %v1976, %v2046
        %v2118 = vadd.f32 %v1977, %v2048
        %v2119 = vadd.f32 %v1978, %v2051
        %v2120 = vadd.f32 %v1979, %v2053
        %v2121 = vadd.f32 %v1980, %v2056
        %v2122 = vadd.f32 %v1981, %v2058
        %v2123 = vadd.f32 %v1982, %v2061
        %v2124 = vadd.f32 %v1983, %v2063
        %v2125 = vadd.f32 %v1984, %v2066
        %v2126 = vadd.f32 %v1985, %v2068
        %v2127 = vadd.f32 %v1986, %v2071
        %v2128 = vadd.f32 %v1987, %v2073
        %v2129 = vadd.f32 %v1988, %v2076
        %v2130 = vadd.f32 %v1989, %v2078
        %v2131 = vadd.f32 %v1990, %v2081
        %v2132 = vadd.f32 %v1991, %v2083
        %v2133 = vadd.f32 %v1992, %v2086
        %v2134 = vadd.f32 %v1993, %v2088
        %v2135 = vadd.f32 %v1994, %v2091
        %v2136 = vadd.f32 %v1995, %v2093
        %v2137 = vadd.f32 %v1996, %v2096
        %v2138 = vadd.f32 %v1997, %v2098
        %v2139 = vadd.f32 %v1998, %v2101
        %v2140 = vadd.f32 %v1999, %v2103
        %v2142 = vunpack.c.l.b16 %v635
        %v2143 = vpack.c.b16 %v2142, %v2142
        %v2144 = vrot.slane %v2143, 2
        %v2146 = vsel %vm392, %v1050, 0
        %v2149 = vsel %vm1118, %v2144, 0
        %2151 = vmatpush.bf16.msra.mxu0 0
        %2152 = vmatpush.bf16.msra.mxu0 0
        %2153 = vmatpush.bf16.msra.mxu0 0
        %2154 = vmatpush.bf16.msra.mxu0 0
        %2155 = vmatpush.bf16.msra.mxu0 0
        %2156 = vmatpush.bf16.msra.mxu0 0
        %2157 = vmatpush.bf16.msra.mxu0 0
        %2158 = vmatpush.bf16.msra.mxu0 %v2149
        %2159 = vmatmul.bf16.gmra.mxu0 %v1071
        %v2160 = vpop.f32.mrf.mxu0
        %v2161 = vadd.f32 0.0, %v2160
        %v2162 = vpop.f32.mrf.mxu0
        %v2163 = vadd.f32 0.0, %v2162
        %2164 = vmatmul.bf16.gmra.mxu0 %v1074
        %v2165 = vpop.f32.mrf.mxu0
        %v2166 = vadd.f32 0.0, %v2165
        %v2167 = vpop.f32.mrf.mxu0
        %v2168 = vadd.f32 0.0, %v2167
        %2169 = vmatmul.bf16.gmra.mxu0 %v1077
        %v2170 = vpop.f32.mrf.mxu0
        %v2171 = vadd.f32 0.0, %v2170
        %v2172 = vpop.f32.mrf.mxu0
        %v2173 = vadd.f32 0.0, %v2172
        %2174 = vmatmul.bf16.gmra.mxu0 %v1080
        %v2175 = vpop.f32.mrf.mxu0
        %v2176 = vadd.f32 0.0, %v2175
        %v2177 = vpop.f32.mrf.mxu0
        %v2178 = vadd.f32 0.0, %v2177
        %2179 = vmatmul.bf16.gmra.mxu0 %v1083
        %v2180 = vpop.f32.mrf.mxu0
        %v2181 = vadd.f32 0.0, %v2180
        %v2182 = vpop.f32.mrf.mxu0
        %v2183 = vadd.f32 0.0, %v2182
        %2184 = vmatmul.bf16.gmra.mxu0 %v1086
        %v2185 = vpop.f32.mrf.mxu0
        %v2186 = vadd.f32 0.0, %v2185
        %v2187 = vpop.f32.mrf.mxu0
        %v2188 = vadd.f32 0.0, %v2187
        %2189 = vmatmul.bf16.gmra.mxu0 %v1089
        %v2190 = vpop.f32.mrf.mxu0
        %v2191 = vadd.f32 0.0, %v2190
        %v2192 = vpop.f32.mrf.mxu0
        %v2193 = vadd.f32 0.0, %v2192
        %2194 = vmatmul.bf16.gmra.mxu0 %v1092
        %v2195 = vpop.f32.mrf.mxu0
        %v2196 = vadd.f32 0.0, %v2195
        %v2197 = vpop.f32.mrf.mxu0
        %v2198 = vadd.f32 0.0, %v2197
        %2199 = vmatmul.bf16.gmra.mxu0 %v1095
        %v2200 = vpop.f32.mrf.mxu0
        %v2201 = vadd.f32 0.0, %v2200
        %v2202 = vpop.f32.mrf.mxu0
        %v2203 = vadd.f32 0.0, %v2202
        %2204 = vmatmul.bf16.gmra.mxu0 %v1098
        %v2205 = vpop.f32.mrf.mxu0
        %v2206 = vadd.f32 0.0, %v2205
        %v2207 = vpop.f32.mrf.mxu0
        %v2208 = vadd.f32 0.0, %v2207
        %2209 = vmatmul.bf16.gmra.mxu0 %v1101
        %v2210 = vpop.f32.mrf.mxu0
        %v2211 = vadd.f32 0.0, %v2210
        %v2212 = vpop.f32.mrf.mxu0
        %v2213 = vadd.f32 0.0, %v2212
        %2214 = vmatmul.bf16.gmra.mxu0 %v1104
        %v2215 = vpop.f32.mrf.mxu0
        %v2216 = vadd.f32 0.0, %v2215
        %v2217 = vpop.f32.mrf.mxu0
        %v2218 = vadd.f32 0.0, %v2217
        %2219 = vmatmul.bf16.gmra.mxu0 %v1107
        %v2220 = vpop.f32.mrf.mxu0
        %v2221 = vadd.f32 0.0, %v2220
        %v2222 = vpop.f32.mrf.mxu0
        %v2223 = vadd.f32 0.0, %v2222
        %2224 = vmatmul.bf16.gmra.mxu0 %v1110
        %v2225 = vpop.f32.mrf.mxu0
        %v2226 = vadd.f32 0.0, %v2225
        %v2227 = vpop.f32.mrf.mxu0
        %v2228 = vadd.f32 0.0, %v2227
        %2229 = vmatmul.bf16.gmra.mxu0 %v1113
        %v2230 = vpop.f32.mrf.mxu0
        %v2231 = vadd.f32 0.0, %v2230
        %v2232 = vpop.f32.mrf.mxu0
        %v2233 = vadd.f32 0.0, %v2232
        %2234 = vmatmul.bf16.gmra.mxu0 %v1116
        %v2235 = vpop.f32.mrf.mxu0
        %v2236 = vadd.f32 0.0, %v2235
        %v2237 = vpop.f32.mrf.mxu0
        %v2238 = vadd.f32 0.0, %v2237
        %2239 = vmatmul.bf16.gmra.mxu0 %v1715
        %v2240 = vpop.f32.mrf.mxu0
        %v2241 = vadd.f32 0.0, %v2240
        %v2242 = vpop.f32.mrf.mxu0
        %v2243 = vadd.f32 0.0, %v2242
        %2244 = vmatmul.bf16.gmra.mxu0 %v2146
        %v2245 = vpop.f32.mrf.mxu0
        %v2246 = vadd.f32 0.0, %v2245
        %v2247 = vpop.f32.mrf.mxu0
        %v2248 = vadd.f32 0.0, %v2247
        %2249 = vdwg.mxu0
        %v2250 = vadd.f32 %v2105, %v2161
        %v2251 = vadd.f32 %v2106, %v2163
        %v2252 = vadd.f32 %v2107, %v2166
        %v2253 = vadd.f32 %v2108, %v2168
        %v2254 = vadd.f32 %v2109, %v2171
        %v2255 = vadd.f32 %v2110, %v2173
        %v2256 = vadd.f32 %v2111, %v2176
        %v2257 = vadd.f32 %v2112, %v2178
        %v2258 = vadd.f32 %v2113, %v2181
        %v2259 = vadd.f32 %v2114, %v2183
        %v2260 = vadd.f32 %v2115, %v2186
        %v2261 = vadd.f32 %v2116, %v2188
        %v2262 = vadd.f32 %v2117, %v2191
        %v2263 = vadd.f32 %v2118, %v2193
        %v2264 = vadd.f32 %v2119, %v2196
        %v2265 = vadd.f32 %v2120, %v2198
        %v2266 = vadd.f32 %v2121, %v2201
        %v2267 = vadd.f32 %v2122, %v2203
        %v2268 = vadd.f32 %v2123, %v2206
        %v2269 = vadd.f32 %v2124, %v2208
        %v2270 = vadd.f32 %v2125, %v2211
        %v2271 = vadd.f32 %v2126, %v2213
        %v2272 = vadd.f32 %v2127, %v2216
        %v2273 = vadd.f32 %v2128, %v2218
        %v2274 = vadd.f32 %v2129, %v2221
        %v2275 = vadd.f32 %v2130, %v2223
        %v2276 = vadd.f32 %v2131, %v2226
        %v2277 = vadd.f32 %v2132, %v2228
        %v2278 = vadd.f32 %v2133, %v2231
        %v2279 = vadd.f32 %v2134, %v2233
        %v2280 = vadd.f32 %v2135, %v2236
        %v2281 = vadd.f32 %v2136, %v2238
        %v2282 = vadd.f32 %v2137, %v2241
        %v2283 = vadd.f32 %v2138, %v2243
        %v2284 = vadd.f32 %v2139, %v2246
        %v2285 = vadd.f32 %v2140, %v2248
        %v2287 = vsel %vm392, %v1059, 0
        %v2290 = vsel %vm1118, %v636, 0
        %2292 = vmatpush.bf16.msra.mxu0 0
        %2293 = vmatpush.bf16.msra.mxu0 0
        %2294 = vmatpush.bf16.msra.mxu0 0
        %2295 = vmatpush.bf16.msra.mxu0 0
        %2296 = vmatpush.bf16.msra.mxu0 0
        %2297 = vmatpush.bf16.msra.mxu0 0
        %2298 = vmatpush.bf16.msra.mxu0 0
        %2299 = vmatpush.bf16.msra.mxu0 %v2290
        %2300 = vmatmul.bf16.gmra.mxu0 %v1384
        %v2301 = vpop.f32.mrf.mxu0
        %v2302 = vadd.f32 0.0, %v2301
        %v2303 = vpop.f32.mrf.mxu0
        %v2304 = vadd.f32 0.0, %v2303
        %2305 = vmatmul.bf16.gmra.mxu0 %v1387
        %v2306 = vpop.f32.mrf.mxu0
        %v2307 = vadd.f32 0.0, %v2306
        %v2308 = vpop.f32.mrf.mxu0
        %v2309 = vadd.f32 0.0, %v2308
        %2310 = vmatmul.bf16.gmra.mxu0 %v1390
        %v2311 = vpop.f32.mrf.mxu0
        %v2312 = vadd.f32 0.0, %v2311
        %v2313 = vpop.f32.mrf.mxu0
        %v2314 = vadd.f32 0.0, %v2313
        %2315 = vmatmul.bf16.gmra.mxu0 %v1393
        %v2316 = vpop.f32.mrf.mxu0
        %v2317 = vadd.f32 0.0, %v2316
        %v2318 = vpop.f32.mrf.mxu0
        %v2319 = vadd.f32 0.0, %v2318
        %2320 = vmatmul.bf16.gmra.mxu0 %v1396
        %v2321 = vpop.f32.mrf.mxu0
        %v2322 = vadd.f32 0.0, %v2321
        %v2323 = vpop.f32.mrf.mxu0
        %v2324 = vadd.f32 0.0, %v2323
        %2325 = vmatmul.bf16.gmra.mxu0 %v1399
        %v2326 = vpop.f32.mrf.mxu0
        %v2327 = vadd.f32 0.0, %v2326
        %v2328 = vpop.f32.mrf.mxu0
        %v2329 = vadd.f32 0.0, %v2328
        %2330 = vmatmul.bf16.gmra.mxu0 %v1402
        %v2331 = vpop.f32.mrf.mxu0
        %v2332 = vadd.f32 0.0, %v2331
        %v2333 = vpop.f32.mrf.mxu0
        %v2334 = vadd.f32 0.0, %v2333
        %2335 = vmatmul.bf16.gmra.mxu0 %v1405
        %v2336 = vpop.f32.mrf.mxu0
        %v2337 = vadd.f32 0.0, %v2336
        %v2338 = vpop.f32.mrf.mxu0
        %v2339 = vadd.f32 0.0, %v2338
        %2340 = vmatmul.bf16.gmra.mxu0 %v1408
        %v2341 = vpop.f32.mrf.mxu0
        %v2342 = vadd.f32 0.0, %v2341
        %v2343 = vpop.f32.mrf.mxu0
        %v2344 = vadd.f32 0.0, %v2343
        %2345 = vmatmul.bf16.gmra.mxu0 %v1411
        %v2346 = vpop.f32.mrf.mxu0
        %v2347 = vadd.f32 0.0, %v2346
        %v2348 = vpop.f32.mrf.mxu0
        %v2349 = vadd.f32 0.0, %v2348
        %2350 = vmatmul.bf16.gmra.mxu0 %v1414
        %v2351 = vpop.f32.mrf.mxu0
        %v2352 = vadd.f32 0.0, %v2351
        %v2353 = vpop.f32.mrf.mxu0
        %v2354 = vadd.f32 0.0, %v2353
        %2355 = vmatmul.bf16.gmra.mxu0 %v1417
        %v2356 = vpop.f32.mrf.mxu0
        %v2357 = vadd.f32 0.0, %v2356
        %v2358 = vpop.f32.mrf.mxu0
        %v2359 = vadd.f32 0.0, %v2358
        %2360 = vmatmul.bf16.gmra.mxu0 %v1420
        %v2361 = vpop.f32.mrf.mxu0
        %v2362 = vadd.f32 0.0, %v2361
        %v2363 = vpop.f32.mrf.mxu0
        %v2364 = vadd.f32 0.0, %v2363
        %2365 = vmatmul.bf16.gmra.mxu0 %v1423
        %v2366 = vpop.f32.mrf.mxu0
        %v2367 = vadd.f32 0.0, %v2366
        %v2368 = vpop.f32.mrf.mxu0
        %v2369 = vadd.f32 0.0, %v2368
        %2370 = vmatmul.bf16.gmra.mxu0 %v1426
        %v2371 = vpop.f32.mrf.mxu0
        %v2372 = vadd.f32 0.0, %v2371
        %v2373 = vpop.f32.mrf.mxu0
        %v2374 = vadd.f32 0.0, %v2373
        %2375 = vmatmul.bf16.gmra.mxu0 %v1429
        %v2376 = vpop.f32.mrf.mxu0
        %v2377 = vadd.f32 0.0, %v2376
        %v2378 = vpop.f32.mrf.mxu0
        %v2379 = vadd.f32 0.0, %v2378
        %2380 = vmatmul.bf16.gmra.mxu0 %v1860
        %v2381 = vpop.f32.mrf.mxu0
        %v2382 = vadd.f32 0.0, %v2381
        %v2383 = vpop.f32.mrf.mxu0
        %v2384 = vadd.f32 0.0, %v2383
        %2385 = vmatmul.bf16.gmra.mxu0 %v2287
        %v2386 = vpop.f32.mrf.mxu0
        %v2387 = vadd.f32 0.0, %v2386
        %v2388 = vpop.f32.mrf.mxu0
        %v2389 = vadd.f32 0.0, %v2388
        %2390 = vdwg.mxu0
        %v2391 = vadd.f32 %v2250, %v2302
        %v2392 = vadd.f32 %v2251, %v2304
        %v2393 = vadd.f32 %v2252, %v2307
        %v2394 = vadd.f32 %v2253, %v2309
        %v2395 = vadd.f32 %v2254, %v2312
        %v2396 = vadd.f32 %v2255, %v2314
        %v2397 = vadd.f32 %v2256, %v2317
        %v2398 = vadd.f32 %v2257, %v2319
        %v2399 = vadd.f32 %v2258, %v2322
        %v2400 = vadd.f32 %v2259, %v2324
        %v2401 = vadd.f32 %v2260, %v2327
        %v2402 = vadd.f32 %v2261, %v2329
        %v2403 = vadd.f32 %v2262, %v2332
        %v2404 = vadd.f32 %v2263, %v2334
        %v2405 = vadd.f32 %v2264, %v2337
        %v2406 = vadd.f32 %v2265, %v2339
        %v2407 = vadd.f32 %v2266, %v2342
        %v2408 = vadd.f32 %v2267, %v2344
        %v2409 = vadd.f32 %v2268, %v2347
        %v2410 = vadd.f32 %v2269, %v2349
        %v2411 = vadd.f32 %v2270, %v2352
        %v2412 = vadd.f32 %v2271, %v2354
        %v2413 = vadd.f32 %v2272, %v2357
        %v2414 = vadd.f32 %v2273, %v2359
        %v2415 = vadd.f32 %v2274, %v2362
        %v2416 = vadd.f32 %v2275, %v2364
        %v2417 = vadd.f32 %v2276, %v2367
        %v2418 = vadd.f32 %v2277, %v2369
        %v2419 = vadd.f32 %v2278, %v2372
        %v2420 = vadd.f32 %v2279, %v2374
        %v2421 = vadd.f32 %v2280, %v2377
        %v2422 = vadd.f32 %v2281, %v2379
        %v2423 = vadd.f32 %v2282, %v2382
        %v2424 = vadd.f32 %v2283, %v2384
        %v2425 = vadd.f32 %v2284, %v2387
        %v2426 = vadd.f32 %v2285, %v2389
        %v2428 = vperm.slane %v637, 0
        %v2430 = vadd.f32 %v2391, %v2428
        %v2431 = vadd.f32 %v2392, %v2428
        %v2432 = vadd.f32 %v2393, %v2428
        %v2433 = vadd.f32 %v2394, %v2428
        %v2434 = vadd.f32 %v2395, %v2428
        %v2435 = vadd.f32 %v2396, %v2428
        %v2436 = vadd.f32 %v2397, %v2428
        %v2437 = vadd.f32 %v2398, %v2428
        %v2438 = vadd.f32 %v2399, %v2428
        %v2439 = vadd.f32 %v2400, %v2428
        %v2440 = vadd.f32 %v2401, %v2428
        %v2441 = vadd.f32 %v2402, %v2428
        %v2442 = vadd.f32 %v2403, %v2428
        %v2443 = vadd.f32 %v2404, %v2428
        %v2444 = vadd.f32 %v2405, %v2428
        %v2445 = vadd.f32 %v2406, %v2428
        %v2446 = vadd.f32 %v2407, %v2428
        %v2447 = vadd.f32 %v2408, %v2428
        %v2448 = vadd.f32 %v2409, %v2428
        %v2449 = vadd.f32 %v2410, %v2428
        %v2450 = vadd.f32 %v2411, %v2428
        %v2451 = vadd.f32 %v2412, %v2428
        %v2452 = vadd.f32 %v2413, %v2428
        %v2453 = vadd.f32 %v2414, %v2428
        %v2454 = vadd.f32 %v2415, %v2428
        %v2455 = vadd.f32 %v2416, %v2428
        %v2456 = vadd.f32 %v2417, %v2428
        %v2457 = vadd.f32 %v2418, %v2428
        %v2458 = vadd.f32 %v2419, %v2428
        %v2459 = vadd.f32 %v2420, %v2428
        %v2460 = vadd.f32 %v2421, %v2428
        %v2461 = vadd.f32 %v2422, %v2428
        %v2462 = vadd.f32 %v2423, %v2428
        %v2463 = vadd.f32 %v2424, %v2428
        %v2464 = vadd.f32 %v2425, %v2428
        %v2465 = vadd.f32 %v2426, %v2428
        %v2466 = vpack.c.bf16 %v2432, %v2432
        %v2467 = vpack.c.bf16 %v2433, %v2433
        %v2468 = vpack.c.bf16 %v2434, %v2434
        %v2469 = vpack.c.bf16 %v2435, %v2435
        %v2470 = vpack.c.bf16 %v2436, %v2436
        %v2471 = vpack.c.bf16 %v2437, %v2437
        %v2472 = vpack.c.bf16 %v2438, %v2438
        %v2473 = vpack.c.bf16 %v2439, %v2439
        %v2474 = vpack.c.bf16 %v2440, %v2440
        %v2475 = vpack.c.bf16 %v2441, %v2441
        %v2476 = vpack.c.bf16 %v2442, %v2442
        %v2477 = vpack.c.bf16 %v2443, %v2443
        %v2478 = vpack.c.bf16 %v2444, %v2444
        %v2479 = vpack.c.bf16 %v2445, %v2445
        %v2480 = vpack.c.bf16 %v2446, %v2446
        %v2481 = vpack.c.bf16 %v2447, %v2447
        %v2482 = vpack.c.bf16 %v2448, %v2448
        %v2483 = vpack.c.bf16 %v2449, %v2449
        %v2484 = vpack.c.bf16 %v2450, %v2450
        %v2485 = vpack.c.bf16 %v2451, %v2451
        %v2486 = vpack.c.bf16 %v2452, %v2452
        %v2487 = vpack.c.bf16 %v2453, %v2453
        %v2488 = vpack.c.bf16 %v2454, %v2454
        %v2489 = vpack.c.bf16 %v2455, %v2455
        %v2490 = vpack.c.bf16 %v2456, %v2456
        %v2491 = vpack.c.bf16 %v2457, %v2457
        %v2492 = vpack.c.bf16 %v2458, %v2458
        %v2493 = vpack.c.bf16 %v2459, %v2459
        %v2494 = vpack.c.bf16 %v2460, %v2460
        %v2495 = vpack.c.bf16 %v2461, %v2461
        %v2496 = vpack.c.bf16 %v2462, %v2462
        %v2497 = vpack.c.bf16 %v2463, %v2463
        %vm2498 = vcmask 60416
        %2499 = vst.msk [vmem:[%s378] sm:$0xf] %vm2498, %v2466
        %2500 = vst.msk [vmem:[%s378 + $0x4] sm:$0xf] %vm2498, %v2467
        %2501 = vst.msk [vmem:[%s378 + $0x8] sm:$0xf] %vm2498, %v2468
        %2502 = vst.msk [vmem:[%s378 + $0xc] sm:$0xf] %vm2498, %v2469
        %2503 = vst.msk [vmem:[%s378 + $0x10] sm:$0xf] %vm2498, %v2470
        %2504 = vst.msk [vmem:[%s378 + $0x14] sm:$0xf] %vm2498, %v2471
        %2505 = vst.msk [vmem:[%s378 + $0x18] sm:$0xf] %vm2498, %v2472
        %2506 = vst.msk [vmem:[%s378 + $0x1c] sm:$0xf] %vm2498, %v2473
        %2507 = vst.msk [vmem:[%s378 + $0x20] sm:$0xf] %vm2498, %v2474
        %2508 = vst.msk [vmem:[%s378 + $0x24] sm:$0xf] %vm2498, %v2475
        %2509 = vst.msk [vmem:[%s378 + $0x28] sm:$0xf] %vm2498, %v2476
        %2510 = vst.msk [vmem:[%s378 + $0x2c] sm:$0xf] %vm2498, %v2477
        %2511 = vst.msk [vmem:[%s378 + $0x30] sm:$0xf] %vm2498, %v2478
        %2512 = vst.msk [vmem:[%s378 + $0x34] sm:$0xf] %vm2498, %v2479
        %2513 = vst.msk [vmem:[%s378 + $0x38] sm:$0xf] %vm2498, %v2480
        %2514 = vst.msk [vmem:[%s378 + $0x3c] sm:$0xf] %vm2498, %v2481
        %2515 = vst.msk [vmem:[%s378 + $0x40] sm:$0xf] %vm2498, %v2482
        %2516 = vst.msk [vmem:[%s378 + $0x44] sm:$0xf] %vm2498, %v2483
        %2517 = vst.msk [vmem:[%s378 + $0x48] sm:$0xf] %vm2498, %v2484
        %2518 = vst.msk [vmem:[%s378 + $0x4c] sm:$0xf] %vm2498, %v2485
        %2519 = vst.msk [vmem:[%s378 + $0x50] sm:$0xf] %vm2498, %v2486
        %2520 = vst.msk [vmem:[%s378 + $0x54] sm:$0xf] %vm2498, %v2487
        %2521 = vst.msk [vmem:[%s378 + $0x58] sm:$0xf] %vm2498, %v2488
        %2522 = vst.msk [vmem:[%s378 + $0x5c] sm:$0xf] %vm2498, %v2489
        %2523 = vst.msk [vmem:[%s378 + $0x60] sm:$0xf] %vm2498, %v2490
        %2524 = vst.msk [vmem:[%s378 + $0x64] sm:$0xf] %vm2498, %v2491
        %2525 = vst.msk [vmem:[%s378 + $0x68] sm:$0xf] %vm2498, %v2492
        %2526 = vst.msk [vmem:[%s378 + $0x6c] sm:$0xf] %vm2498, %v2493
        %2527 = vst.msk [vmem:[%s378 + $0x70] sm:$0xf] %vm2498, %v2494
        %2528 = vst.msk [vmem:[%s378 + $0x74] sm:$0xf] %vm2498, %v2495
        %2529 = vst.msk [vmem:[%s378 + $0x78] sm:$0xf] %vm2498, %v2496
        %2530 = vst.msk [vmem:[%s378 + $0x7c] sm:$0xf] %vm2498, %v2497
        %p2531 = scmp.gt.s32.totalorder %s25, 0
        %s2532 = scalar_select %p2531, 1, 0
        %v2533 = vstv %s2532
        %vm2534 = vcmp.eq.s32.totalorder %v2533, 1
        %v2535 = vsel %vm2534, %v2430, 0.0
        %v2536 = vsel %vm2534, %v2431, 0.0
        %p2537 = scmp.lt.s32.totalorder %s25, 0
        %s2538 = scalar_select %p2537, 1, 0
        %v2539 = vstv %s2538
        %vm2540 = vcmp.eq.s32.totalorder %v2539, 1
        %v2541 = vsel %vm2540, %v2464, 0.0
        %v2542 = vsel %vm2540, %v2465, 0.0
        %2543 = vst.msk [vmem:[#allocation3 + $0x8] sm:$0xff] %vm433, %v2535
        %2544 = vst.msk [vmem:[#allocation3 + $0x10] sm:$0xff] %vm433, %v2536
        %s2545 = scalar_lea.vmem [#allocation3], 32
        %2546 = vst.msk [vmem:[%s2545 + $0x8] sm:$0xff] %vm433, %v2432
        %2547 = vst.msk [vmem:[%s2545 + $0x10] sm:$0xff] %vm433, %v2433
        %2548 = vst.msk [vmem:[%s2545 + $0x28] sm:$0xff] %vm433, %v2434
        %2549 = vst.msk [vmem:[%s2545 + $0x30] sm:$0xff] %vm433, %v2435
        %2550 = vst.msk [vmem:[%s2545 + $0x48] sm:$0xff] %vm433, %v2436
        %2551 = vst.msk [vmem:[%s2545 + $0x50] sm:$0xff] %vm433, %v2437
        %2552 = vst.msk [vmem:[%s2545 + $0x68] sm:$0xff] %vm433, %v2438
        %2553 = vst.msk [vmem:[%s2545 + $0x70] sm:$0xff] %vm433, %v2439
        %2554 = vst.msk [vmem:[%s2545 + $0x88] sm:$0xff] %vm433, %v2440
        %2555 = vst.msk [vmem:[%s2545 + $0x90] sm:$0xff] %vm433, %v2441
        %2556 = vst.msk [vmem:[%s2545 + $0xa8] sm:$0xff] %vm433, %v2442
        %2557 = vst.msk [vmem:[%s2545 + $0xb0] sm:$0xff] %vm433, %v2443
        %2558 = vst.msk [vmem:[%s2545 + $0xc8] sm:$0xff] %vm433, %v2444
        %2559 = vst.msk [vmem:[%s2545 + $0xd0] sm:$0xff] %vm433, %v2445
        %2560 = vst.msk [vmem:[%s2545 + $0xe8] sm:$0xff] %vm433, %v2446
        %2561 = vst.msk [vmem:[%s2545 + $0xf0] sm:$0xff] %vm433, %v2447
        %2562 = vst.msk [vmem:[%s2545 + $0x108] sm:$0xff] %vm433, %v2448
        %2563 = vst.msk [vmem:[%s2545 + $0x110] sm:$0xff] %vm433, %v2449
        %2564 = vst.msk [vmem:[%s2545 + $0x128] sm:$0xff] %vm433, %v2450
        %2565 = vst.msk [vmem:[%s2545 + $0x130] sm:$0xff] %vm433, %v2451
        %2566 = vst.msk [vmem:[%s2545 + $0x148] sm:$0xff] %vm433, %v2452
        %2567 = vst.msk [vmem:[%s2545 + $0x150] sm:$0xff] %vm433, %v2453
        %2568 = vst.msk [vmem:[%s2545 + $0x168] sm:$0xff] %vm433, %v2454
        %2569 = vst.msk [vmem:[%s2545 + $0x170] sm:$0xff] %vm433, %v2455
        %2570 = vst.msk [vmem:[%s2545 + $0x188] sm:$0xff] %vm433, %v2456
        %2571 = vst.msk [vmem:[%s2545 + $0x190] sm:$0xff] %vm433, %v2457
        %2572 = vst.msk [vmem:[%s2545 + $0x1a8] sm:$0xff] %vm433, %v2458
        %2573 = vst.msk [vmem:[%s2545 + $0x1b0] sm:$0xff] %vm433, %v2459
        %2574 = vst.msk [vmem:[%s2545 + $0x1c8] sm:$0xff] %vm433, %v2460
        %2575 = vst.msk [vmem:[%s2545 + $0x1d0] sm:$0xff] %vm433, %v2461
        %2576 = vst.msk [vmem:[%s2545 + $0x1e8] sm:$0xff] %vm433, %v2462
        %2577 = vst.msk [vmem:[%s2545 + $0x1f0] sm:$0xff] %vm433, %v2463
        %s2578 = scalar_lea.vmem [#allocation3], 544
        %2579 = vst.msk [vmem:[%s2578 + $0x8] sm:$0xff] %vm433, %v2541
        %2580 = vst.msk [vmem:[%s2578 + $0x10] sm:$0xff] %vm433, %v2542
        %v2581 = vld [vmem:[#allocation3] sm:$0xff]
        %v2582 = vld [vmem:[#allocation3 + $0x8] sm:$0xff]
        %v2583 = vld [vmem:[#allocation3 + $0x10] sm:$0xff]
        %v2584 = vld [vmem:[#allocation3 + $0x18] sm:$0xff]
        %v2585 = vld [vmem:[#allocation3 + $0x20] sm:$0xff]
        %v2586 = vld [vmem:[#allocation3 + $0x28] sm:$0xff]
        %v2587 = vld [vmem:[#allocation3 + $0x30] sm:$0xff]
        %v2588 = vld [vmem:[#allocation3 + $0x38] sm:$0xff]
        %v2589 = vld [vmem:[#allocation3 + $0x40] sm:$0xff]
        %v2590 = vld [vmem:[#allocation3 + $0x48] sm:$0xff]
        %v2591 = vld [vmem:[#allocation3 + $0x50] sm:$0xff]
        %v2592 = vld [vmem:[#allocation3 + $0x58] sm:$0xff]
        %v2593 = vld [vmem:[#allocation3 + $0x60] sm:$0xff]
        %v2594 = vld [vmem:[#allocation3 + $0x68] sm:$0xff]
        %v2595 = vld [vmem:[#allocation3 + $0x70] sm:$0xff]
        %v2596 = vld [vmem:[#allocation3 + $0x78] sm:$0xff]
        %v2597 = vld [vmem:[#allocation3 + $0x80] sm:$0xff]
        %v2598 = vld [vmem:[#allocation3 + $0x88] sm:$0xff]
        %v2599 = vld [vmem:[#allocation3 + $0x90] sm:$0xff]
        %v2600 = vld [vmem:[#allocation3 + $0x98] sm:$0xff]
        %v2601 = vld [vmem:[#allocation3 + $0xa0] sm:$0xff]
        %v2602 = vld [vmem:[#allocation3 + $0xa8] sm:$0xff]
        %v2603 = vld [vmem:[#allocation3 + $0xb0] sm:$0xff]
        %v2604 = vld [vmem:[#allocation3 + $0xb8] sm:$0xff]
        %v2605 = vld [vmem:[#allocation3 + $0xc0] sm:$0xff]
        %v2606 = vld [vmem:[#allocation3 + $0xc8] sm:$0xff]
        %v2607 = vld [vmem:[#allocation3 + $0xd0] sm:$0xff]
        %v2608 = vld [vmem:[#allocation3 + $0xd8] sm:$0xff]
        %v2609 = vld [vmem:[#allocation3 + $0xe0] sm:$0xff]
        %v2610 = vld [vmem:[#allocation3 + $0xe8] sm:$0xff]
        %v2611 = vld [vmem:[#allocation3 + $0xf0] sm:$0xff]
        %v2612 = vld [vmem:[#allocation3 + $0xf8] sm:$0xff]
        %v2613 = vld [vmem:[#allocation3 + $0x100] sm:$0xff]
        %v2614 = vld [vmem:[#allocation3 + $0x108] sm:$0xff]
        %v2615 = vld [vmem:[#allocation3 + $0x110] sm:$0xff]
        %v2616 = vld [vmem:[#allocation3 + $0x118] sm:$0xff]
        %v2617 = vld [vmem:[#allocation3 + $0x120] sm:$0xff]
        %v2618 = vld [vmem:[#allocation3 + $0x128] sm:$0xff]
        %v2619 = vld [vmem:[#allocation3 + $0x130] sm:$0xff]
        %v2620 = vld [vmem:[#allocation3 + $0x138] sm:$0xff]
        %v2621 = vld [vmem:[#allocation3 + $0x140] sm:$0xff]
        %v2622 = vld [vmem:[#allocation3 + $0x148] sm:$0xff]
        %v2623 = vld [vmem:[#allocation3 + $0x150] sm:$0xff]
        %v2624 = vld [vmem:[#allocation3 + $0x158] sm:$0xff]
        %v2625 = vld [vmem:[#allocation3 + $0x160] sm:$0xff]
        %v2626 = vld [vmem:[#allocation3 + $0x168] sm:$0xff]
        %v2627 = vld [vmem:[#allocation3 + $0x170] sm:$0xff]
        %v2628 = vld [vmem:[#allocation3 + $0x178] sm:$0xff]
        %v2629 = vld [vmem:[#allocation3 + $0x180] sm:$0xff]
        %v2630 = vld [vmem:[#allocation3 + $0x188] sm:$0xff]
        %v2631 = vld [vmem:[#allocation3 + $0x190] sm:$0xff]
        %v2632 = vld [vmem:[#allocation3 + $0x198] sm:$0xff]
        %v2633 = vld [vmem:[#allocation3 + $0x1a0] sm:$0xff]
        %v2634 = vld [vmem:[#allocation3 + $0x1a8] sm:$0xff]
        %v2635 = vld [vmem:[#allocation3 + $0x1b0] sm:$0xff]
        %v2636 = vld [vmem:[#allocation3 + $0x1b8] sm:$0xff]
        %v2637 = vld [vmem:[#allocation3 + $0x1c0] sm:$0xff]
        %v2638 = vld [vmem:[#allocation3 + $0x1c8] sm:$0xff]
        %v2639 = vld [vmem:[#allocation3 + $0x1d0] sm:$0xff]
        %v2640 = vld [vmem:[#allocation3 + $0x1d8] sm:$0xff]
        %v2641 = vld [vmem:[#allocation3 + $0x1e0] sm:$0xff]
        %v2642 = vld [vmem:[#allocation3 + $0x1e8] sm:$0xff]
        %v2643 = vld [vmem:[#allocation3 + $0x1f0] sm:$0xff]
        %v2644 = vld [vmem:[#allocation3 + $0x1f8] sm:$0xff]
        %v2645 = vld [vmem:[#allocation3 + $0x200] sm:$0xff]
        %v2646 = vld [vmem:[#allocation3 + $0x208] sm:$0xff]
        %v2647 = vld [vmem:[#allocation3 + $0x210] sm:$0xff]
        %v2648 = vld [vmem:[#allocation3 + $0x218] sm:$0xff]
        %v2649 = vld [vmem:[#allocation3 + $0x220] sm:$0xff]
        %v2650 = vld [vmem:[#allocation3 + $0x228] sm:$0xff]
        %v2651 = vld [vmem:[#allocation3 + $0x230] sm:$0xff]
        %v2652 = vld [vmem:[#allocation3 + $0x238] sm:$0xff]
        %v2653 = vld [vmem:[%s4] sm:$0xf]
        %v2654 = vld [vmem:[%s4 + $0x4] sm:$0xf]
        %v2655 = vld [vmem:[%s4 + $0x8] sm:$0xf]
        %v2656 = vld [vmem:[%s4 + $0xc] sm:$0xf]
        %v2657 = vld [vmem:[%s4 + $0x10] sm:$0xf]
        %v2658 = vld [vmem:[%s4 + $0x14] sm:$0xf]
        %v2659 = vld [vmem:[%s4 + $0x18] sm:$0xf]
        %v2660 = vld [vmem:[%s4 + $0x1c] sm:$0xf]
        %v2661 = vld [vmem:[%s4 + $0x20] sm:$0xf]
        %v2662 = vld [vmem:[#allocation4] sm:$0x1]
        %v2711 = vrot.slane %v2581, 7
        %v2712 = vrot.slane %v2582, 7
        %v2713 = vsel %vm692, %v2711, %v2712
        %v2714 = vrot.slane %v2583, 7
        %v2715 = vsel %vm692, %v2712, %v2714
        %v2716 = vrot.slane %v2585, 7
        %v2717 = vrot.slane %v2586, 7
        %v2718 = vsel %vm692, %v2716, %v2717
        %v2719 = vrot.slane %v2587, 7
        %v2720 = vsel %vm692, %v2717, %v2719
        %v2721 = vrot.slane %v2589, 7
        %v2722 = vrot.slane %v2590, 7
        %v2723 = vsel %vm692, %v2721, %v2722
        %v2724 = vrot.slane %v2591, 7
        %v2725 = vsel %vm692, %v2722, %v2724
        %v2726 = vrot.slane %v2593, 7
        %v2727 = vrot.slane %v2594, 7
        %v2728 = vsel %vm692, %v2726, %v2727
        %v2729 = vrot.slane %v2595, 7
        %v2730 = vsel %vm692, %v2727, %v2729
        %v2731 = vrot.slane %v2597, 7
        %v2732 = vrot.slane %v2598, 7
        %v2733 = vsel %vm692, %v2731, %v2732
        %v2734 = vrot.slane %v2599, 7
        %v2735 = vsel %vm692, %v2732, %v2734
        %v2736 = vrot.slane %v2601, 7
        %v2737 = vrot.slane %v2602, 7
        %v2738 = vsel %vm692, %v2736, %v2737
        %v2739 = vrot.slane %v2603, 7
        %v2740 = vsel %vm692, %v2737, %v2739
        %v2741 = vrot.slane %v2605, 7
        %v2742 = vrot.slane %v2606, 7
        %v2743 = vsel %vm692, %v2741, %v2742
        %v2744 = vrot.slane %v2607, 7
        %v2745 = vsel %vm692, %v2742, %v2744
        %v2746 = vrot.slane %v2609, 7
        %v2747 = vrot.slane %v2610, 7
        %v2748 = vsel %vm692, %v2746, %v2747
        %v2749 = vrot.slane %v2611, 7
        %v2750 = vsel %vm692, %v2747, %v2749
        %v2751 = vrot.slane %v2613, 7
        %v2752 = vrot.slane %v2614, 7
        %v2753 = vsel %vm692, %v2751, %v2752
        %v2754 = vrot.slane %v2615, 7
        %v2755 = vsel %vm692, %v2752, %v2754
        %v2756 = vrot.slane %v2617, 7
        %v2757 = vrot.slane %v2618, 7
        %v2758 = vsel %vm692, %v2756, %v2757
        %v2759 = vrot.slane %v2619, 7
        %v2760 = vsel %vm692, %v2757, %v2759
        %v2761 = vrot.slane %v2621, 7
        %v2762 = vrot.slane %v2622, 7
        %v2763 = vsel %vm692, %v2761, %v2762
        %v2764 = vrot.slane %v2623, 7
        %v2765 = vsel %vm692, %v2762, %v2764
        %v2766 = vrot.slane %v2625, 7
        %v2767 = vrot.slane %v2626, 7
        %v2768 = vsel %vm692, %v2766, %v2767
        %v2769 = vrot.slane %v2627, 7
        %v2770 = vsel %vm692, %v2767, %v2769
        %v2771 = vrot.slane %v2629, 7
        %v2772 = vrot.slane %v2630, 7
        %v2773 = vsel %vm692, %v2771, %v2772
        %v2774 = vrot.slane %v2631, 7
        %v2775 = vsel %vm692, %v2772, %v2774
        %v2776 = vrot.slane %v2633, 7
        %v2777 = vrot.slane %v2634, 7
        %v2778 = vsel %vm692, %v2776, %v2777
        %v2779 = vrot.slane %v2635, 7
        %v2780 = vsel %vm692, %v2777, %v2779
        %v2781 = vrot.slane %v2637, 7
        %v2782 = vrot.slane %v2638, 7
        %v2783 = vsel %vm692, %v2781, %v2782
        %v2784 = vrot.slane %v2639, 7
        %v2785 = vsel %vm692, %v2782, %v2784
        %v2786 = vrot.slane %v2641, 7
        %v2787 = vrot.slane %v2642, 7
        %v2788 = vsel %vm692, %v2786, %v2787
        %v2789 = vrot.slane %v2643, 7
        %v2790 = vsel %vm692, %v2787, %v2789
        %v2823 = vpack.c.bf16 %v2715, %v2713
        %v2824 = vpack.c.bf16 %v2720, %v2718
        %v2825 = vpack.c.bf16 %v2725, %v2723
        %v2826 = vpack.c.bf16 %v2730, %v2728
        %v2827 = vpack.c.bf16 %v2735, %v2733
        %v2828 = vpack.c.bf16 %v2740, %v2738
        %v2829 = vpack.c.bf16 %v2745, %v2743
        %v2830 = vpack.c.bf16 %v2750, %v2748
        %v2831 = vpack.c.bf16 %v2755, %v2753
        %v2832 = vpack.c.bf16 %v2760, %v2758
        %v2833 = vpack.c.bf16 %v2765, %v2763
        %v2834 = vpack.c.bf16 %v2770, %v2768
        %v2835 = vpack.c.bf16 %v2775, %v2773
        %v2836 = vpack.c.bf16 %v2780, %v2778
        %v2837 = vpack.c.bf16 %v2785, %v2783
        %v2838 = vpack.c.bf16 %v2790, %v2788
        %v2839 = vpack.c.bf16 %v2583, %v2582
        %v2840 = vpack.c.bf16 %v2587, %v2586
        %v2841 = vpack.c.bf16 %v2591, %v2590
        %v2842 = vpack.c.bf16 %v2595, %v2594
        %v2843 = vpack.c.bf16 %v2599, %v2598
        %v2844 = vpack.c.bf16 %v2603, %v2602
        %v2845 = vpack.c.bf16 %v2607, %v2606
        %v2846 = vpack.c.bf16 %v2611, %v2610
        %v2847 = vpack.c.bf16 %v2615, %v2614
        %v2848 = vpack.c.bf16 %v2619, %v2618
        %v2849 = vpack.c.bf16 %v2623, %v2622
        %v2850 = vpack.c.bf16 %v2627, %v2626
        %v2851 = vpack.c.bf16 %v2631, %v2630
        %v2852 = vpack.c.bf16 %v2635, %v2634
        %v2853 = vpack.c.bf16 %v2639, %v2638
        %v2854 = vpack.c.bf16 %v2643, %v2642
        %v2871 = vrot.slane %v2582, 1
        %v2872 = vrot.slane %v2583, 1
        %v2873 = vsel %vm873, %v2871, %v2872
        %v2874 = vrot.slane %v2584, 1
        %v2875 = vsel %vm873, %v2872, %v2874
        %v2876 = vrot.slane %v2586, 1
        %v2877 = vrot.slane %v2587, 1
        %v2878 = vsel %vm873, %v2876, %v2877
        %v2879 = vrot.slane %v2588, 1
        %v2880 = vsel %vm873, %v2877, %v2879
        %v2881 = vrot.slane %v2590, 1
        %v2882 = vrot.slane %v2591, 1
        %v2883 = vsel %vm873, %v2881, %v2882
        %v2884 = vrot.slane %v2592, 1
        %v2885 = vsel %vm873, %v2882, %v2884
        %v2886 = vrot.slane %v2594, 1
        %v2887 = vrot.slane %v2595, 1
        %v2888 = vsel %vm873, %v2886, %v2887
        %v2889 = vrot.slane %v2596, 1
        %v2890 = vsel %vm873, %v2887, %v2889
        %v2891 = vrot.slane %v2598, 1
        %v2892 = vrot.slane %v2599, 1
        %v2893 = vsel %vm873, %v2891, %v2892
        %v2894 = vrot.slane %v2600, 1
        %v2895 = vsel %vm873, %v2892, %v2894
        %v2896 = vrot.slane %v2602, 1
        %v2897 = vrot.slane %v2603, 1
        %v2898 = vsel %vm873, %v2896, %v2897
        %v2899 = vrot.slane %v2604, 1
        %v2900 = vsel %vm873, %v2897, %v2899
        %v2901 = vrot.slane %v2606, 1
        %v2902 = vrot.slane %v2607, 1
        %v2903 = vsel %vm873, %v2901, %v2902
        %v2904 = vrot.slane %v2608, 1
        %v2905 = vsel %vm873, %v2902, %v2904
        %v2906 = vrot.slane %v2610, 1
        %v2907 = vrot.slane %v2611, 1
        %v2908 = vsel %vm873, %v2906, %v2907
        %v2909 = vrot.slane %v2612, 1
        %v2910 = vsel %vm873, %v2907, %v2909
        %v2911 = vrot.slane %v2614, 1
        %v2912 = vrot.slane %v2615, 1
        %v2913 = vsel %vm873, %v2911, %v2912
        %v2914 = vrot.slane %v2616, 1
        %v2915 = vsel %vm873, %v2912, %v2914
        %v2916 = vrot.slane %v2618, 1
        %v2917 = vrot.slane %v2619, 1
        %v2918 = vsel %vm873, %v2916, %v2917
        %v2919 = vrot.slane %v2620, 1
        %v2920 = vsel %vm873, %v2917, %v2919
        %v2921 = vrot.slane %v2622, 1
        %v2922 = vrot.slane %v2623, 1
        %v2923 = vsel %vm873, %v2921, %v2922
        %v2924 = vrot.slane %v2624, 1
        %v2925 = vsel %vm873, %v2922, %v2924
        %v2926 = vrot.slane %v2626, 1
        %v2927 = vrot.slane %v2627, 1
        %v2928 = vsel %vm873, %v2926, %v2927
        %v2929 = vrot.slane %v2628, 1
        %v2930 = vsel %vm873, %v2927, %v2929
        %v2931 = vrot.slane %v2630, 1
        %v2932 = vrot.slane %v2631, 1
        %v2933 = vsel %vm873, %v2931, %v2932
        %v2934 = vrot.slane %v2632, 1
        %v2935 = vsel %vm873, %v2932, %v2934
        %v2936 = vrot.slane %v2634, 1
        %v2937 = vrot.slane %v2635, 1
        %v2938 = vsel %vm873, %v2936, %v2937
        %v2939 = vrot.slane %v2636, 1
        %v2940 = vsel %vm873, %v2937, %v2939
        %v2941 = vrot.slane %v2638, 1
        %v2942 = vrot.slane %v2639, 1
        %v2943 = vsel %vm873, %v2941, %v2942
        %v2944 = vrot.slane %v2640, 1
        %v2945 = vsel %vm873, %v2942, %v2944
        %v2946 = vrot.slane %v2642, 1
        %v2947 = vrot.slane %v2643, 1
        %v2948 = vsel %vm873, %v2946, %v2947
        %v2949 = vrot.slane %v2644, 1
        %v2950 = vsel %vm873, %v2947, %v2949
        %v2983 = vpack.c.bf16 %v2875, %v2873
        %v2984 = vpack.c.bf16 %v2880, %v2878
        %v2985 = vpack.c.bf16 %v2885, %v2883
        %v2986 = vpack.c.bf16 %v2890, %v2888
        %v2987 = vpack.c.bf16 %v2895, %v2893
        %v2988 = vpack.c.bf16 %v2900, %v2898
        %v2989 = vpack.c.bf16 %v2905, %v2903
        %v2990 = vpack.c.bf16 %v2910, %v2908
        %v2991 = vpack.c.bf16 %v2915, %v2913
        %v2992 = vpack.c.bf16 %v2920, %v2918
        %v2993 = vpack.c.bf16 %v2925, %v2923
        %v2994 = vpack.c.bf16 %v2930, %v2928
        %v2995 = vpack.c.bf16 %v2935, %v2933
        %v2996 = vpack.c.bf16 %v2940, %v2938
        %v2997 = vpack.c.bf16 %v2945, %v2943
        %v2998 = vpack.c.bf16 %v2950, %v2948
        %v3002 = vrot.slane %v2645, 7
        %v3003 = vrot.slane %v2646, 7
        %v3004 = vsel %vm692, %v3002, %v3003
        %v3005 = vrot.slane %v2647, 7
        %v3006 = vsel %vm692, %v3003, %v3005
        %v3009 = vpack.c.bf16 %v3006, %v3004
        %v3010 = vpack.c.bf16 %v2647, %v2646
        %v3012 = vrot.slane %v2646, 1
        %v3013 = vrot.slane %v2647, 1
        %v3014 = vsel %vm873, %v3012, %v3013
        %v3015 = vrot.slane %v2648, 1
        %v3016 = vsel %vm873, %v3013, %v3015
        %v3019 = vpack.c.bf16 %v3016, %v3014
        %v3023 = vrot.slane %v2649, 7
        %v3024 = vrot.slane %v2650, 7
        %v3025 = vsel %vm692, %v3023, %v3024
        %v3026 = vrot.slane %v2651, 7
        %v3027 = vsel %vm692, %v3024, %v3026
        %v3030 = vpack.c.bf16 %v3027, %v3025
        %v3031 = vpack.c.bf16 %v2651, %v2650
        %v3033 = vrot.slane %v2650, 1
        %v3034 = vrot.slane %v2651, 1
        %v3035 = vsel %vm873, %v3033, %v3034
        %v3036 = vrot.slane %v2652, 1
        %v3037 = vsel %vm873, %v3034, %v3036
        %v3040 = vpack.c.bf16 %v3037, %v3035
        %v3042 = vsel %vm433, %v2839, 0
        %v3045 = vsel %vm433, %v2840, 0
        %v3048 = vsel %vm433, %v2841, 0
        %v3051 = vsel %vm433, %v2842, 0
        %v3054 = vsel %vm433, %v2843, 0
        %v3057 = vsel %vm433, %v2844, 0
        %v3060 = vsel %vm433, %v2845, 0
        %v3063 = vsel %vm433, %v2846, 0
        %v3066 = vsel %vm433, %v2847, 0
        %v3069 = vsel %vm433, %v2848, 0
        %v3072 = vsel %vm433, %v2849, 0
        %v3075 = vsel %vm433, %v2850, 0
        %v3078 = vsel %vm433, %v2851, 0
        %v3081 = vsel %vm433, %v2852, 0
        %v3084 = vsel %vm433, %v2853, 0
        %v3087 = vsel %vm433, %v2854, 0
        %vm3089 = vcmask 1043456
        %v3091 = vsel %vm3089, %v2654, 0
        %3093 = vmatpush.bf16.msra.mxu0 0
        %3094 = vmatpush.bf16.msra.mxu0 0
        %3095 = vmatpush.bf16.msra.mxu0 0
        %3096 = vmatpush.bf16.msra.mxu0 0
        %3097 = vmatpush.bf16.msra.mxu0 0
        %3098 = vmatpush.bf16.msra.mxu0 0
        %3099 = vmatpush.bf16.msra.mxu0 0
        %3100 = vmatpush.bf16.msra.mxu0 %v3091
        %3101 = vmatmul.bf16.gmra.mxu0 %v3042
        %v3102 = vpop.f32.mrf.mxu0
        %v3103 = vadd.f32 0.0, %v3102
        %v3104 = vpop.f32.mrf.mxu0
        %v3105 = vadd.f32 0.0, %v3104
        %3106 = vmatmul.bf16.gmra.mxu0 %v3045
        %v3107 = vpop.f32.mrf.mxu0
        %v3108 = vadd.f32 0.0, %v3107
        %v3109 = vpop.f32.mrf.mxu0
        %v3110 = vadd.f32 0.0, %v3109
        %3111 = vmatmul.bf16.gmra.mxu0 %v3048
        %v3112 = vpop.f32.mrf.mxu0
        %v3113 = vadd.f32 0.0, %v3112
        %v3114 = vpop.f32.mrf.mxu0
        %v3115 = vadd.f32 0.0, %v3114
        %3116 = vmatmul.bf16.gmra.mxu0 %v3051
        %v3117 = vpop.f32.mrf.mxu0
        %v3118 = vadd.f32 0.0, %v3117
        %v3119 = vpop.f32.mrf.mxu0
        %v3120 = vadd.f32 0.0, %v3119
        %3121 = vmatmul.bf16.gmra.mxu0 %v3054
        %v3122 = vpop.f32.mrf.mxu0
        %v3123 = vadd.f32 0.0, %v3122
        %v3124 = vpop.f32.mrf.mxu0
        %v3125 = vadd.f32 0.0, %v3124
        %3126 = vmatmul.bf16.gmra.mxu0 %v3057
        %v3127 = vpop.f32.mrf.mxu0
        %v3128 = vadd.f32 0.0, %v3127
        %v3129 = vpop.f32.mrf.mxu0
        %v3130 = vadd.f32 0.0, %v3129
        %3131 = vmatmul.bf16.gmra.mxu0 %v3060
        %v3132 = vpop.f32.mrf.mxu0
        %v3133 = vadd.f32 0.0, %v3132
        %v3134 = vpop.f32.mrf.mxu0
        %v3135 = vadd.f32 0.0, %v3134
        %3136 = vmatmul.bf16.gmra.mxu0 %v3063
        %v3137 = vpop.f32.mrf.mxu0
        %v3138 = vadd.f32 0.0, %v3137
        %v3139 = vpop.f32.mrf.mxu0
        %v3140 = vadd.f32 0.0, %v3139
        %3141 = vmatmul.bf16.gmra.mxu0 %v3066
        %v3142 = vpop.f32.mrf.mxu0
        %v3143 = vadd.f32 0.0, %v3142
        %v3144 = vpop.f32.mrf.mxu0
        %v3145 = vadd.f32 0.0, %v3144
        %3146 = vmatmul.bf16.gmra.mxu0 %v3069
        %v3147 = vpop.f32.mrf.mxu0
        %v3148 = vadd.f32 0.0, %v3147
        %v3149 = vpop.f32.mrf.mxu0
        %v3150 = vadd.f32 0.0, %v3149
        %3151 = vmatmul.bf16.gmra.mxu0 %v3072
        %v3152 = vpop.f32.mrf.mxu0
        %v3153 = vadd.f32 0.0, %v3152
        %v3154 = vpop.f32.mrf.mxu0
        %v3155 = vadd.f32 0.0, %v3154
        %3156 = vmatmul.bf16.gmra.mxu0 %v3075
        %v3157 = vpop.f32.mrf.mxu0
        %v3158 = vadd.f32 0.0, %v3157
        %v3159 = vpop.f32.mrf.mxu0
        %v3160 = vadd.f32 0.0, %v3159
        %3161 = vmatmul.bf16.gmra.mxu0 %v3078
        %v3162 = vpop.f32.mrf.mxu0
        %v3163 = vadd.f32 0.0, %v3162
        %v3164 = vpop.f32.mrf.mxu0
        %v3165 = vadd.f32 0.0, %v3164
        %3166 = vmatmul.bf16.gmra.mxu0 %v3081
        %v3167 = vpop.f32.mrf.mxu0
        %v3168 = vadd.f32 0.0, %v3167
        %v3169 = vpop.f32.mrf.mxu0
        %v3170 = vadd.f32 0.0, %v3169
        %3171 = vmatmul.bf16.gmra.mxu0 %v3084
        %v3172 = vpop.f32.mrf.mxu0
        %v3173 = vadd.f32 0.0, %v3172
        %v3174 = vpop.f32.mrf.mxu0
        %v3175 = vadd.f32 0.0, %v3174
        %3176 = vmatmul.bf16.gmra.mxu0 %v3087
        %v3177 = vpop.f32.mrf.mxu0
        %v3178 = vadd.f32 0.0, %v3177
        %v3179 = vpop.f32.mrf.mxu0
        %v3180 = vadd.f32 0.0, %v3179
        %3181 = vdwg.mxu0
        %v3183 = vsel %vm433, %v2823, 0
        %v3186 = vsel %vm433, %v2824, 0
        %v3189 = vsel %vm433, %v2825, 0
        %v3192 = vsel %vm433, %v2826, 0
        %v3195 = vsel %vm433, %v2827, 0
        %v3198 = vsel %vm433, %v2828, 0
        %v3201 = vsel %vm433, %v2829, 0
        %v3204 = vsel %vm433, %v2830, 0
        %v3207 = vsel %vm433, %v2831, 0
        %v3210 = vsel %vm433, %v2832, 0
        %v3213 = vsel %vm433, %v2833, 0
        %v3216 = vsel %vm433, %v2834, 0
        %v3219 = vsel %vm433, %v2835, 0
        %v3222 = vsel %vm433, %v2836, 0
        %v3225 = vsel %vm433, %v2837, 0
        %v3228 = vsel %vm433, %v2838, 0
        %v3231 = vsel %vm3089, %v2653, 0
        %3233 = vmatpush.bf16.msra.mxu0 0
        %3234 = vmatpush.bf16.msra.mxu0 0
        %3235 = vmatpush.bf16.msra.mxu0 0
        %3236 = vmatpush.bf16.msra.mxu0 0
        %3237 = vmatpush.bf16.msra.mxu0 0
        %3238 = vmatpush.bf16.msra.mxu0 0
        %3239 = vmatpush.bf16.msra.mxu0 0
        %3240 = vmatpush.bf16.msra.mxu0 %v3231
        %3241 = vmatmul.bf16.gmra.mxu0 %v3183
        %v3242 = vpop.f32.mrf.mxu0
        %v3243 = vadd.f32 %v3103, %v3242
        %v3244 = vpop.f32.mrf.mxu0
        %v3245 = vadd.f32 %v3105, %v3244
        %3246 = vmatmul.bf16.gmra.mxu0 %v3186
        %v3247 = vpop.f32.mrf.mxu0
        %v3248 = vadd.f32 %v3108, %v3247
        %v3249 = vpop.f32.mrf.mxu0
        %v3250 = vadd.f32 %v3110, %v3249
        %3251 = vmatmul.bf16.gmra.mxu0 %v3189
        %v3252 = vpop.f32.mrf.mxu0
        %v3253 = vadd.f32 %v3113, %v3252
        %v3254 = vpop.f32.mrf.mxu0
        %v3255 = vadd.f32 %v3115, %v3254
        %3256 = vmatmul.bf16.gmra.mxu0 %v3192
        %v3257 = vpop.f32.mrf.mxu0
        %v3258 = vadd.f32 %v3118, %v3257
        %v3259 = vpop.f32.mrf.mxu0
        %v3260 = vadd.f32 %v3120, %v3259
        %3261 = vmatmul.bf16.gmra.mxu0 %v3195
        %v3262 = vpop.f32.mrf.mxu0
        %v3263 = vadd.f32 %v3123, %v3262
        %v3264 = vpop.f32.mrf.mxu0
        %v3265 = vadd.f32 %v3125, %v3264
        %3266 = vmatmul.bf16.gmra.mxu0 %v3198
        %v3267 = vpop.f32.mrf.mxu0
        %v3268 = vadd.f32 %v3128, %v3267
        %v3269 = vpop.f32.mrf.mxu0
        %v3270 = vadd.f32 %v3130, %v3269
        %3271 = vmatmul.bf16.gmra.mxu0 %v3201
        %v3272 = vpop.f32.mrf.mxu0
        %v3273 = vadd.f32 %v3133, %v3272
        %v3274 = vpop.f32.mrf.mxu0
        %v3275 = vadd.f32 %v3135, %v3274
        %3276 = vmatmul.bf16.gmra.mxu0 %v3204
        %v3277 = vpop.f32.mrf.mxu0
        %v3278 = vadd.f32 %v3138, %v3277
        %v3279 = vpop.f32.mrf.mxu0
        %v3280 = vadd.f32 %v3140, %v3279
        %3281 = vmatmul.bf16.gmra.mxu0 %v3207
        %v3282 = vpop.f32.mrf.mxu0
        %v3283 = vadd.f32 %v3143, %v3282
        %v3284 = vpop.f32.mrf.mxu0
        %v3285 = vadd.f32 %v3145, %v3284
        %3286 = vmatmul.bf16.gmra.mxu0 %v3210
        %v3287 = vpop.f32.mrf.mxu0
        %v3288 = vadd.f32 %v3148, %v3287
        %v3289 = vpop.f32.mrf.mxu0
        %v3290 = vadd.f32 %v3150, %v3289
        %3291 = vmatmul.bf16.gmra.mxu0 %v3213
        %v3292 = vpop.f32.mrf.mxu0
        %v3293 = vadd.f32 %v3153, %v3292
        %v3294 = vpop.f32.mrf.mxu0
        %v3295 = vadd.f32 %v3155, %v3294
        %3296 = vmatmul.bf16.gmra.mxu0 %v3216
        %v3297 = vpop.f32.mrf.mxu0
        %v3298 = vadd.f32 %v3158, %v3297
        %v3299 = vpop.f32.mrf.mxu0
        %v3300 = vadd.f32 %v3160, %v3299
        %3301 = vmatmul.bf16.gmra.mxu0 %v3219
        %v3302 = vpop.f32.mrf.mxu0
        %v3303 = vadd.f32 %v3163, %v3302
        %v3304 = vpop.f32.mrf.mxu0
        %v3305 = vadd.f32 %v3165, %v3304
        %3306 = vmatmul.bf16.gmra.mxu0 %v3222
        %v3307 = vpop.f32.mrf.mxu0
        %v3308 = vadd.f32 %v3168, %v3307
        %v3309 = vpop.f32.mrf.mxu0
        %v3310 = vadd.f32 %v3170, %v3309
        %3311 = vmatmul.bf16.gmra.mxu0 %v3225
        %v3312 = vpop.f32.mrf.mxu0
        %v3313 = vadd.f32 %v3173, %v3312
        %v3314 = vpop.f32.mrf.mxu0
        %v3315 = vadd.f32 %v3175, %v3314
        %3316 = vmatmul.bf16.gmra.mxu0 %v3228
        %v3317 = vpop.f32.mrf.mxu0
        %v3318 = vadd.f32 %v3178, %v3317
        %v3319 = vpop.f32.mrf.mxu0
        %v3320 = vadd.f32 %v3180, %v3319
        %3321 = vdwg.mxu0
        %v3323 = vsel %vm433, %v2983, 0
        %v3326 = vsel %vm433, %v2984, 0
        %v3329 = vsel %vm433, %v2985, 0
        %v3332 = vsel %vm433, %v2986, 0
        %v3335 = vsel %vm433, %v2987, 0
        %v3338 = vsel %vm433, %v2988, 0
        %v3341 = vsel %vm433, %v2989, 0
        %v3344 = vsel %vm433, %v2990, 0
        %v3347 = vsel %vm433, %v2991, 0
        %v3350 = vsel %vm433, %v2992, 0
        %v3353 = vsel %vm433, %v2993, 0
        %v3356 = vsel %vm433, %v2994, 0
        %v3359 = vsel %vm433, %v2995, 0
        %v3362 = vsel %vm433, %v2996, 0
        %v3365 = vsel %vm433, %v2997, 0
        %v3368 = vsel %vm433, %v2998, 0
        %v3371 = vsel %vm3089, %v2655, 0
        %3373 = vmatpush.bf16.msra.mxu0 0
        %3374 = vmatpush.bf16.msra.mxu0 0
        %3375 = vmatpush.bf16.msra.mxu0 0
        %3376 = vmatpush.bf16.msra.mxu0 0
        %3377 = vmatpush.bf16.msra.mxu0 0
        %3378 = vmatpush.bf16.msra.mxu0 0
        %3379 = vmatpush.bf16.msra.mxu0 0
        %3380 = vmatpush.bf16.msra.mxu0 %v3371
        %3381 = vmatmul.bf16.gmra.mxu0 %v3323
        %v3382 = vpop.f32.mrf.mxu0
        %v3383 = vadd.f32 0.0, %v3382
        %v3384 = vpop.f32.mrf.mxu0
        %v3385 = vadd.f32 0.0, %v3384
        %3386 = vmatmul.bf16.gmra.mxu0 %v3326
        %v3387 = vpop.f32.mrf.mxu0
        %v3388 = vadd.f32 0.0, %v3387
        %v3389 = vpop.f32.mrf.mxu0
        %v3390 = vadd.f32 0.0, %v3389
        %3391 = vmatmul.bf16.gmra.mxu0 %v3329
        %v3392 = vpop.f32.mrf.mxu0
        %v3393 = vadd.f32 0.0, %v3392
        %v3394 = vpop.f32.mrf.mxu0
        %v3395 = vadd.f32 0.0, %v3394
        %3396 = vmatmul.bf16.gmra.mxu0 %v3332
        %v3397 = vpop.f32.mrf.mxu0
        %v3398 = vadd.f32 0.0, %v3397
        %v3399 = vpop.f32.mrf.mxu0
        %v3400 = vadd.f32 0.0, %v3399
        %3401 = vmatmul.bf16.gmra.mxu0 %v3335
        %v3402 = vpop.f32.mrf.mxu0
        %v3403 = vadd.f32 0.0, %v3402
        %v3404 = vpop.f32.mrf.mxu0
        %v3405 = vadd.f32 0.0, %v3404
        %3406 = vmatmul.bf16.gmra.mxu0 %v3338
        %v3407 = vpop.f32.mrf.mxu0
        %v3408 = vadd.f32 0.0, %v3407
        %v3409 = vpop.f32.mrf.mxu0
        %v3410 = vadd.f32 0.0, %v3409
        %3411 = vmatmul.bf16.gmra.mxu0 %v3341
        %v3412 = vpop.f32.mrf.mxu0
        %v3413 = vadd.f32 0.0, %v3412
        %v3414 = vpop.f32.mrf.mxu0
        %v3415 = vadd.f32 0.0, %v3414
        %3416 = vmatmul.bf16.gmra.mxu0 %v3344
        %v3417 = vpop.f32.mrf.mxu0
        %v3418 = vadd.f32 0.0, %v3417
        %v3419 = vpop.f32.mrf.mxu0
        %v3420 = vadd.f32 0.0, %v3419
        %3421 = vmatmul.bf16.gmra.mxu0 %v3347
        %v3422 = vpop.f32.mrf.mxu0
        %v3423 = vadd.f32 0.0, %v3422
        %v3424 = vpop.f32.mrf.mxu0
        %v3425 = vadd.f32 0.0, %v3424
        %3426 = vmatmul.bf16.gmra.mxu0 %v3350
        %v3427 = vpop.f32.mrf.mxu0
        %v3428 = vadd.f32 0.0, %v3427
        %v3429 = vpop.f32.mrf.mxu0
        %v3430 = vadd.f32 0.0, %v3429
        %3431 = vmatmul.bf16.gmra.mxu0 %v3353
        %v3432 = vpop.f32.mrf.mxu0
        %v3433 = vadd.f32 0.0, %v3432
        %v3434 = vpop.f32.mrf.mxu0
        %v3435 = vadd.f32 0.0, %v3434
        %3436 = vmatmul.bf16.gmra.mxu0 %v3356
        %v3437 = vpop.f32.mrf.mxu0
        %v3438 = vadd.f32 0.0, %v3437
        %v3439 = vpop.f32.mrf.mxu0
        %v3440 = vadd.f32 0.0, %v3439
        %3441 = vmatmul.bf16.gmra.mxu0 %v3359
        %v3442 = vpop.f32.mrf.mxu0
        %v3443 = vadd.f32 0.0, %v3442
        %v3444 = vpop.f32.mrf.mxu0
        %v3445 = vadd.f32 0.0, %v3444
        %3446 = vmatmul.bf16.gmra.mxu0 %v3362
        %v3447 = vpop.f32.mrf.mxu0
        %v3448 = vadd.f32 0.0, %v3447
        %v3449 = vpop.f32.mrf.mxu0
        %v3450 = vadd.f32 0.0, %v3449
        %3451 = vmatmul.bf16.gmra.mxu0 %v3365
        %v3452 = vpop.f32.mrf.mxu0
        %v3453 = vadd.f32 0.0, %v3452
        %v3454 = vpop.f32.mrf.mxu0
        %v3455 = vadd.f32 0.0, %v3454
        %3456 = vmatmul.bf16.gmra.mxu0 %v3368
        %v3457 = vpop.f32.mrf.mxu0
        %v3458 = vadd.f32 0.0, %v3457
        %v3459 = vpop.f32.mrf.mxu0
        %v3460 = vadd.f32 0.0, %v3459
        %3461 = vdwg.mxu0
        %v3462 = vadd.f32 %v3243, %v3383
        %v3463 = vadd.f32 %v3245, %v3385
        %v3464 = vadd.f32 %v3248, %v3388
        %v3465 = vadd.f32 %v3250, %v3390
        %v3466 = vadd.f32 %v3253, %v3393
        %v3467 = vadd.f32 %v3255, %v3395
        %v3468 = vadd.f32 %v3258, %v3398
        %v3469 = vadd.f32 %v3260, %v3400
        %v3470 = vadd.f32 %v3263, %v3403
        %v3471 = vadd.f32 %v3265, %v3405
        %v3472 = vadd.f32 %v3268, %v3408
        %v3473 = vadd.f32 %v3270, %v3410
        %v3474 = vadd.f32 %v3273, %v3413
        %v3475 = vadd.f32 %v3275, %v3415
        %v3476 = vadd.f32 %v3278, %v3418
        %v3477 = vadd.f32 %v3280, %v3420
        %v3478 = vadd.f32 %v3283, %v3423
        %v3479 = vadd.f32 %v3285, %v3425
        %v3480 = vadd.f32 %v3288, %v3428
        %v3481 = vadd.f32 %v3290, %v3430
        %v3482 = vadd.f32 %v3293, %v3433
        %v3483 = vadd.f32 %v3295, %v3435
        %v3484 = vadd.f32 %v3298, %v3438
        %v3485 = vadd.f32 %v3300, %v3440
        %v3486 = vadd.f32 %v3303, %v3443
        %v3487 = vadd.f32 %v3305, %v3445
        %v3488 = vadd.f32 %v3308, %v3448
        %v3489 = vadd.f32 %v3310, %v3450
        %v3490 = vadd.f32 %v3313, %v3453
        %v3491 = vadd.f32 %v3315, %v3455
        %v3492 = vadd.f32 %v3318, %v3458
        %v3493 = vadd.f32 %v3320, %v3460
        %v3495 = vsel %vm433, %v3009, 0
        %v3498 = vsel %vm3089, %v2656, 0
        %3500 = vmatpush.bf16.msra.mxu0 0
        %3501 = vmatpush.bf16.msra.mxu0 0
        %3502 = vmatpush.bf16.msra.mxu0 0
        %3503 = vmatpush.bf16.msra.mxu0 0
        %3504 = vmatpush.bf16.msra.mxu0 0
        %3505 = vmatpush.bf16.msra.mxu0 0
        %3506 = vmatpush.bf16.msra.mxu0 0
        %3507 = vmatpush.bf16.msra.mxu0 %v3498
        %3508 = vmatmul.bf16.gmra.mxu0 %v3186
        %v3509 = vpop.f32.mrf.mxu0
        %v3510 = vadd.f32 0.0, %v3509
        %v3511 = vpop.f32.mrf.mxu0
        %v3512 = vadd.f32 0.0, %v3511
        %3513 = vmatmul.bf16.gmra.mxu0 %v3189
        %v3514 = vpop.f32.mrf.mxu0
        %v3515 = vadd.f32 0.0, %v3514
        %v3516 = vpop.f32.mrf.mxu0
        %v3517 = vadd.f32 0.0, %v3516
        %3518 = vmatmul.bf16.gmra.mxu0 %v3192
        %v3519 = vpop.f32.mrf.mxu0
        %v3520 = vadd.f32 0.0, %v3519
        %v3521 = vpop.f32.mrf.mxu0
        %v3522 = vadd.f32 0.0, %v3521
        %3523 = vmatmul.bf16.gmra.mxu0 %v3195
        %v3524 = vpop.f32.mrf.mxu0
        %v3525 = vadd.f32 0.0, %v3524
        %v3526 = vpop.f32.mrf.mxu0
        %v3527 = vadd.f32 0.0, %v3526
        %3528 = vmatmul.bf16.gmra.mxu0 %v3198
        %v3529 = vpop.f32.mrf.mxu0
        %v3530 = vadd.f32 0.0, %v3529
        %v3531 = vpop.f32.mrf.mxu0
        %v3532 = vadd.f32 0.0, %v3531
        %3533 = vmatmul.bf16.gmra.mxu0 %v3201
        %v3534 = vpop.f32.mrf.mxu0
        %v3535 = vadd.f32 0.0, %v3534
        %v3536 = vpop.f32.mrf.mxu0
        %v3537 = vadd.f32 0.0, %v3536
        %3538 = vmatmul.bf16.gmra.mxu0 %v3204
        %v3539 = vpop.f32.mrf.mxu0
        %v3540 = vadd.f32 0.0, %v3539
        %v3541 = vpop.f32.mrf.mxu0
        %v3542 = vadd.f32 0.0, %v3541
        %3543 = vmatmul.bf16.gmra.mxu0 %v3207
        %v3544 = vpop.f32.mrf.mxu0
        %v3545 = vadd.f32 0.0, %v3544
        %v3546 = vpop.f32.mrf.mxu0
        %v3547 = vadd.f32 0.0, %v3546
        %3548 = vmatmul.bf16.gmra.mxu0 %v3210
        %v3549 = vpop.f32.mrf.mxu0
        %v3550 = vadd.f32 0.0, %v3549
        %v3551 = vpop.f32.mrf.mxu0
        %v3552 = vadd.f32 0.0, %v3551
        %3553 = vmatmul.bf16.gmra.mxu0 %v3213
        %v3554 = vpop.f32.mrf.mxu0
        %v3555 = vadd.f32 0.0, %v3554
        %v3556 = vpop.f32.mrf.mxu0
        %v3557 = vadd.f32 0.0, %v3556
        %3558 = vmatmul.bf16.gmra.mxu0 %v3216
        %v3559 = vpop.f32.mrf.mxu0
        %v3560 = vadd.f32 0.0, %v3559
        %v3561 = vpop.f32.mrf.mxu0
        %v3562 = vadd.f32 0.0, %v3561
        %3563 = vmatmul.bf16.gmra.mxu0 %v3219
        %v3564 = vpop.f32.mrf.mxu0
        %v3565 = vadd.f32 0.0, %v3564
        %v3566 = vpop.f32.mrf.mxu0
        %v3567 = vadd.f32 0.0, %v3566
        %3568 = vmatmul.bf16.gmra.mxu0 %v3222
        %v3569 = vpop.f32.mrf.mxu0
        %v3570 = vadd.f32 0.0, %v3569
        %v3571 = vpop.f32.mrf.mxu0
        %v3572 = vadd.f32 0.0, %v3571
        %3573 = vmatmul.bf16.gmra.mxu0 %v3225
        %v3574 = vpop.f32.mrf.mxu0
        %v3575 = vadd.f32 0.0, %v3574
        %v3576 = vpop.f32.mrf.mxu0
        %v3577 = vadd.f32 0.0, %v3576
        %3578 = vmatmul.bf16.gmra.mxu0 %v3228
        %v3579 = vpop.f32.mrf.mxu0
        %v3580 = vadd.f32 0.0, %v3579
        %v3581 = vpop.f32.mrf.mxu0
        %v3582 = vadd.f32 0.0, %v3581
        %3583 = vmatmul.bf16.gmra.mxu0 %v3495
        %v3584 = vpop.f32.mrf.mxu0
        %v3585 = vadd.f32 0.0, %v3584
        %v3586 = vpop.f32.mrf.mxu0
        %v3587 = vadd.f32 0.0, %v3586
        %3588 = vdwg.mxu0
        %v3589 = vadd.f32 %v3462, %v3510
        %v3590 = vadd.f32 %v3463, %v3512
        %v3591 = vadd.f32 %v3464, %v3515
        %v3592 = vadd.f32 %v3465, %v3517
        %v3593 = vadd.f32 %v3466, %v3520
        %v3594 = vadd.f32 %v3467, %v3522
        %v3595 = vadd.f32 %v3468, %v3525
        %v3596 = vadd.f32 %v3469, %v3527
        %v3597 = vadd.f32 %v3470, %v3530
        %v3598 = vadd.f32 %v3471, %v3532
        %v3599 = vadd.f32 %v3472, %v3535
        %v3600 = vadd.f32 %v3473, %v3537
        %v3601 = vadd.f32 %v3474, %v3540
        %v3602 = vadd.f32 %v3475, %v3542
        %v3603 = vadd.f32 %v3476, %v3545
        %v3604 = vadd.f32 %v3477, %v3547
        %v3605 = vadd.f32 %v3478, %v3550
        %v3606 = vadd.f32 %v3479, %v3552
        %v3607 = vadd.f32 %v3480, %v3555
        %v3608 = vadd.f32 %v3481, %v3557
        %v3609 = vadd.f32 %v3482, %v3560
        %v3610 = vadd.f32 %v3483, %v3562
        %v3611 = vadd.f32 %v3484, %v3565
        %v3612 = vadd.f32 %v3485, %v3567
        %v3613 = vadd.f32 %v3486, %v3570
        %v3614 = vadd.f32 %v3487, %v3572
        %v3615 = vadd.f32 %v3488, %v3575
        %v3616 = vadd.f32 %v3489, %v3577
        %v3617 = vadd.f32 %v3490, %v3580
        %v3618 = vadd.f32 %v3491, %v3582
        %v3619 = vadd.f32 %v3492, %v3585
        %v3620 = vadd.f32 %v3493, %v3587
        %v3622 = vsel %vm433, %v3010, 0
        %v3625 = vsel %vm3089, %v2657, 0
        %3627 = vmatpush.bf16.msra.mxu0 0
        %3628 = vmatpush.bf16.msra.mxu0 0
        %3629 = vmatpush.bf16.msra.mxu0 0
        %3630 = vmatpush.bf16.msra.mxu0 0
        %3631 = vmatpush.bf16.msra.mxu0 0
        %3632 = vmatpush.bf16.msra.mxu0 0
        %3633 = vmatpush.bf16.msra.mxu0 0
        %3634 = vmatpush.bf16.msra.mxu0 %v3625
        %3635 = vmatmul.bf16.gmra.mxu0 %v3045
        %v3636 = vpop.f32.mrf.mxu0
        %v3637 = vadd.f32 0.0, %v3636
        %v3638 = vpop.f32.mrf.mxu0
        %v3639 = vadd.f32 0.0, %v3638
        %3640 = vmatmul.bf16.gmra.mxu0 %v3048
        %v3641 = vpop.f32.mrf.mxu0
        %v3642 = vadd.f32 0.0, %v3641
        %v3643 = vpop.f32.mrf.mxu0
        %v3644 = vadd.f32 0.0, %v3643
        %3645 = vmatmul.bf16.gmra.mxu0 %v3051
        %v3646 = vpop.f32.mrf.mxu0
        %v3647 = vadd.f32 0.0, %v3646
        %v3648 = vpop.f32.mrf.mxu0
        %v3649 = vadd.f32 0.0, %v3648
        %3650 = vmatmul.bf16.gmra.mxu0 %v3054
        %v3651 = vpop.f32.mrf.mxu0
        %v3652 = vadd.f32 0.0, %v3651
        %v3653 = vpop.f32.mrf.mxu0
        %v3654 = vadd.f32 0.0, %v3653
        %3655 = vmatmul.bf16.gmra.mxu0 %v3057
        %v3656 = vpop.f32.mrf.mxu0
        %v3657 = vadd.f32 0.0, %v3656
        %v3658 = vpop.f32.mrf.mxu0
        %v3659 = vadd.f32 0.0, %v3658
        %3660 = vmatmul.bf16.gmra.mxu0 %v3060
        %v3661 = vpop.f32.mrf.mxu0
        %v3662 = vadd.f32 0.0, %v3661
        %v3663 = vpop.f32.mrf.mxu0
        %v3664 = vadd.f32 0.0, %v3663
        %3665 = vmatmul.bf16.gmra.mxu0 %v3063
        %v3666 = vpop.f32.mrf.mxu0
        %v3667 = vadd.f32 0.0, %v3666
        %v3668 = vpop.f32.mrf.mxu0
        %v3669 = vadd.f32 0.0, %v3668
        %3670 = vmatmul.bf16.gmra.mxu0 %v3066
        %v3671 = vpop.f32.mrf.mxu0
        %v3672 = vadd.f32 0.0, %v3671
        %v3673 = vpop.f32.mrf.mxu0
        %v3674 = vadd.f32 0.0, %v3673
        %3675 = vmatmul.bf16.gmra.mxu0 %v3069
        %v3676 = vpop.f32.mrf.mxu0
        %v3677 = vadd.f32 0.0, %v3676
        %v3678 = vpop.f32.mrf.mxu0
        %v3679 = vadd.f32 0.0, %v3678
        %3680 = vmatmul.bf16.gmra.mxu0 %v3072
        %v3681 = vpop.f32.mrf.mxu0
        %v3682 = vadd.f32 0.0, %v3681
        %v3683 = vpop.f32.mrf.mxu0
        %v3684 = vadd.f32 0.0, %v3683
        %3685 = vmatmul.bf16.gmra.mxu0 %v3075
        %v3686 = vpop.f32.mrf.mxu0
        %v3687 = vadd.f32 0.0, %v3686
        %v3688 = vpop.f32.mrf.mxu0
        %v3689 = vadd.f32 0.0, %v3688
        %3690 = vmatmul.bf16.gmra.mxu0 %v3078
        %v3691 = vpop.f32.mrf.mxu0
        %v3692 = vadd.f32 0.0, %v3691
        %v3693 = vpop.f32.mrf.mxu0
        %v3694 = vadd.f32 0.0, %v3693
        %3695 = vmatmul.bf16.gmra.mxu0 %v3081
        %v3696 = vpop.f32.mrf.mxu0
        %v3697 = vadd.f32 0.0, %v3696
        %v3698 = vpop.f32.mrf.mxu0
        %v3699 = vadd.f32 0.0, %v3698
        %3700 = vmatmul.bf16.gmra.mxu0 %v3084
        %v3701 = vpop.f32.mrf.mxu0
        %v3702 = vadd.f32 0.0, %v3701
        %v3703 = vpop.f32.mrf.mxu0
        %v3704 = vadd.f32 0.0, %v3703
        %3705 = vmatmul.bf16.gmra.mxu0 %v3087
        %v3706 = vpop.f32.mrf.mxu0
        %v3707 = vadd.f32 0.0, %v3706
        %v3708 = vpop.f32.mrf.mxu0
        %v3709 = vadd.f32 0.0, %v3708
        %3710 = vmatmul.bf16.gmra.mxu0 %v3622
        %v3711 = vpop.f32.mrf.mxu0
        %v3712 = vadd.f32 0.0, %v3711
        %v3713 = vpop.f32.mrf.mxu0
        %v3714 = vadd.f32 0.0, %v3713
        %3715 = vdwg.mxu0
        %v3716 = vadd.f32 %v3589, %v3637
        %v3717 = vadd.f32 %v3590, %v3639
        %v3718 = vadd.f32 %v3591, %v3642
        %v3719 = vadd.f32 %v3592, %v3644
        %v3720 = vadd.f32 %v3593, %v3647
        %v3721 = vadd.f32 %v3594, %v3649
        %v3722 = vadd.f32 %v3595, %v3652
        %v3723 = vadd.f32 %v3596, %v3654
        %v3724 = vadd.f32 %v3597, %v3657
        %v3725 = vadd.f32 %v3598, %v3659
        %v3726 = vadd.f32 %v3599, %v3662
        %v3727 = vadd.f32 %v3600, %v3664
        %v3728 = vadd.f32 %v3601, %v3667
        %v3729 = vadd.f32 %v3602, %v3669
        %v3730 = vadd.f32 %v3603, %v3672
        %v3731 = vadd.f32 %v3604, %v3674
        %v3732 = vadd.f32 %v3605, %v3677
        %v3733 = vadd.f32 %v3606, %v3679
        %v3734 = vadd.f32 %v3607, %v3682
        %v3735 = vadd.f32 %v3608, %v3684
        %v3736 = vadd.f32 %v3609, %v3687
        %v3737 = vadd.f32 %v3610, %v3689
        %v3738 = vadd.f32 %v3611, %v3692
        %v3739 = vadd.f32 %v3612, %v3694
        %v3740 = vadd.f32 %v3613, %v3697
        %v3741 = vadd.f32 %v3614, %v3699
        %v3742 = vadd.f32 %v3615, %v3702
        %v3743 = vadd.f32 %v3616, %v3704
        %v3744 = vadd.f32 %v3617, %v3707
        %v3745 = vadd.f32 %v3618, %v3709
        %v3746 = vadd.f32 %v3619, %v3712
        %v3747 = vadd.f32 %v3620, %v3714
        %v3749 = vsel %vm433, %v3019, 0
        %v3752 = vsel %vm3089, %v2658, 0
        %3754 = vmatpush.bf16.msra.mxu0 0
        %3755 = vmatpush.bf16.msra.mxu0 0
        %3756 = vmatpush.bf16.msra.mxu0 0
        %3757 = vmatpush.bf16.msra.mxu0 0
        %3758 = vmatpush.bf16.msra.mxu0 0
        %3759 = vmatpush.bf16.msra.mxu0 0
        %3760 = vmatpush.bf16.msra.mxu0 0
        %3761 = vmatpush.bf16.msra.mxu0 %v3752
        %3762 = vmatmul.bf16.gmra.mxu0 %v3326
        %v3763 = vpop.f32.mrf.mxu0
        %v3764 = vadd.f32 0.0, %v3763
        %v3765 = vpop.f32.mrf.mxu0
        %v3766 = vadd.f32 0.0, %v3765
        %3767 = vmatmul.bf16.gmra.mxu0 %v3329
        %v3768 = vpop.f32.mrf.mxu0
        %v3769 = vadd.f32 0.0, %v3768
        %v3770 = vpop.f32.mrf.mxu0
        %v3771 = vadd.f32 0.0, %v3770
        %3772 = vmatmul.bf16.gmra.mxu0 %v3332
        %v3773 = vpop.f32.mrf.mxu0
        %v3774 = vadd.f32 0.0, %v3773
        %v3775 = vpop.f32.mrf.mxu0
        %v3776 = vadd.f32 0.0, %v3775
        %3777 = vmatmul.bf16.gmra.mxu0 %v3335
        %v3778 = vpop.f32.mrf.mxu0
        %v3779 = vadd.f32 0.0, %v3778
        %v3780 = vpop.f32.mrf.mxu0
        %v3781 = vadd.f32 0.0, %v3780
        %3782 = vmatmul.bf16.gmra.mxu0 %v3338
        %v3783 = vpop.f32.mrf.mxu0
        %v3784 = vadd.f32 0.0, %v3783
        %v3785 = vpop.f32.mrf.mxu0
        %v3786 = vadd.f32 0.0, %v3785
        %3787 = vmatmul.bf16.gmra.mxu0 %v3341
        %v3788 = vpop.f32.mrf.mxu0
        %v3789 = vadd.f32 0.0, %v3788
        %v3790 = vpop.f32.mrf.mxu0
        %v3791 = vadd.f32 0.0, %v3790
        %3792 = vmatmul.bf16.gmra.mxu0 %v3344
        %v3793 = vpop.f32.mrf.mxu0
        %v3794 = vadd.f32 0.0, %v3793
        %v3795 = vpop.f32.mrf.mxu0
        %v3796 = vadd.f32 0.0, %v3795
        %3797 = vmatmul.bf16.gmra.mxu0 %v3347
        %v3798 = vpop.f32.mrf.mxu0
        %v3799 = vadd.f32 0.0, %v3798
        %v3800 = vpop.f32.mrf.mxu0
        %v3801 = vadd.f32 0.0, %v3800
        %3802 = vmatmul.bf16.gmra.mxu0 %v3350
        %v3803 = vpop.f32.mrf.mxu0
        %v3804 = vadd.f32 0.0, %v3803
        %v3805 = vpop.f32.mrf.mxu0
        %v3806 = vadd.f32 0.0, %v3805
        %3807 = vmatmul.bf16.gmra.mxu0 %v3353
        %v3808 = vpop.f32.mrf.mxu0
        %v3809 = vadd.f32 0.0, %v3808
        %v3810 = vpop.f32.mrf.mxu0
        %v3811 = vadd.f32 0.0, %v3810
        %3812 = vmatmul.bf16.gmra.mxu0 %v3356
        %v3813 = vpop.f32.mrf.mxu0
        %v3814 = vadd.f32 0.0, %v3813
        %v3815 = vpop.f32.mrf.mxu0
        %v3816 = vadd.f32 0.0, %v3815
        %3817 = vmatmul.bf16.gmra.mxu0 %v3359
        %v3818 = vpop.f32.mrf.mxu0
        %v3819 = vadd.f32 0.0, %v3818
        %v3820 = vpop.f32.mrf.mxu0
        %v3821 = vadd.f32 0.0, %v3820
        %3822 = vmatmul.bf16.gmra.mxu0 %v3362
        %v3823 = vpop.f32.mrf.mxu0
        %v3824 = vadd.f32 0.0, %v3823
        %v3825 = vpop.f32.mrf.mxu0
        %v3826 = vadd.f32 0.0, %v3825
        %3827 = vmatmul.bf16.gmra.mxu0 %v3365
        %v3828 = vpop.f32.mrf.mxu0
        %v3829 = vadd.f32 0.0, %v3828
        %v3830 = vpop.f32.mrf.mxu0
        %v3831 = vadd.f32 0.0, %v3830
        %3832 = vmatmul.bf16.gmra.mxu0 %v3368
        %v3833 = vpop.f32.mrf.mxu0
        %v3834 = vadd.f32 0.0, %v3833
        %v3835 = vpop.f32.mrf.mxu0
        %v3836 = vadd.f32 0.0, %v3835
        %3837 = vmatmul.bf16.gmra.mxu0 %v3749
        %v3838 = vpop.f32.mrf.mxu0
        %v3839 = vadd.f32 0.0, %v3838
        %v3840 = vpop.f32.mrf.mxu0
        %v3841 = vadd.f32 0.0, %v3840
        %3842 = vdwg.mxu0
        %v3843 = vadd.f32 %v3716, %v3764
        %v3844 = vadd.f32 %v3717, %v3766
        %v3845 = vadd.f32 %v3718, %v3769
        %v3846 = vadd.f32 %v3719, %v3771
        %v3847 = vadd.f32 %v3720, %v3774
        %v3848 = vadd.f32 %v3721, %v3776
        %v3849 = vadd.f32 %v3722, %v3779
        %v3850 = vadd.f32 %v3723, %v3781
        %v3851 = vadd.f32 %v3724, %v3784
        %v3852 = vadd.f32 %v3725, %v3786
        %v3853 = vadd.f32 %v3726, %v3789
        %v3854 = vadd.f32 %v3727, %v3791
        %v3855 = vadd.f32 %v3728, %v3794
        %v3856 = vadd.f32 %v3729, %v3796
        %v3857 = vadd.f32 %v3730, %v3799
        %v3858 = vadd.f32 %v3731, %v3801
        %v3859 = vadd.f32 %v3732, %v3804
        %v3860 = vadd.f32 %v3733, %v3806
        %v3861 = vadd.f32 %v3734, %v3809
        %v3862 = vadd.f32 %v3735, %v3811
        %v3863 = vadd.f32 %v3736, %v3814
        %v3864 = vadd.f32 %v3737, %v3816
        %v3865 = vadd.f32 %v3738, %v3819
        %v3866 = vadd.f32 %v3739, %v3821
        %v3867 = vadd.f32 %v3740, %v3824
        %v3868 = vadd.f32 %v3741, %v3826
        %v3869 = vadd.f32 %v3742, %v3829
        %v3870 = vadd.f32 %v3743, %v3831
        %v3871 = vadd.f32 %v3744, %v3834
        %v3872 = vadd.f32 %v3745, %v3836
        %v3873 = vadd.f32 %v3746, %v3839
        %v3874 = vadd.f32 %v3747, %v3841
        %v3876 = vsel %vm433, %v3030, 0
        %v3879 = vsel %vm3089, %v2659, 0
        %3881 = vmatpush.bf16.msra.mxu0 0
        %3882 = vmatpush.bf16.msra.mxu0 0
        %3883 = vmatpush.bf16.msra.mxu0 0
        %3884 = vmatpush.bf16.msra.mxu0 0
        %3885 = vmatpush.bf16.msra.mxu0 0
        %3886 = vmatpush.bf16.msra.mxu0 0
        %3887 = vmatpush.bf16.msra.mxu0 0
        %3888 = vmatpush.bf16.msra.mxu0 %v3879
        %3889 = vmatmul.bf16.gmra.mxu0 %v3189
        %v3890 = vpop.f32.mrf.mxu0
        %v3891 = vadd.f32 0.0, %v3890
        %v3892 = vpop.f32.mrf.mxu0
        %v3893 = vadd.f32 0.0, %v3892
        %3894 = vmatmul.bf16.gmra.mxu0 %v3192
        %v3895 = vpop.f32.mrf.mxu0
        %v3896 = vadd.f32 0.0, %v3895
        %v3897 = vpop.f32.mrf.mxu0
        %v3898 = vadd.f32 0.0, %v3897
        %3899 = vmatmul.bf16.gmra.mxu0 %v3195
        %v3900 = vpop.f32.mrf.mxu0
        %v3901 = vadd.f32 0.0, %v3900
        %v3902 = vpop.f32.mrf.mxu0
        %v3903 = vadd.f32 0.0, %v3902
        %3904 = vmatmul.bf16.gmra.mxu0 %v3198
        %v3905 = vpop.f32.mrf.mxu0
        %v3906 = vadd.f32 0.0, %v3905
        %v3907 = vpop.f32.mrf.mxu0
        %v3908 = vadd.f32 0.0, %v3907
        %3909 = vmatmul.bf16.gmra.mxu0 %v3201
        %v3910 = vpop.f32.mrf.mxu0
        %v3911 = vadd.f32 0.0, %v3910
        %v3912 = vpop.f32.mrf.mxu0
        %v3913 = vadd.f32 0.0, %v3912
        %3914 = vmatmul.bf16.gmra.mxu0 %v3204
        %v3915 = vpop.f32.mrf.mxu0
        %v3916 = vadd.f32 0.0, %v3915
        %v3917 = vpop.f32.mrf.mxu0
        %v3918 = vadd.f32 0.0, %v3917
        %3919 = vmatmul.bf16.gmra.mxu0 %v3207
        %v3920 = vpop.f32.mrf.mxu0
        %v3921 = vadd.f32 0.0, %v3920
        %v3922 = vpop.f32.mrf.mxu0
        %v3923 = vadd.f32 0.0, %v3922
        %3924 = vmatmul.bf16.gmra.mxu0 %v3210
        %v3925 = vpop.f32.mrf.mxu0
        %v3926 = vadd.f32 0.0, %v3925
        %v3927 = vpop.f32.mrf.mxu0
        %v3928 = vadd.f32 0.0, %v3927
        %3929 = vmatmul.bf16.gmra.mxu0 %v3213
        %v3930 = vpop.f32.mrf.mxu0
        %v3931 = vadd.f32 0.0, %v3930
        %v3932 = vpop.f32.mrf.mxu0
        %v3933 = vadd.f32 0.0, %v3932
        %3934 = vmatmul.bf16.gmra.mxu0 %v3216
        %v3935 = vpop.f32.mrf.mxu0
        %v3936 = vadd.f32 0.0, %v3935
        %v3937 = vpop.f32.mrf.mxu0
        %v3938 = vadd.f32 0.0, %v3937
        %3939 = vmatmul.bf16.gmra.mxu0 %v3219
        %v3940 = vpop.f32.mrf.mxu0
        %v3941 = vadd.f32 0.0, %v3940
        %v3942 = vpop.f32.mrf.mxu0
        %v3943 = vadd.f32 0.0, %v3942
        %3944 = vmatmul.bf16.gmra.mxu0 %v3222
        %v3945 = vpop.f32.mrf.mxu0
        %v3946 = vadd.f32 0.0, %v3945
        %v3947 = vpop.f32.mrf.mxu0
        %v3948 = vadd.f32 0.0, %v3947
        %3949 = vmatmul.bf16.gmra.mxu0 %v3225
        %v3950 = vpop.f32.mrf.mxu0
        %v3951 = vadd.f32 0.0, %v3950
        %v3952 = vpop.f32.mrf.mxu0
        %v3953 = vadd.f32 0.0, %v3952
        %3954 = vmatmul.bf16.gmra.mxu0 %v3228
        %v3955 = vpop.f32.mrf.mxu0
        %v3956 = vadd.f32 0.0, %v3955
        %v3957 = vpop.f32.mrf.mxu0
        %v3958 = vadd.f32 0.0, %v3957
        %3959 = vmatmul.bf16.gmra.mxu0 %v3495
        %v3960 = vpop.f32.mrf.mxu0
        %v3961 = vadd.f32 0.0, %v3960
        %v3962 = vpop.f32.mrf.mxu0
        %v3963 = vadd.f32 0.0, %v3962
        %3964 = vmatmul.bf16.gmra.mxu0 %v3876
        %v3965 = vpop.f32.mrf.mxu0
        %v3966 = vadd.f32 0.0, %v3965
        %v3967 = vpop.f32.mrf.mxu0
        %v3968 = vadd.f32 0.0, %v3967
        %3969 = vdwg.mxu0
        %v3970 = vadd.f32 %v3843, %v3891
        %v3971 = vadd.f32 %v3844, %v3893
        %v3972 = vadd.f32 %v3845, %v3896
        %v3973 = vadd.f32 %v3846, %v3898
        %v3974 = vadd.f32 %v3847, %v3901
        %v3975 = vadd.f32 %v3848, %v3903
        %v3976 = vadd.f32 %v3849, %v3906
        %v3977 = vadd.f32 %v3850, %v3908
        %v3978 = vadd.f32 %v3851, %v3911
        %v3979 = vadd.f32 %v3852, %v3913
        %v3980 = vadd.f32 %v3853, %v3916
        %v3981 = vadd.f32 %v3854, %v3918
        %v3982 = vadd.f32 %v3855, %v3921
        %v3983 = vadd.f32 %v3856, %v3923
        %v3984 = vadd.f32 %v3857, %v3926
        %v3985 = vadd.f32 %v3858, %v3928
        %v3986 = vadd.f32 %v3859, %v3931
        %v3987 = vadd.f32 %v3860, %v3933
        %v3988 = vadd.f32 %v3861, %v3936
        %v3989 = vadd.f32 %v3862, %v3938
        %v3990 = vadd.f32 %v3863, %v3941
        %v3991 = vadd.f32 %v3864, %v3943
        %v3992 = vadd.f32 %v3865, %v3946
        %v3993 = vadd.f32 %v3866, %v3948
        %v3994 = vadd.f32 %v3867, %v3951
        %v3995 = vadd.f32 %v3868, %v3953
        %v3996 = vadd.f32 %v3869, %v3956
        %v3997 = vadd.f32 %v3870, %v3958
        %v3998 = vadd.f32 %v3871, %v3961
        %v3999 = vadd.f32 %v3872, %v3963
        %v4000 = vadd.f32 %v3873, %v3966
        %v4001 = vadd.f32 %v3874, %v3968
        %v4003 = vsel %vm433, %v3031, 0
        %v4006 = vsel %vm3089, %v2660, 0
        %4008 = vmatpush.bf16.msra.mxu0 0
        %4009 = vmatpush.bf16.msra.mxu0 0
        %4010 = vmatpush.bf16.msra.mxu0 0
        %4011 = vmatpush.bf16.msra.mxu0 0
        %4012 = vmatpush.bf16.msra.mxu0 0
        %4013 = vmatpush.bf16.msra.mxu0 0
        %4014 = vmatpush.bf16.msra.mxu0 0
        %4015 = vmatpush.bf16.msra.mxu0 %v4006
        %4016 = vmatmul.bf16.gmra.mxu0 %v3048
        %v4017 = vpop.f32.mrf.mxu0
        %v4018 = vadd.f32 0.0, %v4017
        %v4019 = vpop.f32.mrf.mxu0
        %v4020 = vadd.f32 0.0, %v4019
        %4021 = vmatmul.bf16.gmra.mxu0 %v3051
        %v4022 = vpop.f32.mrf.mxu0
        %v4023 = vadd.f32 0.0, %v4022
        %v4024 = vpop.f32.mrf.mxu0
        %v4025 = vadd.f32 0.0, %v4024
        %4026 = vmatmul.bf16.gmra.mxu0 %v3054
        %v4027 = vpop.f32.mrf.mxu0
        %v4028 = vadd.f32 0.0, %v4027
        %v4029 = vpop.f32.mrf.mxu0
        %v4030 = vadd.f32 0.0, %v4029
        %4031 = vmatmul.bf16.gmra.mxu0 %v3057
        %v4032 = vpop.f32.mrf.mxu0
        %v4033 = vadd.f32 0.0, %v4032
        %v4034 = vpop.f32.mrf.mxu0
        %v4035 = vadd.f32 0.0, %v4034
        %4036 = vmatmul.bf16.gmra.mxu0 %v3060
        %v4037 = vpop.f32.mrf.mxu0
        %v4038 = vadd.f32 0.0, %v4037
        %v4039 = vpop.f32.mrf.mxu0
        %v4040 = vadd.f32 0.0, %v4039
        %4041 = vmatmul.bf16.gmra.mxu0 %v3063
        %v4042 = vpop.f32.mrf.mxu0
        %v4043 = vadd.f32 0.0, %v4042
        %v4044 = vpop.f32.mrf.mxu0
        %v4045 = vadd.f32 0.0, %v4044
        %4046 = vmatmul.bf16.gmra.mxu0 %v3066
        %v4047 = vpop.f32.mrf.mxu0
        %v4048 = vadd.f32 0.0, %v4047
        %v4049 = vpop.f32.mrf.mxu0
        %v4050 = vadd.f32 0.0, %v4049
        %4051 = vmatmul.bf16.gmra.mxu0 %v3069
        %v4052 = vpop.f32.mrf.mxu0
        %v4053 = vadd.f32 0.0, %v4052
        %v4054 = vpop.f32.mrf.mxu0
        %v4055 = vadd.f32 0.0, %v4054
        %4056 = vmatmul.bf16.gmra.mxu0 %v3072
        %v4057 = vpop.f32.mrf.mxu0
        %v4058 = vadd.f32 0.0, %v4057
        %v4059 = vpop.f32.mrf.mxu0
        %v4060 = vadd.f32 0.0, %v4059
        %4061 = vmatmul.bf16.gmra.mxu0 %v3075
        %v4062 = vpop.f32.mrf.mxu0
        %v4063 = vadd.f32 0.0, %v4062
        %v4064 = vpop.f32.mrf.mxu0
        %v4065 = vadd.f32 0.0, %v4064
        %4066 = vmatmul.bf16.gmra.mxu0 %v3078
        %v4067 = vpop.f32.mrf.mxu0
        %v4068 = vadd.f32 0.0, %v4067
        %v4069 = vpop.f32.mrf.mxu0
        %v4070 = vadd.f32 0.0, %v4069
        %4071 = vmatmul.bf16.gmra.mxu0 %v3081
        %v4072 = vpop.f32.mrf.mxu0
        %v4073 = vadd.f32 0.0, %v4072
        %v4074 = vpop.f32.mrf.mxu0
        %v4075 = vadd.f32 0.0, %v4074
        %4076 = vmatmul.bf16.gmra.mxu0 %v3084
        %v4077 = vpop.f32.mrf.mxu0
        %v4078 = vadd.f32 0.0, %v4077
        %v4079 = vpop.f32.mrf.mxu0
        %v4080 = vadd.f32 0.0, %v4079
        %4081 = vmatmul.bf16.gmra.mxu0 %v3087
        %v4082 = vpop.f32.mrf.mxu0
        %v4083 = vadd.f32 0.0, %v4082
        %v4084 = vpop.f32.mrf.mxu0
        %v4085 = vadd.f32 0.0, %v4084
        %4086 = vmatmul.bf16.gmra.mxu0 %v3622
        %v4087 = vpop.f32.mrf.mxu0
        %v4088 = vadd.f32 0.0, %v4087
        %v4089 = vpop.f32.mrf.mxu0
        %v4090 = vadd.f32 0.0, %v4089
        %4091 = vmatmul.bf16.gmra.mxu0 %v4003
        %v4092 = vpop.f32.mrf.mxu0
        %v4093 = vadd.f32 0.0, %v4092
        %v4094 = vpop.f32.mrf.mxu0
        %v4095 = vadd.f32 0.0, %v4094
        %4096 = vdwg.mxu0
        %v4097 = vadd.f32 %v3970, %v4018
        %v4098 = vadd.f32 %v3971, %v4020
        %v4099 = vadd.f32 %v3972, %v4023
        %v4100 = vadd.f32 %v3973, %v4025
        %v4101 = vadd.f32 %v3974, %v4028
        %v4102 = vadd.f32 %v3975, %v4030
        %v4103 = vadd.f32 %v3976, %v4033
        %v4104 = vadd.f32 %v3977, %v4035
        %v4105 = vadd.f32 %v3978, %v4038
        %v4106 = vadd.f32 %v3979, %v4040
        %v4107 = vadd.f32 %v3980, %v4043
        %v4108 = vadd.f32 %v3981, %v4045
        %v4109 = vadd.f32 %v3982, %v4048
        %v4110 = vadd.f32 %v3983, %v4050
        %v4111 = vadd.f32 %v3984, %v4053
        %v4112 = vadd.f32 %v3985, %v4055
        %v4113 = vadd.f32 %v3986, %v4058
        %v4114 = vadd.f32 %v3987, %v4060
        %v4115 = vadd.f32 %v3988, %v4063
        %v4116 = vadd.f32 %v3989, %v4065
        %v4117 = vadd.f32 %v3990, %v4068
        %v4118 = vadd.f32 %v3991, %v4070
        %v4119 = vadd.f32 %v3992, %v4073
        %v4120 = vadd.f32 %v3993, %v4075
        %v4121 = vadd.f32 %v3994, %v4078
        %v4122 = vadd.f32 %v3995, %v4080
        %v4123 = vadd.f32 %v3996, %v4083
        %v4124 = vadd.f32 %v3997, %v4085
        %v4125 = vadd.f32 %v3998, %v4088
        %v4126 = vadd.f32 %v3999, %v4090
        %v4127 = vadd.f32 %v4000, %v4093
        %v4128 = vadd.f32 %v4001, %v4095
        %v4130 = vsel %vm433, %v3040, 0
        %v4133 = vsel %vm3089, %v2661, 0
        %4135 = vmatpush.bf16.msra.mxu0 0
        %4136 = vmatpush.bf16.msra.mxu0 0
        %4137 = vmatpush.bf16.msra.mxu0 0
        %4138 = vmatpush.bf16.msra.mxu0 0
        %4139 = vmatpush.bf16.msra.mxu0 0
        %4140 = vmatpush.bf16.msra.mxu0 0
        %4141 = vmatpush.bf16.msra.mxu0 0
        %4142 = vmatpush.bf16.msra.mxu0 %v4133
        %4143 = vmatmul.bf16.gmra.mxu0 %v3329
        %v4144 = vpop.f32.mrf.mxu0
        %v4145 = vadd.f32 0.0, %v4144
        %v4146 = vpop.f32.mrf.mxu0
        %v4147 = vadd.f32 0.0, %v4146
        %4148 = vmatmul.bf16.gmra.mxu0 %v3332
        %v4149 = vpop.f32.mrf.mxu0
        %v4150 = vadd.f32 0.0, %v4149
        %v4151 = vpop.f32.mrf.mxu0
        %v4152 = vadd.f32 0.0, %v4151
        %4153 = vmatmul.bf16.gmra.mxu0 %v3335
        %v4154 = vpop.f32.mrf.mxu0
        %v4155 = vadd.f32 0.0, %v4154
        %v4156 = vpop.f32.mrf.mxu0
        %v4157 = vadd.f32 0.0, %v4156
        %4158 = vmatmul.bf16.gmra.mxu0 %v3338
        %v4159 = vpop.f32.mrf.mxu0
        %v4160 = vadd.f32 0.0, %v4159
        %v4161 = vpop.f32.mrf.mxu0
        %v4162 = vadd.f32 0.0, %v4161
        %4163 = vmatmul.bf16.gmra.mxu0 %v3341
        %v4164 = vpop.f32.mrf.mxu0
        %v4165 = vadd.f32 0.0, %v4164
        %v4166 = vpop.f32.mrf.mxu0
        %v4167 = vadd.f32 0.0, %v4166
        %4168 = vmatmul.bf16.gmra.mxu0 %v3344
        %v4169 = vpop.f32.mrf.mxu0
        %v4170 = vadd.f32 0.0, %v4169
        %v4171 = vpop.f32.mrf.mxu0
        %v4172 = vadd.f32 0.0, %v4171
        %4173 = vmatmul.bf16.gmra.mxu0 %v3347
        %v4174 = vpop.f32.mrf.mxu0
        %v4175 = vadd.f32 0.0, %v4174
        %v4176 = vpop.f32.mrf.mxu0
        %v4177 = vadd.f32 0.0, %v4176
        %4178 = vmatmul.bf16.gmra.mxu0 %v3350
        %v4179 = vpop.f32.mrf.mxu0
        %v4180 = vadd.f32 0.0, %v4179
        %v4181 = vpop.f32.mrf.mxu0
        %v4182 = vadd.f32 0.0, %v4181
        %4183 = vmatmul.bf16.gmra.mxu0 %v3353
        %v4184 = vpop.f32.mrf.mxu0
        %v4185 = vadd.f32 0.0, %v4184
        %v4186 = vpop.f32.mrf.mxu0
        %v4187 = vadd.f32 0.0, %v4186
        %4188 = vmatmul.bf16.gmra.mxu0 %v3356
        %v4189 = vpop.f32.mrf.mxu0
        %v4190 = vadd.f32 0.0, %v4189
        %v4191 = vpop.f32.mrf.mxu0
        %v4192 = vadd.f32 0.0, %v4191
        %4193 = vmatmul.bf16.gmra.mxu0 %v3359
        %v4194 = vpop.f32.mrf.mxu0
        %v4195 = vadd.f32 0.0, %v4194
        %v4196 = vpop.f32.mrf.mxu0
        %v4197 = vadd.f32 0.0, %v4196
        %4198 = vmatmul.bf16.gmra.mxu0 %v3362
        %v4199 = vpop.f32.mrf.mxu0
        %v4200 = vadd.f32 0.0, %v4199
        %v4201 = vpop.f32.mrf.mxu0
        %v4202 = vadd.f32 0.0, %v4201
        %4203 = vmatmul.bf16.gmra.mxu0 %v3365
        %v4204 = vpop.f32.mrf.mxu0
        %v4205 = vadd.f32 0.0, %v4204
        %v4206 = vpop.f32.mrf.mxu0
        %v4207 = vadd.f32 0.0, %v4206
        %4208 = vmatmul.bf16.gmra.mxu0 %v3368
        %v4209 = vpop.f32.mrf.mxu0
        %v4210 = vadd.f32 0.0, %v4209
        %v4211 = vpop.f32.mrf.mxu0
        %v4212 = vadd.f32 0.0, %v4211
        %4213 = vmatmul.bf16.gmra.mxu0 %v3749
        %v4214 = vpop.f32.mrf.mxu0
        %v4215 = vadd.f32 0.0, %v4214
        %v4216 = vpop.f32.mrf.mxu0
        %v4217 = vadd.f32 0.0, %v4216
        %4218 = vmatmul.bf16.gmra.mxu0 %v4130
        %v4219 = vpop.f32.mrf.mxu0
        %v4220 = vadd.f32 0.0, %v4219
        %v4221 = vpop.f32.mrf.mxu0
        %v4222 = vadd.f32 0.0, %v4221
        %4223 = vdwg.mxu0
        %v4224 = vadd.f32 %v4097, %v4145
        %v4225 = vadd.f32 %v4098, %v4147
        %v4226 = vadd.f32 %v4099, %v4150
        %v4227 = vadd.f32 %v4100, %v4152
        %v4228 = vadd.f32 %v4101, %v4155
        %v4229 = vadd.f32 %v4102, %v4157
        %v4230 = vadd.f32 %v4103, %v4160
        %v4231 = vadd.f32 %v4104, %v4162
        %v4232 = vadd.f32 %v4105, %v4165
        %v4233 = vadd.f32 %v4106, %v4167
        %v4234 = vadd.f32 %v4107, %v4170
        %v4235 = vadd.f32 %v4108, %v4172
        %v4236 = vadd.f32 %v4109, %v4175
        %v4237 = vadd.f32 %v4110, %v4177
        %v4238 = vadd.f32 %v4111, %v4180
        %v4239 = vadd.f32 %v4112, %v4182
        %v4240 = vadd.f32 %v4113, %v4185
        %v4241 = vadd.f32 %v4114, %v4187
        %v4242 = vadd.f32 %v4115, %v4190
        %v4243 = vadd.f32 %v4116, %v4192
        %v4244 = vadd.f32 %v4117, %v4195
        %v4245 = vadd.f32 %v4118, %v4197
        %v4246 = vadd.f32 %v4119, %v4200
        %v4247 = vadd.f32 %v4120, %v4202
        %v4248 = vadd.f32 %v4121, %v4205
        %v4249 = vadd.f32 %v4122, %v4207
        %v4250 = vadd.f32 %v4123, %v4210
        %v4251 = vadd.f32 %v4124, %v4212
        %v4252 = vadd.f32 %v4125, %v4215
        %v4253 = vadd.f32 %v4126, %v4217
        %v4254 = vadd.f32 %v4127, %v4220
        %v4255 = vadd.f32 %v4128, %v4222
        %v4257 = vperm.slane %v2662, 0
        %v4259 = vadd.f32 %v4224, %v4257
        %v4260 = vadd.f32 %v4225, %v4257
        %v4261 = vadd.f32 %v4226, %v4257
        %v4262 = vadd.f32 %v4227, %v4257
        %v4263 = vadd.f32 %v4228, %v4257
        %v4264 = vadd.f32 %v4229, %v4257
        %v4265 = vadd.f32 %v4230, %v4257
        %v4266 = vadd.f32 %v4231, %v4257
        %v4267 = vadd.f32 %v4232, %v4257
        %v4268 = vadd.f32 %v4233, %v4257
        %v4269 = vadd.f32 %v4234, %v4257
        %v4270 = vadd.f32 %v4235, %v4257
        %v4271 = vadd.f32 %v4236, %v4257
        %v4272 = vadd.f32 %v4237, %v4257
        %v4273 = vadd.f32 %v4238, %v4257
        %v4274 = vadd.f32 %v4239, %v4257
        %v4275 = vadd.f32 %v4240, %v4257
        %v4276 = vadd.f32 %v4241, %v4257
        %v4277 = vadd.f32 %v4242, %v4257
        %v4278 = vadd.f32 %v4243, %v4257
        %v4279 = vadd.f32 %v4244, %v4257
        %v4280 = vadd.f32 %v4245, %v4257
        %v4281 = vadd.f32 %v4246, %v4257
        %v4282 = vadd.f32 %v4247, %v4257
        %v4283 = vadd.f32 %v4248, %v4257
        %v4284 = vadd.f32 %v4249, %v4257
        %v4285 = vadd.f32 %v4250, %v4257
        %v4286 = vadd.f32 %v4251, %v4257
        %v4287 = vadd.f32 %v4252, %v4257
        %v4288 = vadd.f32 %v4253, %v4257
        %v4289 = vadd.f32 %v4254, %v4257
        %v4290 = vadd.f32 %v4255, %v4257
        %vm4291 = vcmask 146432
        %4292 = vst.msk [vmem:[%s389] sm:$0xff] %vm4291, %v4259
        %4293 = vst.msk [vmem:[%s389 + $0x8] sm:$0xff] %vm4291, %v4260
        %4294 = vst.msk [vmem:[%s389 + $0x10] sm:$0xff] %vm4291, %v4261
        %4295 = vst.msk [vmem:[%s389 + $0x18] sm:$0xff] %vm4291, %v4262
        %4296 = vst.msk [vmem:[%s389 + $0x20] sm:$0xff] %vm4291, %v4263
        %4297 = vst.msk [vmem:[%s389 + $0x28] sm:$0xff] %vm4291, %v4264
        %4298 = vst.msk [vmem:[%s389 + $0x30] sm:$0xff] %vm4291, %v4265
        %4299 = vst.msk [vmem:[%s389 + $0x38] sm:$0xff] %vm4291, %v4266
        %4300 = vst.msk [vmem:[%s389 + $0x40] sm:$0xff] %vm4291, %v4267
        %4301 = vst.msk [vmem:[%s389 + $0x48] sm:$0xff] %vm4291, %v4268
        %4302 = vst.msk [vmem:[%s389 + $0x50] sm:$0xff] %vm4291, %v4269
        %4303 = vst.msk [vmem:[%s389 + $0x58] sm:$0xff] %vm4291, %v4270
        %4304 = vst.msk [vmem:[%s389 + $0x60] sm:$0xff] %vm4291, %v4271
        %4305 = vst.msk [vmem:[%s389 + $0x68] sm:$0xff] %vm4291, %v4272
        %4306 = vst.msk [vmem:[%s389 + $0x70] sm:$0xff] %vm4291, %v4273
        %4307 = vst.msk [vmem:[%s389 + $0x78] sm:$0xff] %vm4291, %v4274
        %4308 = vst.msk [vmem:[%s389 + $0x80] sm:$0xff] %vm4291, %v4275
        %4309 = vst.msk [vmem:[%s389 + $0x88] sm:$0xff] %vm4291, %v4276
        %4310 = vst.msk [vmem:[%s389 + $0x90] sm:$0xff] %vm4291, %v4277
        %4311 = vst.msk [vmem:[%s389 + $0x98] sm:$0xff] %vm4291, %v4278
        %4312 = vst.msk [vmem:[%s389 + $0xa0] sm:$0xff] %vm4291, %v4279
        %4313 = vst.msk [vmem:[%s389 + $0xa8] sm:$0xff] %vm4291, %v4280
        %4314 = vst.msk [vmem:[%s389 + $0xb0] sm:$0xff] %vm4291, %v4281
        %4315 = vst.msk [vmem:[%s389 + $0xb8] sm:$0xff] %vm4291, %v4282
        %4316 = vst.msk [vmem:[%s389 + $0xc0] sm:$0xff] %vm4291, %v4283
        %4317 = vst.msk [vmem:[%s389 + $0xc8] sm:$0xff] %vm4291, %v4284
        %4318 = vst.msk [vmem:[%s389 + $0xd0] sm:$0xff] %vm4291, %v4285
        %4319 = vst.msk [vmem:[%s389 + $0xd8] sm:$0xff] %vm4291, %v4286
        %4320 = vst.msk [vmem:[%s389 + $0xe0] sm:$0xff] %vm4291, %v4287
        %4321 = vst.msk [vmem:[%s389 + $0xe8] sm:$0xff] %vm4291, %v4288
        %4322 = vst.msk [vmem:[%s389 + $0xf0] sm:$0xff] %vm4291, %v4289
        %4323 = vst.msk [vmem:[%s389 + $0xf8] sm:$0xff] %vm4291, %v4290
        %s4324 = smul.u32 16, %s25
        %p4325 = scmp.lt.s32.totalorder %s24, 1
        %s4326 = scalar_select %p4325, %s24, 1
        %p4327 = scmp.lt.s32.totalorder %s4324, 15
        %s4328 = scalar_select %p4327, %s4324, 15
        %s4329 = smul.addr %s4328, 2
        %s4330 = smul.addr %s4326, 32
        %s4331 = sadd.s32 %s4329, %s4330
        %s4332 = smul.addr %s4331, 4
        %s4333 = scalar_lea.vmem %s6, %s4332
        %s4334 = smul.u32 16, %s25
        %p4335 = scmp.lt.s32.totalorder %s24, 1
        %s4336 = scalar_select %p4335, %s24, 1
        %p4337 = scmp.lt.s32.totalorder %s4334, 15
        %s4338 = scalar_select %p4337, %s4334, 15
        %s4339 = smul.addr %s4338, 2
        %s4340 = smul.addr %s4336, 32
        %s4341 = sadd.s32 %s4339, %s4340
        %s4342 = smul.addr %s4341, 8
        %s4343 = scalar_lea.vmem %s7, %s4342
        // Predicated region
        $region49: #{dc_unet_block_forward.5} parent=43 // pred_check
          %p4344 = pneg %p192
        $region50: #{dc_unet_block_forward.5} parent=43 // pred_check_branch
          %4346 = sbr.rel (%p4344) target = $region52
        $region51: #{dc_unet_block_forward.5} parent=43 // pred_region
          %s4347 = smul.u32 16, %s25
        $region52: #{dc_unet_block_forward.5} parent=43 // pred_fallthru
          _
        // Predicated region
        $region53: #{dc_unet_block_forward.5} parent=43 // pred_check
          %p4348 = pneg %p220
        $region54: #{dc_unet_block_forward.5} parent=43 // pred_check_branch
          %4350 = sbr.rel (%p4348) target = $region56
        $region55: #{dc_unet_block_forward.5} parent=43 // pred_region
          %s4351 = smul.u32 16, %s25
        $region56: #{dc_unet_block_forward.5} parent=43 // pred_fallthru
          _
      $region44: #{dc_unet_block_forward.5} parent=5 // pred_fallthru
        _
      %p4352 = scmp.le.s32.totalorder 2, %s15
      // Predicated region
      $region57: #{dc_unet_block_forward.5} parent=5 // pred_check
        %p4353 = pneg %p4352
      $region58: #{dc_unet_block_forward.5} parent=5 // pred_check_branch
        %4355 = sbr.rel (%p4353) target = $region60
      $region59: #{dc_unet_block_forward.5} parent=5 // pred_region
        %s4356 = ssub.s32 %s15, 2
        // Predicated region
        $region61: #{dc_unet_block_forward.5} parent=59 // pred_check
          %p4357 = pneg %p198
        $region62: #{dc_unet_block_forward.5} parent=59 // pred_check_branch
          %4359 = sbr.rel (%p4357) target = $region64
        $region63: #{dc_unet_block_forward.5} parent=59 // pred_region
          %s4360 = smul.u32 16, %s27
          %p4361 = scmp.lt.s32.totalorder %s26, 1
          %s4362 = scalar_select %p4361, %s26, 1
          %p4363 = scmp.lt.s32.totalorder %s4360, 15
          %s4364 = scalar_select %p4363, %s4360, 15
          %s4365 = smul.addr %s4364, 2
          %s4366 = smul.addr %s4362, 32
          %s4367 = sadd.s32 %s4365, %s4366
          %s4368 = smul.addr %s4367, 4
          %s4369 = scalar_lea.vmem %s6, %s4368
        $region64: #{dc_unet_block_forward.5} parent=59 // pred_fallthru
          _
        // Predicated region
        $region65: #{dc_unet_block_forward.5} parent=59 // pred_check
          %p4370 = pneg %p226
        $region66: #{dc_unet_block_forward.5} parent=59 // pred_check_branch
          %4372 = sbr.rel (%p4370) target = $region68
        $region67: #{dc_unet_block_forward.5} parent=59 // pred_region
          %s4373 = smul.u32 16, %s27
          %p4374 = scmp.lt.s32.totalorder %s26, 1
          %s4375 = scalar_select %p4374, %s26, 1
          %p4376 = scmp.lt.s32.totalorder %s4373, 15
          %s4377 = scalar_select %p4376, %s4373, 15
          %s4378 = smul.addr %s4377, 2
          %s4379 = smul.addr %s4375, 32
          %s4380 = sadd.s32 %s4378, %s4379
          %s4381 = smul.addr %s4380, 8
          %s4382 = scalar_lea.vmem %s7, %s4381
        $region68: #{dc_unet_block_forward.5} parent=59 // pred_fallthru
          _
      $region60: #{dc_unet_block_forward.5} parent=5 // pred_fallthru
        _
    $region6: #{dc_unet_block_forward.5} parent=1 // loop_footer
      %s19 = sadd.s32 1, %s15
    $region7: #{dc_unet_block_forward.5} parent=1 // loop_footer_branch
      %14 = sbr.rel target = $region3
    $region8: #{dc_unet_block_forward.5} parent=1 // loop_exit
      _
    %4383 = vsyncpa [#allocation5], 1
    %s4384 = scalar_lea.sflag [#allocation5], 1
    %4385 = vsyncpa %s4384, 1

// kernel: mul.9
$region0: #{mul.9}
  #allocation0 [shape = 's32[1]{0}', space=sflag, size = 0x4, scoped, tag = 'scoped memory for mul.9']
  %s0 = inlined_call_operand.vmem [shape: f32[512,72], index: 0, kind: input, shape index: {}]
  %s1 = inlined_call_operand.vmem [shape: f32[512,72], index: 1, kind: input, shape index: {}]
  %s2 = inlined_call_operand.vmem [shape: f32[512,72], index: 2, kind: output, shape index: {}]
  %v3 = vld [vmem:[%s0] sm:$0xff]
  %v4 = vld [vmem:[%s1] sm:$0xff]
  %5 = xla_tuple %v3, %v4
  %6 = xla_tuple %5
  %v7 = vmul.f32 %v3, %v4
  %8 = xla_tuple %v7
  %9 = vst [vmem:[%s2] sm:$0xff] %v7
  %s10 = scalar_lea.vmem %s0, 32
  %v11 = vld [vmem:[%s10] sm:$0xff]
  %s12 = scalar_lea.vmem %s1, 32
  %v13 = vld [vmem:[%s12] sm:$0xff]
  %14 = xla_tuple %v11, %v13
  %15 = xla_tuple %14
  %v16 = vmul.f32 %v11, %v13
  %17 = xla_tuple %v16
  %s18 = scalar_lea.vmem %s2, 32
  %19 = vst [vmem:[%s18] sm:$0xff] %v16
  %s20 = scalar_lea.vmem %s0, 64
  %v21 = vld [vmem:[%s20] sm:$0xff]
  %s22 = scalar_lea.vmem %s1, 64
  %v23 = vld [vmem:[%s22] sm:$0xff]
  %24 = xla_tuple %v21, %v23
  %25 = xla_tuple %24
  %v26 = vmul.f32 %v21, %v23
  %27 = xla_tuple %v26
  %s28 = scalar_lea.vmem %s2, 64
  %29 = vst [vmem:[%s28] sm:$0xff] %v26
  %s30 = scalar_lea.vmem %s0, 96
  %v31 = vld [vmem:[%s30] sm:$0xff]
  %s32 = scalar_lea.vmem %s1, 96
  %v33 = vld [vmem:[%s32] sm:$0xff]
  %34 = xla_tuple %v31, %v33
  %35 = xla_tuple %34
  %v36 = vmul.f32 %v31, %v33
  %37 = xla_tuple %v36
  %s38 = scalar_lea.vmem %s2, 96
  %39 = vst [vmem:[%s38] sm:$0xff] %v36
  %s40 = scalar_lea.vmem %s0, 128
  %v41 = vld [vmem:[%s40] sm:$0xff]
  %s42 = scalar_lea.vmem %s1, 128
  %v43 = vld [vmem:[%s42] sm:$0xff]
  %44 = xla_tuple %v41, %v43
  %45 = xla_tuple %44
  %v46 = vmul.f32 %v41, %v43
  %47 = xla_tuple %v46
  %s48 = scalar_lea.vmem %s2, 128
  %49 = vst [vmem:[%s48] sm:$0xff] %v46
  %s50 = scalar_lea.vmem %s0, 160
  %v51 = vld [vmem:[%s50] sm:$0xff]
  %s52 = scalar_lea.vmem %s1, 160
  %v53 = vld [vmem:[%s52] sm:$0xff]
  %54 = xla_tuple %v51, %v53
  %55 = xla_tuple %54
  %v56 = vmul.f32 %v51, %v53
  %57 = xla_tuple %v56
  %s58 = scalar_lea.vmem %s2, 160
  %59 = vst [vmem:[%s58] sm:$0xff] %v56
  %s60 = scalar_lea.vmem %s0, 192
  %v61 = vld [vmem:[%s60] sm:$0xff]
  %s62 = scalar_lea.vmem %s1, 192
  %v63 = vld [vmem:[%s62] sm:$0xff]
  %64 = xla_tuple %v61, %v63
  %65 = xla_tuple %64
  %v66 = vmul.f32 %v61, %v63
  %67 = xla_tuple %v66
  %s68 = scalar_lea.vmem %s2, 192
  %69 = vst [vmem:[%s68] sm:$0xff] %v66
  %s70 = scalar_lea.vmem %s0, 224
  %v71 = vld [vmem:[%s70] sm:$0xff]
  %s72 = scalar_lea.vmem %s1, 224
  %v73 = vld [vmem:[%s72] sm:$0xff]
  %74 = xla_tuple %v71, %v73
  %75 = xla_tuple %74
  %v76 = vmul.f32 %v71, %v73
  %77 = xla_tuple %v76
  %s78 = scalar_lea.vmem %s2, 224
  %79 = vst [vmem:[%s78] sm:$0xff] %v76
  %s80 = scalar_lea.vmem %s0, 256
  %v81 = vld [vmem:[%s80] sm:$0xff]
  %s82 = scalar_lea.vmem %s1, 256
  %v83 = vld [vmem:[%s82] sm:$0xff]
  %84 = xla_tuple %v81, %v83
  %85 = xla_tuple %84
  %v86 = vmul.f32 %v81, %v83
  %87 = xla_tuple %v86
  %s88 = scalar_lea.vmem %s2, 256
  %89 = vst [vmem:[%s88] sm:$0xff] %v86
  %s90 = scalar_lea.vmem %s0, 8
  %v91 = vld [vmem:[%s90] sm:$0xff]
  %s92 = scalar_lea.vmem %s1, 8
  %v93 = vld [vmem:[%s92] sm:$0xff]
  %94 = xla_tuple %v91, %v93
  %95 = xla_tuple %94
  %v96 = vmul.f32 %v91, %v93
  %97 = xla_tuple %v96
  %s98 = scalar_lea.vmem %s2, 8
  %99 = vst [vmem:[%s98] sm:$0xff] %v96
  %s100 = scalar_lea.vmem %s0, 40
  %v101 = vld [vmem:[%s100] sm:$0xff]
  %s102 = scalar_lea.vmem %s1, 40
  %v103 = vld [vmem:[%s102] sm:$0xff]
  %104 = xla_tuple %v101, %v103
  %105 = xla_tuple %104
  %v106 = vmul.f32 %v101, %v103
  %107 = xla_tuple %v106
  %s108 = scalar_lea.vmem %s2, 40
  %109 = vst [vmem:[%s108] sm:$0xff] %v106
  %s110 = scalar_lea.vmem %s0, 72
  %v111 = vld [vmem:[%s110] sm:$0xff]
  %s112 = scalar_lea.vmem %s1, 72
  %v113 = vld [vmem:[%s112] sm:$0xff]
  %114 = xla_tuple %v111, %v113
  %115 = xla_tuple %114
  %v116 = vmul.f32 %v111, %v113
  %117 = xla_tuple %v116
  %s118 = scalar_lea.vmem %s2, 72
  %119 = vst [vmem:[%s118] sm:$0xff] %v116
  %s120 = scalar_lea.vmem %s0, 104
  %v121 = vld [vmem:[%s120] sm:$0xff]
  %s122 = scalar_lea.vmem %s1, 104
  %v123 = vld [vmem:[%s122] sm:$0xff]
  %124 = xla_tuple %v121, %v123
  %125 = xla_tuple %124
  %v126 = vmul.f32 %v121, %v123
  %127 = xla_tuple %v126
  %s128 = scalar_lea.vmem %s2, 104
  %129 = vst [vmem:[%s128] sm:$0xff] %v126
  %s130 = scalar_lea.vmem %s0, 136
  %v131 = vld [vmem:[%s130] sm:$0xff]
  %s132 = scalar_lea.vmem %s1, 136
  %v133 = vld [vmem:[%s132] sm:$0xff]
  %134 = xla_tuple %v131, %v133
  %135 = xla_tuple %134
  %v136 = vmul.f32 %v131, %v133
  %137 = xla_tuple %v136
  %s138 = scalar_lea.vmem %s2, 136
  %139 = vst [vmem:[%s138] sm:$0xff] %v136
  %s140 = scalar_lea.vmem %s0, 168
  %v141 = vld [vmem:[%s140] sm:$0xff]
  %s142 = scalar_lea.vmem %s1, 168
  %v143 = vld [vmem:[%s142] sm:$0xff]
  %144 = xla_tuple %v141, %v143
  %145 = xla_tuple %144
  %v146 = vmul.f32 %v141, %v143
  %147 = xla_tuple %v146
  %s148 = scalar_lea.vmem %s2, 168
  %149 = vst [vmem:[%s148] sm:$0xff] %v146
  %s150 = scalar_lea.vmem %s0, 200
  %v151 = vld [vmem:[%s150] sm:$0xff]
  %s152 = scalar_lea.vmem %s1, 200
  %v153 = vld [vmem:[%s152] sm:$0xff]
  %154 = xla_tuple %v151, %v153
  %155 = xla_tuple %154
  %v156 = vmul.f32 %v151, %v153
  %157 = xla_tuple %v156
  %s158 = scalar_lea.vmem %s2, 200
  %159 = vst [vmem:[%s158] sm:$0xff] %v156
  %s160 = scalar_lea.vmem %s0, 232
  %v161 = vld [vmem:[%s160] sm:$0xff]
  %s162 = scalar_lea.vmem %s1, 232
  %v163 = vld [vmem:[%s162] sm:$0xff]
  %164 = xla_tuple %v161, %v163
  %165 = xla_tuple %164
  %v166 = vmul.f32 %v161, %v163
  %167 = xla_tuple %v166
  %s168 = scalar_lea.vmem %s2, 232
  %169 = vst [vmem:[%s168] sm:$0xff] %v166
  %s170 = scalar_lea.vmem %s0, 264
  %v171 = vld [vmem:[%s170] sm:$0xff]
  %s172 = scalar_lea.vmem %s1, 264
  %v173 = vld [vmem:[%s172] sm:$0xff]
  %174 = xla_tuple %v171, %v173
  %175 = xla_tuple %174
  %v176 = vmul.f32 %v171, %v173
  %177 = xla_tuple %v176
  %s178 = scalar_lea.vmem %s2, 264
  %179 = vst [vmem:[%s178] sm:$0xff] %v176
  %s180 = scalar_lea.vmem %s0, 16
  %v181 = vld [vmem:[%s180] sm:$0xff]
  %s182 = scalar_lea.vmem %s1, 16
  %v183 = vld [vmem:[%s182] sm:$0xff]
  %184 = xla_tuple %v181, %v183
  %185 = xla_tuple %184
  %v186 = vmul.f32 %v181, %v183
  %187 = xla_tuple %v186
  %s188 = scalar_lea.vmem %s2, 16
  %189 = vst [vmem:[%s188] sm:$0xff] %v186
  %s190 = scalar_lea.vmem %s0, 48
  %v191 = vld [vmem:[%s190] sm:$0xff]
  %s192 = scalar_lea.vmem %s1, 48
  %v193 = vld [vmem:[%s192] sm:$0xff]
  %194 = xla_tuple %v191, %v193
  %195 = xla_tuple %194
  %v196 = vmul.f32 %v191, %v193
  %197 = xla_tuple %v196
  %s198 = scalar_lea.vmem %s2, 48
  %199 = vst [vmem:[%s198] sm:$0xff] %v196
  %s200 = scalar_lea.vmem %s0, 80
  %v201 = vld [vmem:[%s200] sm:$0xff]
  %s202 = scalar_lea.vmem %s1, 80
  %v203 = vld [vmem:[%s202] sm:$0xff]
  %204 = xla_tuple %v201, %v203
  %205 = xla_tuple %204
  %v206 = vmul.f32 %v201, %v203
  %207 = xla_tuple %v206
  %s208 = scalar_lea.vmem %s2, 80
  %209 = vst [vmem:[%s208] sm:$0xff] %v206
  %s210 = scalar_lea.vmem %s0, 112
  %v211 = vld [vmem:[%s210] sm:$0xff]
  %s212 = scalar_lea.vmem %s1, 112
  %v213 = vld [vmem:[%s212] sm:$0xff]
  %214 = xla_tuple %v211, %v213
  %215 = xla_tuple %214
  %v216 = vmul.f32 %v211, %v213
  %217 = xla_tuple %v216
  %s218 = scalar_lea.vmem %s2, 112
  %219 = vst [vmem:[%s218] sm:$0xff] %v216
  %s220 = scalar_lea.vmem %s0, 144
  %v221 = vld [vmem:[%s220] sm:$0xff]
  %s222 = scalar_lea.vmem %s1, 144
  %v223 = vld [vmem:[%s222] sm:$0xff]
  %224 = xla_tuple %v221, %v223
  %225 = xla_tuple %224
  %v226 = vmul.f32 %v221, %v223
  %227 = xla_tuple %v226
  %s228 = scalar_lea.vmem %s2, 144
  %229 = vst [vmem:[%s228] sm:$0xff] %v226
  %s230 = scalar_lea.vmem %s0, 176
  %v231 = vld [vmem:[%s230] sm:$0xff]
  %s232 = scalar_lea.vmem %s1, 176
  %v233 = vld [vmem:[%s232] sm:$0xff]
  %234 = xla_tuple %v231, %v233
  %235 = xla_tuple %234
  %v236 = vmul.f32 %v231, %v233
  %237 = xla_tuple %v236
  %s238 = scalar_lea.vmem %s2, 176
  %239 = vst [vmem:[%s238] sm:$0xff] %v236
  %s240 = scalar_lea.vmem %s0, 208
  %v241 = vld [vmem:[%s240] sm:$0xff]
  %s242 = scalar_lea.vmem %s1, 208
  %v243 = vld [vmem:[%s242] sm:$0xff]
  %244 = xla_tuple %v241, %v243
  %245 = xla_tuple %244
  %v246 = vmul.f32 %v241, %v243
  %247 = xla_tuple %v246
  %s248 = scalar_lea.vmem %s2, 208
  %249 = vst [vmem:[%s248] sm:$0xff] %v246
  %s250 = scalar_lea.vmem %s0, 240
  %v251 = vld [vmem:[%s250] sm:$0xff]
  %s252 = scalar_lea.vmem %s1, 240
  %v253 = vld [vmem:[%s252] sm:$0xff]
  %254 = xla_tuple %v251, %v253
  %255 = xla_tuple %254
  %v256 = vmul.f32 %v251, %v253
  %257 = xla_tuple %v256
  %s258 = scalar_lea.vmem %s2, 240
  %259 = vst [vmem:[%s258] sm:$0xff] %v256
  %s260 = scalar_lea.vmem %s0, 272
  %v261 = vld [vmem:[%s260] sm:$0xff]
  %s262 = scalar_lea.vmem %s1, 272
  %v263 = vld [vmem:[%s262] sm:$0xff]
  %264 = xla_tuple %v261, %v263
  %265 = xla_tuple %264
  %v266 = vmul.f32 %v261, %v263
  %267 = xla_tuple %v266
  %s268 = scalar_lea.vmem %s2, 272
  %269 = vst [vmem:[%s268] sm:$0xff] %v266
  %s270 = scalar_lea.vmem %s0, 24
  %v271 = vld [vmem:[%s270] sm:$0xff]
  %s272 = scalar_lea.vmem %s1, 24
  %v273 = vld [vmem:[%s272] sm:$0xff]
  %274 = xla_tuple %v271, %v273
  %275 = xla_tuple %274
  %v276 = vmul.f32 %v271, %v273
  %277 = xla_tuple %v276
  %s278 = scalar_lea.vmem %s2, 24
  %279 = vst [vmem:[%s278] sm:$0xff] %v276
  %s280 = scalar_lea.vmem %s0, 56
  %v281 = vld [vmem:[%s280] sm:$0xff]
  %s282 = scalar_lea.vmem %s1, 56
  %v283 = vld [vmem:[%s282] sm:$0xff]
  %284 = xla_tuple %v281, %v283
  %285 = xla_tuple %284
  %v286 = vmul.f32 %v281, %v283
  %287 = xla_tuple %v286
  %s288 = scalar_lea.vmem %s2, 56
  %289 = vst [vmem:[%s288] sm:$0xff] %v286
  %s290 = scalar_lea.vmem %s0, 88
  %v291 = vld [vmem:[%s290] sm:$0xff]
  %s292 = scalar_lea.vmem %s1, 88
  %v293 = vld [vmem:[%s292] sm:$0xff]
  %294 = xla_tuple %v291, %v293
  %295 = xla_tuple %294
  %v296 = vmul.f32 %v291, %v293
  %297 = xla_tuple %v296
  %s298 = scalar_lea.vmem %s2, 88
  %299 = vst [vmem:[%s298] sm:$0xff] %v296
  %s300 = scalar_lea.vmem %s0, 120
  %v301 = vld [vmem:[%s300] sm:$0xff]
  %s302 = scalar_lea.vmem %s1, 120
  %v303 = vld [vmem:[%s302] sm:$0xff]
  %304 = xla_tuple %v301, %v303
  %305 = xla_tuple %304
  %v306 = vmul.f32 %v301, %v303
  %307 = xla_tuple %v306
  %s308 = scalar_lea.vmem %s2, 120
  %309 = vst [vmem:[%s308] sm:$0xff] %v306
  %s310 = scalar_lea.vmem %s0, 152
  %v311 = vld [vmem:[%s310] sm:$0xff]
  %s312 = scalar_lea.vmem %s1, 152
  %v313 = vld [vmem:[%s312] sm:$0xff]
  %314 = xla_tuple %v311, %v313
  %315 = xla_tuple %314
  %v316 = vmul.f32 %v311, %v313
  %317 = xla_tuple %v316
  %s318 = scalar_lea.vmem %s2, 152
  %319 = vst [vmem:[%s318] sm:$0xff] %v316
  %s320 = scalar_lea.vmem %s0, 184
  %v321 = vld [vmem:[%s320] sm:$0xff]
  %s322 = scalar_lea.vmem %s1, 184
  %v323 = vld [vmem:[%s322] sm:$0xff]
  %324 = xla_tuple %v321, %v323
  %325 = xla_tuple %324
  %v326 = vmul.f32 %v321, %v323
  %327 = xla_tuple %v326
  %s328 = scalar_lea.vmem %s2, 184
  %329 = vst [vmem:[%s328] sm:$0xff] %v326
  %s330 = scalar_lea.vmem %s0, 216
  %v331 = vld [vmem:[%s330] sm:$0xff]
  %s332 = scalar_lea.vmem %s1, 216
  %v333 = vld [vmem:[%s332] sm:$0xff]
  %334 = xla_tuple %v331, %v333
  %335 = xla_tuple %334
  %v336 = vmul.f32 %v331, %v333
  %337 = xla_tuple %v336
  %s338 = scalar_lea.vmem %s2, 216
  %339 = vst [vmem:[%s338] sm:$0xff] %v336
  %s340 = scalar_lea.vmem %s0, 248
  %v341 = vld [vmem:[%s340] sm:$0xff]
  %s342 = scalar_lea.vmem %s1, 248
  %v343 = vld [vmem:[%s342] sm:$0xff]
  %344 = xla_tuple %v341, %v343
  %345 = xla_tuple %344
  %v346 = vmul.f32 %v341, %v343
  %347 = xla_tuple %v346
  %s348 = scalar_lea.vmem %s2, 248
  %349 = vst [vmem:[%s348] sm:$0xff] %v346
  %s350 = scalar_lea.vmem %s0, 280
  %v351 = vld [vmem:[%s350] sm:$0xff]
  %s352 = scalar_lea.vmem %s1, 280
  %v353 = vld [vmem:[%s352] sm:$0xff]
  %354 = xla_tuple %v351, %v353
  %355 = xla_tuple %354
  %v356 = vmul.f32 %v351, %v353
  %357 = xla_tuple %v356
  %s358 = scalar_lea.vmem %s2, 280
  %359 = vst [vmem:[%s358] sm:$0xff] %v356

// kernel: dc_unet_block_forward.6
$region0: #{dc_unet_block_forward.6}
  #allocation0 [shape = 'u32[]', space=smem, size = 0x4, offset = 0x4, fixed_abs, tag = 'smem constant byte address 0x4 - core index']
  #allocation1 [shape = 'u32[72,128]{1,0:T(1,128)}', space=vmem, size = 0x9000, scoped, tag = 'internal scratch']
  %s0 = inlined_call_operand.vmem [shape: bf16[512,72], index: 0, kind: input, shape index: {}]
  %s1 = inlined_call_operand.vmem [shape: bf16[72,8], index: 1, kind: input, shape index: {}]
  %s2 = inlined_call_operand.vmem [shape: bf16[512,8], index: 2, kind: output, shape index: {0}]
  %s3 = inlined_call_operand.vmem [shape: f32[1,1,8], index: 3, kind: output, shape index: {1}]
  %s4 = inlined_call_operand.vmem [shape: f32[1,1,8], index: 4, kind: output, shape index: {2}]
  %5 = xla_tuple %s2, %s3, %s4
  %s6 = sld [smem:[#allocation0]]
  $region34: #{dc_unet_block_forward.6} parent=0
    _
  %s8 = ssub.s32 1, %s6
  %s9 = scalar_select 0, %s8, %s6
  // Predicated region
  $region2: #{dc_unet_block_forward.6} parent=0 // pred_check
    _
  $region3: #{dc_unet_block_forward.6} parent=0 // pred_check_branch
    %11 = sbr.rel (0) target = $region5
  $region4: #{dc_unet_block_forward.6} parent=0 // pred_region
    _
  $region5: #{dc_unet_block_forward.6} parent=0 // pred_fallthru
    _
  // Predicated region
  $region6: #{dc_unet_block_forward.6} parent=0 // pred_check
    _
  $region7: #{dc_unet_block_forward.6} parent=0 // pred_check_branch
    %13 = sbr.rel (0) target = $region9
  $region8: #{dc_unet_block_forward.6} parent=0 // pred_region
    _
  $region9: #{dc_unet_block_forward.6} parent=0 // pred_fallthru
    _
  %v15 = vld [vmem:[%s0] sm:$0xf]
  %v16 = vld [vmem:[%s0 + $0x4] sm:$0xf]
  %v17 = vld [vmem:[%s0 + $0x8] sm:$0xf]
  %v18 = vld [vmem:[%s0 + $0xc] sm:$0xf]
  %v19 = vld [vmem:[%s0 + $0x10] sm:$0xf]
  %v20 = vld [vmem:[%s0 + $0x14] sm:$0xf]
  %v21 = vld [vmem:[%s0 + $0x18] sm:$0xf]
  %v22 = vld [vmem:[%s0 + $0x1c] sm:$0xf]
  %v23 = vld [vmem:[%s0 + $0x20] sm:$0xf]
  %v24 = vld [vmem:[%s0 + $0x24] sm:$0xf]
  %v25 = vld [vmem:[%s0 + $0x28] sm:$0xf]
  %v26 = vld [vmem:[%s0 + $0x2c] sm:$0xf]
  %v27 = vld [vmem:[%s0 + $0x30] sm:$0xf]
  %v28 = vld [vmem:[%s0 + $0x34] sm:$0xf]
  %v29 = vld [vmem:[%s0 + $0x38] sm:$0xf]
  %v30 = vld [vmem:[%s0 + $0x3c] sm:$0xf]
  %v31 = vld [vmem:[%s0 + $0x40] sm:$0xf]
  %v32 = vld [vmem:[%s0 + $0x44] sm:$0xf]
  %v33 = vld [vmem:[%s0 + $0x48] sm:$0xf]
  %v34 = vld [vmem:[%s0 + $0x4c] sm:$0xf]
  %v35 = vld [vmem:[%s0 + $0x50] sm:$0xf]
  %v36 = vld [vmem:[%s0 + $0x54] sm:$0xf]
  %v37 = vld [vmem:[%s0 + $0x58] sm:$0xf]
  %v38 = vld [vmem:[%s0 + $0x5c] sm:$0xf]
  %v39 = vld [vmem:[%s0 + $0x60] sm:$0xf]
  %v40 = vld [vmem:[%s0 + $0x64] sm:$0xf]
  %v41 = vld [vmem:[%s0 + $0x68] sm:$0xf]
  %v42 = vld [vmem:[%s0 + $0x6c] sm:$0xf]
  %v43 = vld [vmem:[%s0 + $0x70] sm:$0xf]
  %v44 = vld [vmem:[%s0 + $0x74] sm:$0xf]
  %v45 = vld [vmem:[%s0 + $0x78] sm:$0xf]
  %v46 = vld [vmem:[%s0 + $0x7c] sm:$0xf]
  %v47 = vld [vmem:[%s0 + $0x80] sm:$0xf]
  %v48 = vld [vmem:[%s0 + $0x84] sm:$0xf]
  %v49 = vld [vmem:[%s0 + $0x88] sm:$0xf]
  %v50 = vld [vmem:[%s0 + $0x8c] sm:$0xf]
  %v51 = vld [vmem:[%s0 + $0x90] sm:$0xf]
  %v52 = vld [vmem:[%s0 + $0x94] sm:$0xf]
  %v53 = vld [vmem:[%s0 + $0x98] sm:$0xf]
  %v54 = vld [vmem:[%s0 + $0x9c] sm:$0xf]
  %v55 = vld [vmem:[%s0 + $0xa0] sm:$0xf]
  %v56 = vld [vmem:[%s0 + $0xa4] sm:$0xf]
  %v57 = vld [vmem:[%s0 + $0xa8] sm:$0xf]
  %v58 = vld [vmem:[%s0 + $0xac] sm:$0xf]
  %v59 = vld [vmem:[%s0 + $0xb0] sm:$0xf]
  %v60 = vld [vmem:[%s0 + $0xb4] sm:$0xf]
  %v61 = vld [vmem:[%s0 + $0xb8] sm:$0xf]
  %v62 = vld [vmem:[%s0 + $0xbc] sm:$0xf]
  %v63 = vld [vmem:[%s0 + $0xc0] sm:$0xf]
  %v64 = vld [vmem:[%s0 + $0xc4] sm:$0xf]
  %v65 = vld [vmem:[%s0 + $0xc8] sm:$0xf]
  %v66 = vld [vmem:[%s0 + $0xcc] sm:$0xf]
  %v67 = vld [vmem:[%s0 + $0xd0] sm:$0xf]
  %v68 = vld [vmem:[%s0 + $0xd4] sm:$0xf]
  %v69 = vld [vmem:[%s0 + $0xd8] sm:$0xf]
  %v70 = vld [vmem:[%s0 + $0xdc] sm:$0xf]
  %v71 = vld [vmem:[%s0 + $0xe0] sm:$0xf]
  %v72 = vld [vmem:[%s0 + $0xe4] sm:$0xf]
  %v73 = vld [vmem:[%s0 + $0xe8] sm:$0xf]
  %v74 = vld [vmem:[%s0 + $0xec] sm:$0xf]
  %v75 = vld [vmem:[%s0 + $0xf0] sm:$0xf]
  %v76 = vld [vmem:[%s0 + $0xf4] sm:$0xf]
  %v77 = vld [vmem:[%s0 + $0xf8] sm:$0xf]
  %v78 = vld [vmem:[%s0 + $0xfc] sm:$0xf]
  %v79 = vld [vmem:[%s1] sm:$0xf]
  %v80 = vld [vmem:[%s1 + $0x4] sm:$0xf]
  %v81 = vld [vmem:[%s1 + $0x8] sm:$0xf]
  %v82 = vld [vmem:[%s1 + $0xc] sm:$0xf]
  %v83 = vld [vmem:[%s1 + $0x10] sm:$0xf]
  %v84 = vld [vmem:[%s1 + $0x14] sm:$0xf]
  %v85 = vld [vmem:[%s1 + $0x18] sm:$0xf]
  %v86 = vld [vmem:[%s1 + $0x1c] sm:$0xf]
  %v87 = vld [vmem:[%s1 + $0x20] sm:$0xf]
  %v152 = vunpack.c.l.b16 %v15
  %v153 = vunpack.c.l.b16 %v16
  %v154 = vunpack.c.l.b16 %v17
  %v155 = vunpack.c.l.b16 %v18
  %v156 = vunpack.c.l.b16 %v19
  %v157 = vunpack.c.l.b16 %v20
  %v158 = vunpack.c.l.b16 %v21
  %v159 = vunpack.c.l.b16 %v22
  %v160 = vunpack.c.l.b16 %v23
  %v161 = vunpack.c.l.b16 %v24
  %v162 = vunpack.c.l.b16 %v25
  %v163 = vunpack.c.l.b16 %v26
  %v164 = vunpack.c.l.b16 %v27
  %v165 = vunpack.c.l.b16 %v28
  %v166 = vunpack.c.l.b16 %v29
  %v167 = vunpack.c.l.b16 %v30
  %v168 = vunpack.c.l.b16 %v31
  %v169 = vunpack.c.l.b16 %v32
  %v170 = vunpack.c.l.b16 %v33
  %v171 = vunpack.c.l.b16 %v34
  %v172 = vunpack.c.l.b16 %v35
  %v173 = vunpack.c.l.b16 %v36
  %v174 = vunpack.c.l.b16 %v37
  %v175 = vunpack.c.l.b16 %v38
  %v176 = vunpack.c.l.b16 %v39
  %v177 = vunpack.c.l.b16 %v40
  %v178 = vunpack.c.l.b16 %v41
  %v179 = vunpack.c.l.b16 %v42
  %v180 = vunpack.c.l.b16 %v43
  %v181 = vunpack.c.l.b16 %v44
  %v182 = vunpack.c.l.b16 %v45
  %v183 = vunpack.c.l.b16 %v46
  %v184 = vunpack.c.l.b16 %v47
  %v185 = vunpack.c.l.b16 %v48
  %v186 = vunpack.c.l.b16 %v49
  %v187 = vunpack.c.l.b16 %v50
  %v188 = vunpack.c.l.b16 %v51
  %v189 = vunpack.c.l.b16 %v52
  %v190 = vunpack.c.l.b16 %v53
  %v191 = vunpack.c.l.b16 %v54
  %v192 = vunpack.c.l.b16 %v55
  %v193 = vunpack.c.l.b16 %v56
  %v194 = vunpack.c.l.b16 %v57
  %v195 = vunpack.c.l.b16 %v58
  %v196 = vunpack.c.l.b16 %v59
  %v197 = vunpack.c.l.b16 %v60
  %v198 = vunpack.c.l.b16 %v61
  %v199 = vunpack.c.l.b16 %v62
  %v200 = vunpack.c.l.b16 %v63
  %v201 = vunpack.c.l.b16 %v64
  %v202 = vunpack.c.l.b16 %v65
  %v203 = vunpack.c.l.b16 %v66
  %v204 = vunpack.c.l.b16 %v67
  %v205 = vunpack.c.l.b16 %v68
  %v206 = vunpack.c.l.b16 %v69
  %v207 = vunpack.c.l.b16 %v70
  %v208 = vunpack.c.l.b16 %v71
  %v209 = vunpack.c.l.b16 %v72
  %v210 = vunpack.c.l.b16 %v73
  %v211 = vunpack.c.l.b16 %v74
  %v212 = vunpack.c.l.b16 %v75
  %v213 = vunpack.c.l.b16 %v76
  %v214 = vunpack.c.l.b16 %v77
  %v215 = vunpack.c.l.b16 %v78
  %v216 = vpack.c.b16 %v153, %v152
  %v217 = vpack.c.b16 %v155, %v154
  %v218 = vpack.c.b16 %v157, %v156
  %v219 = vpack.c.b16 %v159, %v158
  %v220 = vpack.c.b16 %v161, %v160
  %v221 = vpack.c.b16 %v163, %v162
  %v222 = vpack.c.b16 %v165, %v164
  %v223 = vpack.c.b16 %v167, %v166
  %v224 = vpack.c.b16 %v169, %v168
  %v225 = vpack.c.b16 %v171, %v170
  %v226 = vpack.c.b16 %v173, %v172
  %v227 = vpack.c.b16 %v175, %v174
  %v228 = vpack.c.b16 %v177, %v176
  %v229 = vpack.c.b16 %v179, %v178
  %v230 = vpack.c.b16 %v181, %v180
  %v231 = vpack.c.b16 %v183, %v182
  %v232 = vpack.c.b16 %v185, %v184
  %v233 = vpack.c.b16 %v187, %v186
  %v234 = vpack.c.b16 %v189, %v188
  %v235 = vpack.c.b16 %v191, %v190
  %v236 = vpack.c.b16 %v193, %v192
  %v237 = vpack.c.b16 %v195, %v194
  %v238 = vpack.c.b16 %v197, %v196
  %v239 = vpack.c.b16 %v199, %v198
  %v240 = vpack.c.b16 %v201, %v200
  %v241 = vpack.c.b16 %v203, %v202
  %v242 = vpack.c.b16 %v205, %v204
  %v243 = vpack.c.b16 %v207, %v206
  %v244 = vpack.c.b16 %v209, %v208
  %v245 = vpack.c.b16 %v211, %v210
  %v246 = vpack.c.b16 %v213, %v212
  %v247 = vpack.c.b16 %v215, %v214
  %v257 = vunpack.c.l.b16 %v79
  %v258 = vunpack.c.l.b16 %v80
  %v259 = vunpack.c.l.b16 %v81
  %v260 = vunpack.c.l.b16 %v82
  %v261 = vunpack.c.l.b16 %v83
  %v262 = vunpack.c.l.b16 %v84
  %v263 = vunpack.c.l.b16 %v85
  %v264 = vunpack.c.l.b16 %v86
  %v265 = vunpack.c.l.b16 %v87
  %v266 = vpack.c.b16 %v258, %v257
  %v267 = vpack.c.b16 %v260, %v259
  %v268 = vpack.c.b16 %v262, %v261
  %v269 = vpack.c.b16 %v264, %v263
  %v270 = vpack.c.b16 %v265, %v265
  %vm275 = vcmask 588800
  %v277 = vsel %vm275, %v216, 0
  %v280 = vsel %vm275, %v217, 0
  %v283 = vsel %vm275, %v218, 0
  %v286 = vsel %vm275, %v219, 0
  %v289 = vsel %vm275, %v220, 0
  %v292 = vsel %vm275, %v221, 0
  %v295 = vsel %vm275, %v222, 0
  %v298 = vsel %vm275, %v223, 0
  %v301 = vsel %vm275, %v224, 0
  %v304 = vsel %vm275, %v225, 0
  %v307 = vsel %vm275, %v226, 0
  %v310 = vsel %vm275, %v227, 0
  %v313 = vsel %vm275, %v228, 0
  %v316 = vsel %vm275, %v229, 0
  %v319 = vsel %vm275, %v230, 0
  %v322 = vsel %vm275, %v231, 0
  %v325 = vsel %vm275, %v232, 0
  %v328 = vsel %vm275, %v233, 0
  %v331 = vsel %vm275, %v234, 0
  %v334 = vsel %vm275, %v235, 0
  %v337 = vsel %vm275, %v236, 0
  %v340 = vsel %vm275, %v237, 0
  %v343 = vsel %vm275, %v238, 0
  %v346 = vsel %vm275, %v239, 0
  %v349 = vsel %vm275, %v240, 0
  %v352 = vsel %vm275, %v241, 0
  %v355 = vsel %vm275, %v242, 0
  %v358 = vsel %vm275, %v243, 0
  %v361 = vsel %vm275, %v244, 0
  %v364 = vsel %vm275, %v245, 0
  %v367 = vsel %vm275, %v246, 0
  %v370 = vsel %vm275, %v247, 0
  %vm372 = vcmask 1043456
  %v374 = vsel %vm372, %v270, 0
  %376 = vmatpush.bf16.msra.mxu0 0
  %377 = vmatpush.bf16.msra.mxu0 0
  %378 = vmatpush.bf16.msra.mxu0 0
  %379 = vmatpush.bf16.msra.mxu0 %v374
  %380 = vmatpush.bf16.msra.mxu0 %v269
  %381 = vmatpush.bf16.msra.mxu0 %v268
  %382 = vmatpush.bf16.msra.mxu0 %v267
  %383 = vmatpush.bf16.msra.mxu0 %v266
  %384 = vmatmul.bf16.gmra.mxu0 %v277
  %v385 = vpop.f32.mrf.mxu0
  %v386 = vadd.f32 0.0, %v385
  %v387 = vpop.f32.mrf.mxu0
  %v388 = vadd.f32 0.0, %v387
  %389 = vmatmul.bf16.gmra.mxu0 %v280
  %v390 = vpop.f32.mrf.mxu0
  %v391 = vadd.f32 0.0, %v390
  %v392 = vpop.f32.mrf.mxu0
  %v393 = vadd.f32 0.0, %v392
  %394 = vmatmul.bf16.gmra.mxu0 %v283
  %v395 = vpop.f32.mrf.mxu0
  %v396 = vadd.f32 0.0, %v395
  %v397 = vpop.f32.mrf.mxu0
  %v398 = vadd.f32 0.0, %v397
  %399 = vmatmul.bf16.gmra.mxu0 %v286
  %v400 = vpop.f32.mrf.mxu0
  %v401 = vadd.f32 0.0, %v400
  %v402 = vpop.f32.mrf.mxu0
  %v403 = vadd.f32 0.0, %v402
  %404 = vmatmul.bf16.gmra.mxu0 %v289
  %v405 = vpop.f32.mrf.mxu0
  %v406 = vadd.f32 0.0, %v405
  %v407 = vpop.f32.mrf.mxu0
  %v408 = vadd.f32 0.0, %v407
  %409 = vmatmul.bf16.gmra.mxu0 %v292
  %v410 = vpop.f32.mrf.mxu0
  %v411 = vadd.f32 0.0, %v410
  %v412 = vpop.f32.mrf.mxu0
  %v413 = vadd.f32 0.0, %v412
  %414 = vmatmul.bf16.gmra.mxu0 %v295
  %v415 = vpop.f32.mrf.mxu0
  %v416 = vadd.f32 0.0, %v415
  %v417 = vpop.f32.mrf.mxu0
  %v418 = vadd.f32 0.0, %v417
  %419 = vmatmul.bf16.gmra.mxu0 %v298
  %v420 = vpop.f32.mrf.mxu0
  %v421 = vadd.f32 0.0, %v420
  %v422 = vpop.f32.mrf.mxu0
  %v423 = vadd.f32 0.0, %v422
  %424 = vmatmul.bf16.gmra.mxu0 %v301
  %v425 = vpop.f32.mrf.mxu0
  %v426 = vadd.f32 0.0, %v425
  %v427 = vpop.f32.mrf.mxu0
  %v428 = vadd.f32 0.0, %v427
  %429 = vmatmul.bf16.gmra.mxu0 %v304
  %v430 = vpop.f32.mrf.mxu0
  %v431 = vadd.f32 0.0, %v430
  %v432 = vpop.f32.mrf.mxu0
  %v433 = vadd.f32 0.0, %v432
  %434 = vmatmul.bf16.gmra.mxu0 %v307
  %v435 = vpop.f32.mrf.mxu0
  %v436 = vadd.f32 0.0, %v435
  %v437 = vpop.f32.mrf.mxu0
  %v438 = vadd.f32 0.0, %v437
  %439 = vmatmul.bf16.gmra.mxu0 %v310
  %v440 = vpop.f32.mrf.mxu0
  %v441 = vadd.f32 0.0, %v440
  %v442 = vpop.f32.mrf.mxu0
  %v443 = vadd.f32 0.0, %v442
  %444 = vmatmul.bf16.gmra.mxu0 %v313
  %v445 = vpop.f32.mrf.mxu0
  %v446 = vadd.f32 0.0, %v445
  %v447 = vpop.f32.mrf.mxu0
  %v448 = vadd.f32 0.0, %v447
  %449 = vmatmul.bf16.gmra.mxu0 %v316
  %v450 = vpop.f32.mrf.mxu0
  %v451 = vadd.f32 0.0, %v450
  %v452 = vpop.f32.mrf.mxu0
  %v453 = vadd.f32 0.0, %v452
  %454 = vmatmul.bf16.gmra.mxu0 %v319
  %v455 = vpop.f32.mrf.mxu0
  %v456 = vadd.f32 0.0, %v455
  %v457 = vpop.f32.mrf.mxu0
  %v458 = vadd.f32 0.0, %v457
  %459 = vmatmul.bf16.gmra.mxu0 %v322
  %v460 = vpop.f32.mrf.mxu0
  %v461 = vadd.f32 0.0, %v460
  %v462 = vpop.f32.mrf.mxu0
  %v463 = vadd.f32 0.0, %v462
  %464 = vmatmul.bf16.gmra.mxu0 %v325
  %v465 = vpop.f32.mrf.mxu0
  %v466 = vadd.f32 0.0, %v465
  %v467 = vpop.f32.mrf.mxu0
  %v468 = vadd.f32 0.0, %v467
  %469 = vmatmul.bf16.gmra.mxu0 %v328
  %v470 = vpop.f32.mrf.mxu0
  %v471 = vadd.f32 0.0, %v470
  %v472 = vpop.f32.mrf.mxu0
  %v473 = vadd.f32 0.0, %v472
  %474 = vmatmul.bf16.gmra.mxu0 %v331
  %v475 = vpop.f32.mrf.mxu0
  %v476 = vadd.f32 0.0, %v475
  %v477 = vpop.f32.mrf.mxu0
  %v478 = vadd.f32 0.0, %v477
  %479 = vmatmul.bf16.gmra.mxu0 %v334
  %v480 = vpop.f32.mrf.mxu0
  %v481 = vadd.f32 0.0, %v480
  %v482 = vpop.f32.mrf.mxu0
  %v483 = vadd.f32 0.0, %v482
  %484 = vmatmul.bf16.gmra.mxu0 %v337
  %v485 = vpop.f32.mrf.mxu0
  %v486 = vadd.f32 0.0, %v485
  %v487 = vpop.f32.mrf.mxu0
  %v488 = vadd.f32 0.0, %v487
  %489 = vmatmul.bf16.gmra.mxu0 %v340
  %v490 = vpop.f32.mrf.mxu0
  %v491 = vadd.f32 0.0, %v490
  %v492 = vpop.f32.mrf.mxu0
  %v493 = vadd.f32 0.0, %v492
  %494 = vmatmul.bf16.gmra.mxu0 %v343
  %v495 = vpop.f32.mrf.mxu0
  %v496 = vadd.f32 0.0, %v495
  %v497 = vpop.f32.mrf.mxu0
  %v498 = vadd.f32 0.0, %v497
  %499 = vmatmul.bf16.gmra.mxu0 %v346
  %v500 = vpop.f32.mrf.mxu0
  %v501 = vadd.f32 0.0, %v500
  %v502 = vpop.f32.mrf.mxu0
  %v503 = vadd.f32 0.0, %v502
  %504 = vmatmul.bf16.gmra.mxu0 %v349
  %v505 = vpop.f32.mrf.mxu0
  %v506 = vadd.f32 0.0, %v505
  %v507 = vpop.f32.mrf.mxu0
  %v508 = vadd.f32 0.0, %v507
  %509 = vmatmul.bf16.gmra.mxu0 %v352
  %v510 = vpop.f32.mrf.mxu0
  %v511 = vadd.f32 0.0, %v510
  %v512 = vpop.f32.mrf.mxu0
  %v513 = vadd.f32 0.0, %v512
  %514 = vmatmul.bf16.gmra.mxu0 %v355
  %v515 = vpop.f32.mrf.mxu0
  %v516 = vadd.f32 0.0, %v515
  %v517 = vpop.f32.mrf.mxu0
  %v518 = vadd.f32 0.0, %v517
  %519 = vmatmul.bf16.gmra.mxu0 %v358
  %v520 = vpop.f32.mrf.mxu0
  %v521 = vadd.f32 0.0, %v520
  %v522 = vpop.f32.mrf.mxu0
  %v523 = vadd.f32 0.0, %v522
  %524 = vmatmul.bf16.gmra.mxu0 %v361
  %v525 = vpop.f32.mrf.mxu0
  %v526 = vadd.f32 0.0, %v525
  %v527 = vpop.f32.mrf.mxu0
  %v528 = vadd.f32 0.0, %v527
  %529 = vmatmul.bf16.gmra.mxu0 %v364
  %v530 = vpop.f32.mrf.mxu0
  %v531 = vadd.f32 0.0, %v530
  %v532 = vpop.f32.mrf.mxu0
  %v533 = vadd.f32 0.0, %v532
  %534 = vmatmul.bf16.gmra.mxu0 %v367
  %v535 = vpop.f32.mrf.mxu0
  %v536 = vadd.f32 0.0, %v535
  %v537 = vpop.f32.mrf.mxu0
  %v538 = vadd.f32 0.0, %v537
  %539 = vmatmul.bf16.gmra.mxu0 %v370
  %v540 = vpop.f32.mrf.mxu0
  %v541 = vadd.f32 0.0, %v540
  %v542 = vpop.f32.mrf.mxu0
  %v543 = vadd.f32 0.0, %v542
  %544 = vdwg.mxu0
  %v545 = vpack.c.bf16 %v386, %v386
  %v546 = vpack.c.bf16 %v388, %v388
  %v547 = vpack.c.bf16 %v391, %v391
  %v548 = vpack.c.bf16 %v393, %v393
  %v549 = vpack.c.bf16 %v396, %v396
  %v550 = vpack.c.bf16 %v398, %v398
  %v551 = vpack.c.bf16 %v401, %v401
  %v552 = vpack.c.bf16 %v403, %v403
  %v553 = vpack.c.bf16 %v406, %v406
  %v554 = vpack.c.bf16 %v408, %v408
  %v555 = vpack.c.bf16 %v411, %v411
  %v556 = vpack.c.bf16 %v413, %v413
  %v557 = vpack.c.bf16 %v416, %v416
  %v558 = vpack.c.bf16 %v418, %v418
  %v559 = vpack.c.bf16 %v421, %v421
  %v560 = vpack.c.bf16 %v423, %v423
  %v561 = vpack.c.bf16 %v426, %v426
  %v562 = vpack.c.bf16 %v428, %v428
  %v563 = vpack.c.bf16 %v431, %v431
  %v564 = vpack.c.bf16 %v433, %v433
  %v565 = vpack.c.bf16 %v436, %v436
  %v566 = vpack.c.bf16 %v438, %v438
  %v567 = vpack.c.bf16 %v441, %v441
  %v568 = vpack.c.bf16 %v443, %v443
  %v569 = vpack.c.bf16 %v446, %v446
  %v570 = vpack.c.bf16 %v448, %v448
  %v571 = vpack.c.bf16 %v451, %v451
  %v572 = vpack.c.bf16 %v453, %v453
  %v573 = vpack.c.bf16 %v456, %v456
  %v574 = vpack.c.bf16 %v458, %v458
  %v575 = vpack.c.bf16 %v461, %v461
  %v576 = vpack.c.bf16 %v463, %v463
  %v577 = vpack.c.bf16 %v466, %v466
  %v578 = vpack.c.bf16 %v468, %v468
  %v579 = vpack.c.bf16 %v471, %v471
  %v580 = vpack.c.bf16 %v473, %v473
  %v581 = vpack.c.bf16 %v476, %v476
  %v582 = vpack.c.bf16 %v478, %v478
  %v583 = vpack.c.bf16 %v481, %v481
  %v584 = vpack.c.bf16 %v483, %v483
  %v585 = vpack.c.bf16 %v486, %v486
  %v586 = vpack.c.bf16 %v488, %v488
  %v587 = vpack.c.bf16 %v491, %v491
  %v588 = vpack.c.bf16 %v493, %v493
  %v589 = vpack.c.bf16 %v496, %v496
  %v590 = vpack.c.bf16 %v498, %v498
  %v591 = vpack.c.bf16 %v501, %v501
  %v592 = vpack.c.bf16 %v503, %v503
  %v593 = vpack.c.bf16 %v506, %v506
  %v594 = vpack.c.bf16 %v508, %v508
  %v595 = vpack.c.bf16 %v511, %v511
  %v596 = vpack.c.bf16 %v513, %v513
  %v597 = vpack.c.bf16 %v516, %v516
  %v598 = vpack.c.bf16 %v518, %v518
  %v599 = vpack.c.bf16 %v521, %v521
  %v600 = vpack.c.bf16 %v523, %v523
  %v601 = vpack.c.bf16 %v526, %v526
  %v602 = vpack.c.bf16 %v528, %v528
  %v603 = vpack.c.bf16 %v531, %v531
  %v604 = vpack.c.bf16 %v533, %v533
  %v605 = vpack.c.bf16 %v536, %v536
  %v606 = vpack.c.bf16 %v538, %v538
  %v607 = vpack.c.bf16 %v541, %v541
  %v608 = vpack.c.bf16 %v543, %v543
  %vm609 = vcmask 60416
  %610 = vst.msk [vmem:[%s2] sm:$0xf] %vm609, %v545
  %611 = vst.msk [vmem:[%s2 + $0x4] sm:$0xf] %vm609, %v546
  %612 = vst.msk [vmem:[%s2 + $0x8] sm:$0xf] %vm609, %v547
  %613 = vst.msk [vmem:[%s2 + $0xc] sm:$0xf] %vm609, %v548
  %614 = vst.msk [vmem:[%s2 + $0x10] sm:$0xf] %vm609, %v549
  %615 = vst.msk [vmem:[%s2 + $0x14] sm:$0xf] %vm609, %v550
  %616 = vst.msk [vmem:[%s2 + $0x18] sm:$0xf] %vm609, %v551
  %617 = vst.msk [vmem:[%s2 + $0x1c] sm:$0xf] %vm609, %v552
  %618 = vst.msk [vmem:[%s2 + $0x20] sm:$0xf] %vm609, %v553
  %619 = vst.msk [vmem:[%s2 + $0x24] sm:$0xf] %vm609, %v554
  %620 = vst.msk [vmem:[%s2 + $0x28] sm:$0xf] %vm609, %v555
  %621 = vst.msk [vmem:[%s2 + $0x2c] sm:$0xf] %vm609, %v556
  %622 = vst.msk [vmem:[%s2 + $0x30] sm:$0xf] %vm609, %v557
  %623 = vst.msk [vmem:[%s2 + $0x34] sm:$0xf] %vm609, %v558
  %624 = vst.msk [vmem:[%s2 + $0x38] sm:$0xf] %vm609, %v559
  %625 = vst.msk [vmem:[%s2 + $0x3c] sm:$0xf] %vm609, %v560
  %626 = vst.msk [vmem:[%s2 + $0x40] sm:$0xf] %vm609, %v561
  %627 = vst.msk [vmem:[%s2 + $0x44] sm:$0xf] %vm609, %v562
  %628 = vst.msk [vmem:[%s2 + $0x48] sm:$0xf] %vm609, %v563
  %629 = vst.msk [vmem:[%s2 + $0x4c] sm:$0xf] %vm609, %v564
  %630 = vst.msk [vmem:[%s2 + $0x50] sm:$0xf] %vm609, %v565
  %631 = vst.msk [vmem:[%s2 + $0x54] sm:$0xf] %vm609, %v566
  %632 = vst.msk [vmem:[%s2 + $0x58] sm:$0xf] %vm609, %v567
  %633 = vst.msk [vmem:[%s2 + $0x5c] sm:$0xf] %vm609, %v568
  %634 = vst.msk [vmem:[%s2 + $0x60] sm:$0xf] %vm609, %v569
  %635 = vst.msk [vmem:[%s2 + $0x64] sm:$0xf] %vm609, %v570
  %636 = vst.msk [vmem:[%s2 + $0x68] sm:$0xf] %vm609, %v571
  %637 = vst.msk [vmem:[%s2 + $0x6c] sm:$0xf] %vm609, %v572
  %638 = vst.msk [vmem:[%s2 + $0x70] sm:$0xf] %vm609, %v573
  %639 = vst.msk [vmem:[%s2 + $0x74] sm:$0xf] %vm609, %v574
  %640 = vst.msk [vmem:[%s2 + $0x78] sm:$0xf] %vm609, %v575
  %641 = vst.msk [vmem:[%s2 + $0x7c] sm:$0xf] %vm609, %v576
  %642 = vst.msk [vmem:[%s2 + $0x80] sm:$0xf] %vm609, %v577
  %643 = vst.msk [vmem:[%s2 + $0x84] sm:$0xf] %vm609, %v578
  %644 = vst.msk [vmem:[%s2 + $0x88] sm:$0xf] %vm609, %v579
  %645 = vst.msk [vmem:[%s2 + $0x8c] sm:$0xf] %vm609, %v580
  %646 = vst.msk [vmem:[%s2 + $0x90] sm:$0xf] %vm609, %v581
  %647 = vst.msk [vmem:[%s2 + $0x94] sm:$0xf] %vm609, %v582
  %648 = vst.msk [vmem:[%s2 + $0x98] sm:$0xf] %vm609, %v583
  %649 = vst.msk [vmem:[%s2 + $0x9c] sm:$0xf] %vm609, %v584
  %650 = vst.msk [vmem:[%s2 + $0xa0] sm:$0xf] %vm609, %v585
  %651 = vst.msk [vmem:[%s2 + $0xa4] sm:$0xf] %vm609, %v586
  %652 = vst.msk [vmem:[%s2 + $0xa8] sm:$0xf] %vm609, %v587
  %653 = vst.msk [vmem:[%s2 + $0xac] sm:$0xf] %vm609, %v588
  %654 = vst.msk [vmem:[%s2 + $0xb0] sm:$0xf] %vm609, %v589
  %655 = vst.msk [vmem:[%s2 + $0xb4] sm:$0xf] %vm609, %v590
  %656 = vst.msk [vmem:[%s2 + $0xb8] sm:$0xf] %vm609, %v591
  %657 = vst.msk [vmem:[%s2 + $0xbc] sm:$0xf] %vm609, %v592
  %658 = vst.msk [vmem:[%s2 + $0xc0] sm:$0xf] %vm609, %v593
  %659 = vst.msk [vmem:[%s2 + $0xc4] sm:$0xf] %vm609, %v594
  %660 = vst.msk [vmem:[%s2 + $0xc8] sm:$0xf] %vm609, %v595
  %661 = vst.msk [vmem:[%s2 + $0xcc] sm:$0xf] %vm609, %v596
  %662 = vst.msk [vmem:[%s2 + $0xd0] sm:$0xf] %vm609, %v597
  %663 = vst.msk [vmem:[%s2 + $0xd4] sm:$0xf] %vm609, %v598
  %664 = vst.msk [vmem:[%s2 + $0xd8] sm:$0xf] %vm609, %v599
  %665 = vst.msk [vmem:[%s2 + $0xdc] sm:$0xf] %vm609, %v600
  %666 = vst.msk [vmem:[%s2 + $0xe0] sm:$0xf] %vm609, %v601
  %667 = vst.msk [vmem:[%s2 + $0xe4] sm:$0xf] %vm609, %v602
  %668 = vst.msk [vmem:[%s2 + $0xe8] sm:$0xf] %vm609, %v603
  %669 = vst.msk [vmem:[%s2 + $0xec] sm:$0xf] %vm609, %v604
  %670 = vst.msk [vmem:[%s2 + $0xf0] sm:$0xf] %vm609, %v605
  %671 = vst.msk [vmem:[%s2 + $0xf4] sm:$0xf] %vm609, %v606
  %672 = vst.msk [vmem:[%s2 + $0xf8] sm:$0xf] %vm609, %v607
  %673 = vst.msk [vmem:[%s2 + $0xfc] sm:$0xf] %vm609, %v608
  %vm674 = vcmask 64512
  %v675 = vsel %vm674, %v386, 0.0
  %v676 = vsel %vm674, %v388, 0.0
  %v677 = vadd.f32 %v675, %v676
  %v678 = vsel %vm674, %v391, 0.0
  %v679 = vadd.f32 %v677, %v678
  %v680 = vsel %vm674, %v393, 0.0
  %v681 = vadd.f32 %v679, %v680
  %v682 = vsel %vm674, %v396, 0.0
  %v683 = vadd.f32 %v681, %v682
  %v684 = vsel %vm674, %v398, 0.0
  %v685 = vadd.f32 %v683, %v684
  %v686 = vsel %vm674, %v401, 0.0
  %v687 = vadd.f32 %v685, %v686
  %v688 = vsel %vm674, %v403, 0.0
  %v689 = vadd.f32 %v687, %v688
  %v690 = vsel %vm674, %v406, 0.0
  %v691 = vadd.f32 %v689, %v690
  %v692 = vsel %vm674, %v408, 0.0
  %v693 = vadd.f32 %v691, %v692
  %v694 = vsel %vm674, %v411, 0.0
  %v695 = vadd.f32 %v693, %v694
  %v696 = vsel %vm674, %v413, 0.0
  %v697 = vadd.f32 %v695, %v696
  %v698 = vsel %vm674, %v416, 0.0
  %v699 = vadd.f32 %v697, %v698
  %v700 = vsel %vm674, %v418, 0.0
  %v701 = vadd.f32 %v699, %v700
  %v702 = vsel %vm674, %v421, 0.0
  %v703 = vadd.f32 %v701, %v702
  %v704 = vsel %vm674, %v423, 0.0
  %v705 = vadd.f32 %v703, %v704
  %v706 = vsel %vm674, %v426, 0.0
  %v707 = vadd.f32 %v705, %v706
  %v708 = vsel %vm674, %v428, 0.0
  %v709 = vadd.f32 %v707, %v708
  %v710 = vsel %vm674, %v431, 0.0
  %v711 = vadd.f32 %v709, %v710
  %v712 = vsel %vm674, %v433, 0.0
  %v713 = vadd.f32 %v711, %v712
  %v714 = vsel %vm674, %v436, 0.0
  %v715 = vadd.f32 %v713, %v714
  %v716 = vsel %vm674, %v438, 0.0
  %v717 = vadd.f32 %v715, %v716
  %v718 = vsel %vm674, %v441, 0.0
  %v719 = vadd.f32 %v717, %v718
  %v720 = vsel %vm674, %v443, 0.0
  %v721 = vadd.f32 %v719, %v720
  %v722 = vsel %vm674, %v446, 0.0
  %v723 = vadd.f32 %v721, %v722
  %v724 = vsel %vm674, %v448, 0.0
  %v725 = vadd.f32 %v723, %v724
  %v726 = vsel %vm674, %v451, 0.0
  %v727 = vadd.f32 %v725, %v726
  %v728 = vsel %vm674, %v453, 0.0
  %v729 = vadd.f32 %v727, %v728
  %v730 = vsel %vm674, %v456, 0.0
  %v731 = vadd.f32 %v729, %v730
  %v732 = vsel %vm674, %v458, 0.0
  %v733 = vadd.f32 %v731, %v732
  %v734 = vsel %vm674, %v461, 0.0
  %v735 = vadd.f32 %v733, %v734
  %v736 = vsel %vm674, %v463, 0.0
  %v737 = vadd.f32 %v735, %v736
  %v738 = vsel %vm674, %v466, 0.0
  %v739 = vadd.f32 %v737, %v738
  %v740 = vsel %vm674, %v468, 0.0
  %v741 = vadd.f32 %v739, %v740
  %v742 = vsel %vm674, %v471, 0.0
  %v743 = vadd.f32 %v741, %v742
  %v744 = vsel %vm674, %v473, 0.0
  %v745 = vadd.f32 %v743, %v744
  %v746 = vsel %vm674, %v476, 0.0
  %v747 = vadd.f32 %v745, %v746
  %v748 = vsel %vm674, %v478, 0.0
  %v749 = vadd.f32 %v747, %v748
  %v750 = vsel %vm674, %v481, 0.0
  %v751 = vadd.f32 %v749, %v750
  %v752 = vsel %vm674, %v483, 0.0
  %v753 = vadd.f32 %v751, %v752
  %v754 = vsel %vm674, %v486, 0.0
  %v755 = vadd.f32 %v753, %v754
  %v756 = vsel %vm674, %v488, 0.0
  %v757 = vadd.f32 %v755, %v756
  %v758 = vsel %vm674, %v491, 0.0
  %v759 = vadd.f32 %v757, %v758
  %v760 = vsel %vm674, %v493, 0.0
  %v761 = vadd.f32 %v759, %v760
  %v762 = vsel %vm674, %v496, 0.0
  %v763 = vadd.f32 %v761, %v762
  %v764 = vsel %vm674, %v498, 0.0
  %v765 = vadd.f32 %v763, %v764
  %v766 = vsel %vm674, %v501, 0.0
  %v767 = vadd.f32 %v765, %v766
  %v768 = vsel %vm674, %v503, 0.0
  %v769 = vadd.f32 %v767, %v768
  %v770 = vsel %vm674, %v506, 0.0
  %v771 = vadd.f32 %v769, %v770
  %v772 = vsel %vm674, %v508, 0.0
  %v773 = vadd.f32 %v771, %v772
  %v774 = vsel %vm674, %v511, 0.0
  %v775 = vadd.f32 %v773, %v774
  %v776 = vsel %vm674, %v513, 0.0
  %v777 = vadd.f32 %v775, %v776
  %v778 = vsel %vm674, %v516, 0.0
  %v779 = vadd.f32 %v777, %v778
  %v780 = vsel %vm674, %v518, 0.0
  %v781 = vadd.f32 %v779, %v780
  %v782 = vsel %vm674, %v521, 0.0
  %v783 = vadd.f32 %v781, %v782
  %v784 = vsel %vm674, %v523, 0.0
  %v785 = vadd.f32 %v783, %v784
  %v786 = vsel %vm674, %v526, 0.0
  %v787 = vadd.f32 %v785, %v786
  %v788 = vsel %vm674, %v528, 0.0
  %v789 = vadd.f32 %v787, %v788
  %v790 = vsel %vm674, %v531, 0.0
  %v791 = vadd.f32 %v789, %v790
  %v792 = vsel %vm674, %v533, 0.0
  %v793 = vadd.f32 %v791, %v792
  %v794 = vsel %vm674, %v536, 0.0
  %v795 = vadd.f32 %v793, %v794
  %v796 = vsel %vm674, %v538, 0.0
  %v797 = vadd.f32 %v795, %v796
  %v798 = vsel %vm674, %v541, 0.0
  %v799 = vadd.f32 %v797, %v798
  %v800 = vsel %vm674, %v543, 0.0
  %v801 = vadd.f32 %v799, %v800
  %v802 = vrot.slane %v801, 4
  %v803 = vadd.f32 %v801, %v802
  %v804 = vrot.slane %v803, 2
  %v805 = vadd.f32 %v803, %v804
  %v806 = vrot.slane %v805, 1
  %v807 = vadd.f32 %v805, %v806
  %vm808 = vcmask 57344
  %809 = vst.msk [vmem:[%s3] sm:$0x1] %vm808, %v807
  %v810 = vmul.f32 %v386, %v386
  %v811 = vmul.f32 %v388, %v388
  %v812 = vmul.f32 %v391, %v391
  %v813 = vmul.f32 %v393, %v393
  %v814 = vmul.f32 %v396, %v396
  %v815 = vmul.f32 %v398, %v398
  %v816 = vmul.f32 %v401, %v401
  %v817 = vmul.f32 %v403, %v403
  %v818 = vmul.f32 %v406, %v406
  %v819 = vmul.f32 %v408, %v408
  %v820 = vmul.f32 %v411, %v411
  %v821 = vmul.f32 %v413, %v413
  %v822 = vmul.f32 %v416, %v416
  %v823 = vmul.f32 %v418, %v418
  %v824 = vmul.f32 %v421, %v421
  %v825 = vmul.f32 %v423, %v423
  %v826 = vmul.f32 %v426, %v426
  %v827 = vmul.f32 %v428, %v428
  %v828 = vmul.f32 %v431, %v431
  %v829 = vmul.f32 %v433, %v433
  %v830 = vmul.f32 %v436, %v436
  %v831 = vmul.f32 %v438, %v438
  %v832 = vmul.f32 %v441, %v441
  %v833 = vmul.f32 %v443, %v443
  %v834 = vmul.f32 %v446, %v446
  %v835 = vmul.f32 %v448, %v448
  %v836 = vmul.f32 %v451, %v451
  %v837 = vmul.f32 %v453, %v453
  %v838 = vmul.f32 %v456, %v456
  %v839 = vmul.f32 %v458, %v458
  %v840 = vmul.f32 %v461, %v461
  %v841 = vmul.f32 %v463, %v463
  %v842 = vmul.f32 %v466, %v466
  %v843 = vmul.f32 %v468, %v468
  %v844 = vmul.f32 %v471, %v471
  %v845 = vmul.f32 %v473, %v473
  %v846 = vmul.f32 %v476, %v476
  %v847 = vmul.f32 %v478, %v478
  %v848 = vmul.f32 %v481, %v481
  %v849 = vmul.f32 %v483, %v483
  %v850 = vmul.f32 %v486, %v486
  %v851 = vmul.f32 %v488, %v488
  %v852 = vmul.f32 %v491, %v491
  %v853 = vmul.f32 %v493, %v493
  %v854 = vmul.f32 %v496, %v496
  %v855 = vmul.f32 %v498, %v498
  %v856 = vmul.f32 %v501, %v501
  %v857 = vmul.f32 %v503, %v503
  %v858 = vmul.f32 %v506, %v506
  %v859 = vmul.f32 %v508, %v508
  %v860 = vmul.f32 %v511, %v511
  %v861 = vmul.f32 %v513, %v513
  %v862 = vmul.f32 %v516, %v516
  %v863 = vmul.f32 %v518, %v518
  %v864 = vmul.f32 %v521, %v521
  %v865 = vmul.f32 %v523, %v523
  %v866 = vmul.f32 %v526, %v526
  %v867 = vmul.f32 %v528, %v528
  %v868 = vmul.f32 %v531, %v531
  %v869 = vmul.f32 %v533, %v533
  %v870 = vmul.f32 %v536, %v536
  %v871 = vmul.f32 %v538, %v538
  %v872 = vmul.f32 %v541, %v541
  %v873 = vmul.f32 %v543, %v543
  %v874 = vsel %vm674, %v810, 0.0
  %v875 = vsel %vm674, %v811, 0.0
  %v876 = vadd.f32 %v874, %v875
  %v877 = vsel %vm674, %v812, 0.0
  %v878 = vadd.f32 %v876, %v877
  %v879 = vsel %vm674, %v813, 0.0
  %v880 = vadd.f32 %v878, %v879
  %v881 = vsel %vm674, %v814, 0.0
  %v882 = vadd.f32 %v880, %v881
  %v883 = vsel %vm674, %v815, 0.0
  %v884 = vadd.f32 %v882, %v883
  %v885 = vsel %vm674, %v816, 0.0
  %v886 = vadd.f32 %v884, %v885
  %v887 = vsel %vm674, %v817, 0.0
  %v888 = vadd.f32 %v886, %v887
  %v889 = vsel %vm674, %v818, 0.0
  %v890 = vadd.f32 %v888, %v889
  %v891 = vsel %vm674, %v819, 0.0
  %v892 = vadd.f32 %v890, %v891
  %v893 = vsel %vm674, %v820, 0.0
  %v894 = vadd.f32 %v892, %v893
  %v895 = vsel %vm674, %v821, 0.0
  %v896 = vadd.f32 %v894, %v895
  %v897 = vsel %vm674, %v822, 0.0
  %v898 = vadd.f32 %v896, %v897
  %v899 = vsel %vm674, %v823, 0.0
  %v900 = vadd.f32 %v898, %v899
  %v901 = vsel %vm674, %v824, 0.0
  %v902 = vadd.f32 %v900, %v901
  %v903 = vsel %vm674, %v825, 0.0
  %v904 = vadd.f32 %v902, %v903
  %v905 = vsel %vm674, %v826, 0.0
  %v906 = vadd.f32 %v904, %v905
  %v907 = vsel %vm674, %v827, 0.0
  %v908 = vadd.f32 %v906, %v907
  %v909 = vsel %vm674, %v828, 0.0
  %v910 = vadd.f32 %v908, %v909
  %v911 = vsel %vm674, %v829, 0.0
  %v912 = vadd.f32 %v910, %v911
  %v913 = vsel %vm674, %v830, 0.0
  %v914 = vadd.f32 %v912, %v913
  %v915 = vsel %vm674, %v831, 0.0
  %v916 = vadd.f32 %v914, %v915
  %v917 = vsel %vm674, %v832, 0.0
  %v918 = vadd.f32 %v916, %v917
  %v919 = vsel %vm674, %v833, 0.0
  %v920 = vadd.f32 %v918, %v919
  %v921 = vsel %vm674, %v834, 0.0
  %v922 = vadd.f32 %v920, %v921
  %v923 = vsel %vm674, %v835, 0.0
  %v924 = vadd.f32 %v922, %v923
  %v925 = vsel %vm674, %v836, 0.0
  %v926 = vadd.f32 %v924, %v925
  %v927 = vsel %vm674, %v837, 0.0
  %v928 = vadd.f32 %v926, %v927
  %v929 = vsel %vm674, %v838, 0.0
  %v930 = vadd.f32 %v928, %v929
  %v931 = vsel %vm674, %v839, 0.0
  %v932 = vadd.f32 %v930, %v931
  %v933 = vsel %vm674, %v840, 0.0
  %v934 = vadd.f32 %v932, %v933
  %v935 = vsel %vm674, %v841, 0.0
  %v936 = vadd.f32 %v934, %v935
  %v937 = vsel %vm674, %v842, 0.0
  %v938 = vadd.f32 %v936, %v937
  %v939 = vsel %vm674, %v843, 0.0
  %v940 = vadd.f32 %v938, %v939
  %v941 = vsel %vm674, %v844, 0.0
  %v942 = vadd.f32 %v940, %v941
  %v943 = vsel %vm674, %v845, 0.0
  %v944 = vadd.f32 %v942, %v943
  %v945 = vsel %vm674, %v846, 0.0
  %v946 = vadd.f32 %v944, %v945
  %v947 = vsel %vm674, %v847, 0.0
  %v948 = vadd.f32 %v946, %v947
  %v949 = vsel %vm674, %v848, 0.0
  %v950 = vadd.f32 %v948, %v949
  %v951 = vsel %vm674, %v849, 0.0
  %v952 = vadd.f32 %v950, %v951
  %v953 = vsel %vm674, %v850, 0.0
  %v954 = vadd.f32 %v952, %v953
  %v955 = vsel %vm674, %v851, 0.0
  %v956 = vadd.f32 %v954, %v955
  %v957 = vsel %vm674, %v852, 0.0
  %v958 = vadd.f32 %v956, %v957
  %v959 = vsel %vm674, %v853, 0.0
  %v960 = vadd.f32 %v958, %v959
  %v961 = vsel %vm674, %v854, 0.0
  %v962 = vadd.f32 %v960, %v961
  %v963 = vsel %vm674, %v855, 0.0
  %v964 = vadd.f32 %v962, %v963
  %v965 = vsel %vm674, %v856, 0.0
  %v966 = vadd.f32 %v964, %v965
  %v967 = vsel %vm674, %v857, 0.0
  %v968 = vadd.f32 %v966, %v967
  %v969 = vsel %vm674, %v858, 0.0
  %v970 = vadd.f32 %v968, %v969
  %v971 = vsel %vm674, %v859, 0.0
  %v972 = vadd.f32 %v970, %v971
  %v973 = vsel %vm674, %v860, 0.0
  %v974 = vadd.f32 %v972, %v973
  %v975 = vsel %vm674, %v861, 0.0
  %v976 = vadd.f32 %v974, %v975
  %v977 = vsel %vm674, %v862, 0.0
  %v978 = vadd.f32 %v976, %v977
  %v979 = vsel %vm674, %v863, 0.0
  %v980 = vadd.f32 %v978, %v979
  %v981 = vsel %vm674, %v864, 0.0
  %v982 = vadd.f32 %v980, %v981
  %v983 = vsel %vm674, %v865, 0.0
  %v984 = vadd.f32 %v982, %v983
  %v985 = vsel %vm674, %v866, 0.0
  %v986 = vadd.f32 %v984, %v985
  %v987 = vsel %vm674, %v867, 0.0
  %v988 = vadd.f32 %v986, %v987
  %v989 = vsel %vm674, %v868, 0.0
  %v990 = vadd.f32 %v988, %v989
  %v991 = vsel %vm674, %v869, 0.0
  %v992 = vadd.f32 %v990, %v991
  %v993 = vsel %vm674, %v870, 0.0
  %v994 = vadd.f32 %v992, %v993
  %v995 = vsel %vm674, %v871, 0.0
  %v996 = vadd.f32 %v994, %v995
  %v997 = vsel %vm674, %v872, 0.0
  %v998 = vadd.f32 %v996, %v997
  %v999 = vsel %vm674, %v873, 0.0
  %v1000 = vadd.f32 %v998, %v999
  %v1001 = vrot.slane %v1000, 4
  %v1002 = vadd.f32 %v1000, %v1001
  %v1003 = vrot.slane %v1002, 2
  %v1004 = vadd.f32 %v1002, %v1003
  %v1005 = vrot.slane %v1004, 1
  %v1006 = vadd.f32 %v1004, %v1005
  %1007 = vst.msk [vmem:[%s4] sm:$0x1] %vm808, %v1006
  // Predicated region
  $region10: #{dc_unet_block_forward.6} parent=0 // pred_check
    _
  $region11: #{dc_unet_block_forward.6} parent=0 // pred_check_branch
    %1009 = sbr.rel (0) target = $region13
  $region12: #{dc_unet_block_forward.6} parent=0 // pred_region
    _
  $region13: #{dc_unet_block_forward.6} parent=0 // pred_fallthru
    _
  // Predicated region
  $region14: #{dc_unet_block_forward.6} parent=0 // pred_check
    _
  $region15: #{dc_unet_block_forward.6} parent=0 // pred_check_branch
    %1011 = sbr.rel (0) target = $region17
  $region16: #{dc_unet_block_forward.6} parent=0 // pred_region
    _
  $region17: #{dc_unet_block_forward.6} parent=0 // pred_fallthru
    _
  // Predicated region
  $region18: #{dc_unet_block_forward.6} parent=0 // pred_check
    _
  $region19: #{dc_unet_block_forward.6} parent=0 // pred_check_branch
    %1013 = sbr.rel (0) target = $region21
  $region20: #{dc_unet_block_forward.6} parent=0 // pred_region
    _
  $region21: #{dc_unet_block_forward.6} parent=0 // pred_fallthru
    _
  // Predicated region
  $region22: #{dc_unet_block_forward.6} parent=0 // pred_check
    _
  $region23: #{dc_unet_block_forward.6} parent=0 // pred_check_branch
    %1015 = sbr.rel (0) target = $region25
  $region24: #{dc_unet_block_forward.6} parent=0 // pred_region
    _
  $region25: #{dc_unet_block_forward.6} parent=0 // pred_fallthru
    _
  // Predicated region
  $region26: #{dc_unet_block_forward.6} parent=0 // pred_check
    _
  $region27: #{dc_unet_block_forward.6} parent=0 // pred_check_branch
    %1017 = sbr.rel (0) target = $region29
  $region28: #{dc_unet_block_forward.6} parent=0 // pred_region
    _
  $region29: #{dc_unet_block_forward.6} parent=0 // pred_fallthru
    _
  // Predicated region
  $region30: #{dc_unet_block_forward.6} parent=0 // pred_check
    _
  $region31: #{dc_unet_block_forward.6} parent=0 // pred_check_branch
    %1019 = sbr.rel (0) target = $region33
  $region32: #{dc_unet_block_forward.6} parent=0 // pred_region
    _
  $region33: #{dc_unet_block_forward.6} parent=0 // pred_fallthru
    _

// kernel: dc_unet_block_forward.9
$region0: #{dc_unet_block_forward.9}
  #allocation0 [shape = 'u32[]', space=smem, size = 0x4, offset = 0x4, fixed_abs, tag = 'smem constant byte address 0x4 - core index']
  #allocation1 [shape = 'u32[72,128]{1,0:T(1,128)}', space=vmem, size = 0x9000, scoped, tag = 'internal scratch']
  %s0 = inlined_call_operand.vmem [shape: bf16[512,8], index: 0, kind: input, shape index: {}]
  %s1 = inlined_call_operand.vmem [shape: f32[1,8], index: 1, kind: input, shape index: {}]
  %s2 = inlined_call_operand.vmem [shape: f32[1,8], index: 2, kind: input, shape index: {}]
  %s3 = inlined_call_operand.vmem [shape: f32[512,8], index: 3, kind: output, shape index: {}]
  %s4 = sld [smem:[#allocation0]]
  $region22: #{dc_unet_block_forward.9} parent=0
    _
  %s6 = ssub.s32 1, %s4
  %s7 = scalar_select 0, %s6, %s4
  // Predicated region
  $region2: #{dc_unet_block_forward.9} parent=0 // pred_check
    _
  $region3: #{dc_unet_block_forward.9} parent=0 // pred_check_branch
    %9 = sbr.rel (0) target = $region5
  $region4: #{dc_unet_block_forward.9} parent=0 // pred_region
    _
  $region5: #{dc_unet_block_forward.9} parent=0 // pred_fallthru
    _
  // Predicated region
  $region6: #{dc_unet_block_forward.9} parent=0 // pred_check
    _
  $region7: #{dc_unet_block_forward.9} parent=0 // pred_check_branch
    %11 = sbr.rel (0) target = $region9
  $region8: #{dc_unet_block_forward.9} parent=0 // pred_region
    _
  $region9: #{dc_unet_block_forward.9} parent=0 // pred_fallthru
    _
  // Predicated region
  $region10: #{dc_unet_block_forward.9} parent=0 // pred_check
    _
  $region11: #{dc_unet_block_forward.9} parent=0 // pred_check_branch
    %13 = sbr.rel (0) target = $region13
  $region12: #{dc_unet_block_forward.9} parent=0 // pred_region
    _
  $region13: #{dc_unet_block_forward.9} parent=0 // pred_fallthru
    _
  %v14 = vld [vmem:[%s0] sm:$0xf]
  %v15 = vld [vmem:[%s0 + $0x4] sm:$0xf]
  %v16 = vld [vmem:[%s0 + $0x8] sm:$0xf]
  %v17 = vld [vmem:[%s0 + $0xc] sm:$0xf]
  %v18 = vld [vmem:[%s0 + $0x10] sm:$0xf]
  %v19 = vld [vmem:[%s0 + $0x14] sm:$0xf]
  %v20 = vld [vmem:[%s0 + $0x18] sm:$0xf]
  %v21 = vld [vmem:[%s0 + $0x1c] sm:$0xf]
  %v22 = vld [vmem:[%s0 + $0x20] sm:$0xf]
  %v23 = vld [vmem:[%s0 + $0x24] sm:$0xf]
  %v24 = vld [vmem:[%s0 + $0x28] sm:$0xf]
  %v25 = vld [vmem:[%s0 + $0x2c] sm:$0xf]
  %v26 = vld [vmem:[%s0 + $0x30] sm:$0xf]
  %v27 = vld [vmem:[%s0 + $0x34] sm:$0xf]
  %v28 = vld [vmem:[%s0 + $0x38] sm:$0xf]
  %v29 = vld [vmem:[%s0 + $0x3c] sm:$0xf]
  %v30 = vld [vmem:[%s0 + $0x40] sm:$0xf]
  %v31 = vld [vmem:[%s0 + $0x44] sm:$0xf]
  %v32 = vld [vmem:[%s0 + $0x48] sm:$0xf]
  %v33 = vld [vmem:[%s0 + $0x4c] sm:$0xf]
  %v34 = vld [vmem:[%s0 + $0x50] sm:$0xf]
  %v35 = vld [vmem:[%s0 + $0x54] sm:$0xf]
  %v36 = vld [vmem:[%s0 + $0x58] sm:$0xf]
  %v37 = vld [vmem:[%s0 + $0x5c] sm:$0xf]
  %v38 = vld [vmem:[%s0 + $0x60] sm:$0xf]
  %v39 = vld [vmem:[%s0 + $0x64] sm:$0xf]
  %v40 = vld [vmem:[%s0 + $0x68] sm:$0xf]
  %v41 = vld [vmem:[%s0 + $0x6c] sm:$0xf]
  %v42 = vld [vmem:[%s0 + $0x70] sm:$0xf]
  %v43 = vld [vmem:[%s0 + $0x74] sm:$0xf]
  %v44 = vld [vmem:[%s0 + $0x78] sm:$0xf]
  %v45 = vld [vmem:[%s0 + $0x7c] sm:$0xf]
  %v46 = vld [vmem:[%s0 + $0x80] sm:$0xf]
  %v47 = vld [vmem:[%s0 + $0x84] sm:$0xf]
  %v48 = vld [vmem:[%s0 + $0x88] sm:$0xf]
  %v49 = vld [vmem:[%s0 + $0x8c] sm:$0xf]
  %v50 = vld [vmem:[%s0 + $0x90] sm:$0xf]
  %v51 = vld [vmem:[%s0 + $0x94] sm:$0xf]
  %v52 = vld [vmem:[%s0 + $0x98] sm:$0xf]
  %v53 = vld [vmem:[%s0 + $0x9c] sm:$0xf]
  %v54 = vld [vmem:[%s0 + $0xa0] sm:$0xf]
  %v55 = vld [vmem:[%s0 + $0xa4] sm:$0xf]
  %v56 = vld [vmem:[%s0 + $0xa8] sm:$0xf]
  %v57 = vld [vmem:[%s0 + $0xac] sm:$0xf]
  %v58 = vld [vmem:[%s0 + $0xb0] sm:$0xf]
  %v59 = vld [vmem:[%s0 + $0xb4] sm:$0xf]
  %v60 = vld [vmem:[%s0 + $0xb8] sm:$0xf]
  %v61 = vld [vmem:[%s0 + $0xbc] sm:$0xf]
  %v62 = vld [vmem:[%s0 + $0xc0] sm:$0xf]
  %v63 = vld [vmem:[%s0 + $0xc4] sm:$0xf]
  %v64 = vld [vmem:[%s0 + $0xc8] sm:$0xf]
  %v65 = vld [vmem:[%s0 + $0xcc] sm:$0xf]
  %v66 = vld [vmem:[%s0 + $0xd0] sm:$0xf]
  %v67 = vld [vmem:[%s0 + $0xd4] sm:$0xf]
  %v68 = vld [vmem:[%s0 + $0xd8] sm:$0xf]
  %v69 = vld [vmem:[%s0 + $0xdc] sm:$0xf]
  %v70 = vld [vmem:[%s0 + $0xe0] sm:$0xf]
  %v71 = vld [vmem:[%s0 + $0xe4] sm:$0xf]
  %v72 = vld [vmem:[%s0 + $0xe8] sm:$0xf]
  %v73 = vld [vmem:[%s0 + $0xec] sm:$0xf]
  %v74 = vld [vmem:[%s0 + $0xf0] sm:$0xf]
  %v75 = vld [vmem:[%s0 + $0xf4] sm:$0xf]
  %v76 = vld [vmem:[%s0 + $0xf8] sm:$0xf]
  %v77 = vld [vmem:[%s0 + $0xfc] sm:$0xf]
  %v78 = vunpack.c.l.bf16 %v14
  %v79 = vunpack.c.l.bf16 %v15
  %v80 = vunpack.c.l.bf16 %v16
  %v81 = vunpack.c.l.bf16 %v17
  %v82 = vunpack.c.l.bf16 %v18
  %v83 = vunpack.c.l.bf16 %v19
  %v84 = vunpack.c.l.bf16 %v20
  %v85 = vunpack.c.l.bf16 %v21
  %v86 = vunpack.c.l.bf16 %v22
  %v87 = vunpack.c.l.bf16 %v23
  %v88 = vunpack.c.l.bf16 %v24
  %v89 = vunpack.c.l.bf16 %v25
  %v90 = vunpack.c.l.bf16 %v26
  %v91 = vunpack.c.l.bf16 %v27
  %v92 = vunpack.c.l.bf16 %v28
  %v93 = vunpack.c.l.bf16 %v29
  %v94 = vunpack.c.l.bf16 %v30
  %v95 = vunpack.c.l.bf16 %v31
  %v96 = vunpack.c.l.bf16 %v32
  %v97 = vunpack.c.l.bf16 %v33
  %v98 = vunpack.c.l.bf16 %v34
  %v99 = vunpack.c.l.bf16 %v35
  %v100 = vunpack.c.l.bf16 %v36
  %v101 = vunpack.c.l.bf16 %v37
  %v102 = vunpack.c.l.bf16 %v38
  %v103 = vunpack.c.l.bf16 %v39
  %v104 = vunpack.c.l.bf16 %v40
  %v105 = vunpack.c.l.bf16 %v41
  %v106 = vunpack.c.l.bf16 %v42
  %v107 = vunpack.c.l.bf16 %v43
  %v108 = vunpack.c.l.bf16 %v44
  %v109 = vunpack.c.l.bf16 %v45
  %v110 = vunpack.c.l.bf16 %v46
  %v111 = vunpack.c.l.bf16 %v47
  %v112 = vunpack.c.l.bf16 %v48
  %v113 = vunpack.c.l.bf16 %v49
  %v114 = vunpack.c.l.bf16 %v50
  %v115 = vunpack.c.l.bf16 %v51
  %v116 = vunpack.c.l.bf16 %v52
  %v117 = vunpack.c.l.bf16 %v53
  %v118 = vunpack.c.l.bf16 %v54
  %v119 = vunpack.c.l.bf16 %v55
  %v120 = vunpack.c.l.bf16 %v56
  %v121 = vunpack.c.l.bf16 %v57
  %v122 = vunpack.c.l.bf16 %v58
  %v123 = vunpack.c.l.bf16 %v59
  %v124 = vunpack.c.l.bf16 %v60
  %v125 = vunpack.c.l.bf16 %v61
  %v126 = vunpack.c.l.bf16 %v62
  %v127 = vunpack.c.l.bf16 %v63
  %v128 = vunpack.c.l.bf16 %v64
  %v129 = vunpack.c.l.bf16 %v65
  %v130 = vunpack.c.l.bf16 %v66
  %v131 = vunpack.c.l.bf16 %v67
  %v132 = vunpack.c.l.bf16 %v68
  %v133 = vunpack.c.l.bf16 %v69
  %v134 = vunpack.c.l.bf16 %v70
  %v135 = vunpack.c.l.bf16 %v71
  %v136 = vunpack.c.l.bf16 %v72
  %v137 = vunpack.c.l.bf16 %v73
  %v138 = vunpack.c.l.bf16 %v74
  %v139 = vunpack.c.l.bf16 %v75
  %v140 = vunpack.c.l.bf16 %v76
  %v141 = vunpack.c.l.bf16 %v77
  %v142 = vld [vmem:[%s1] sm:$0x1]
  %v144 = vperm.slane %v142, 0
  %v146 = vmul.f32 %v78, %v144
  %v147 = vmul.f32 %v79, %v144
  %v148 = vmul.f32 %v80, %v144
  %v149 = vmul.f32 %v81, %v144
  %v150 = vmul.f32 %v82, %v144
  %v151 = vmul.f32 %v83, %v144
  %v152 = vmul.f32 %v84, %v144
  %v153 = vmul.f32 %v85, %v144
  %v154 = vmul.f32 %v86, %v144
  %v155 = vmul.f32 %v87, %v144
  %v156 = vmul.f32 %v88, %v144
  %v157 = vmul.f32 %v89, %v144
  %v158 = vmul.f32 %v90, %v144
  %v159 = vmul.f32 %v91, %v144
  %v160 = vmul.f32 %v92, %v144
  %v161 = vmul.f32 %v93, %v144
  %v162 = vmul.f32 %v94, %v144
  %v163 = vmul.f32 %v95, %v144
  %v164 = vmul.f32 %v96, %v144
  %v165 = vmul.f32 %v97, %v144
  %v166 = vmul.f32 %v98, %v144
  %v167 = vmul.f32 %v99, %v144
  %v168 = vmul.f32 %v100, %v144
  %v169 = vmul.f32 %v101, %v144
  %v170 = vmul.f32 %v102, %v144
  %v171 = vmul.f32 %v103, %v144
  %v172 = vmul.f32 %v104, %v144
  %v173 = vmul.f32 %v105, %v144
  %v174 = vmul.f32 %v106, %v144
  %v175 = vmul.f32 %v107, %v144
  %v176 = vmul.f32 %v108, %v144
  %v177 = vmul.f32 %v109, %v144
  %v178 = vmul.f32 %v110, %v144
  %v179 = vmul.f32 %v111, %v144
  %v180 = vmul.f32 %v112, %v144
  %v181 = vmul.f32 %v113, %v144
  %v182 = vmul.f32 %v114, %v144
  %v183 = vmul.f32 %v115, %v144
  %v184 = vmul.f32 %v116, %v144
  %v185 = vmul.f32 %v117, %v144
  %v186 = vmul.f32 %v118, %v144
  %v187 = vmul.f32 %v119, %v144
  %v188 = vmul.f32 %v120, %v144
  %v189 = vmul.f32 %v121, %v144
  %v190 = vmul.f32 %v122, %v144
  %v191 = vmul.f32 %v123, %v144
  %v192 = vmul.f32 %v124, %v144
  %v193 = vmul.f32 %v125, %v144
  %v194 = vmul.f32 %v126, %v144
  %v195 = vmul.f32 %v127, %v144
  %v196 = vmul.f32 %v128, %v144
  %v197 = vmul.f32 %v129, %v144
  %v198 = vmul.f32 %v130, %v144
  %v199 = vmul.f32 %v131, %v144
  %v200 = vmul.f32 %v132, %v144
  %v201 = vmul.f32 %v133, %v144
  %v202 = vmul.f32 %v134, %v144
  %v203 = vmul.f32 %v135, %v144
  %v204 = vmul.f32 %v136, %v144
  %v205 = vmul.f32 %v137, %v144
  %v206 = vmul.f32 %v138, %v144
  %v207 = vmul.f32 %v139, %v144
  %v208 = vmul.f32 %v140, %v144
  %v209 = vmul.f32 %v141, %v144
  %v210 = vld [vmem:[%s2] sm:$0x1]
  %v212 = vperm.slane %v210, 0
  %v214 = vadd.f32 %v146, %v212
  %v215 = vadd.f32 %v147, %v212
  %v216 = vadd.f32 %v148, %v212
  %v217 = vadd.f32 %v149, %v212
  %v218 = vadd.f32 %v150, %v212
  %v219 = vadd.f32 %v151, %v212
  %v220 = vadd.f32 %v152, %v212
  %v221 = vadd.f32 %v153, %v212
  %v222 = vadd.f32 %v154, %v212
  %v223 = vadd.f32 %v155, %v212
  %v224 = vadd.f32 %v156, %v212
  %v225 = vadd.f32 %v157, %v212
  %v226 = vadd.f32 %v158, %v212
  %v227 = vadd.f32 %v159, %v212
  %v228 = vadd.f32 %v160, %v212
  %v229 = vadd.f32 %v161, %v212
  %v230 = vadd.f32 %v162, %v212
  %v231 = vadd.f32 %v163, %v212
  %v232 = vadd.f32 %v164, %v212
  %v233 = vadd.f32 %v165, %v212
  %v234 = vadd.f32 %v166, %v212
  %v235 = vadd.f32 %v167, %v212
  %v236 = vadd.f32 %v168, %v212
  %v237 = vadd.f32 %v169, %v212
  %v238 = vadd.f32 %v170, %v212
  %v239 = vadd.f32 %v171, %v212
  %v240 = vadd.f32 %v172, %v212
  %v241 = vadd.f32 %v173, %v212
  %v242 = vadd.f32 %v174, %v212
  %v243 = vadd.f32 %v175, %v212
  %v244 = vadd.f32 %v176, %v212
  %v245 = vadd.f32 %v177, %v212
  %v246 = vadd.f32 %v178, %v212
  %v247 = vadd.f32 %v179, %v212
  %v248 = vadd.f32 %v180, %v212
  %v249 = vadd.f32 %v181, %v212
  %v250 = vadd.f32 %v182, %v212
  %v251 = vadd.f32 %v183, %v212
  %v252 = vadd.f32 %v184, %v212
  %v253 = vadd.f32 %v185, %v212
  %v254 = vadd.f32 %v186, %v212
  %v255 = vadd.f32 %v187, %v212
  %v256 = vadd.f32 %v188, %v212
  %v257 = vadd.f32 %v189, %v212
  %v258 = vadd.f32 %v190, %v212
  %v259 = vadd.f32 %v191, %v212
  %v260 = vadd.f32 %v192, %v212
  %v261 = vadd.f32 %v193, %v212
  %v262 = vadd.f32 %v194, %v212
  %v263 = vadd.f32 %v195, %v212
  %v264 = vadd.f32 %v196, %v212
  %v265 = vadd.f32 %v197, %v212
  %v266 = vadd.f32 %v198, %v212
  %v267 = vadd.f32 %v199, %v212
  %v268 = vadd.f32 %v200, %v212
  %v269 = vadd.f32 %v201, %v212
  %v270 = vadd.f32 %v202, %v212
  %v271 = vadd.f32 %v203, %v212
  %v272 = vadd.f32 %v204, %v212
  %v273 = vadd.f32 %v205, %v212
  %v274 = vadd.f32 %v206, %v212
  %v275 = vadd.f32 %v207, %v212
  %v276 = vadd.f32 %v208, %v212
  %v277 = vadd.f32 %v209, %v212
  %vm278 = vcmp.ge.f32.partialorder %v214, 0.0
  %vm279 = vcmp.ge.f32.partialorder %v215, 0.0
  %vm280 = vcmp.ge.f32.partialorder %v216, 0.0
  %vm281 = vcmp.ge.f32.partialorder %v217, 0.0
  %vm282 = vcmp.ge.f32.partialorder %v218, 0.0
  %vm283 = vcmp.ge.f32.partialorder %v219, 0.0
  %vm284 = vcmp.ge.f32.partialorder %v220, 0.0
  %vm285 = vcmp.ge.f32.partialorder %v221, 0.0
  %vm286 = vcmp.ge.f32.partialorder %v222, 0.0
  %vm287 = vcmp.ge.f32.partialorder %v223, 0.0
  %vm288 = vcmp.ge.f32.partialorder %v224, 0.0
  %vm289 = vcmp.ge.f32.partialorder %v225, 0.0
  %vm290 = vcmp.ge.f32.partialorder %v226, 0.0
  %vm291 = vcmp.ge.f32.partialorder %v227, 0.0
  %vm292 = vcmp.ge.f32.partialorder %v228, 0.0
  %vm293 = vcmp.ge.f32.partialorder %v229, 0.0
  %vm294 = vcmp.ge.f32.partialorder %v230, 0.0
  %vm295 = vcmp.ge.f32.partialorder %v231, 0.0
  %vm296 = vcmp.ge.f32.partialorder %v232, 0.0
  %vm297 = vcmp.ge.f32.partialorder %v233, 0.0
  %vm298 = vcmp.ge.f32.partialorder %v234, 0.0
  %vm299 = vcmp.ge.f32.partialorder %v235, 0.0
  %vm300 = vcmp.ge.f32.partialorder %v236, 0.0
  %vm301 = vcmp.ge.f32.partialorder %v237, 0.0
  %vm302 = vcmp.ge.f32.partialorder %v238, 0.0
  %vm303 = vcmp.ge.f32.partialorder %v239, 0.0
  %vm304 = vcmp.ge.f32.partialorder %v240, 0.0
  %vm305 = vcmp.ge.f32.partialorder %v241, 0.0
  %vm306 = vcmp.ge.f32.partialorder %v242, 0.0
  %vm307 = vcmp.ge.f32.partialorder %v243, 0.0
  %vm308 = vcmp.ge.f32.partialorder %v244, 0.0
  %vm309 = vcmp.ge.f32.partialorder %v245, 0.0
  %vm310 = vcmp.ge.f32.partialorder %v246, 0.0
  %vm311 = vcmp.ge.f32.partialorder %v247, 0.0
  %vm312 = vcmp.ge.f32.partialorder %v248, 0.0
  %vm313 = vcmp.ge.f32.partialorder %v249, 0.0
  %vm314 = vcmp.ge.f32.partialorder %v250, 0.0
  %vm315 = vcmp.ge.f32.partialorder %v251, 0.0
  %vm316 = vcmp.ge.f32.partialorder %v252, 0.0
  %vm317 = vcmp.ge.f32.partialorder %v253, 0.0
  %vm318 = vcmp.ge.f32.partialorder %v254, 0.0
  %vm319 = vcmp.ge.f32.partialorder %v255, 0.0
  %vm320 = vcmp.ge.f32.partialorder %v256, 0.0
  %vm321 = vcmp.ge.f32.partialorder %v257, 0.0
  %vm322 = vcmp.ge.f32.partialorder %v258, 0.0
  %vm323 = vcmp.ge.f32.partialorder %v259, 0.0
  %vm324 = vcmp.ge.f32.partialorder %v260, 0.0
  %vm325 = vcmp.ge.f32.partialorder %v261, 0.0
  %vm326 = vcmp.ge.f32.partialorder %v262, 0.0
  %vm327 = vcmp.ge.f32.partialorder %v263, 0.0
  %vm328 = vcmp.ge.f32.partialorder %v264, 0.0
  %vm329 = vcmp.ge.f32.partialorder %v265, 0.0
  %vm330 = vcmp.ge.f32.partialorder %v266, 0.0
  %vm331 = vcmp.ge.f32.partialorder %v267, 0.0
  %vm332 = vcmp.ge.f32.partialorder %v268, 0.0
  %vm333 = vcmp.ge.f32.partialorder %v269, 0.0
  %vm334 = vcmp.ge.f32.partialorder %v270, 0.0
  %vm335 = vcmp.ge.f32.partialorder %v271, 0.0
  %vm336 = vcmp.ge.f32.partialorder %v272, 0.0
  %vm337 = vcmp.ge.f32.partialorder %v273, 0.0
  %vm338 = vcmp.ge.f32.partialorder %v274, 0.0
  %vm339 = vcmp.ge.f32.partialorder %v275, 0.0
  %vm340 = vcmp.ge.f32.partialorder %v276, 0.0
  %vm341 = vcmp.ge.f32.partialorder %v277, 0.0
  %v342 = vmul.f32 %v214, 0.01
  %v343 = vmul.f32 %v215, 0.01
  %v344 = vmul.f32 %v216, 0.01
  %v345 = vmul.f32 %v217, 0.01
  %v346 = vmul.f32 %v218, 0.01
  %v347 = vmul.f32 %v219, 0.01
  %v348 = vmul.f32 %v220, 0.01
  %v349 = vmul.f32 %v221, 0.01
  %v350 = vmul.f32 %v222, 0.01
  %v351 = vmul.f32 %v223, 0.01
  %v352 = vmul.f32 %v224, 0.01
  %v353 = vmul.f32 %v225, 0.01
  %v354 = vmul.f32 %v226, 0.01
  %v355 = vmul.f32 %v227, 0.01
  %v356 = vmul.f32 %v228, 0.01
  %v357 = vmul.f32 %v229, 0.01
  %v358 = vmul.f32 %v230, 0.01
  %v359 = vmul.f32 %v231, 0.01
  %v360 = vmul.f32 %v232, 0.01
  %v361 = vmul.f32 %v233, 0.01
  %v362 = vmul.f32 %v234, 0.01
  %v363 = vmul.f32 %v235, 0.01
  %v364 = vmul.f32 %v236, 0.01
  %v365 = vmul.f32 %v237, 0.01
  %v366 = vmul.f32 %v238, 0.01
  %v367 = vmul.f32 %v239, 0.01
  %v368 = vmul.f32 %v240, 0.01
  %v369 = vmul.f32 %v241, 0.01
  %v370 = vmul.f32 %v242, 0.01
  %v371 = vmul.f32 %v243, 0.01
  %v372 = vmul.f32 %v244, 0.01
  %v373 = vmul.f32 %v245, 0.01
  %v374 = vmul.f32 %v246, 0.01
  %v375 = vmul.f32 %v247, 0.01
  %v376 = vmul.f32 %v248, 0.01
  %v377 = vmul.f32 %v249, 0.01
  %v378 = vmul.f32 %v250, 0.01
  %v379 = vmul.f32 %v251, 0.01
  %v380 = vmul.f32 %v252, 0.01
  %v381 = vmul.f32 %v253, 0.01
  %v382 = vmul.f32 %v254, 0.01
  %v383 = vmul.f32 %v255, 0.01
  %v384 = vmul.f32 %v256, 0.01
  %v385 = vmul.f32 %v257, 0.01
  %v386 = vmul.f32 %v258, 0.01
  %v387 = vmul.f32 %v259, 0.01
  %v388 = vmul.f32 %v260, 0.01
  %v389 = vmul.f32 %v261, 0.01
  %v390 = vmul.f32 %v262, 0.01
  %v391 = vmul.f32 %v263, 0.01
  %v392 = vmul.f32 %v264, 0.01
  %v393 = vmul.f32 %v265, 0.01
  %v394 = vmul.f32 %v266, 0.01
  %v395 = vmul.f32 %v267, 0.01
  %v396 = vmul.f32 %v268, 0.01
  %v397 = vmul.f32 %v269, 0.01
  %v398 = vmul.f32 %v270, 0.01
  %v399 = vmul.f32 %v271, 0.01
  %v400 = vmul.f32 %v272, 0.01
  %v401 = vmul.f32 %v273, 0.01
  %v402 = vmul.f32 %v274, 0.01
  %v403 = vmul.f32 %v275, 0.01
  %v404 = vmul.f32 %v276, 0.01
  %v405 = vmul.f32 %v277, 0.01
  %v406 = vsel %vm278, %v214, %v342
  %v407 = vsel %vm279, %v215, %v343
  %v408 = vsel %vm280, %v216, %v344
  %v409 = vsel %vm281, %v217, %v345
  %v410 = vsel %vm282, %v218, %v346
  %v411 = vsel %vm283, %v219, %v347
  %v412 = vsel %vm284, %v220, %v348
  %v413 = vsel %vm285, %v221, %v349
  %v414 = vsel %vm286, %v222, %v350
  %v415 = vsel %vm287, %v223, %v351
  %v416 = vsel %vm288, %v224, %v352
  %v417 = vsel %vm289, %v225, %v353
  %v418 = vsel %vm290, %v226, %v354
  %v419 = vsel %vm291, %v227, %v355
  %v420 = vsel %vm292, %v228, %v356
  %v421 = vsel %vm293, %v229, %v357
  %v422 = vsel %vm294, %v230, %v358
  %v423 = vsel %vm295, %v231, %v359
  %v424 = vsel %vm296, %v232, %v360
  %v425 = vsel %vm297, %v233, %v361
  %v426 = vsel %vm298, %v234, %v362
  %v427 = vsel %vm299, %v235, %v363
  %v428 = vsel %vm300, %v236, %v364
  %v429 = vsel %vm301, %v237, %v365
  %v430 = vsel %vm302, %v238, %v366
  %v431 = vsel %vm303, %v239, %v367
  %v432 = vsel %vm304, %v240, %v368
  %v433 = vsel %vm305, %v241, %v369
  %v434 = vsel %vm306, %v242, %v370
  %v435 = vsel %vm307, %v243, %v371
  %v436 = vsel %vm308, %v244, %v372
  %v437 = vsel %vm309, %v245, %v373
  %v438 = vsel %vm310, %v246, %v374
  %v439 = vsel %vm311, %v247, %v375
  %v440 = vsel %vm312, %v248, %v376
  %v441 = vsel %vm313, %v249, %v377
  %v442 = vsel %vm314, %v250, %v378
  %v443 = vsel %vm315, %v251, %v379
  %v444 = vsel %vm316, %v252, %v380
  %v445 = vsel %vm317, %v253, %v381
  %v446 = vsel %vm318, %v254, %v382
  %v447 = vsel %vm319, %v255, %v383
  %v448 = vsel %vm320, %v256, %v384
  %v449 = vsel %vm321, %v257, %v385
  %v450 = vsel %vm322, %v258, %v386
  %v451 = vsel %vm323, %v259, %v387
  %v452 = vsel %vm324, %v260, %v388
  %v453 = vsel %vm325, %v261, %v389
  %v454 = vsel %vm326, %v262, %v390
  %v455 = vsel %vm327, %v263, %v391
  %v456 = vsel %vm328, %v264, %v392
  %v457 = vsel %vm329, %v265, %v393
  %v458 = vsel %vm330, %v266, %v394
  %v459 = vsel %vm331, %v267, %v395
  %v460 = vsel %vm332, %v268, %v396
  %v461 = vsel %vm333, %v269, %v397
  %v462 = vsel %vm334, %v270, %v398
  %v463 = vsel %vm335, %v271, %v399
  %v464 = vsel %vm336, %v272, %v400
  %v465 = vsel %vm337, %v273, %v401
  %v466 = vsel %vm338, %v274, %v402
  %v467 = vsel %vm339, %v275, %v403
  %v468 = vsel %vm340, %v276, %v404
  %v469 = vsel %vm341, %v277, %v405
  %vm470 = vcmask 64512
  %471 = vst.msk [vmem:[%s3] sm:$0xff] %vm470, %v406
  %472 = vst.msk [vmem:[%s3 + $0x8] sm:$0xff] %vm470, %v407
  %473 = vst.msk [vmem:[%s3 + $0x10] sm:$0xff] %vm470, %v408
  %474 = vst.msk [vmem:[%s3 + $0x18] sm:$0xff] %vm470, %v409
  %475 = vst.msk [vmem:[%s3 + $0x20] sm:$0xff] %vm470, %v410
  %476 = vst.msk [vmem:[%s3 + $0x28] sm:$0xff] %vm470, %v411
  %477 = vst.msk [vmem:[%s3 + $0x30] sm:$0xff] %vm470, %v412
  %478 = vst.msk [vmem:[%s3 + $0x38] sm:$0xff] %vm470, %v413
  %479 = vst.msk [vmem:[%s3 + $0x40] sm:$0xff] %vm470, %v414
  %480 = vst.msk [vmem:[%s3 + $0x48] sm:$0xff] %vm470, %v415
  %481 = vst.msk [vmem:[%s3 + $0x50] sm:$0xff] %vm470, %v416
  %482 = vst.msk [vmem:[%s3 + $0x58] sm:$0xff] %vm470, %v417
  %483 = vst.msk [vmem:[%s3 + $0x60] sm:$0xff] %vm470, %v418
  %484 = vst.msk [vmem:[%s3 + $0x68] sm:$0xff] %vm470, %v419
  %485 = vst.msk [vmem:[%s3 + $0x70] sm:$0xff] %vm470, %v420
  %486 = vst.msk [vmem:[%s3 + $0x78] sm:$0xff] %vm470, %v421
  %487 = vst.msk [vmem:[%s3 + $0x80] sm:$0xff] %vm470, %v422
  %488 = vst.msk [vmem:[%s3 + $0x88] sm:$0xff] %vm470, %v423
  %489 = vst.msk [vmem:[%s3 + $0x90] sm:$0xff] %vm470, %v424
  %490 = vst.msk [vmem:[%s3 + $0x98] sm:$0xff] %vm470, %v425
  %491 = vst.msk [vmem:[%s3 + $0xa0] sm:$0xff] %vm470, %v426
  %492 = vst.msk [vmem:[%s3 + $0xa8] sm:$0xff] %vm470, %v427
  %493 = vst.msk [vmem:[%s3 + $0xb0] sm:$0xff] %vm470, %v428
  %494 = vst.msk [vmem:[%s3 + $0xb8] sm:$0xff] %vm470, %v429
  %495 = vst.msk [vmem:[%s3 + $0xc0] sm:$0xff] %vm470, %v430
  %496 = vst.msk [vmem:[%s3 + $0xc8] sm:$0xff] %vm470, %v431
  %497 = vst.msk [vmem:[%s3 + $0xd0] sm:$0xff] %vm470, %v432
  %498 = vst.msk [vmem:[%s3 + $0xd8] sm:$0xff] %vm470, %v433
  %499 = vst.msk [vmem:[%s3 + $0xe0] sm:$0xff] %vm470, %v434
  %500 = vst.msk [vmem:[%s3 + $0xe8] sm:$0xff] %vm470, %v435
  %501 = vst.msk [vmem:[%s3 + $0xf0] sm:$0xff] %vm470, %v436
  %502 = vst.msk [vmem:[%s3 + $0xf8] sm:$0xff] %vm470, %v437
  %503 = vst.msk [vmem:[%s3 + $0x100] sm:$0xff] %vm470, %v438
  %504 = vst.msk [vmem:[%s3 + $0x108] sm:$0xff] %vm470, %v439
  %505 = vst.msk [vmem:[%s3 + $0x110] sm:$0xff] %vm470, %v440
  %506 = vst.msk [vmem:[%s3 + $0x118] sm:$0xff] %vm470, %v441
  %507 = vst.msk [vmem:[%s3 + $0x120] sm:$0xff] %vm470, %v442
  %508 = vst.msk [vmem:[%s3 + $0x128] sm:$0xff] %vm470, %v443
  %509 = vst.msk [vmem:[%s3 + $0x130] sm:$0xff] %vm470, %v444
  %510 = vst.msk [vmem:[%s3 + $0x138] sm:$0xff] %vm470, %v445
  %511 = vst.msk [vmem:[%s3 + $0x140] sm:$0xff] %vm470, %v446
  %512 = vst.msk [vmem:[%s3 + $0x148] sm:$0xff] %vm470, %v447
  %513 = vst.msk [vmem:[%s3 + $0x150] sm:$0xff] %vm470, %v448
  %514 = vst.msk [vmem:[%s3 + $0x158] sm:$0xff] %vm470, %v449
  %515 = vst.msk [vmem:[%s3 + $0x160] sm:$0xff] %vm470, %v450
  %516 = vst.msk [vmem:[%s3 + $0x168] sm:$0xff] %vm470, %v451
  %517 = vst.msk [vmem:[%s3 + $0x170] sm:$0xff] %vm470, %v452
  %518 = vst.msk [vmem:[%s3 + $0x178] sm:$0xff] %vm470, %v453
  %519 = vst.msk [vmem:[%s3 + $0x180] sm:$0xff] %vm470, %v454
  %520 = vst.msk [vmem:[%s3 + $0x188] sm:$0xff] %vm470, %v455
  %521 = vst.msk [vmem:[%s3 + $0x190] sm:$0xff] %vm470, %v456
  %522 = vst.msk [vmem:[%s3 + $0x198] sm:$0xff] %vm470, %v457
  %523 = vst.msk [vmem:[%s3 + $0x1a0] sm:$0xff] %vm470, %v458
  %524 = vst.msk [vmem:[%s3 + $0x1a8] sm:$0xff] %vm470, %v459
  %525 = vst.msk [vmem:[%s3 + $0x1b0] sm:$0xff] %vm470, %v460
  %526 = vst.msk [vmem:[%s3 + $0x1b8] sm:$0xff] %vm470, %v461
  %527 = vst.msk [vmem:[%s3 + $0x1c0] sm:$0xff] %vm470, %v462
  %528 = vst.msk [vmem:[%s3 + $0x1c8] sm:$0xff] %vm470, %v463
  %529 = vst.msk [vmem:[%s3 + $0x1d0] sm:$0xff] %vm470, %v464
  %530 = vst.msk [vmem:[%s3 + $0x1d8] sm:$0xff] %vm470, %v465
  %531 = vst.msk [vmem:[%s3 + $0x1e0] sm:$0xff] %vm470, %v466
  %532 = vst.msk [vmem:[%s3 + $0x1e8] sm:$0xff] %vm470, %v467
  %533 = vst.msk [vmem:[%s3 + $0x1f0] sm:$0xff] %vm470, %v468
  %534 = vst.msk [vmem:[%s3 + $0x1f8] sm:$0xff] %vm470, %v469
  // Predicated region
  $region14: #{dc_unet_block_forward.9} parent=0 // pred_check
    _
  $region15: #{dc_unet_block_forward.9} parent=0 // pred_check_branch
    %536 = sbr.rel (0) target = $region17
  $region16: #{dc_unet_block_forward.9} parent=0 // pred_region
    _
  $region17: #{dc_unet_block_forward.9} parent=0 // pred_fallthru
    _
  // Predicated region
  $region18: #{dc_unet_block_forward.9} parent=0 // pred_check
    _
  $region19: #{dc_unet_block_forward.9} parent=0 // pred_check_branch
    %538 = sbr.rel (0) target = $region21
  $region20: #{dc_unet_block_forward.9} parent=0 // pred_region
    _
  $region21: #{dc_unet_block_forward.9} parent=0 // pred_fallthru
    _

// kernel: dc_unet_block_forward.7
$region0: #{dc_unet_block_forward.7}
  #allocation0 [shape = 'u32[]', space=smem, size = 0x4, offset = 0x4, fixed_abs, tag = 'smem constant byte address 0x4 - core index']
  #allocation1 [shape = 'u32[72,128]{1,0:T(1,128)}', space=vmem, size = 0x9000, scoped, tag = 'internal scratch']
  #allocation2 [shape = 'f32[18,32,8]{2,1,0:T(8,128)}', space=vmem, size = 0x48000, scoped, tag = 'scratch operand']
  %s0 = inlined_call_operand.vmem [shape: bf16[2,16,16,8], index: 0, kind: input, shape index: {}]
  %s1 = inlined_call_operand.vmem [shape: bf16[2,2,16,8], index: 1, kind: input, shape index: {}]
  %s2 = inlined_call_operand.vmem [shape: f32[1,8], index: 2, kind: input, shape index: {}]
  %s3 = inlined_call_operand.vmem [shape: f32[1,8], index: 3, kind: input, shape index: {}]
  %s4 = inlined_call_operand.vmem [shape: bf16[72,18], index: 4, kind: input, shape index: {}]
  %s5 = inlined_call_operand.vmem [shape: f32[1,18], index: 5, kind: input, shape index: {}]
  %s6 = inlined_call_operand.vmem [shape: bf16[2,16,16,8], index: 6, kind: output, shape index: {0}]
  %s7 = inlined_call_operand.vmem [shape: f32[2,16,16,18], index: 7, kind: output, shape index: {1}]
  %8 = xla_tuple %s6, %s7
  %s9 = sld [smem:[#allocation0]]
  $region65: #{dc_unet_block_forward.7} parent=0
    _
  %s11 = ssub.s32 1, %s9
  %s12 = scalar_select 0, %s11, %s9
  loop: start=0, step=1, limit=4
  $region2: #{dc_unet_block_forward.7} parent=0 // loop_pre_header
    _
  $region3: #{dc_unet_block_forward.7} parent=0 // loop_header
    %s14 = sphi 0, %s18
    %p15 = scmp.ge.s32.totalorder %s14, 4
    %s21 = sphi 0, %s33
    %s22 = sphi 0, %s29
    %s23 = sphi 0, %s21
    %s24 = sphi 0, %s22
    %s25 = sphi 0, %s23
    %s26 = sphi 0, %s24
    %s38 = sphi 0, %s40
    %s41 = sphi 0, %s38
    %s42 = sphi 0, %s41
    %s58 = sphi 0, %s42
    %s66 = sphi 0, %s68
    %s69 = sphi 0, %s66
    %s70 = sphi 0, %s69
    %s86 = sphi 0, %s70
    %s90 = sphi 0, %s90
    %s92 = sphi 0, %s90
    %s93 = sphi 0, %s92
    %s107 = sphi 0, %s93
    %s111 = sphi 0, %s111
    %s113 = sphi 0, %s111
    %s114 = sphi 0, %s113
    %s128 = sphi 0, %s114
    %s132 = sphi 0, %s132
    %s134 = sphi 0, %s132
    %s135 = sphi 0, %s134
    %s149 = sphi 0, %s135
    %s153 = sphi 0, %s153
    %s155 = sphi 0, %s153
    %s156 = sphi 0, %s155
    %s170 = sphi 0, %s156
    %s178 = sphi 0, %s180
    %s181 = sphi 0, %s178
    %s182 = sphi 0, %s181
    %s198 = sphi 0, %s182
    %s206 = sphi 0, %s208
    %s209 = sphi 0, %s206
    %s210 = sphi 0, %s209
    %s226 = sphi 0, %s210
  $region4: #{dc_unet_block_forward.7} parent=0 // loop_header_branch
    %17 = sbr.rel (%p15) target = $region8
  $region5: #{dc_unet_block_forward.7} parent=0 // loop_body
    %s19 = ssub.s32 %s14, 1
    %s20 = ssub.s32 %s14, 2
    %s27 = sadd.s32 1, %s22
    %p28 = scmp.ge.s32.totalorder %s27, 1
    %s29 = scalar_select %p28, 0, %s27
    %s30 = sadd.s32 1, %s21
    %s31 = scalar_select %p28, %s30, %s21
    %p32 = scmp.ge.s32.totalorder %s31, 2
    %s33 = scalar_select %p32, 0, %s31
    %s34 = ssub.s32 %s21, %s33
    %s35 = ssub.s32 %s22, %s29
    %s36 = sor.u32 %s34, %s35
    %p37 = scmp.eq.s32.totalorder %s36, 0
    %s39 = sadd.s32 %s38, 1
    %s40 = scalar_select %p37, %s38, %s39
    %p43 = pneg %p37
    %p44 = scmp.eq.s32.totalorder %s14, 1
    %p45 = por %p43, %p44
    %p46 = scmp.ne.s32.totalorder %s38, %s41
    %p47 = scmp.eq.s32.totalorder %s14, 0
    %p48 = por %p46, %p47
    %p49 = scmp.ne.s32.totalorder %s38, %s41
    %p50 = scmp.eq.s32.totalorder %s19, 1
    %p51 = por %p49, %p50
    %p52 = scmp.ne.s32.totalorder %s41, %s42
    %p53 = scmp.eq.s32.totalorder %s19, 0
    %p54 = por %p52, %p53
    %p55 = scmp.ne.s32.totalorder %s41, %s42
    %p56 = scmp.eq.s32.totalorder %s20, 1
    %p57 = por %p55, %p56
    %p59 = scmp.ne.s32.totalorder %s42, %s58
    %p60 = scmp.eq.s32.totalorder %s20, 0
    %p61 = por %p59, %p60
    %s62 = sadd.s32 %s21, %s22
    %s63 = sadd.s32 %s33, %s29
    %s64 = ssub.s32 %s62, %s63
    %p65 = scmp.eq.s32.totalorder %s64, 0
    %s67 = sadd.s32 %s66, 1
    %s68 = scalar_select %p65, %s66, %s67
    %p71 = pneg %p65
    %p72 = scmp.eq.s32.totalorder %s14, 1
    %p73 = por %p71, %p72
    %p74 = scmp.ne.s32.totalorder %s66, %s69
    %p75 = scmp.eq.s32.totalorder %s14, 0
    %p76 = por %p74, %p75
    %p77 = scmp.ne.s32.totalorder %s66, %s69
    %p78 = scmp.eq.s32.totalorder %s19, 1
    %p79 = por %p77, %p78
    %p80 = scmp.ne.s32.totalorder %s69, %s70
    %p81 = scmp.eq.s32.totalorder %s19, 0
    %p82 = por %p80, %p81
    %p83 = scmp.ne.s32.totalorder %s69, %s70
    %p84 = scmp.eq.s32.totalorder %s20, 1
    %p85 = por %p83, %p84
    %p87 = scmp.ne.s32.totalorder %s70, %s86
    %p88 = scmp.eq.s32.totalorder %s20, 0
    %p89 = por %p87, %p88
    %s91 = sadd.s32 %s90, 1
    %p94 = scmp.eq.s32.totalorder %s14, 1
    %p95 = scmp.ne.s32.totalorder %s90, %s92
    %p96 = scmp.eq.s32.totalorder %s14, 0
    %p97 = por %p95, %p96
    %p98 = scmp.ne.s32.totalorder %s90, %s92
    %p99 = scmp.eq.s32.totalorder %s19, 1
    %p100 = por %p98, %p99
    %p101 = scmp.ne.s32.totalorder %s92, %s93
    %p102 = scmp.eq.s32.totalorder %s19, 0
    %p103 = por %p101, %p102
    %p104 = scmp.ne.s32.totalorder %s92, %s93
    %p105 = scmp.eq.s32.totalorder %s20, 1
    %p106 = por %p104, %p105
    %p108 = scmp.ne.s32.totalorder %s93, %s107
    %p109 = scmp.eq.s32.totalorder %s20, 0
    %p110 = por %p108, %p109
    %s112 = sadd.s32 %s111, 1
    %p115 = scmp.eq.s32.totalorder %s14, 1
    %p116 = scmp.ne.s32.totalorder %s111, %s113
    %p117 = scmp.eq.s32.totalorder %s14, 0
    %p118 = por %p116, %p117
    %p119 = scmp.ne.s32.totalorder %s111, %s113
    %p120 = scmp.eq.s32.totalorder %s19, 1
    %p121 = por %p119, %p120
    %p122 = scmp.ne.s32.totalorder %s113, %s114
    %p123 = scmp.eq.s32.totalorder %s19, 0
    %p124 = por %p122, %p123
    %p125 = scmp.ne.s32.totalorder %s113, %s114
    %p126 = scmp.eq.s32.totalorder %s20, 1
    %p127 = por %p125, %p126
    %p129 = scmp.ne.s32.totalorder %s114, %s128
    %p130 = scmp.eq.s32.totalorder %s20, 0
    %p131 = por %p129, %p130
    %s133 = sadd.s32 %s132, 1
    %p136 = scmp.eq.s32.totalorder %s14, 1
    %p137 = scmp.ne.s32.totalorder %s132, %s134
    %p138 = scmp.eq.s32.totalorder %s14, 0
    %p139 = por %p137, %p138
    %p140 = scmp.ne.s32.totalorder %s132, %s134
    %p141 = scmp.eq.s32.totalorder %s19, 1
    %p142 = por %p140, %p141
    %p143 = scmp.ne.s32.totalorder %s134, %s135
    %p144 = scmp.eq.s32.totalorder %s19, 0
    %p145 = por %p143, %p144
    %p146 = scmp.ne.s32.totalorder %s134, %s135
    %p147 = scmp.eq.s32.totalorder %s20, 1
    %p148 = por %p146, %p147
    %p150 = scmp.ne.s32.totalorder %s135, %s149
    %p151 = scmp.eq.s32.totalorder %s20, 0
    %p152 = por %p150, %p151
    %s154 = sadd.s32 %s153, 1
    %p157 = scmp.eq.s32.totalorder %s14, 1
    %p158 = scmp.ne.s32.totalorder %s153, %s155
    %p159 = scmp.eq.s32.totalorder %s14, 0
    %p160 = por %p158, %p159
    %p161 = scmp.ne.s32.totalorder %s153, %s155
    %p162 = scmp.eq.s32.totalorder %s19, 1
    %p163 = por %p161, %p162
    %p164 = scmp.ne.s32.totalorder %s155, %s156
    %p165 = scmp.eq.s32.totalorder %s19, 0
    %p166 = por %p164, %p165
    %p167 = scmp.ne.s32.totalorder %s155, %s156
    %p168 = scmp.eq.s32.totalorder %s20, 1
    %p169 = por %p167, %p168
    %p171 = scmp.ne.s32.totalorder %s156, %s170
    %p172 = scmp.eq.s32.totalorder %s20, 0
    %p173 = por %p171, %p172
    %s174 = ssub.s32 %s21, %s33
    %s175 = ssub.s32 %s22, %s29
    %s176 = sor.u32 %s174, %s175
    %p177 = scmp.eq.s32.totalorder %s176, 0
    %s179 = sadd.s32 %s178, 1
    %s180 = scalar_select %p177, %s178, %s179
    %p183 = pneg %p177
    %p184 = scmp.eq.s32.totalorder %s14, 1
    %p185 = por %p183, %p184
    %p186 = scmp.ne.s32.totalorder %s178, %s181
    %p187 = scmp.eq.s32.totalorder %s14, 0
    %p188 = por %p186, %p187
    %p189 = scmp.ne.s32.totalorder %s178, %s181
    %p190 = scmp.eq.s32.totalorder %s19, 1
    %p191 = por %p189, %p190
    %p192 = scmp.ne.s32.totalorder %s181, %s182
    %p193 = scmp.eq.s32.totalorder %s19, 0
    %p194 = por %p192, %p193
    %p195 = scmp.ne.s32.totalorder %s181, %s182
    %p196 = scmp.eq.s32.totalorder %s20, 1
    %p197 = por %p195, %p196
    %p199 = scmp.ne.s32.totalorder %s182, %s198
    %p200 = scmp.eq.s32.totalorder %s20, 0
    %p201 = por %p199, %p200
    %s202 = ssub.s32 %s21, %s33
    %s203 = ssub.s32 %s22, %s29
    %s204 = sor.u32 %s202, %s203
    %p205 = scmp.eq.s32.totalorder %s204, 0
    %s207 = sadd.s32 %s206, 1
    %s208 = scalar_select %p205, %s206, %s207
    %p211 = pneg %p205
    %p212 = scmp.eq.s32.totalorder %s14, 1
    %p213 = por %p211, %p212
    %p214 = scmp.ne.s32.totalorder %s206, %s209
    %p215 = scmp.eq.s32.totalorder %s14, 0
    %p216 = por %p214, %p215
    %p217 = scmp.ne.s32.totalorder %s206, %s209
    %p218 = scmp.eq.s32.totalorder %s19, 1
    %p219 = por %p217, %p218
    %p220 = scmp.ne.s32.totalorder %s209, %s210
    %p221 = scmp.eq.s32.totalorder %s19, 0
    %p222 = por %p220, %p221
    %p223 = scmp.ne.s32.totalorder %s209, %s210
    %p224 = scmp.eq.s32.totalorder %s20, 1
    %p225 = por %p223, %p224
    %p227 = scmp.ne.s32.totalorder %s210, %s226
    %p228 = scmp.eq.s32.totalorder %s20, 0
    %p229 = por %p227, %p228
    %p230 = scmp.le.s32.totalorder 1, %s14
    %p231 = scmp.lt.s32.totalorder %s14, 3
    %p232 = pnand %p230, %p231
    %p233 = pneg %p232
    // Predicated region
    $region9: #{dc_unet_block_forward.7} parent=5 // pred_check
      _
    $region10: #{dc_unet_block_forward.7} parent=5 // pred_check_branch
      %235 = sbr.rel (%p232) target = $region12
    $region11: #{dc_unet_block_forward.7} parent=5 // pred_region
      %s236 = ssub.s32 %s14, 1
      // Predicated region
      $region13: #{dc_unet_block_forward.7} parent=11 // pred_check
        %p237 = pneg %p103
      $region14: #{dc_unet_block_forward.7} parent=11 // pred_check_branch
        %239 = sbr.rel (%p237) target = $region16
      $region15: #{dc_unet_block_forward.7} parent=11 // pred_region
        _
      $region16: #{dc_unet_block_forward.7} parent=11 // pred_fallthru
        _
      // Predicated region
      $region17: #{dc_unet_block_forward.7} parent=11 // pred_check
        %p240 = pneg %p124
      $region18: #{dc_unet_block_forward.7} parent=11 // pred_check_branch
        %242 = sbr.rel (%p240) target = $region20
      $region19: #{dc_unet_block_forward.7} parent=11 // pred_region
        _
      $region20: #{dc_unet_block_forward.7} parent=11 // pred_fallthru
        _
      // Predicated region
      $region21: #{dc_unet_block_forward.7} parent=11 // pred_check
        %p243 = pneg %p145
      $region22: #{dc_unet_block_forward.7} parent=11 // pred_check_branch
        %245 = sbr.rel (%p243) target = $region24
      $region23: #{dc_unet_block_forward.7} parent=11 // pred_region
        _
      $region24: #{dc_unet_block_forward.7} parent=11 // pred_fallthru
        _
      // Predicated region
      $region25: #{dc_unet_block_forward.7} parent=11 // pred_check
        %p246 = pneg %p166
      $region26: #{dc_unet_block_forward.7} parent=11 // pred_check_branch
        %248 = sbr.rel (%p246) target = $region28
      $region27: #{dc_unet_block_forward.7} parent=11 // pred_region
        _
      $region28: #{dc_unet_block_forward.7} parent=11 // pred_fallthru
        _
    $region12: #{dc_unet_block_forward.7} parent=5 // pred_fallthru
      _
    %p249 = scmp.lt.s32.totalorder %s14, 2
    // Predicated region
    $region29: #{dc_unet_block_forward.7} parent=5 // pred_check
      %p250 = pneg %p249
    $region30: #{dc_unet_block_forward.7} parent=5 // pred_check_branch
      %252 = sbr.rel (%p250) target = $region32
    $region31: #{dc_unet_block_forward.7} parent=5 // pred_region
      // Predicated region
      $region33: #{dc_unet_block_forward.7} parent=31 // pred_check
        %p253 = pneg %p48
      $region34: #{dc_unet_block_forward.7} parent=31 // pred_check_branch
        %255 = sbr.rel (%p253) target = $region36
      $region35: #{dc_unet_block_forward.7} parent=31 // pred_region
        %s256 = smul.u32 16, %s22
        %p257 = scmp.lt.s32.totalorder %s21, 1
        %s258 = scalar_select %p257, %s21, 1
        %p259 = scmp.lt.s32.totalorder %s256, 15
        %s260 = scalar_select %p259, %s256, 15
        %s261 = smul.addr %s260, 2
        %s262 = smul.addr %s258, 32
        %s263 = sadd.s32 %s261, %s262
        %s264 = smul.addr %s263, 4
        %s265 = scalar_lea.vmem %s0, %s264
        %s266 = smul.u32 16, %s22
      $region36: #{dc_unet_block_forward.7} parent=31 // pred_fallthru
        _
      // Predicated region
      $region37: #{dc_unet_block_forward.7} parent=31 // pred_check
        %p267 = pneg %p76
      $region38: #{dc_unet_block_forward.7} parent=31 // pred_check_branch
        %269 = sbr.rel (%p267) target = $region40
      $region39: #{dc_unet_block_forward.7} parent=31 // pred_region
        %s270 = sadd.s32 %s21, %s22
        %p271 = scmp.lt.s32.totalorder %s270, 1
        %s272 = scalar_select %p271, %s270, 1
        %s273 = smul.addr %s272, 4
        %s274 = smul.addr %s273, 4
        %s275 = scalar_lea.vmem %s1, %s274
        %s276 = sadd.s32 %s21, %s22
      $region40: #{dc_unet_block_forward.7} parent=31 // pred_fallthru
        _
    $region32: #{dc_unet_block_forward.7} parent=5 // pred_fallthru
      _
    %p277 = scmp.le.s32.totalorder 1, %s14
    %p278 = scmp.lt.s32.totalorder %s14, 3
    %p279 = pnand %p277, %p278
    %p280 = pneg %p279
    // Predicated region
    $region41: #{dc_unet_block_forward.7} parent=5 // pred_check
      _
    $region42: #{dc_unet_block_forward.7} parent=5 // pred_check_branch
      %282 = sbr.rel (%p279) target = $region44
    $region43: #{dc_unet_block_forward.7} parent=5 // pred_region
      %s283 = ssub.s32 %s14, 1
      %s284 = smul.u32 16, %s24
      %p285 = scmp.lt.s32.totalorder %s23, 1
      %s286 = scalar_select %p285, %s23, 1
      %p287 = scmp.lt.s32.totalorder %s284, 15
      %s288 = scalar_select %p287, %s284, 15
      %s289 = smul.addr %s288, 2
      %s290 = smul.addr %s286, 32
      %s291 = sadd.s32 %s289, %s290
      %s292 = smul.addr %s291, 4
      %s293 = scalar_lea.vmem %s0, %s292
      %p294 = pneg %p54
      %p295 = pneg %p51
      %s296 = sadd.s32 %s23, %s24
      %p297 = scmp.lt.s32.totalorder %s296, 1
      %s298 = scalar_select %p297, %s296, 1
      %s299 = smul.addr %s298, 4
      %s300 = smul.addr %s299, 4
      %s301 = scalar_lea.vmem %s1, %s300
      %p302 = pneg %p82
      %p303 = pneg %p79
      %p304 = pneg %p103
      %p305 = pneg %p100
      %p306 = pneg %p124
      %p307 = pneg %p121
      %p308 = pneg %p145
      %p309 = pneg %p142
      %p310 = pneg %p166
      %p311 = pneg %p163
      %p312 = pneg %p194
      %p313 = pneg %p191
      %s314 = smul.u32 16, %s24
      %p315 = scmp.lt.s32.totalorder %s23, 1
      %s316 = scalar_select %p315, %s23, 1
      %p317 = scmp.lt.s32.totalorder %s314, 15
      %s318 = scalar_select %p317, %s314, 15
      %s319 = smul.addr %s318, 2
      %s320 = smul.addr %s316, 32
      %s321 = sadd.s32 %s319, %s320
      %s322 = smul.addr %s321, 4
      %s323 = scalar_lea.vmem %s6, %s322
      %p324 = pneg %p222
      %p325 = pneg %p219
      %s326 = smul.u32 16, %s24
      %p327 = scmp.lt.s32.totalorder %s23, 1
      %s328 = scalar_select %p327, %s23, 1
      %p329 = scmp.lt.s32.totalorder %s326, 15
      %s330 = scalar_select %p329, %s326, 15
      %s331 = smul.addr %s330, 2
      %s332 = smul.addr %s328, 32
      %s333 = sadd.s32 %s331, %s332
      %s334 = smul.addr %s333, 8
      %s335 = scalar_lea.vmem %s7, %s334
      %s336 = smul.u32 16, %s24
      %p337 = scmp.lt.s32.totalorder %s23, 1
      %s338 = scalar_select %p337, %s23, 1
      %p339 = scmp.lt.s32.totalorder %s336, 15
      %s340 = scalar_select %p339, %s336, 15
      %s341 = smul.addr %s340, 2
      %s342 = smul.addr %s338, 32
      %s343 = sadd.s32 %s341, %s342
      %s344 = smul.addr %s343, 4
      %s345 = scalar_lea.vmem %s0, %s344
      %s346 = smul.u32 16, %s24
      %s347 = sadd.s32 %s23, %s24
      %p348 = scmp.lt.s32.totalorder %s347, 1
      %s349 = scalar_select %p348, %s347, 1
      %s350 = smul.addr %s349, 4
      %s351 = smul.addr %s350, 4
      %s352 = scalar_lea.vmem %s1, %s351
      %s353 = sadd.s32 %s23, %s24
      %s354 = smul.u32 16, %s24
      %p355 = scmp.lt.s32.totalorder %s23, 1
      %s356 = scalar_select %p355, %s23, 1
      %p357 = scmp.lt.s32.totalorder %s354, 15
      %s358 = scalar_select %p357, %s354, 15
      %s359 = smul.addr %s358, 2
      %s360 = smul.addr %s356, 32
      %s361 = sadd.s32 %s359, %s360
      %s362 = smul.addr %s361, 4
      %s363 = scalar_lea.vmem %s6, %s362
      %s364 = smul.u32 16, %s24
      %s365 = smul.u32 16, %s24
      %p366 = scmp.lt.s32.totalorder %s23, 1
      %s367 = scalar_select %p366, %s23, 1
      %p368 = scmp.lt.s32.totalorder %s365, 15
      %s369 = scalar_select %p368, %s365, 15
      %s370 = smul.addr %s369, 2
      %s371 = smul.addr %s367, 32
      %s372 = sadd.s32 %s370, %s371
      %s373 = smul.addr %s372, 8
      %s374 = scalar_lea.vmem %s7, %s373
      %s375 = smul.u32 16, %s24
      %vm377 = vcmask 64512
      %378 = vst.msk [vmem:[#allocation2] sm:$0xff] %vm377, 0.0
      %379 = vst.msk [vmem:[#allocation2 + $0x20] sm:$0xff] %vm377, 0.0
      %380 = vst.msk [vmem:[#allocation2 + $0x40] sm:$0xff] %vm377, 0.0
      %381 = vst.msk [vmem:[#allocation2 + $0x60] sm:$0xff] %vm377, 0.0
      %382 = vst.msk [vmem:[#allocation2 + $0x80] sm:$0xff] %vm377, 0.0
      %383 = vst.msk [vmem:[#allocation2 + $0xa0] sm:$0xff] %vm377, 0.0
      %384 = vst.msk [vmem:[#allocation2 + $0xc0] sm:$0xff] %vm377, 0.0
      %385 = vst.msk [vmem:[#allocation2 + $0xe0] sm:$0xff] %vm377, 0.0
      %386 = vst.msk [vmem:[#allocation2 + $0x100] sm:$0xff] %vm377, 0.0
      %387 = vst.msk [vmem:[#allocation2 + $0x120] sm:$0xff] %vm377, 0.0
      %388 = vst.msk [vmem:[#allocation2 + $0x140] sm:$0xff] %vm377, 0.0
      %389 = vst.msk [vmem:[#allocation2 + $0x160] sm:$0xff] %vm377, 0.0
      %390 = vst.msk [vmem:[#allocation2 + $0x180] sm:$0xff] %vm377, 0.0
      %391 = vst.msk [vmem:[#allocation2 + $0x1a0] sm:$0xff] %vm377, 0.0
      %392 = vst.msk [vmem:[#allocation2 + $0x1c0] sm:$0xff] %vm377, 0.0
      %393 = vst.msk [vmem:[#allocation2 + $0x1e0] sm:$0xff] %vm377, 0.0
      %394 = vst.msk [vmem:[#allocation2 + $0x200] sm:$0xff] %vm377, 0.0
      %395 = vst.msk [vmem:[#allocation2 + $0x220] sm:$0xff] %vm377, 0.0
      %396 = vst.msk [vmem:[#allocation2 + $0x18] sm:$0xff] %vm377, 0.0
      %397 = vst.msk [vmem:[#allocation2 + $0x38] sm:$0xff] %vm377, 0.0
      %398 = vst.msk [vmem:[#allocation2 + $0x58] sm:$0xff] %vm377, 0.0
      %399 = vst.msk [vmem:[#allocation2 + $0x78] sm:$0xff] %vm377, 0.0
      %400 = vst.msk [vmem:[#allocation2 + $0x98] sm:$0xff] %vm377, 0.0
      %401 = vst.msk [vmem:[#allocation2 + $0xb8] sm:$0xff] %vm377, 0.0
      %402 = vst.msk [vmem:[#allocation2 + $0xd8] sm:$0xff] %vm377, 0.0
      %403 = vst.msk [vmem:[#allocation2 + $0xf8] sm:$0xff] %vm377, 0.0
      %404 = vst.msk [vmem:[#allocation2 + $0x118] sm:$0xff] %vm377, 0.0
      %405 = vst.msk [vmem:[#allocation2 + $0x138] sm:$0xff] %vm377, 0.0
      %406 = vst.msk [vmem:[#allocation2 + $0x158] sm:$0xff] %vm377, 0.0
      %407 = vst.msk [vmem:[#allocation2 + $0x178] sm:$0xff] %vm377, 0.0
      %408 = vst.msk [vmem:[#allocation2 + $0x198] sm:$0xff] %vm377, 0.0
      %409 = vst.msk [vmem:[#allocation2 + $0x1b8] sm:$0xff] %vm377, 0.0
      %410 = vst.msk [vmem:[#allocation2 + $0x1d8] sm:$0xff] %vm377, 0.0
      %411 = vst.msk [vmem:[#allocation2 + $0x1f8] sm:$0xff] %vm377, 0.0
      %412 = vst.msk [vmem:[#allocation2 + $0x218] sm:$0xff] %vm377, 0.0
      %413 = vst.msk [vmem:[#allocation2 + $0x238] sm:$0xff] %vm377, 0.0
      %v414 = vld [vmem:[%s352] sm:$0xf]
      %v415 = vld [vmem:[%s352 + $0x4] sm:$0xf]
      %v416 = vld [vmem:[%s352 + $0x8] sm:$0xf]
      %v417 = vld [vmem:[%s352 + $0xc] sm:$0xf]
      %v418 = vld [vmem:[%s345] sm:$0xf]
      %v419 = vld [vmem:[%s345 + $0x4] sm:$0xf]
      %v420 = vld [vmem:[%s345 + $0x8] sm:$0xf]
      %v421 = vld [vmem:[%s345 + $0xc] sm:$0xf]
      %v422 = vld [vmem:[%s345 + $0x10] sm:$0xf]
      %v423 = vld [vmem:[%s345 + $0x14] sm:$0xf]
      %v424 = vld [vmem:[%s345 + $0x18] sm:$0xf]
      %v425 = vld [vmem:[%s345 + $0x1c] sm:$0xf]
      %v426 = vld [vmem:[%s345 + $0x20] sm:$0xf]
      %v427 = vld [vmem:[%s345 + $0x24] sm:$0xf]
      %v428 = vld [vmem:[%s345 + $0x28] sm:$0xf]
      %v429 = vld [vmem:[%s345 + $0x2c] sm:$0xf]
      %v430 = vld [vmem:[%s345 + $0x30] sm:$0xf]
      %v431 = vld [vmem:[%s345 + $0x34] sm:$0xf]
      %v432 = vld [vmem:[%s345 + $0x38] sm:$0xf]
      %v433 = vld [vmem:[%s345 + $0x3c] sm:$0xf]
      %v434 = vld [vmem:[%s345 + $0x40] sm:$0xf]
      %v435 = vld [vmem:[%s345 + $0x44] sm:$0xf]
      %v436 = vld [vmem:[%s345 + $0x48] sm:$0xf]
      %v437 = vld [vmem:[%s345 + $0x4c] sm:$0xf]
      %v438 = vld [vmem:[%s345 + $0x50] sm:$0xf]
      %v439 = vld [vmem:[%s345 + $0x54] sm:$0xf]
      %v440 = vld [vmem:[%s345 + $0x58] sm:$0xf]
      %v441 = vld [vmem:[%s345 + $0x5c] sm:$0xf]
      %v442 = vld [vmem:[%s345 + $0x60] sm:$0xf]
      %v443 = vld [vmem:[%s345 + $0x64] sm:$0xf]
      %v444 = vld [vmem:[%s345 + $0x68] sm:$0xf]
      %v445 = vld [vmem:[%s345 + $0x6c] sm:$0xf]
      %v446 = vld [vmem:[%s345 + $0x70] sm:$0xf]
      %v447 = vld [vmem:[%s345 + $0x74] sm:$0xf]
      %v448 = vld [vmem:[%s345 + $0x78] sm:$0xf]
      %v449 = vld [vmem:[%s345 + $0x7c] sm:$0xf]
      %v450 = vunpack.c.l.bf16 %v418
      %v451 = vunpack.c.l.bf16 %v419
      %v452 = vunpack.c.l.bf16 %v420
      %v453 = vunpack.c.l.bf16 %v421
      %v454 = vunpack.c.l.bf16 %v422
      %v455 = vunpack.c.l.bf16 %v423
      %v456 = vunpack.c.l.bf16 %v424
      %v457 = vunpack.c.l.bf16 %v425
      %v458 = vunpack.c.l.bf16 %v426
      %v459 = vunpack.c.l.bf16 %v427
      %v460 = vunpack.c.l.bf16 %v428
      %v461 = vunpack.c.l.bf16 %v429
      %v462 = vunpack.c.l.bf16 %v430
      %v463 = vunpack.c.l.bf16 %v431
      %v464 = vunpack.c.l.bf16 %v432
      %v465 = vunpack.c.l.bf16 %v433
      %v466 = vunpack.c.l.bf16 %v434
      %v467 = vunpack.c.l.bf16 %v435
      %v468 = vunpack.c.l.bf16 %v436
      %v469 = vunpack.c.l.bf16 %v437
      %v470 = vunpack.c.l.bf16 %v438
      %v471 = vunpack.c.l.bf16 %v439
      %v472 = vunpack.c.l.bf16 %v440
      %v473 = vunpack.c.l.bf16 %v441
      %v474 = vunpack.c.l.bf16 %v442
      %v475 = vunpack.c.l.bf16 %v443
      %v476 = vunpack.c.l.bf16 %v444
      %v477 = vunpack.c.l.bf16 %v445
      %v478 = vunpack.c.l.bf16 %v446
      %v479 = vunpack.c.l.bf16 %v447
      %v480 = vunpack.c.l.bf16 %v448
      %v481 = vunpack.c.l.bf16 %v449
      %v482 = vld [vmem:[%s2] sm:$0x1]
      %v484 = vperm.slane %v482, 0
      %v486 = vmul.f32 %v450, %v484
      %v487 = vmul.f32 %v451, %v484
      %v488 = vmul.f32 %v452, %v484
      %v489 = vmul.f32 %v453, %v484
      %v490 = vmul.f32 %v454, %v484
      %v491 = vmul.f32 %v455, %v484
      %v492 = vmul.f32 %v456, %v484
      %v493 = vmul.f32 %v457, %v484
      %v494 = vmul.f32 %v458, %v484
      %v495 = vmul.f32 %v459, %v484
      %v496 = vmul.f32 %v460, %v484
      %v497 = vmul.f32 %v461, %v484
      %v498 = vmul.f32 %v462, %v484
      %v499 = vmul.f32 %v463, %v484
      %v500 = vmul.f32 %v464, %v484
      %v501 = vmul.f32 %v465, %v484
      %v502 = vmul.f32 %v466, %v484
      %v503 = vmul.f32 %v467, %v484
      %v504 = vmul.f32 %v468, %v484
      %v505 = vmul.f32 %v469, %v484
      %v506 = vmul.f32 %v470, %v484
      %v507 = vmul.f32 %v471, %v484
      %v508 = vmul.f32 %v472, %v484
      %v509 = vmul.f32 %v473, %v484
      %v510 = vmul.f32 %v474, %v484
      %v511 = vmul.f32 %v475, %v484
      %v512 = vmul.f32 %v476, %v484
      %v513 = vmul.f32 %v477, %v484
      %v514 = vmul.f32 %v478, %v484
      %v515 = vmul.f32 %v479, %v484
      %v516 = vmul.f32 %v480, %v484
      %v517 = vmul.f32 %v481, %v484
      %v518 = vld [vmem:[%s3] sm:$0x1]
      %v520 = vperm.slane %v518, 0
      %v522 = vadd.f32 %v486, %v520
      %v523 = vadd.f32 %v487, %v520
      %v524 = vadd.f32 %v488, %v520
      %v525 = vadd.f32 %v489, %v520
      %v526 = vadd.f32 %v490, %v520
      %v527 = vadd.f32 %v491, %v520
      %v528 = vadd.f32 %v492, %v520
      %v529 = vadd.f32 %v493, %v520
      %v530 = vadd.f32 %v494, %v520
      %v531 = vadd.f32 %v495, %v520
      %v532 = vadd.f32 %v496, %v520
      %v533 = vadd.f32 %v497, %v520
      %v534 = vadd.f32 %v498, %v520
      %v535 = vadd.f32 %v499, %v520
      %v536 = vadd.f32 %v500, %v520
      %v537 = vadd.f32 %v501, %v520
      %v538 = vadd.f32 %v502, %v520
      %v539 = vadd.f32 %v503, %v520
      %v540 = vadd.f32 %v504, %v520
      %v541 = vadd.f32 %v505, %v520
      %v542 = vadd.f32 %v506, %v520
      %v543 = vadd.f32 %v507, %v520
      %v544 = vadd.f32 %v508, %v520
      %v545 = vadd.f32 %v509, %v520
      %v546 = vadd.f32 %v510, %v520
      %v547 = vadd.f32 %v511, %v520
      %v548 = vadd.f32 %v512, %v520
      %v549 = vadd.f32 %v513, %v520
      %v550 = vadd.f32 %v514, %v520
      %v551 = vadd.f32 %v515, %v520
      %v552 = vadd.f32 %v516, %v520
      %v553 = vadd.f32 %v517, %v520
      %vm554 = vcmp.ge.f32.partialorder %v522, 0.0
      %vm555 = vcmp.ge.f32.partialorder %v523, 0.0
      %vm556 = vcmp.ge.f32.partialorder %v524, 0.0
      %vm557 = vcmp.ge.f32.partialorder %v525, 0.0
      %vm558 = vcmp.ge.f32.partialorder %v526, 0.0
      %vm559 = vcmp.ge.f32.partialorder %v527, 0.0
      %vm560 = vcmp.ge.f32.partialorder %v528, 0.0
      %vm561 = vcmp.ge.f32.partialorder %v529, 0.0
      %vm562 = vcmp.ge.f32.partialorder %v530, 0.0
      %vm563 = vcmp.ge.f32.partialorder %v531, 0.0
      %vm564 = vcmp.ge.f32.partialorder %v532, 0.0
      %vm565 = vcmp.ge.f32.partialorder %v533, 0.0
      %vm566 = vcmp.ge.f32.partialorder %v534, 0.0
      %vm567 = vcmp.ge.f32.partialorder %v535, 0.0
      %vm568 = vcmp.ge.f32.partialorder %v536, 0.0
      %vm569 = vcmp.ge.f32.partialorder %v537, 0.0
      %vm570 = vcmp.ge.f32.partialorder %v538, 0.0
      %vm571 = vcmp.ge.f32.partialorder %v539, 0.0
      %vm572 = vcmp.ge.f32.partialorder %v540, 0.0
      %vm573 = vcmp.ge.f32.partialorder %v541, 0.0
      %vm574 = vcmp.ge.f32.partialorder %v542, 0.0
      %vm575 = vcmp.ge.f32.partialorder %v543, 0.0
      %vm576 = vcmp.ge.f32.partialorder %v544, 0.0
      %vm577 = vcmp.ge.f32.partialorder %v545, 0.0
      %vm578 = vcmp.ge.f32.partialorder %v546, 0.0
      %vm579 = vcmp.ge.f32.partialorder %v547, 0.0
      %vm580 = vcmp.ge.f32.partialorder %v548, 0.0
      %vm581 = vcmp.ge.f32.partialorder %v549, 0.0
      %vm582 = vcmp.ge.f32.partialorder %v550, 0.0
      %vm583 = vcmp.ge.f32.partialorder %v551, 0.0
      %vm584 = vcmp.ge.f32.partialorder %v552, 0.0
      %vm585 = vcmp.ge.f32.partialorder %v553, 0.0
      %v586 = vmul.f32 %v522, 0.01
      %v587 = vmul.f32 %v523, 0.01
      %v588 = vmul.f32 %v524, 0.01
      %v589 = vmul.f32 %v525, 0.01
      %v590 = vmul.f32 %v526, 0.01
      %v591 = vmul.f32 %v527, 0.01
      %v592 = vmul.f32 %v528, 0.01
      %v593 = vmul.f32 %v529, 0.01
      %v594 = vmul.f32 %v530, 0.01
      %v595 = vmul.f32 %v531, 0.01
      %v596 = vmul.f32 %v532, 0.01
      %v597 = vmul.f32 %v533, 0.01
      %v598 = vmul.f32 %v534, 0.01
      %v599 = vmul.f32 %v535, 0.01
      %v600 = vmul.f32 %v536, 0.01
      %v601 = vmul.f32 %v537, 0.01
      %v602 = vmul.f32 %v538, 0.01
      %v603 = vmul.f32 %v539, 0.01
      %v604 = vmul.f32 %v540, 0.01
      %v605 = vmul.f32 %v541, 0.01
      %v606 = vmul.f32 %v542, 0.01
      %v607 = vmul.f32 %v543, 0.01
      %v608 = vmul.f32 %v544, 0.01
      %v609 = vmul.f32 %v545, 0.01
      %v610 = vmul.f32 %v546, 0.01
      %v611 = vmul.f32 %v547, 0.01
      %v612 = vmul.f32 %v548, 0.01
      %v613 = vmul.f32 %v549, 0.01
      %v614 = vmul.f32 %v550, 0.01
      %v615 = vmul.f32 %v551, 0.01
      %v616 = vmul.f32 %v552, 0.01
      %v617 = vmul.f32 %v553, 0.01
      %v618 = vsel %vm554, %v522, %v586
      %v619 = vsel %vm555, %v523, %v587
      %v620 = vsel %vm556, %v524, %v588
      %v621 = vsel %vm557, %v525, %v589
      %v622 = vsel %vm558, %v526, %v590
      %v623 = vsel %vm559, %v527, %v591
      %v624 = vsel %vm560, %v528, %v592
      %v625 = vsel %vm561, %v529, %v593
      %v626 = vsel %vm562, %v530, %v594
      %v627 = vsel %vm563, %v531, %v595
      %v628 = vsel %vm564, %v532, %v596
      %v629 = vsel %vm565, %v533, %v597
      %v630 = vsel %vm566, %v534, %v598
      %v631 = vsel %vm567, %v535, %v599
      %v632 = vsel %vm568, %v536, %v600
      %v633 = vsel %vm569, %v537, %v601
      %v634 = vsel %vm570, %v538, %v602
      %v635 = vsel %vm571, %v539, %v603
      %v636 = vsel %vm572, %v540, %v604
      %v637 = vsel %vm573, %v541, %v605
      %v638 = vsel %vm574, %v542, %v606
      %v639 = vsel %vm575, %v543, %v607
      %v640 = vsel %vm576, %v544, %v608
      %v641 = vsel %vm577, %v545, %v609
      %v642 = vsel %vm578, %v546, %v610
      %v643 = vsel %vm579, %v547, %v611
      %v644 = vsel %vm580, %v548, %v612
      %v645 = vsel %vm581, %v549, %v613
      %v646 = vsel %vm582, %v550, %v614
      %v647 = vsel %vm583, %v551, %v615
      %v648 = vsel %vm584, %v552, %v616
      %v649 = vsel %vm585, %v553, %v617
      %v650 = vpack.c.bf16 %v618, %v618
      %v651 = vpack.c.bf16 %v619, %v619
      %v652 = vpack.c.bf16 %v620, %v620
      %v653 = vpack.c.bf16 %v621, %v621
      %v654 = vpack.c.bf16 %v622, %v622
      %v655 = vpack.c.bf16 %v623, %v623
      %v656 = vpack.c.bf16 %v624, %v624
      %v657 = vpack.c.bf16 %v625, %v625
      %v658 = vpack.c.bf16 %v626, %v626
      %v659 = vpack.c.bf16 %v627, %v627
      %v660 = vpack.c.bf16 %v628, %v628
      %v661 = vpack.c.bf16 %v629, %v629
      %v662 = vpack.c.bf16 %v630, %v630
      %v663 = vpack.c.bf16 %v631, %v631
      %v664 = vpack.c.bf16 %v632, %v632
      %v665 = vpack.c.bf16 %v633, %v633
      %v666 = vpack.c.bf16 %v634, %v634
      %v667 = vpack.c.bf16 %v635, %v635
      %v668 = vpack.c.bf16 %v636, %v636
      %v669 = vpack.c.bf16 %v637, %v637
      %v670 = vpack.c.bf16 %v638, %v638
      %v671 = vpack.c.bf16 %v639, %v639
      %v672 = vpack.c.bf16 %v640, %v640
      %v673 = vpack.c.bf16 %v641, %v641
      %v674 = vpack.c.bf16 %v642, %v642
      %v675 = vpack.c.bf16 %v643, %v643
      %v676 = vpack.c.bf16 %v644, %v644
      %v677 = vpack.c.bf16 %v645, %v645
      %v678 = vpack.c.bf16 %v646, %v646
      %v679 = vpack.c.bf16 %v647, %v647
      %v680 = vpack.c.bf16 %v648, %v648
      %v681 = vpack.c.bf16 %v649, %v649
      %vm682 = vcmask 60416
      %683 = vst.msk [vmem:[%s363] sm:$0xf] %vm682, %v650
      %684 = vst.msk [vmem:[%s363 + $0x4] sm:$0xf] %vm682, %v651
      %685 = vst.msk [vmem:[%s363 + $0x8] sm:$0xf] %vm682, %v652
      %686 = vst.msk [vmem:[%s363 + $0xc] sm:$0xf] %vm682, %v653
      %687 = vst.msk [vmem:[%s363 + $0x10] sm:$0xf] %vm682, %v654
      %688 = vst.msk [vmem:[%s363 + $0x14] sm:$0xf] %vm682, %v655
      %689 = vst.msk [vmem:[%s363 + $0x18] sm:$0xf] %vm682, %v656
      %690 = vst.msk [vmem:[%s363 + $0x1c] sm:$0xf] %vm682, %v657
      %691 = vst.msk [vmem:[%s363 + $0x20] sm:$0xf] %vm682, %v658
      %692 = vst.msk [vmem:[%s363 + $0x24] sm:$0xf] %vm682, %v659
      %693 = vst.msk [vmem:[%s363 + $0x28] sm:$0xf] %vm682, %v660
      %694 = vst.msk [vmem:[%s363 + $0x2c] sm:$0xf] %vm682, %v661
      %695 = vst.msk [vmem:[%s363 + $0x30] sm:$0xf] %vm682, %v662
      %696 = vst.msk [vmem:[%s363 + $0x34] sm:$0xf] %vm682, %v663
      %697 = vst.msk [vmem:[%s363 + $0x38] sm:$0xf] %vm682, %v664
      %698 = vst.msk [vmem:[%s363 + $0x3c] sm:$0xf] %vm682, %v665
      %699 = vst.msk [vmem:[%s363 + $0x40] sm:$0xf] %vm682, %v666
      %700 = vst.msk [vmem:[%s363 + $0x44] sm:$0xf] %vm682, %v667
      %701 = vst.msk [vmem:[%s363 + $0x48] sm:$0xf] %vm682, %v668
      %702 = vst.msk [vmem:[%s363 + $0x4c] sm:$0xf] %vm682, %v669
      %703 = vst.msk [vmem:[%s363 + $0x50] sm:$0xf] %vm682, %v670
      %704 = vst.msk [vmem:[%s363 + $0x54] sm:$0xf] %vm682, %v671
      %705 = vst.msk [vmem:[%s363 + $0x58] sm:$0xf] %vm682, %v672
      %706 = vst.msk [vmem:[%s363 + $0x5c] sm:$0xf] %vm682, %v673
      %707 = vst.msk [vmem:[%s363 + $0x60] sm:$0xf] %vm682, %v674
      %708 = vst.msk [vmem:[%s363 + $0x64] sm:$0xf] %vm682, %v675
      %709 = vst.msk [vmem:[%s363 + $0x68] sm:$0xf] %vm682, %v676
      %710 = vst.msk [vmem:[%s363 + $0x6c] sm:$0xf] %vm682, %v677
      %711 = vst.msk [vmem:[%s363 + $0x70] sm:$0xf] %vm682, %v678
      %712 = vst.msk [vmem:[%s363 + $0x74] sm:$0xf] %vm682, %v679
      %713 = vst.msk [vmem:[%s363 + $0x78] sm:$0xf] %vm682, %v680
      %714 = vst.msk [vmem:[%s363 + $0x7c] sm:$0xf] %vm682, %v681
      %p715 = scmp.gt.s32.totalorder %s24, 0
      %v716 = vunpack.c.l.bf16 %v414
      %v717 = vunpack.c.l.bf16 %v415
      %v718 = vld [vmem:[%s2] sm:$0x1]
      %v720 = vperm.slane %v718, 0
      %v722 = vmul.f32 %v716, %v720
      %v723 = vmul.f32 %v717, %v720
      %v724 = vld [vmem:[%s3] sm:$0x1]
      %v726 = vperm.slane %v724, 0
      %v728 = vadd.f32 %v722, %v726
      %v729 = vadd.f32 %v723, %v726
      %vm730 = vcmp.ge.f32.partialorder %v728, 0.0
      %vm731 = vcmp.ge.f32.partialorder %v729, 0.0
      %v732 = vmul.f32 %v728, 0.01
      %v733 = vmul.f32 %v729, 0.01
      %v734 = vsel %vm730, %v728, %v732
      %v735 = vsel %vm731, %v729, %v733
      %s736 = scalar_select %p715, 1, 0
      %v737 = vstv %s736
      %vm738 = vcmp.eq.s32.totalorder %v737, 1
      %v739 = vsel %vm738, %v734, 0.0
      %v740 = vsel %vm738, %v735, 0.0
      %p741 = scmp.lt.s32.totalorder %s24, 0
      %v742 = vunpack.c.l.bf16 %v416
      %v743 = vunpack.c.l.bf16 %v417
      %v744 = vmul.f32 %v742, %v720
      %v745 = vmul.f32 %v743, %v720
      %v746 = vadd.f32 %v744, %v726
      %v747 = vadd.f32 %v745, %v726
      %vm748 = vcmp.ge.f32.partialorder %v746, 0.0
      %vm749 = vcmp.ge.f32.partialorder %v747, 0.0
      %v750 = vmul.f32 %v746, 0.01
      %v751 = vmul.f32 %v747, 0.01
      %v752 = vsel %vm748, %v746, %v750
      %v753 = vsel %vm749, %v747, %v751
      %s754 = scalar_select %p741, 1, 0
      %v755 = vstv %s754
      %vm756 = vcmp.eq.s32.totalorder %v755, 1
      %v757 = vsel %vm756, %v752, 0.0
      %v758 = vsel %vm756, %v753, 0.0
      %759 = vst.msk [vmem:[#allocation2 + $0x8] sm:$0xff] %vm377, %v739
      %760 = vst.msk [vmem:[#allocation2 + $0x10] sm:$0xff] %vm377, %v740
      %s761 = scalar_lea.vmem [#allocation2], 32
      %762 = vst.msk [vmem:[%s761 + $0x8] sm:$0xff] %vm377, %v618
      %763 = vst.msk [vmem:[%s761 + $0x10] sm:$0xff] %vm377, %v619
      %764 = vst.msk [vmem:[%s761 + $0x28] sm:$0xff] %vm377, %v620
      %765 = vst.msk [vmem:[%s761 + $0x30] sm:$0xff] %vm377, %v621
      %766 = vst.msk [vmem:[%s761 + $0x48] sm:$0xff] %vm377, %v622
      %767 = vst.msk [vmem:[%s761 + $0x50] sm:$0xff] %vm377, %v623
      %768 = vst.msk [vmem:[%s761 + $0x68] sm:$0xff] %vm377, %v624
      %769 = vst.msk [vmem:[%s761 + $0x70] sm:$0xff] %vm377, %v625
      %770 = vst.msk [vmem:[%s761 + $0x88] sm:$0xff] %vm377, %v626
      %771 = vst.msk [vmem:[%s761 + $0x90] sm:$0xff] %vm377, %v627
      %772 = vst.msk [vmem:[%s761 + $0xa8] sm:$0xff] %vm377, %v628
      %773 = vst.msk [vmem:[%s761 + $0xb0] sm:$0xff] %vm377, %v629
      %774 = vst.msk [vmem:[%s761 + $0xc8] sm:$0xff] %vm377, %v630
      %775 = vst.msk [vmem:[%s761 + $0xd0] sm:$0xff] %vm377, %v631
      %776 = vst.msk [vmem:[%s761 + $0xe8] sm:$0xff] %vm377, %v632
      %777 = vst.msk [vmem:[%s761 + $0xf0] sm:$0xff] %vm377, %v633
      %778 = vst.msk [vmem:[%s761 + $0x108] sm:$0xff] %vm377, %v634
      %779 = vst.msk [vmem:[%s761 + $0x110] sm:$0xff] %vm377, %v635
      %780 = vst.msk [vmem:[%s761 + $0x128] sm:$0xff] %vm377, %v636
      %781 = vst.msk [vmem:[%s761 + $0x130] sm:$0xff] %vm377, %v637
      %782 = vst.msk [vmem:[%s761 + $0x148] sm:$0xff] %vm377, %v638
      %783 = vst.msk [vmem:[%s761 + $0x150] sm:$0xff] %vm377, %v639
      %784 = vst.msk [vmem:[%s761 + $0x168] sm:$0xff] %vm377, %v640
      %785 = vst.msk [vmem:[%s761 + $0x170] sm:$0xff] %vm377, %v641
      %786 = vst.msk [vmem:[%s761 + $0x188] sm:$0xff] %vm377, %v642
      %787 = vst.msk [vmem:[%s761 + $0x190] sm:$0xff] %vm377, %v643
      %788 = vst.msk [vmem:[%s761 + $0x1a8] sm:$0xff] %vm377, %v644
      %789 = vst.msk [vmem:[%s761 + $0x1b0] sm:$0xff] %vm377, %v645
      %790 = vst.msk [vmem:[%s761 + $0x1c8] sm:$0xff] %vm377, %v646
      %791 = vst.msk [vmem:[%s761 + $0x1d0] sm:$0xff] %vm377, %v647
      %792 = vst.msk [vmem:[%s761 + $0x1e8] sm:$0xff] %vm377, %v648
      %793 = vst.msk [vmem:[%s761 + $0x1f0] sm:$0xff] %vm377, %v649
      %s794 = scalar_lea.vmem [#allocation2], 544
      %795 = vst.msk [vmem:[%s794 + $0x8] sm:$0xff] %vm377, %v757
      %796 = vst.msk [vmem:[%s794 + $0x10] sm:$0xff] %vm377, %v758
      %v797 = vld [vmem:[#allocation2] sm:$0xff]
      %v798 = vld [vmem:[#allocation2 + $0x8] sm:$0xff]
      %v799 = vld [vmem:[#allocation2 + $0x10] sm:$0xff]
      %v800 = vld [vmem:[#allocation2 + $0x18] sm:$0xff]
      %v801 = vld [vmem:[#allocation2 + $0x20] sm:$0xff]
      %v802 = vld [vmem:[#allocation2 + $0x28] sm:$0xff]
      %v803 = vld [vmem:[#allocation2 + $0x30] sm:$0xff]
      %v804 = vld [vmem:[#allocation2 + $0x38] sm:$0xff]
      %v805 = vld [vmem:[#allocation2 + $0x40] sm:$0xff]
      %v806 = vld [vmem:[#allocation2 + $0x48] sm:$0xff]
      %v807 = vld [vmem:[#allocation2 + $0x50] sm:$0xff]
      %v808 = vld [vmem:[#allocation2 + $0x58] sm:$0xff]
      %v809 = vld [vmem:[#allocation2 + $0x60] sm:$0xff]
      %v810 = vld [vmem:[#allocation2 + $0x68] sm:$0xff]
      %v811 = vld [vmem:[#allocation2 + $0x70] sm:$0xff]
      %v812 = vld [vmem:[#allocation2 + $0x78] sm:$0xff]
      %v813 = vld [vmem:[#allocation2 + $0x80] sm:$0xff]
      %v814 = vld [vmem:[#allocation2 + $0x88] sm:$0xff]
      %v815 = vld [vmem:[#allocation2 + $0x90] sm:$0xff]
      %v816 = vld [vmem:[#allocation2 + $0x98] sm:$0xff]
      %v817 = vld [vmem:[#allocation2 + $0xa0] sm:$0xff]
      %v818 = vld [vmem:[#allocation2 + $0xa8] sm:$0xff]
      %v819 = vld [vmem:[#allocation2 + $0xb0] sm:$0xff]
      %v820 = vld [vmem:[#allocation2 + $0xb8] sm:$0xff]
      %v821 = vld [vmem:[#allocation2 + $0xc0] sm:$0xff]
      %v822 = vld [vmem:[#allocation2 + $0xc8] sm:$0xff]
      %v823 = vld [vmem:[#allocation2 + $0xd0] sm:$0xff]
      %v824 = vld [vmem:[#allocation2 + $0xd8] sm:$0xff]
      %v825 = vld [vmem:[#allocation2 + $0xe0] sm:$0xff]
      %v826 = vld [vmem:[#allocation2 + $0xe8] sm:$0xff]
      %v827 = vld [vmem:[#allocation2 + $0xf0] sm:$0xff]
      %v828 = vld [vmem:[#allocation2 + $0xf8] sm:$0xff]
      %v829 = vld [vmem:[#allocation2 + $0x100] sm:$0xff]
      %v830 = vld [vmem:[#allocation2 + $0x108] sm:$0xff]
      %v831 = vld [vmem:[#allocation2 + $0x110] sm:$0xff]
      %v832 = vld [vmem:[#allocation2 + $0x118] sm:$0xff]
      %v833 = vld [vmem:[#allocation2 + $0x120] sm:$0xff]
      %v834 = vld [vmem:[#allocation2 + $0x128] sm:$0xff]
      %v835 = vld [vmem:[#allocation2 + $0x130] sm:$0xff]
      %v836 = vld [vmem:[#allocation2 + $0x138] sm:$0xff]
      %v837 = vld [vmem:[#allocation2 + $0x140] sm:$0xff]
      %v838 = vld [vmem:[#allocation2 + $0x148] sm:$0xff]
      %v839 = vld [vmem:[#allocation2 + $0x150] sm:$0xff]
      %v840 = vld [vmem:[#allocation2 + $0x158] sm:$0xff]
      %v841 = vld [vmem:[#allocation2 + $0x160] sm:$0xff]
      %v842 = vld [vmem:[#allocation2 + $0x168] sm:$0xff]
      %v843 = vld [vmem:[#allocation2 + $0x170] sm:$0xff]
      %v844 = vld [vmem:[#allocation2 + $0x178] sm:$0xff]
      %v845 = vld [vmem:[#allocation2 + $0x180] sm:$0xff]
      %v846 = vld [vmem:[#allocation2 + $0x188] sm:$0xff]
      %v847 = vld [vmem:[#allocation2 + $0x190] sm:$0xff]
      %v848 = vld [vmem:[#allocation2 + $0x198] sm:$0xff]
      %v849 = vld [vmem:[#allocation2 + $0x1a0] sm:$0xff]
      %v850 = vld [vmem:[#allocation2 + $0x1a8] sm:$0xff]
      %v851 = vld [vmem:[#allocation2 + $0x1b0] sm:$0xff]
      %v852 = vld [vmem:[#allocation2 + $0x1b8] sm:$0xff]
      %v853 = vld [vmem:[#allocation2 + $0x1c0] sm:$0xff]
      %v854 = vld [vmem:[#allocation2 + $0x1c8] sm:$0xff]
      %v855 = vld [vmem:[#allocation2 + $0x1d0] sm:$0xff]
      %v856 = vld [vmem:[#allocation2 + $0x1d8] sm:$0xff]
      %v857 = vld [vmem:[#allocation2 + $0x1e0] sm:$0xff]
      %v858 = vld [vmem:[#allocation2 + $0x1e8] sm:$0xff]
      %v859 = vld [vmem:[#allocation2 + $0x1f0] sm:$0xff]
      %v860 = vld [vmem:[#allocation2 + $0x1f8] sm:$0xff]
      %v861 = vld [vmem:[#allocation2 + $0x200] sm:$0xff]
      %v862 = vld [vmem:[#allocation2 + $0x208] sm:$0xff]
      %v863 = vld [vmem:[#allocation2 + $0x210] sm:$0xff]
      %v864 = vld [vmem:[#allocation2 + $0x218] sm:$0xff]
      %v865 = vld [vmem:[#allocation2 + $0x220] sm:$0xff]
      %v866 = vld [vmem:[#allocation2 + $0x228] sm:$0xff]
      %v867 = vld [vmem:[#allocation2 + $0x230] sm:$0xff]
      %v868 = vld [vmem:[#allocation2 + $0x238] sm:$0xff]
      %v869 = vld [vmem:[%s4] sm:$0xf]
      %v870 = vld [vmem:[%s4 + $0x4] sm:$0xf]
      %v871 = vld [vmem:[%s4 + $0x8] sm:$0xf]
      %v872 = vld [vmem:[%s4 + $0xc] sm:$0xf]
      %v873 = vld [vmem:[%s4 + $0x10] sm:$0xf]
      %v874 = vld [vmem:[%s4 + $0x14] sm:$0xf]
      %v875 = vld [vmem:[%s4 + $0x18] sm:$0xf]
      %v876 = vld [vmem:[%s4 + $0x1c] sm:$0xf]
      %v877 = vld [vmem:[%s4 + $0x20] sm:$0xf]
      %v878 = vld [vmem:[%s5] sm:$0x1]
      %vm927 = vcmask 1040384
      %v928 = vrot.slane %v797, 7
      %v929 = vrot.slane %v798, 7
      %v930 = vsel %vm927, %v928, %v929
      %v931 = vrot.slane %v799, 7
      %v932 = vsel %vm927, %v929, %v931
      %v933 = vrot.slane %v801, 7
      %v934 = vrot.slane %v802, 7
      %v935 = vsel %vm927, %v933, %v934
      %v936 = vrot.slane %v803, 7
      %v937 = vsel %vm927, %v934, %v936
      %v938 = vrot.slane %v805, 7
      %v939 = vrot.slane %v806, 7
      %v940 = vsel %vm927, %v938, %v939
      %v941 = vrot.slane %v807, 7
      %v942 = vsel %vm927, %v939, %v941
      %v943 = vrot.slane %v809, 7
      %v944 = vrot.slane %v810, 7
      %v945 = vsel %vm927, %v943, %v944
      %v946 = vrot.slane %v811, 7
      %v947 = vsel %vm927, %v944, %v946
      %v948 = vrot.slane %v813, 7
      %v949 = vrot.slane %v814, 7
      %v950 = vsel %vm927, %v948, %v949
      %v951 = vrot.slane %v815, 7
      %v952 = vsel %vm927, %v949, %v951
      %v953 = vrot.slane %v817, 7
      %v954 = vrot.slane %v818, 7
      %v955 = vsel %vm927, %v953, %v954
      %v956 = vrot.slane %v819, 7
      %v957 = vsel %vm927, %v954, %v956
      %v958 = vrot.slane %v821, 7
      %v959 = vrot.slane %v822, 7
      %v960 = vsel %vm927, %v958, %v959
      %v961 = vrot.slane %v823, 7
      %v962 = vsel %vm927, %v959, %v961
      %v963 = vrot.slane %v825, 7
      %v964 = vrot.slane %v826, 7
      %v965 = vsel %vm927, %v963, %v964
      %v966 = vrot.slane %v827, 7
      %v967 = vsel %vm927, %v964, %v966
      %v968 = vrot.slane %v829, 7
      %v969 = vrot.slane %v830, 7
      %v970 = vsel %vm927, %v968, %v969
      %v971 = vrot.slane %v831, 7
      %v972 = vsel %vm927, %v969, %v971
      %v973 = vrot.slane %v833, 7
      %v974 = vrot.slane %v834, 7
      %v975 = vsel %vm927, %v973, %v974
      %v976 = vrot.slane %v835, 7
      %v977 = vsel %vm927, %v974, %v976
      %v978 = vrot.slane %v837, 7
      %v979 = vrot.slane %v838, 7
      %v980 = vsel %vm927, %v978, %v979
      %v981 = vrot.slane %v839, 7
      %v982 = vsel %vm927, %v979, %v981
      %v983 = vrot.slane %v841, 7
      %v984 = vrot.slane %v842, 7
      %v985 = vsel %vm927, %v983, %v984
      %v986 = vrot.slane %v843, 7
      %v987 = vsel %vm927, %v984, %v986
      %v988 = vrot.slane %v845, 7
      %v989 = vrot.slane %v846, 7
      %v990 = vsel %vm927, %v988, %v989
      %v991 = vrot.slane %v847, 7
      %v992 = vsel %vm927, %v989, %v991
      %v993 = vrot.slane %v849, 7
      %v994 = vrot.slane %v850, 7
      %v995 = vsel %vm927, %v993, %v994
      %v996 = vrot.slane %v851, 7
      %v997 = vsel %vm927, %v994, %v996
      %v998 = vrot.slane %v853, 7
      %v999 = vrot.slane %v854, 7
      %v1000 = vsel %vm927, %v998, %v999
      %v1001 = vrot.slane %v855, 7
      %v1002 = vsel %vm927, %v999, %v1001
      %v1003 = vrot.slane %v857, 7
      %v1004 = vrot.slane %v858, 7
      %v1005 = vsel %vm927, %v1003, %v1004
      %v1006 = vrot.slane %v859, 7
      %v1007 = vsel %vm927, %v1004, %v1006
      %v1040 = vpack.c.bf16 %v932, %v930
      %v1041 = vpack.c.bf16 %v937, %v935
      %v1042 = vpack.c.bf16 %v942, %v940
      %v1043 = vpack.c.bf16 %v947, %v945
      %v1044 = vpack.c.bf16 %v952, %v950
      %v1045 = vpack.c.bf16 %v957, %v955
      %v1046 = vpack.c.bf16 %v962, %v960
      %v1047 = vpack.c.bf16 %v967, %v965
      %v1048 = vpack.c.bf16 %v972, %v970
      %v1049 = vpack.c.bf16 %v977, %v975
      %v1050 = vpack.c.bf16 %v982, %v980
      %v1051 = vpack.c.bf16 %v987, %v985
      %v1052 = vpack.c.bf16 %v992, %v990
      %v1053 = vpack.c.bf16 %v997, %v995
      %v1054 = vpack.c.bf16 %v1002, %v1000
      %v1055 = vpack.c.bf16 %v1007, %v1005
      %v1056 = vpack.c.bf16 %v799, %v798
      %v1057 = vpack.c.bf16 %v803, %v802
      %v1058 = vpack.c.bf16 %v807, %v806
      %v1059 = vpack.c.bf16 %v811, %v810
      %v1060 = vpack.c.bf16 %v815, %v814
      %v1061 = vpack.c.bf16 %v819, %v818
      %v1062 = vpack.c.bf16 %v823, %v822
      %v1063 = vpack.c.bf16 %v827, %v826
      %v1064 = vpack.c.bf16 %v831, %v830
      %v1065 = vpack.c.bf16 %v835, %v834
      %v1066 = vpack.c.bf16 %v839, %v838
      %v1067 = vpack.c.bf16 %v843, %v842
      %v1068 = vpack.c.bf16 %v847, %v846
      %v1069 = vpack.c.bf16 %v851, %v850
      %v1070 = vpack.c.bf16 %v855, %v854
      %v1071 = vpack.c.bf16 %v859, %v858
      %vm1088 = vcmask 1046528
      %v1089 = vrot.slane %v798, 1
      %v1090 = vrot.slane %v799, 1
      %v1091 = vsel %vm1088, %v1089, %v1090
      %v1092 = vrot.slane %v800, 1
      %v1093 = vsel %vm1088, %v1090, %v1092
      %v1094 = vrot.slane %v802, 1
      %v1095 = vrot.slane %v803, 1
      %v1096 = vsel %vm1088, %v1094, %v1095
      %v1097 = vrot.slane %v804, 1
      %v1098 = vsel %vm1088, %v1095, %v1097
      %v1099 = vrot.slane %v806, 1
      %v1100 = vrot.slane %v807, 1
      %v1101 = vsel %vm1088, %v1099, %v1100
      %v1102 = vrot.slane %v808, 1
      %v1103 = vsel %vm1088, %v1100, %v1102
      %v1104 = vrot.slane %v810, 1
      %v1105 = vrot.slane %v811, 1
      %v1106 = vsel %vm1088, %v1104, %v1105
      %v1107 = vrot.slane %v812, 1
      %v1108 = vsel %vm1088, %v1105, %v1107
      %v1109 = vrot.slane %v814, 1
      %v1110 = vrot.slane %v815, 1
      %v1111 = vsel %vm1088, %v1109, %v1110
      %v1112 = vrot.slane %v816, 1
      %v1113 = vsel %vm1088, %v1110, %v1112
      %v1114 = vrot.slane %v818, 1
      %v1115 = vrot.slane %v819, 1
      %v1116 = vsel %vm1088, %v1114, %v1115
      %v1117 = vrot.slane %v820, 1
      %v1118 = vsel %vm1088, %v1115, %v1117
      %v1119 = vrot.slane %v822, 1
      %v1120 = vrot.slane %v823, 1
      %v1121 = vsel %vm1088, %v1119, %v1120
      %v1122 = vrot.slane %v824, 1
      %v1123 = vsel %vm1088, %v1120, %v1122
      %v1124 = vrot.slane %v826, 1
      %v1125 = vrot.slane %v827, 1
      %v1126 = vsel %vm1088, %v1124, %v1125
      %v1127 = vrot.slane %v828, 1
      %v1128 = vsel %vm1088, %v1125, %v1127
      %v1129 = vrot.slane %v830, 1
      %v1130 = vrot.slane %v831, 1
      %v1131 = vsel %vm1088, %v1129, %v1130
      %v1132 = vrot.slane %v832, 1
      %v1133 = vsel %vm1088, %v1130, %v1132
      %v1134 = vrot.slane %v834, 1
      %v1135 = vrot.slane %v835, 1
      %v1136 = vsel %vm1088, %v1134, %v1135
      %v1137 = vrot.slane %v836, 1
      %v1138 = vsel %vm1088, %v1135, %v1137
      %v1139 = vrot.slane %v838, 1
      %v1140 = vrot.slane %v839, 1
      %v1141 = vsel %vm1088, %v1139, %v1140
      %v1142 = vrot.slane %v840, 1
      %v1143 = vsel %vm1088, %v1140, %v1142
      %v1144 = vrot.slane %v842, 1
      %v1145 = vrot.slane %v843, 1
      %v1146 = vsel %vm1088, %v1144, %v1145
      %v1147 = vrot.slane %v844, 1
      %v1148 = vsel %vm1088, %v1145, %v1147
      %v1149 = vrot.slane %v846, 1
      %v1150 = vrot.slane %v847, 1
      %v1151 = vsel %vm1088, %v1149, %v1150
      %v1152 = vrot.slane %v848, 1
      %v1153 = vsel %vm1088, %v1150, %v1152
      %v1154 = vrot.slane %v850, 1
      %v1155 = vrot.slane %v851, 1
      %v1156 = vsel %vm1088, %v1154, %v1155
      %v1157 = vrot.slane %v852, 1
      %v1158 = vsel %vm1088, %v1155, %v1157
      %v1159 = vrot.slane %v854, 1
      %v1160 = vrot.slane %v855, 1
      %v1161 = vsel %vm1088, %v1159, %v1160
      %v1162 = vrot.slane %v856, 1
      %v1163 = vsel %vm1088, %v1160, %v1162
      %v1164 = vrot.slane %v858, 1
      %v1165 = vrot.slane %v859, 1
      %v1166 = vsel %vm1088, %v1164, %v1165
      %v1167 = vrot.slane %v860, 1
      %v1168 = vsel %vm1088, %v1165, %v1167
      %v1201 = vpack.c.bf16 %v1093, %v1091
      %v1202 = vpack.c.bf16 %v1098, %v1096
      %v1203 = vpack.c.bf16 %v1103, %v1101
      %v1204 = vpack.c.bf16 %v1108, %v1106
      %v1205 = vpack.c.bf16 %v1113, %v1111
      %v1206 = vpack.c.bf16 %v1118, %v1116
      %v1207 = vpack.c.bf16 %v1123, %v1121
      %v1208 = vpack.c.bf16 %v1128, %v1126
      %v1209 = vpack.c.bf16 %v1133, %v1131
      %v1210 = vpack.c.bf16 %v1138, %v1136
      %v1211 = vpack.c.bf16 %v1143, %v1141
      %v1212 = vpack.c.bf16 %v1148, %v1146
      %v1213 = vpack.c.bf16 %v1153, %v1151
      %v1214 = vpack.c.bf16 %v1158, %v1156
      %v1215 = vpack.c.bf16 %v1163, %v1161
      %v1216 = vpack.c.bf16 %v1168, %v1166
      %v1220 = vrot.slane %v861, 7
      %v1221 = vrot.slane %v862, 7
      %v1222 = vsel %vm927, %v1220, %v1221
      %v1223 = vrot.slane %v863, 7
      %v1224 = vsel %vm927, %v1221, %v1223
      %v1227 = vpack.c.bf16 %v1224, %v1222
      %v1228 = vpack.c.bf16 %v863, %v862
      %v1230 = vrot.slane %v862, 1
      %v1231 = vrot.slane %v863, 1
      %v1232 = vsel %vm1088, %v1230, %v1231
      %v1233 = vrot.slane %v864, 1
      %v1234 = vsel %vm1088, %v1231, %v1233
      %v1237 = vpack.c.bf16 %v1234, %v1232
      %v1241 = vrot.slane %v865, 7
      %v1242 = vrot.slane %v866, 7
      %v1243 = vsel %vm927, %v1241, %v1242
      %v1244 = vrot.slane %v867, 7
      %v1245 = vsel %vm927, %v1242, %v1244
      %v1248 = vpack.c.bf16 %v1245, %v1243
      %v1249 = vpack.c.bf16 %v867, %v866
      %v1251 = vrot.slane %v866, 1
      %v1252 = vrot.slane %v867, 1
      %v1253 = vsel %vm1088, %v1251, %v1252
      %v1254 = vrot.slane %v868, 1
      %v1255 = vsel %vm1088, %v1252, %v1254
      %v1258 = vpack.c.bf16 %v1255, %v1253
      %v1260 = vsel %vm377, %v1056, 0
      %v1263 = vsel %vm377, %v1057, 0
      %v1266 = vsel %vm377, %v1058, 0
      %v1269 = vsel %vm377, %v1059, 0
      %v1272 = vsel %vm377, %v1060, 0
      %v1275 = vsel %vm377, %v1061, 0
      %v1278 = vsel %vm377, %v1062, 0
      %v1281 = vsel %vm377, %v1063, 0
      %v1284 = vsel %vm377, %v1064, 0
      %v1287 = vsel %vm377, %v1065, 0
      %v1290 = vsel %vm377, %v1066, 0
      %v1293 = vsel %vm377, %v1067, 0
      %v1296 = vsel %vm377, %v1068, 0
      %v1299 = vsel %vm377, %v1069, 0
      %v1302 = vsel %vm377, %v1070, 0
      %v1305 = vsel %vm377, %v1071, 0
      %vm1307 = vcmask 1043456
      %v1309 = vsel %vm1307, %v870, 0
      %1311 = vmatpush.bf16.msra.mxu0 0
      %1312 = vmatpush.bf16.msra.mxu0 0
      %1313 = vmatpush.bf16.msra.mxu0 0
      %1314 = vmatpush.bf16.msra.mxu0 0
      %1315 = vmatpush.bf16.msra.mxu0 0
      %1316 = vmatpush.bf16.msra.mxu0 0
      %1317 = vmatpush.bf16.msra.mxu0 0
      %1318 = vmatpush.bf16.msra.mxu0 %v1309
      %1319 = vmatmul.bf16.gmra.mxu0 %v1260
      %v1320 = vpop.f32.mrf.mxu0
      %v1321 = vadd.f32 0.0, %v1320
      %v1322 = vpop.f32.mrf.mxu0
      %v1323 = vadd.f32 0.0, %v1322
      %1324 = vmatmul.bf16.gmra.mxu0 %v1263
      %v1325 = vpop.f32.mrf.mxu0
      %v1326 = vadd.f32 0.0, %v1325
      %v1327 = vpop.f32.mrf.mxu0
      %v1328 = vadd.f32 0.0, %v1327
      %1329 = vmatmul.bf16.gmra.mxu0 %v1266
      %v1330 = vpop.f32.mrf.mxu0
      %v1331 = vadd.f32 0.0, %v1330
      %v1332 = vpop.f32.mrf.mxu0
      %v1333 = vadd.f32 0.0, %v1332
      %1334 = vmatmul.bf16.gmra.mxu0 %v1269
      %v1335 = vpop.f32.mrf.mxu0
      %v1336 = vadd.f32 0.0, %v1335
      %v1337 = vpop.f32.mrf.mxu0
      %v1338 = vadd.f32 0.0, %v1337
      %1339 = vmatmul.bf16.gmra.mxu0 %v1272
      %v1340 = vpop.f32.mrf.mxu0
      %v1341 = vadd.f32 0.0, %v1340
      %v1342 = vpop.f32.mrf.mxu0
      %v1343 = vadd.f32 0.0, %v1342
      %1344 = vmatmul.bf16.gmra.mxu0 %v1275
      %v1345 = vpop.f32.mrf.mxu0
      %v1346 = vadd.f32 0.0, %v1345
      %v1347 = vpop.f32.mrf.mxu0
      %v1348 = vadd.f32 0.0, %v1347
      %1349 = vmatmul.bf16.gmra.mxu0 %v1278
      %v1350 = vpop.f32.mrf.mxu0
      %v1351 = vadd.f32 0.0, %v1350
      %v1352 = vpop.f32.mrf.mxu0
      %v1353 = vadd.f32 0.0, %v1352
      %1354 = vmatmul.bf16.gmra.mxu0 %v1281
      %v1355 = vpop.f32.mrf.mxu0
      %v1356 = vadd.f32 0.0, %v1355
      %v1357 = vpop.f32.mrf.mxu0
      %v1358 = vadd.f32 0.0, %v1357
      %1359 = vmatmul.bf16.gmra.mxu0 %v1284
      %v1360 = vpop.f32.mrf.mxu0
      %v1361 = vadd.f32 0.0, %v1360
      %v1362 = vpop.f32.mrf.mxu0
      %v1363 = vadd.f32 0.0, %v1362
      %1364 = vmatmul.bf16.gmra.mxu0 %v1287
      %v1365 = vpop.f32.mrf.mxu0
      %v1366 = vadd.f32 0.0, %v1365
      %v1367 = vpop.f32.mrf.mxu0
      %v1368 = vadd.f32 0.0, %v1367
      %1369 = vmatmul.bf16.gmra.mxu0 %v1290
      %v1370 = vpop.f32.mrf.mxu0
      %v1371 = vadd.f32 0.0, %v1370
      %v1372 = vpop.f32.mrf.mxu0
      %v1373 = vadd.f32 0.0, %v1372
      %1374 = vmatmul.bf16.gmra.mxu0 %v1293
      %v1375 = vpop.f32.mrf.mxu0
      %v1376 = vadd.f32 0.0, %v1375
      %v1377 = vpop.f32.mrf.mxu0
      %v1378 = vadd.f32 0.0, %v1377
      %1379 = vmatmul.bf16.gmra.mxu0 %v1296
      %v1380 = vpop.f32.mrf.mxu0
      %v1381 = vadd.f32 0.0, %v1380
      %v1382 = vpop.f32.mrf.mxu0
      %v1383 = vadd.f32 0.0, %v1382
      %1384 = vmatmul.bf16.gmra.mxu0 %v1299
      %v1385 = vpop.f32.mrf.mxu0
      %v1386 = vadd.f32 0.0, %v1385
      %v1387 = vpop.f32.mrf.mxu0
      %v1388 = vadd.f32 0.0, %v1387
      %1389 = vmatmul.bf16.gmra.mxu0 %v1302
      %v1390 = vpop.f32.mrf.mxu0
      %v1391 = vadd.f32 0.0, %v1390
      %v1392 = vpop.f32.mrf.mxu0
      %v1393 = vadd.f32 0.0, %v1392
      %1394 = vmatmul.bf16.gmra.mxu0 %v1305
      %v1395 = vpop.f32.mrf.mxu0
      %v1396 = vadd.f32 0.0, %v1395
      %v1397 = vpop.f32.mrf.mxu0
      %v1398 = vadd.f32 0.0, %v1397
      %1399 = vdwg.mxu0
      %v1401 = vsel %vm377, %v1040, 0
      %v1404 = vsel %vm377, %v1041, 0
      %v1407 = vsel %vm377, %v1042, 0
      %v1410 = vsel %vm377, %v1043, 0
      %v1413 = vsel %vm377, %v1044, 0
      %v1416 = vsel %vm377, %v1045, 0
      %v1419 = vsel %vm377, %v1046, 0
      %v1422 = vsel %vm377, %v1047, 0
      %v1425 = vsel %vm377, %v1048, 0
      %v1428 = vsel %vm377, %v1049, 0
      %v1431 = vsel %vm377, %v1050, 0
      %v1434 = vsel %vm377, %v1051, 0
      %v1437 = vsel %vm377, %v1052, 0
      %v1440 = vsel %vm377, %v1053, 0
      %v1443 = vsel %vm377, %v1054, 0
      %v1446 = vsel %vm377, %v1055, 0
      %v1449 = vsel %vm1307, %v869, 0
      %1451 = vmatpush.bf16.msra.mxu0 0
      %1452 = vmatpush.bf16.msra.mxu0 0
      %1453 = vmatpush.bf16.msra.mxu0 0
      %1454 = vmatpush.bf16.msra.mxu0 0
      %1455 = vmatpush.bf16.msra.mxu0 0
      %1456 = vmatpush.bf16.msra.mxu0 0
      %1457 = vmatpush.bf16.msra.mxu0 0
      %1458 = vmatpush.bf16.msra.mxu0 %v1449
      %1459 = vmatmul.bf16.gmra.mxu0 %v1401
      %v1460 = vpop.f32.mrf.mxu0
      %v1461 = vadd.f32 %v1321, %v1460
      %v1462 = vpop.f32.mrf.mxu0
      %v1463 = vadd.f32 %v1323, %v1462
      %1464 = vmatmul.bf16.gmra.mxu0 %v1404
      %v1465 = vpop.f32.mrf.mxu0
      %v1466 = vadd.f32 %v1326, %v1465
      %v1467 = vpop.f32.mrf.mxu0
      %v1468 = vadd.f32 %v1328, %v1467
      %1469 = vmatmul.bf16.gmra.mxu0 %v1407
      %v1470 = vpop.f32.mrf.mxu0
      %v1471 = vadd.f32 %v1331, %v1470
      %v1472 = vpop.f32.mrf.mxu0
      %v1473 = vadd.f32 %v1333, %v1472
      %1474 = vmatmul.bf16.gmra.mxu0 %v1410
      %v1475 = vpop.f32.mrf.mxu0
      %v1476 = vadd.f32 %v1336, %v1475
      %v1477 = vpop.f32.mrf.mxu0
      %v1478 = vadd.f32 %v1338, %v1477
      %1479 = vmatmul.bf16.gmra.mxu0 %v1413
      %v1480 = vpop.f32.mrf.mxu0
      %v1481 = vadd.f32 %v1341, %v1480
      %v1482 = vpop.f32.mrf.mxu0
      %v1483 = vadd.f32 %v1343, %v1482
      %1484 = vmatmul.bf16.gmra.mxu0 %v1416
      %v1485 = vpop.f32.mrf.mxu0
      %v1486 = vadd.f32 %v1346, %v1485
      %v1487 = vpop.f32.mrf.mxu0
      %v1488 = vadd.f32 %v1348, %v1487
      %1489 = vmatmul.bf16.gmra.mxu0 %v1419
      %v1490 = vpop.f32.mrf.mxu0
      %v1491 = vadd.f32 %v1351, %v1490
      %v1492 = vpop.f32.mrf.mxu0
      %v1493 = vadd.f32 %v1353, %v1492
      %1494 = vmatmul.bf16.gmra.mxu0 %v1422
      %v1495 = vpop.f32.mrf.mxu0
      %v1496 = vadd.f32 %v1356, %v1495
      %v1497 = vpop.f32.mrf.mxu0
      %v1498 = vadd.f32 %v1358, %v1497
      %1499 = vmatmul.bf16.gmra.mxu0 %v1425
      %v1500 = vpop.f32.mrf.mxu0
      %v1501 = vadd.f32 %v1361, %v1500
      %v1502 = vpop.f32.mrf.mxu0
      %v1503 = vadd.f32 %v1363, %v1502
      %1504 = vmatmul.bf16.gmra.mxu0 %v1428
      %v1505 = vpop.f32.mrf.mxu0
      %v1506 = vadd.f32 %v1366, %v1505
      %v1507 = vpop.f32.mrf.mxu0
      %v1508 = vadd.f32 %v1368, %v1507
      %1509 = vmatmul.bf16.gmra.mxu0 %v1431
      %v1510 = vpop.f32.mrf.mxu0
      %v1511 = vadd.f32 %v1371, %v1510
      %v1512 = vpop.f32.mrf.mxu0
      %v1513 = vadd.f32 %v1373, %v1512
      %1514 = vmatmul.bf16.gmra.mxu0 %v1434
      %v1515 = vpop.f32.mrf.mxu0
      %v1516 = vadd.f32 %v1376, %v1515
      %v1517 = vpop.f32.mrf.mxu0
      %v1518 = vadd.f32 %v1378, %v1517
      %1519 = vmatmul.bf16.gmra.mxu0 %v1437
      %v1520 = vpop.f32.mrf.mxu0
      %v1521 = vadd.f32 %v1381, %v1520
      %v1522 = vpop.f32.mrf.mxu0
      %v1523 = vadd.f32 %v1383, %v1522
      %1524 = vmatmul.bf16.gmra.mxu0 %v1440
      %v1525 = vpop.f32.mrf.mxu0
      %v1526 = vadd.f32 %v1386, %v1525
      %v1527 = vpop.f32.mrf.mxu0
      %v1528 = vadd.f32 %v1388, %v1527
      %1529 = vmatmul.bf16.gmra.mxu0 %v1443
      %v1530 = vpop.f32.mrf.mxu0
      %v1531 = vadd.f32 %v1391, %v1530
      %v1532 = vpop.f32.mrf.mxu0
      %v1533 = vadd.f32 %v1393, %v1532
      %1534 = vmatmul.bf16.gmra.mxu0 %v1446
      %v1535 = vpop.f32.mrf.mxu0
      %v1536 = vadd.f32 %v1396, %v1535
      %v1537 = vpop.f32.mrf.mxu0
      %v1538 = vadd.f32 %v1398, %v1537
      %1539 = vdwg.mxu0
      %v1541 = vsel %vm377, %v1201, 0
      %v1544 = vsel %vm377, %v1202, 0
      %v1547 = vsel %vm377, %v1203, 0
      %v1550 = vsel %vm377, %v1204, 0
      %v1553 = vsel %vm377, %v1205, 0
      %v1556 = vsel %vm377, %v1206, 0
      %v1559 = vsel %vm377, %v1207, 0
      %v1562 = vsel %vm377, %v1208, 0
      %v1565 = vsel %vm377, %v1209, 0
      %v1568 = vsel %vm377, %v1210, 0
      %v1571 = vsel %vm377, %v1211, 0
      %v1574 = vsel %vm377, %v1212, 0
      %v1577 = vsel %vm377, %v1213, 0
      %v1580 = vsel %vm377, %v1214, 0
      %v1583 = vsel %vm377, %v1215, 0
      %v1586 = vsel %vm377, %v1216, 0
      %v1589 = vsel %vm1307, %v871, 0
      %1591 = vmatpush.bf16.msra.mxu0 0
      %1592 = vmatpush.bf16.msra.mxu0 0
      %1593 = vmatpush.bf16.msra.mxu0 0
      %1594 = vmatpush.bf16.msra.mxu0 0
      %1595 = vmatpush.bf16.msra.mxu0 0
      %1596 = vmatpush.bf16.msra.mxu0 0
      %1597 = vmatpush.bf16.msra.mxu0 0
      %1598 = vmatpush.bf16.msra.mxu0 %v1589
      %1599 = vmatmul.bf16.gmra.mxu0 %v1541
      %v1600 = vpop.f32.mrf.mxu0
      %v1601 = vadd.f32 0.0, %v1600
      %v1602 = vpop.f32.mrf.mxu0
      %v1603 = vadd.f32 0.0, %v1602
      %1604 = vmatmul.bf16.gmra.mxu0 %v1544
      %v1605 = vpop.f32.mrf.mxu0
      %v1606 = vadd.f32 0.0, %v1605
      %v1607 = vpop.f32.mrf.mxu0
      %v1608 = vadd.f32 0.0, %v1607
      %1609 = vmatmul.bf16.gmra.mxu0 %v1547
      %v1610 = vpop.f32.mrf.mxu0
      %v1611 = vadd.f32 0.0, %v1610
      %v1612 = vpop.f32.mrf.mxu0
      %v1613 = vadd.f32 0.0, %v1612
      %1614 = vmatmul.bf16.gmra.mxu0 %v1550
      %v1615 = vpop.f32.mrf.mxu0
      %v1616 = vadd.f32 0.0, %v1615
      %v1617 = vpop.f32.mrf.mxu0
      %v1618 = vadd.f32 0.0, %v1617
      %1619 = vmatmul.bf16.gmra.mxu0 %v1553
      %v1620 = vpop.f32.mrf.mxu0
      %v1621 = vadd.f32 0.0, %v1620
      %v1622 = vpop.f32.mrf.mxu0
      %v1623 = vadd.f32 0.0, %v1622
      %1624 = vmatmul.bf16.gmra.mxu0 %v1556
      %v1625 = vpop.f32.mrf.mxu0
      %v1626 = vadd.f32 0.0, %v1625
      %v1627 = vpop.f32.mrf.mxu0
      %v1628 = vadd.f32 0.0, %v1627
      %1629 = vmatmul.bf16.gmra.mxu0 %v1559
      %v1630 = vpop.f32.mrf.mxu0
      %v1631 = vadd.f32 0.0, %v1630
      %v1632 = vpop.f32.mrf.mxu0
      %v1633 = vadd.f32 0.0, %v1632
      %1634 = vmatmul.bf16.gmra.mxu0 %v1562
      %v1635 = vpop.f32.mrf.mxu0
      %v1636 = vadd.f32 0.0, %v1635
      %v1637 = vpop.f32.mrf.mxu0
      %v1638 = vadd.f32 0.0, %v1637
      %1639 = vmatmul.bf16.gmra.mxu0 %v1565
      %v1640 = vpop.f32.mrf.mxu0
      %v1641 = vadd.f32 0.0, %v1640
      %v1642 = vpop.f32.mrf.mxu0
      %v1643 = vadd.f32 0.0, %v1642
      %1644 = vmatmul.bf16.gmra.mxu0 %v1568
      %v1645 = vpop.f32.mrf.mxu0
      %v1646 = vadd.f32 0.0, %v1645
      %v1647 = vpop.f32.mrf.mxu0
      %v1648 = vadd.f32 0.0, %v1647
      %1649 = vmatmul.bf16.gmra.mxu0 %v1571
      %v1650 = vpop.f32.mrf.mxu0
      %v1651 = vadd.f32 0.0, %v1650
      %v1652 = vpop.f32.mrf.mxu0
      %v1653 = vadd.f32 0.0, %v1652
      %1654 = vmatmul.bf16.gmra.mxu0 %v1574
      %v1655 = vpop.f32.mrf.mxu0
      %v1656 = vadd.f32 0.0, %v1655
      %v1657 = vpop.f32.mrf.mxu0
      %v1658 = vadd.f32 0.0, %v1657
      %1659 = vmatmul.bf16.gmra.mxu0 %v1577
      %v1660 = vpop.f32.mrf.mxu0
      %v1661 = vadd.f32 0.0, %v1660
      %v1662 = vpop.f32.mrf.mxu0
      %v1663 = vadd.f32 0.0, %v1662
      %1664 = vmatmul.bf16.gmra.mxu0 %v1580
      %v1665 = vpop.f32.mrf.mxu0
      %v1666 = vadd.f32 0.0, %v1665
      %v1667 = vpop.f32.mrf.mxu0
      %v1668 = vadd.f32 0.0, %v1667
      %1669 = vmatmul.bf16.gmra.mxu0 %v1583
      %v1670 = vpop.f32.mrf.mxu0
      %v1671 = vadd.f32 0.0, %v1670
      %v1672 = vpop.f32.mrf.mxu0
      %v1673 = vadd.f32 0.0, %v1672
      %1674 = vmatmul.bf16.gmra.mxu0 %v1586
      %v1675 = vpop.f32.mrf.mxu0
      %v1676 = vadd.f32 0.0, %v1675
      %v1677 = vpop.f32.mrf.mxu0
      %v1678 = vadd.f32 0.0, %v1677
      %1679 = vdwg.mxu0
      %v1680 = vadd.f32 %v1461, %v1601
      %v1681 = vadd.f32 %v1463, %v1603
      %v1682 = vadd.f32 %v1466, %v1606
      %v1683 = vadd.f32 %v1468, %v1608
      %v1684 = vadd.f32 %v1471, %v1611
      %v1685 = vadd.f32 %v1473, %v1613
      %v1686 = vadd.f32 %v1476, %v1616
      %v1687 = vadd.f32 %v1478, %v1618
      %v1688 = vadd.f32 %v1481, %v1621
      %v1689 = vadd.f32 %v1483, %v1623
      %v1690 = vadd.f32 %v1486, %v1626
      %v1691 = vadd.f32 %v1488, %v1628
      %v1692 = vadd.f32 %v1491, %v1631
      %v1693 = vadd.f32 %v1493, %v1633
      %v1694 = vadd.f32 %v1496, %v1636
      %v1695 = vadd.f32 %v1498, %v1638
      %v1696 = vadd.f32 %v1501, %v1641
      %v1697 = vadd.f32 %v1503, %v1643
      %v1698 = vadd.f32 %v1506, %v1646
      %v1699 = vadd.f32 %v1508, %v1648
      %v1700 = vadd.f32 %v1511, %v1651
      %v1701 = vadd.f32 %v1513, %v1653
      %v1702 = vadd.f32 %v1516, %v1656
      %v1703 = vadd.f32 %v1518, %v1658
      %v1704 = vadd.f32 %v1521, %v1661
      %v1705 = vadd.f32 %v1523, %v1663
      %v1706 = vadd.f32 %v1526, %v1666
      %v1707 = vadd.f32 %v1528, %v1668
      %v1708 = vadd.f32 %v1531, %v1671
      %v1709 = vadd.f32 %v1533, %v1673
      %v1710 = vadd.f32 %v1536, %v1676
      %v1711 = vadd.f32 %v1538, %v1678
      %v1713 = vsel %vm377, %v1227, 0
      %v1716 = vsel %vm1307, %v872, 0
      %1718 = vmatpush.bf16.msra.mxu0 0
      %1719 = vmatpush.bf16.msra.mxu0 0
      %1720 = vmatpush.bf16.msra.mxu0 0
      %1721 = vmatpush.bf16.msra.mxu0 0
      %1722 = vmatpush.bf16.msra.mxu0 0
      %1723 = vmatpush.bf16.msra.mxu0 0
      %1724 = vmatpush.bf16.msra.mxu0 0
      %1725 = vmatpush.bf16.msra.mxu0 %v1716
      %1726 = vmatmul.bf16.gmra.mxu0 %v1404
      %v1727 = vpop.f32.mrf.mxu0
      %v1728 = vadd.f32 0.0, %v1727
      %v1729 = vpop.f32.mrf.mxu0
      %v1730 = vadd.f32 0.0, %v1729
      %1731 = vmatmul.bf16.gmra.mxu0 %v1407
      %v1732 = vpop.f32.mrf.mxu0
      %v1733 = vadd.f32 0.0, %v1732
      %v1734 = vpop.f32.mrf.mxu0
      %v1735 = vadd.f32 0.0, %v1734
      %1736 = vmatmul.bf16.gmra.mxu0 %v1410
      %v1737 = vpop.f32.mrf.mxu0
      %v1738 = vadd.f32 0.0, %v1737
      %v1739 = vpop.f32.mrf.mxu0
      %v1740 = vadd.f32 0.0, %v1739
      %1741 = vmatmul.bf16.gmra.mxu0 %v1413
      %v1742 = vpop.f32.mrf.mxu0
      %v1743 = vadd.f32 0.0, %v1742
      %v1744 = vpop.f32.mrf.mxu0
      %v1745 = vadd.f32 0.0, %v1744
      %1746 = vmatmul.bf16.gmra.mxu0 %v1416
      %v1747 = vpop.f32.mrf.mxu0
      %v1748 = vadd.f32 0.0, %v1747
      %v1749 = vpop.f32.mrf.mxu0
      %v1750 = vadd.f32 0.0, %v1749
      %1751 = vmatmul.bf16.gmra.mxu0 %v1419
      %v1752 = vpop.f32.mrf.mxu0
      %v1753 = vadd.f32 0.0, %v1752
      %v1754 = vpop.f32.mrf.mxu0
      %v1755 = vadd.f32 0.0, %v1754
      %1756 = vmatmul.bf16.gmra.mxu0 %v1422
      %v1757 = vpop.f32.mrf.mxu0
      %v1758 = vadd.f32 0.0, %v1757
      %v1759 = vpop.f32.mrf.mxu0
      %v1760 = vadd.f32 0.0, %v1759
      %1761 = vmatmul.bf16.gmra.mxu0 %v1425
      %v1762 = vpop.f32.mrf.mxu0
      %v1763 = vadd.f32 0.0, %v1762
      %v1764 = vpop.f32.mrf.mxu0
      %v1765 = vadd.f32 0.0, %v1764
      %1766 = vmatmul.bf16.gmra.mxu0 %v1428
      %v1767 = vpop.f32.mrf.mxu0
      %v1768 = vadd.f32 0.0, %v1767
      %v1769 = vpop.f32.mrf.mxu0
      %v1770 = vadd.f32 0.0, %v1769
      %1771 = vmatmul.bf16.gmra.mxu0 %v1431
      %v1772 = vpop.f32.mrf.mxu0
      %v1773 = vadd.f32 0.0, %v1772
      %v1774 = vpop.f32.mrf.mxu0
      %v1775 = vadd.f32 0.0, %v1774
      %1776 = vmatmul.bf16.gmra.mxu0 %v1434
      %v1777 = vpop.f32.mrf.mxu0
      %v1778 = vadd.f32 0.0, %v1777
      %v1779 = vpop.f32.mrf.mxu0
      %v1780 = vadd.f32 0.0, %v1779
      %1781 = vmatmul.bf16.gmra.mxu0 %v1437
      %v1782 = vpop.f32.mrf.mxu0
      %v1783 = vadd.f32 0.0, %v1782
      %v1784 = vpop.f32.mrf.mxu0
      %v1785 = vadd.f32 0.0, %v1784
      %1786 = vmatmul.bf16.gmra.mxu0 %v1440
      %v1787 = vpop.f32.mrf.mxu0
      %v1788 = vadd.f32 0.0, %v1787
      %v1789 = vpop.f32.mrf.mxu0
      %v1790 = vadd.f32 0.0, %v1789
      %1791 = vmatmul.bf16.gmra.mxu0 %v1443
      %v1792 = vpop.f32.mrf.mxu0
      %v1793 = vadd.f32 0.0, %v1792
      %v1794 = vpop.f32.mrf.mxu0
      %v1795 = vadd.f32 0.0, %v1794
      %1796 = vmatmul.bf16.gmra.mxu0 %v1446
      %v1797 = vpop.f32.mrf.mxu0
      %v1798 = vadd.f32 0.0, %v1797
      %v1799 = vpop.f32.mrf.mxu0
      %v1800 = vadd.f32 0.0, %v1799
      %1801 = vmatmul.bf16.gmra.mxu0 %v1713
      %v1802 = vpop.f32.mrf.mxu0
      %v1803 = vadd.f32 0.0, %v1802
      %v1804 = vpop.f32.mrf.mxu0
      %v1805 = vadd.f32 0.0, %v1804
      %1806 = vdwg.mxu0
      %v1807 = vadd.f32 %v1680, %v1728
      %v1808 = vadd.f32 %v1681, %v1730
      %v1809 = vadd.f32 %v1682, %v1733
      %v1810 = vadd.f32 %v1683, %v1735
      %v1811 = vadd.f32 %v1684, %v1738
      %v1812 = vadd.f32 %v1685, %v1740
      %v1813 = vadd.f32 %v1686, %v1743
      %v1814 = vadd.f32 %v1687, %v1745
      %v1815 = vadd.f32 %v1688, %v1748
      %v1816 = vadd.f32 %v1689, %v1750
      %v1817 = vadd.f32 %v1690, %v1753
      %v1818 = vadd.f32 %v1691, %v1755
      %v1819 = vadd.f32 %v1692, %v1758
      %v1820 = vadd.f32 %v1693, %v1760
      %v1821 = vadd.f32 %v1694, %v1763
      %v1822 = vadd.f32 %v1695, %v1765
      %v1823 = vadd.f32 %v1696, %v1768
      %v1824 = vadd.f32 %v1697, %v1770
      %v1825 = vadd.f32 %v1698, %v1773
      %v1826 = vadd.f32 %v1699, %v1775
      %v1827 = vadd.f32 %v1700, %v1778
      %v1828 = vadd.f32 %v1701, %v1780
      %v1829 = vadd.f32 %v1702, %v1783
      %v1830 = vadd.f32 %v1703, %v1785
      %v1831 = vadd.f32 %v1704, %v1788
      %v1832 = vadd.f32 %v1705, %v1790
      %v1833 = vadd.f32 %v1706, %v1793
      %v1834 = vadd.f32 %v1707, %v1795
      %v1835 = vadd.f32 %v1708, %v1798
      %v1836 = vadd.f32 %v1709, %v1800
      %v1837 = vadd.f32 %v1710, %v1803
      %v1838 = vadd.f32 %v1711, %v1805
      %v1840 = vsel %vm377, %v1228, 0
      %v1843 = vsel %vm1307, %v873, 0
      %1845 = vmatpush.bf16.msra.mxu0 0
      %1846 = vmatpush.bf16.msra.mxu0 0
      %1847 = vmatpush.bf16.msra.mxu0 0
      %1848 = vmatpush.bf16.msra.mxu0 0
      %1849 = vmatpush.bf16.msra.mxu0 0
      %1850 = vmatpush.bf16.msra.mxu0 0
      %1851 = vmatpush.bf16.msra.mxu0 0
      %1852 = vmatpush.bf16.msra.mxu0 %v1843
      %1853 = vmatmul.bf16.gmra.mxu0 %v1263
      %v1854 = vpop.f32.mrf.mxu0
      %v1855 = vadd.f32 0.0, %v1854
      %v1856 = vpop.f32.mrf.mxu0
      %v1857 = vadd.f32 0.0, %v1856
      %1858 = vmatmul.bf16.gmra.mxu0 %v1266
      %v1859 = vpop.f32.mrf.mxu0
      %v1860 = vadd.f32 0.0, %v1859
      %v1861 = vpop.f32.mrf.mxu0
      %v1862 = vadd.f32 0.0, %v1861
      %1863 = vmatmul.bf16.gmra.mxu0 %v1269
      %v1864 = vpop.f32.mrf.mxu0
      %v1865 = vadd.f32 0.0, %v1864
      %v1866 = vpop.f32.mrf.mxu0
      %v1867 = vadd.f32 0.0, %v1866
      %1868 = vmatmul.bf16.gmra.mxu0 %v1272
      %v1869 = vpop.f32.mrf.mxu0
      %v1870 = vadd.f32 0.0, %v1869
      %v1871 = vpop.f32.mrf.mxu0
      %v1872 = vadd.f32 0.0, %v1871
      %1873 = vmatmul.bf16.gmra.mxu0 %v1275
      %v1874 = vpop.f32.mrf.mxu0
      %v1875 = vadd.f32 0.0, %v1874
      %v1876 = vpop.f32.mrf.mxu0
      %v1877 = vadd.f32 0.0, %v1876
      %1878 = vmatmul.bf16.gmra.mxu0 %v1278
      %v1879 = vpop.f32.mrf.mxu0
      %v1880 = vadd.f32 0.0, %v1879
      %v1881 = vpop.f32.mrf.mxu0
      %v1882 = vadd.f32 0.0, %v1881
      %1883 = vmatmul.bf16.gmra.mxu0 %v1281
      %v1884 = vpop.f32.mrf.mxu0
      %v1885 = vadd.f32 0.0, %v1884
      %v1886 = vpop.f32.mrf.mxu0
      %v1887 = vadd.f32 0.0, %v1886
      %1888 = vmatmul.bf16.gmra.mxu0 %v1284
      %v1889 = vpop.f32.mrf.mxu0
      %v1890 = vadd.f32 0.0, %v1889
      %v1891 = vpop.f32.mrf.mxu0
      %v1892 = vadd.f32 0.0, %v1891
      %1893 = vmatmul.bf16.gmra.mxu0 %v1287
      %v1894 = vpop.f32.mrf.mxu0
      %v1895 = vadd.f32 0.0, %v1894
      %v1896 = vpop.f32.mrf.mxu0
      %v1897 = vadd.f32 0.0, %v1896
      %1898 = vmatmul.bf16.gmra.mxu0 %v1290
      %v1899 = vpop.f32.mrf.mxu0
      %v1900 = vadd.f32 0.0, %v1899
      %v1901 = vpop.f32.mrf.mxu0
      %v1902 = vadd.f32 0.0, %v1901
      %1903 = vmatmul.bf16.gmra.mxu0 %v1293
      %v1904 = vpop.f32.mrf.mxu0
      %v1905 = vadd.f32 0.0, %v1904
      %v1906 = vpop.f32.mrf.mxu0
      %v1907 = vadd.f32 0.0, %v1906
      %1908 = vmatmul.bf16.gmra.mxu0 %v1296
      %v1909 = vpop.f32.mrf.mxu0
      %v1910 = vadd.f32 0.0, %v1909
      %v1911 = vpop.f32.mrf.mxu0
      %v1912 = vadd.f32 0.0, %v1911
      %1913 = vmatmul.bf16.gmra.mxu0 %v1299
      %v1914 = vpop.f32.mrf.mxu0
      %v1915 = vadd.f32 0.0, %v1914
      %v1916 = vpop.f32.mrf.mxu0
      %v1917 = vadd.f32 0.0, %v1916
      %1918 = vmatmul.bf16.gmra.mxu0 %v1302
      %v1919 = vpop.f32.mrf.mxu0
      %v1920 = vadd.f32 0.0, %v1919
      %v1921 = vpop.f32.mrf.mxu0
      %v1922 = vadd.f32 0.0, %v1921
      %1923 = vmatmul.bf16.gmra.mxu0 %v1305
      %v1924 = vpop.f32.mrf.mxu0
      %v1925 = vadd.f32 0.0, %v1924
      %v1926 = vpop.f32.mrf.mxu0
      %v1927 = vadd.f32 0.0, %v1926
      %1928 = vmatmul.bf16.gmra.mxu0 %v1840
      %v1929 = vpop.f32.mrf.mxu0
      %v1930 = vadd.f32 0.0, %v1929
      %v1931 = vpop.f32.mrf.mxu0
      %v1932 = vadd.f32 0.0, %v1931
      %1933 = vdwg.mxu0
      %v1934 = vadd.f32 %v1807, %v1855
      %v1935 = vadd.f32 %v1808, %v1857
      %v1936 = vadd.f32 %v1809, %v1860
      %v1937 = vadd.f32 %v1810, %v1862
      %v1938 = vadd.f32 %v1811, %v1865
      %v1939 = vadd.f32 %v1812, %v1867
      %v1940 = vadd.f32 %v1813, %v1870
      %v1941 = vadd.f32 %v1814, %v1872
      %v1942 = vadd.f32 %v1815, %v1875
      %v1943 = vadd.f32 %v1816, %v1877
      %v1944 = vadd.f32 %v1817, %v1880
      %v1945 = vadd.f32 %v1818, %v1882
      %v1946 = vadd.f32 %v1819, %v1885
      %v1947 = vadd.f32 %v1820, %v1887
      %v1948 = vadd.f32 %v1821, %v1890
      %v1949 = vadd.f32 %v1822, %v1892
      %v1950 = vadd.f32 %v1823, %v1895
      %v1951 = vadd.f32 %v1824, %v1897
      %v1952 = vadd.f32 %v1825, %v1900
      %v1953 = vadd.f32 %v1826, %v1902
      %v1954 = vadd.f32 %v1827, %v1905
      %v1955 = vadd.f32 %v1828, %v1907
      %v1956 = vadd.f32 %v1829, %v1910
      %v1957 = vadd.f32 %v1830, %v1912
      %v1958 = vadd.f32 %v1831, %v1915
      %v1959 = vadd.f32 %v1832, %v1917
      %v1960 = vadd.f32 %v1833, %v1920
      %v1961 = vadd.f32 %v1834, %v1922
      %v1962 = vadd.f32 %v1835, %v1925
      %v1963 = vadd.f32 %v1836, %v1927
      %v1964 = vadd.f32 %v1837, %v1930
      %v1965 = vadd.f32 %v1838, %v1932
      %v1967 = vsel %vm377, %v1237, 0
      %v1970 = vsel %vm1307, %v874, 0
      %1972 = vmatpush.bf16.msra.mxu0 0
      %1973 = vmatpush.bf16.msra.mxu0 0
      %1974 = vmatpush.bf16.msra.mxu0 0
      %1975 = vmatpush.bf16.msra.mxu0 0
      %1976 = vmatpush.bf16.msra.mxu0 0
      %1977 = vmatpush.bf16.msra.mxu0 0
      %1978 = vmatpush.bf16.msra.mxu0 0
      %1979 = vmatpush.bf16.msra.mxu0 %v1970
      %1980 = vmatmul.bf16.gmra.mxu0 %v1544
      %v1981 = vpop.f32.mrf.mxu0
      %v1982 = vadd.f32 0.0, %v1981
      %v1983 = vpop.f32.mrf.mxu0
      %v1984 = vadd.f32 0.0, %v1983
      %1985 = vmatmul.bf16.gmra.mxu0 %v1547
      %v1986 = vpop.f32.mrf.mxu0
      %v1987 = vadd.f32 0.0, %v1986
      %v1988 = vpop.f32.mrf.mxu0
      %v1989 = vadd.f32 0.0, %v1988
      %1990 = vmatmul.bf16.gmra.mxu0 %v1550
      %v1991 = vpop.f32.mrf.mxu0
      %v1992 = vadd.f32 0.0, %v1991
      %v1993 = vpop.f32.mrf.mxu0
      %v1994 = vadd.f32 0.0, %v1993
      %1995 = vmatmul.bf16.gmra.mxu0 %v1553
      %v1996 = vpop.f32.mrf.mxu0
      %v1997 = vadd.f32 0.0, %v1996
      %v1998 = vpop.f32.mrf.mxu0
      %v1999 = vadd.f32 0.0, %v1998
      %2000 = vmatmul.bf16.gmra.mxu0 %v1556
      %v2001 = vpop.f32.mrf.mxu0
      %v2002 = vadd.f32 0.0, %v2001
      %v2003 = vpop.f32.mrf.mxu0
      %v2004 = vadd.f32 0.0, %v2003
      %2005 = vmatmul.bf16.gmra.mxu0 %v1559
      %v2006 = vpop.f32.mrf.mxu0
      %v2007 = vadd.f32 0.0, %v2006
      %v2008 = vpop.f32.mrf.mxu0
      %v2009 = vadd.f32 0.0, %v2008
      %2010 = vmatmul.bf16.gmra.mxu0 %v1562
      %v2011 = vpop.f32.mrf.mxu0
      %v2012 = vadd.f32 0.0, %v2011
      %v2013 = vpop.f32.mrf.mxu0
      %v2014 = vadd.f32 0.0, %v2013
      %2015 = vmatmul.bf16.gmra.mxu0 %v1565
      %v2016 = vpop.f32.mrf.mxu0
      %v2017 = vadd.f32 0.0, %v2016
      %v2018 = vpop.f32.mrf.mxu0
      %v2019 = vadd.f32 0.0, %v2018
      %2020 = vmatmul.bf16.gmra.mxu0 %v1568
      %v2021 = vpop.f32.mrf.mxu0
      %v2022 = vadd.f32 0.0, %v2021
      %v2023 = vpop.f32.mrf.mxu0
      %v2024 = vadd.f32 0.0, %v2023
      %2025 = vmatmul.bf16.gmra.mxu0 %v1571
      %v2026 = vpop.f32.mrf.mxu0
      %v2027 = vadd.f32 0.0, %v2026
      %v2028 = vpop.f32.mrf.mxu0
      %v2029 = vadd.f32 0.0, %v2028
      %2030 = vmatmul.bf16.gmra.mxu0 %v1574
      %v2031 = vpop.f32.mrf.mxu0
      %v2032 = vadd.f32 0.0, %v2031
      %v2033 = vpop.f32.mrf.mxu0
      %v2034 = vadd.f32 0.0, %v2033
      %2035 = vmatmul.bf16.gmra.mxu0 %v1577
      %v2036 = vpop.f32.mrf.mxu0
      %v2037 = vadd.f32 0.0, %v2036
      %v2038 = vpop.f32.mrf.mxu0
      %v2039 = vadd.f32 0.0, %v2038
      %2040 = vmatmul.bf16.gmra.mxu0 %v1580
      %v2041 = vpop.f32.mrf.mxu0
      %v2042 = vadd.f32 0.0, %v2041
      %v2043 = vpop.f32.mrf.mxu0
      %v2044 = vadd.f32 0.0, %v2043
      %2045 = vmatmul.bf16.gmra.mxu0 %v1583
      %v2046 = vpop.f32.mrf.mxu0
      %v2047 = vadd.f32 0.0, %v2046
      %v2048 = vpop.f32.mrf.mxu0
      %v2049 = vadd.f32 0.0, %v2048
      %2050 = vmatmul.bf16.gmra.mxu0 %v1586
      %v2051 = vpop.f32.mrf.mxu0
      %v2052 = vadd.f32 0.0, %v2051
      %v2053 = vpop.f32.mrf.mxu0
      %v2054 = vadd.f32 0.0, %v2053
      %2055 = vmatmul.bf16.gmra.mxu0 %v1967
      %v2056 = vpop.f32.mrf.mxu0
      %v2057 = vadd.f32 0.0, %v2056
      %v2058 = vpop.f32.mrf.mxu0
      %v2059 = vadd.f32 0.0, %v2058
      %2060 = vdwg.mxu0
      %v2061 = vadd.f32 %v1934, %v1982
      %v2062 = vadd.f32 %v1935, %v1984
      %v2063 = vadd.f32 %v1936, %v1987
      %v2064 = vadd.f32 %v1937, %v1989
      %v2065 = vadd.f32 %v1938, %v1992
      %v2066 = vadd.f32 %v1939, %v1994
      %v2067 = vadd.f32 %v1940, %v1997
      %v2068 = vadd.f32 %v1941, %v1999
      %v2069 = vadd.f32 %v1942, %v2002
      %v2070 = vadd.f32 %v1943, %v2004
      %v2071 = vadd.f32 %v1944, %v2007
      %v2072 = vadd.f32 %v1945, %v2009
      %v2073 = vadd.f32 %v1946, %v2012
      %v2074 = vadd.f32 %v1947, %v2014
      %v2075 = vadd.f32 %v1948, %v2017
      %v2076 = vadd.f32 %v1949, %v2019
      %v2077 = vadd.f32 %v1950, %v2022
      %v2078 = vadd.f32 %v1951, %v2024
      %v2079 = vadd.f32 %v1952, %v2027
      %v2080 = vadd.f32 %v1953, %v2029
      %v2081 = vadd.f32 %v1954, %v2032
      %v2082 = vadd.f32 %v1955, %v2034
      %v2083 = vadd.f32 %v1956, %v2037
      %v2084 = vadd.f32 %v1957, %v2039
      %v2085 = vadd.f32 %v1958, %v2042
      %v2086 = vadd.f32 %v1959, %v2044
      %v2087 = vadd.f32 %v1960, %v2047
      %v2088 = vadd.f32 %v1961, %v2049
      %v2089 = vadd.f32 %v1962, %v2052
      %v2090 = vadd.f32 %v1963, %v2054
      %v2091 = vadd.f32 %v1964, %v2057
      %v2092 = vadd.f32 %v1965, %v2059
      %v2094 = vsel %vm377, %v1248, 0
      %v2097 = vsel %vm1307, %v875, 0
      %2099 = vmatpush.bf16.msra.mxu0 0
      %2100 = vmatpush.bf16.msra.mxu0 0
      %2101 = vmatpush.bf16.msra.mxu0 0
      %2102 = vmatpush.bf16.msra.mxu0 0
      %2103 = vmatpush.bf16.msra.mxu0 0
      %2104 = vmatpush.bf16.msra.mxu0 0
      %2105 = vmatpush.bf16.msra.mxu0 0
      %2106 = vmatpush.bf16.msra.mxu0 %v2097
      %2107 = vmatmul.bf16.gmra.mxu0 %v1407
      %v2108 = vpop.f32.mrf.mxu0
      %v2109 = vadd.f32 0.0, %v2108
      %v2110 = vpop.f32.mrf.mxu0
      %v2111 = vadd.f32 0.0, %v2110
      %2112 = vmatmul.bf16.gmra.mxu0 %v1410
      %v2113 = vpop.f32.mrf.mxu0
      %v2114 = vadd.f32 0.0, %v2113
      %v2115 = vpop.f32.mrf.mxu0
      %v2116 = vadd.f32 0.0, %v2115
      %2117 = vmatmul.bf16.gmra.mxu0 %v1413
      %v2118 = vpop.f32.mrf.mxu0
      %v2119 = vadd.f32 0.0, %v2118
      %v2120 = vpop.f32.mrf.mxu0
      %v2121 = vadd.f32 0.0, %v2120
      %2122 = vmatmul.bf16.gmra.mxu0 %v1416
      %v2123 = vpop.f32.mrf.mxu0
      %v2124 = vadd.f32 0.0, %v2123
      %v2125 = vpop.f32.mrf.mxu0
      %v2126 = vadd.f32 0.0, %v2125
      %2127 = vmatmul.bf16.gmra.mxu0 %v1419
      %v2128 = vpop.f32.mrf.mxu0
      %v2129 = vadd.f32 0.0, %v2128
      %v2130 = vpop.f32.mrf.mxu0
      %v2131 = vadd.f32 0.0, %v2130
      %2132 = vmatmul.bf16.gmra.mxu0 %v1422
      %v2133 = vpop.f32.mrf.mxu0
      %v2134 = vadd.f32 0.0, %v2133
      %v2135 = vpop.f32.mrf.mxu0
      %v2136 = vadd.f32 0.0, %v2135
      %2137 = vmatmul.bf16.gmra.mxu0 %v1425
      %v2138 = vpop.f32.mrf.mxu0
      %v2139 = vadd.f32 0.0, %v2138
      %v2140 = vpop.f32.mrf.mxu0
      %v2141 = vadd.f32 0.0, %v2140
      %2142 = vmatmul.bf16.gmra.mxu0 %v1428
      %v2143 = vpop.f32.mrf.mxu0
      %v2144 = vadd.f32 0.0, %v2143
      %v2145 = vpop.f32.mrf.mxu0
      %v2146 = vadd.f32 0.0, %v2145
      %2147 = vmatmul.bf16.gmra.mxu0 %v1431
      %v2148 = vpop.f32.mrf.mxu0
      %v2149 = vadd.f32 0.0, %v2148
      %v2150 = vpop.f32.mrf.mxu0
      %v2151 = vadd.f32 0.0, %v2150
      %2152 = vmatmul.bf16.gmra.mxu0 %v1434
      %v2153 = vpop.f32.mrf.mxu0
      %v2154 = vadd.f32 0.0, %v2153
      %v2155 = vpop.f32.mrf.mxu0
      %v2156 = vadd.f32 0.0, %v2155
      %2157 = vmatmul.bf16.gmra.mxu0 %v1437
      %v2158 = vpop.f32.mrf.mxu0
      %v2159 = vadd.f32 0.0, %v2158
      %v2160 = vpop.f32.mrf.mxu0
      %v2161 = vadd.f32 0.0, %v2160
      %2162 = vmatmul.bf16.gmra.mxu0 %v1440
      %v2163 = vpop.f32.mrf.mxu0
      %v2164 = vadd.f32 0.0, %v2163
      %v2165 = vpop.f32.mrf.mxu0
      %v2166 = vadd.f32 0.0, %v2165
      %2167 = vmatmul.bf16.gmra.mxu0 %v1443
      %v2168 = vpop.f32.mrf.mxu0
      %v2169 = vadd.f32 0.0, %v2168
      %v2170 = vpop.f32.mrf.mxu0
      %v2171 = vadd.f32 0.0, %v2170
      %2172 = vmatmul.bf16.gmra.mxu0 %v1446
      %v2173 = vpop.f32.mrf.mxu0
      %v2174 = vadd.f32 0.0, %v2173
      %v2175 = vpop.f32.mrf.mxu0
      %v2176 = vadd.f32 0.0, %v2175
      %2177 = vmatmul.bf16.gmra.mxu0 %v1713
      %v2178 = vpop.f32.mrf.mxu0
      %v2179 = vadd.f32 0.0, %v2178
      %v2180 = vpop.f32.mrf.mxu0
      %v2181 = vadd.f32 0.0, %v2180
      %2182 = vmatmul.bf16.gmra.mxu0 %v2094
      %v2183 = vpop.f32.mrf.mxu0
      %v2184 = vadd.f32 0.0, %v2183
      %v2185 = vpop.f32.mrf.mxu0
      %v2186 = vadd.f32 0.0, %v2185
      %2187 = vdwg.mxu0
      %v2188 = vadd.f32 %v2061, %v2109
      %v2189 = vadd.f32 %v2062, %v2111
      %v2190 = vadd.f32 %v2063, %v2114
      %v2191 = vadd.f32 %v2064, %v2116
      %v2192 = vadd.f32 %v2065, %v2119
      %v2193 = vadd.f32 %v2066, %v2121
      %v2194 = vadd.f32 %v2067, %v2124
      %v2195 = vadd.f32 %v2068, %v2126
      %v2196 = vadd.f32 %v2069, %v2129
      %v2197 = vadd.f32 %v2070, %v2131
      %v2198 = vadd.f32 %v2071, %v2134
      %v2199 = vadd.f32 %v2072, %v2136
      %v2200 = vadd.f32 %v2073, %v2139
      %v2201 = vadd.f32 %v2074, %v2141
      %v2202 = vadd.f32 %v2075, %v2144
      %v2203 = vadd.f32 %v2076, %v2146
      %v2204 = vadd.f32 %v2077, %v2149
      %v2205 = vadd.f32 %v2078, %v2151
      %v2206 = vadd.f32 %v2079, %v2154
      %v2207 = vadd.f32 %v2080, %v2156
      %v2208 = vadd.f32 %v2081, %v2159
      %v2209 = vadd.f32 %v2082, %v2161
      %v2210 = vadd.f32 %v2083, %v2164
      %v2211 = vadd.f32 %v2084, %v2166
      %v2212 = vadd.f32 %v2085, %v2169
      %v2213 = vadd.f32 %v2086, %v2171
      %v2214 = vadd.f32 %v2087, %v2174
      %v2215 = vadd.f32 %v2088, %v2176
      %v2216 = vadd.f32 %v2089, %v2179
      %v2217 = vadd.f32 %v2090, %v2181
      %v2218 = vadd.f32 %v2091, %v2184
      %v2219 = vadd.f32 %v2092, %v2186
      %v2221 = vsel %vm377, %v1249, 0
      %v2224 = vsel %vm1307, %v876, 0
      %2226 = vmatpush.bf16.msra.mxu0 0
      %2227 = vmatpush.bf16.msra.mxu0 0
      %2228 = vmatpush.bf16.msra.mxu0 0
      %2229 = vmatpush.bf16.msra.mxu0 0
      %2230 = vmatpush.bf16.msra.mxu0 0
      %2231 = vmatpush.bf16.msra.mxu0 0
      %2232 = vmatpush.bf16.msra.mxu0 0
      %2233 = vmatpush.bf16.msra.mxu0 %v2224
      %2234 = vmatmul.bf16.gmra.mxu0 %v1266
      %v2235 = vpop.f32.mrf.mxu0
      %v2236 = vadd.f32 0.0, %v2235
      %v2237 = vpop.f32.mrf.mxu0
      %v2238 = vadd.f32 0.0, %v2237
      %2239 = vmatmul.bf16.gmra.mxu0 %v1269
      %v2240 = vpop.f32.mrf.mxu0
      %v2241 = vadd.f32 0.0, %v2240
      %v2242 = vpop.f32.mrf.mxu0
      %v2243 = vadd.f32 0.0, %v2242
      %2244 = vmatmul.bf16.gmra.mxu0 %v1272
      %v2245 = vpop.f32.mrf.mxu0
      %v2246 = vadd.f32 0.0, %v2245
      %v2247 = vpop.f32.mrf.mxu0
      %v2248 = vadd.f32 0.0, %v2247
      %2249 = vmatmul.bf16.gmra.mxu0 %v1275
      %v2250 = vpop.f32.mrf.mxu0
      %v2251 = vadd.f32 0.0, %v2250
      %v2252 = vpop.f32.mrf.mxu0
      %v2253 = vadd.f32 0.0, %v2252
      %2254 = vmatmul.bf16.gmra.mxu0 %v1278
      %v2255 = vpop.f32.mrf.mxu0
      %v2256 = vadd.f32 0.0, %v2255
      %v2257 = vpop.f32.mrf.mxu0
      %v2258 = vadd.f32 0.0, %v2257
      %2259 = vmatmul.bf16.gmra.mxu0 %v1281
      %v2260 = vpop.f32.mrf.mxu0
      %v2261 = vadd.f32 0.0, %v2260
      %v2262 = vpop.f32.mrf.mxu0
      %v2263 = vadd.f32 0.0, %v2262
      %2264 = vmatmul.bf16.gmra.mxu0 %v1284
      %v2265 = vpop.f32.mrf.mxu0
      %v2266 = vadd.f32 0.0, %v2265
      %v2267 = vpop.f32.mrf.mxu0
      %v2268 = vadd.f32 0.0, %v2267
      %2269 = vmatmul.bf16.gmra.mxu0 %v1287
      %v2270 = vpop.f32.mrf.mxu0
      %v2271 = vadd.f32 0.0, %v2270
      %v2272 = vpop.f32.mrf.mxu0
      %v2273 = vadd.f32 0.0, %v2272
      %2274 = vmatmul.bf16.gmra.mxu0 %v1290
      %v2275 = vpop.f32.mrf.mxu0
      %v2276 = vadd.f32 0.0, %v2275
      %v2277 = vpop.f32.mrf.mxu0
      %v2278 = vadd.f32 0.0, %v2277
      %2279 = vmatmul.bf16.gmra.mxu0 %v1293
      %v2280 = vpop.f32.mrf.mxu0
      %v2281 = vadd.f32 0.0, %v2280
      %v2282 = vpop.f32.mrf.mxu0
      %v2283 = vadd.f32 0.0, %v2282
      %2284 = vmatmul.bf16.gmra.mxu0 %v1296
      %v2285 = vpop.f32.mrf.mxu0
      %v2286 = vadd.f32 0.0, %v2285
      %v2287 = vpop.f32.mrf.mxu0
      %v2288 = vadd.f32 0.0, %v2287
      %2289 = vmatmul.bf16.gmra.mxu0 %v1299
      %v2290 = vpop.f32.mrf.mxu0
      %v2291 = vadd.f32 0.0, %v2290
      %v2292 = vpop.f32.mrf.mxu0
      %v2293 = vadd.f32 0.0, %v2292
      %2294 = vmatmul.bf16.gmra.mxu0 %v1302
      %v2295 = vpop.f32.mrf.mxu0
      %v2296 = vadd.f32 0.0, %v2295
      %v2297 = vpop.f32.mrf.mxu0
      %v2298 = vadd.f32 0.0, %v2297
      %2299 = vmatmul.bf16.gmra.mxu0 %v1305
      %v2300 = vpop.f32.mrf.mxu0
      %v2301 = vadd.f32 0.0, %v2300
      %v2302 = vpop.f32.mrf.mxu0
      %v2303 = vadd.f32 0.0, %v2302
      %2304 = vmatmul.bf16.gmra.mxu0 %v1840
      %v2305 = vpop.f32.mrf.mxu0
      %v2306 = vadd.f32 0.0, %v2305
      %v2307 = vpop.f32.mrf.mxu0
      %v2308 = vadd.f32 0.0, %v2307
      %2309 = vmatmul.bf16.gmra.mxu0 %v2221
      %v2310 = vpop.f32.mrf.mxu0
      %v2311 = vadd.f32 0.0, %v2310
      %v2312 = vpop.f32.mrf.mxu0
      %v2313 = vadd.f32 0.0, %v2312
      %2314 = vdwg.mxu0
      %v2315 = vadd.f32 %v2188, %v2236
      %v2316 = vadd.f32 %v2189, %v2238
      %v2317 = vadd.f32 %v2190, %v2241
      %v2318 = vadd.f32 %v2191, %v2243
      %v2319 = vadd.f32 %v2192, %v2246
      %v2320 = vadd.f32 %v2193, %v2248
      %v2321 = vadd.f32 %v2194, %v2251
      %v2322 = vadd.f32 %v2195, %v2253
      %v2323 = vadd.f32 %v2196, %v2256
      %v2324 = vadd.f32 %v2197, %v2258
      %v2325 = vadd.f32 %v2198, %v2261
      %v2326 = vadd.f32 %v2199, %v2263
      %v2327 = vadd.f32 %v2200, %v2266
      %v2328 = vadd.f32 %v2201, %v2268
      %v2329 = vadd.f32 %v2202, %v2271
      %v2330 = vadd.f32 %v2203, %v2273
      %v2331 = vadd.f32 %v2204, %v2276
      %v2332 = vadd.f32 %v2205, %v2278
      %v2333 = vadd.f32 %v2206, %v2281
      %v2334 = vadd.f32 %v2207, %v2283
      %v2335 = vadd.f32 %v2208, %v2286
      %v2336 = vadd.f32 %v2209, %v2288
      %v2337 = vadd.f32 %v2210, %v2291
      %v2338 = vadd.f32 %v2211, %v2293
      %v2339 = vadd.f32 %v2212, %v2296
      %v2340 = vadd.f32 %v2213, %v2298
      %v2341 = vadd.f32 %v2214, %v2301
      %v2342 = vadd.f32 %v2215, %v2303
      %v2343 = vadd.f32 %v2216, %v2306
      %v2344 = vadd.f32 %v2217, %v2308
      %v2345 = vadd.f32 %v2218, %v2311
      %v2346 = vadd.f32 %v2219, %v2313
      %v2348 = vsel %vm377, %v1258, 0
      %v2351 = vsel %vm1307, %v877, 0
      %2353 = vmatpush.bf16.msra.mxu0 0
      %2354 = vmatpush.bf16.msra.mxu0 0
      %2355 = vmatpush.bf16.msra.mxu0 0
      %2356 = vmatpush.bf16.msra.mxu0 0
      %2357 = vmatpush.bf16.msra.mxu0 0
      %2358 = vmatpush.bf16.msra.mxu0 0
      %2359 = vmatpush.bf16.msra.mxu0 0
      %2360 = vmatpush.bf16.msra.mxu0 %v2351
      %2361 = vmatmul.bf16.gmra.mxu0 %v1547
      %v2362 = vpop.f32.mrf.mxu0
      %v2363 = vadd.f32 0.0, %v2362
      %v2364 = vpop.f32.mrf.mxu0
      %v2365 = vadd.f32 0.0, %v2364
      %2366 = vmatmul.bf16.gmra.mxu0 %v1550
      %v2367 = vpop.f32.mrf.mxu0
      %v2368 = vadd.f32 0.0, %v2367
      %v2369 = vpop.f32.mrf.mxu0
      %v2370 = vadd.f32 0.0, %v2369
      %2371 = vmatmul.bf16.gmra.mxu0 %v1553
      %v2372 = vpop.f32.mrf.mxu0
      %v2373 = vadd.f32 0.0, %v2372
      %v2374 = vpop.f32.mrf.mxu0
      %v2375 = vadd.f32 0.0, %v2374
      %2376 = vmatmul.bf16.gmra.mxu0 %v1556
      %v2377 = vpop.f32.mrf.mxu0
      %v2378 = vadd.f32 0.0, %v2377
      %v2379 = vpop.f32.mrf.mxu0
      %v2380 = vadd.f32 0.0, %v2379
      %2381 = vmatmul.bf16.gmra.mxu0 %v1559
      %v2382 = vpop.f32.mrf.mxu0
      %v2383 = vadd.f32 0.0, %v2382
      %v2384 = vpop.f32.mrf.mxu0
      %v2385 = vadd.f32 0.0, %v2384
      %2386 = vmatmul.bf16.gmra.mxu0 %v1562
      %v2387 = vpop.f32.mrf.mxu0
      %v2388 = vadd.f32 0.0, %v2387
      %v2389 = vpop.f32.mrf.mxu0
      %v2390 = vadd.f32 0.0, %v2389
      %2391 = vmatmul.bf16.gmra.mxu0 %v1565
      %v2392 = vpop.f32.mrf.mxu0
      %v2393 = vadd.f32 0.0, %v2392
      %v2394 = vpop.f32.mrf.mxu0
      %v2395 = vadd.f32 0.0, %v2394
      %2396 = vmatmul.bf16.gmra.mxu0 %v1568
      %v2397 = vpop.f32.mrf.mxu0
      %v2398 = vadd.f32 0.0, %v2397
      %v2399 = vpop.f32.mrf.mxu0
      %v2400 = vadd.f32 0.0, %v2399
      %2401 = vmatmul.bf16.gmra.mxu0 %v1571
      %v2402 = vpop.f32.mrf.mxu0
      %v2403 = vadd.f32 0.0, %v2402
      %v2404 = vpop.f32.mrf.mxu0
      %v2405 = vadd.f32 0.0, %v2404
      %2406 = vmatmul.bf16.gmra.mxu0 %v1574
      %v2407 = vpop.f32.mrf.mxu0
      %v2408 = vadd.f32 0.0, %v2407
      %v2409 = vpop.f32.mrf.mxu0
      %v2410 = vadd.f32 0.0, %v2409
      %2411 = vmatmul.bf16.gmra.mxu0 %v1577
      %v2412 = vpop.f32.mrf.mxu0
      %v2413 = vadd.f32 0.0, %v2412
      %v2414 = vpop.f32.mrf.mxu0
      %v2415 = vadd.f32 0.0, %v2414
      %2416 = vmatmul.bf16.gmra.mxu0 %v1580
      %v2417 = vpop.f32.mrf.mxu0
      %v2418 = vadd.f32 0.0, %v2417
      %v2419 = vpop.f32.mrf.mxu0
      %v2420 = vadd.f32 0.0, %v2419
      %2421 = vmatmul.bf16.gmra.mxu0 %v1583
      %v2422 = vpop.f32.mrf.mxu0
      %v2423 = vadd.f32 0.0, %v2422
      %v2424 = vpop.f32.mrf.mxu0
      %v2425 = vadd.f32 0.0, %v2424
      %2426 = vmatmul.bf16.gmra.mxu0 %v1586
      %v2427 = vpop.f32.mrf.mxu0
      %v2428 = vadd.f32 0.0, %v2427
      %v2429 = vpop.f32.mrf.mxu0
      %v2430 = vadd.f32 0.0, %v2429
      %2431 = vmatmul.bf16.gmra.mxu0 %v1967
      %v2432 = vpop.f32.mrf.mxu0
      %v2433 = vadd.f32 0.0, %v2432
      %v2434 = vpop.f32.mrf.mxu0
      %v2435 = vadd.f32 0.0, %v2434
      %2436 = vmatmul.bf16.gmra.mxu0 %v2348
      %v2437 = vpop.f32.mrf.mxu0
      %v2438 = vadd.f32 0.0, %v2437
      %v2439 = vpop.f32.mrf.mxu0
      %v2440 = vadd.f32 0.0, %v2439
      %2441 = vdwg.mxu0
      %v2442 = vadd.f32 %v2315, %v2363
      %v2443 = vadd.f32 %v2316, %v2365
      %v2444 = vadd.f32 %v2317, %v2368
      %v2445 = vadd.f32 %v2318, %v2370
      %v2446 = vadd.f32 %v2319, %v2373
      %v2447 = vadd.f32 %v2320, %v2375
      %v2448 = vadd.f32 %v2321, %v2378
      %v2449 = vadd.f32 %v2322, %v2380
      %v2450 = vadd.f32 %v2323, %v2383
      %v2451 = vadd.f32 %v2324, %v2385
      %v2452 = vadd.f32 %v2325, %v2388
      %v2453 = vadd.f32 %v2326, %v2390
      %v2454 = vadd.f32 %v2327, %v2393
      %v2455 = vadd.f32 %v2328, %v2395
      %v2456 = vadd.f32 %v2329, %v2398
      %v2457 = vadd.f32 %v2330, %v2400
      %v2458 = vadd.f32 %v2331, %v2403
      %v2459 = vadd.f32 %v2332, %v2405
      %v2460 = vadd.f32 %v2333, %v2408
      %v2461 = vadd.f32 %v2334, %v2410
      %v2462 = vadd.f32 %v2335, %v2413
      %v2463 = vadd.f32 %v2336, %v2415
      %v2464 = vadd.f32 %v2337, %v2418
      %v2465 = vadd.f32 %v2338, %v2420
      %v2466 = vadd.f32 %v2339, %v2423
      %v2467 = vadd.f32 %v2340, %v2425
      %v2468 = vadd.f32 %v2341, %v2428
      %v2469 = vadd.f32 %v2342, %v2430
      %v2470 = vadd.f32 %v2343, %v2433
      %v2471 = vadd.f32 %v2344, %v2435
      %v2472 = vadd.f32 %v2345, %v2438
      %v2473 = vadd.f32 %v2346, %v2440
      %v2475 = vperm.slane %v878, 0
      %v2477 = vadd.f32 %v2442, %v2475
      %v2478 = vadd.f32 %v2443, %v2475
      %v2479 = vadd.f32 %v2444, %v2475
      %v2480 = vadd.f32 %v2445, %v2475
      %v2481 = vadd.f32 %v2446, %v2475
      %v2482 = vadd.f32 %v2447, %v2475
      %v2483 = vadd.f32 %v2448, %v2475
      %v2484 = vadd.f32 %v2449, %v2475
      %v2485 = vadd.f32 %v2450, %v2475
      %v2486 = vadd.f32 %v2451, %v2475
      %v2487 = vadd.f32 %v2452, %v2475
      %v2488 = vadd.f32 %v2453, %v2475
      %v2489 = vadd.f32 %v2454, %v2475
      %v2490 = vadd.f32 %v2455, %v2475
      %v2491 = vadd.f32 %v2456, %v2475
      %v2492 = vadd.f32 %v2457, %v2475
      %v2493 = vadd.f32 %v2458, %v2475
      %v2494 = vadd.f32 %v2459, %v2475
      %v2495 = vadd.f32 %v2460, %v2475
      %v2496 = vadd.f32 %v2461, %v2475
      %v2497 = vadd.f32 %v2462, %v2475
      %v2498 = vadd.f32 %v2463, %v2475
      %v2499 = vadd.f32 %v2464, %v2475
      %v2500 = vadd.f32 %v2465, %v2475
      %v2501 = vadd.f32 %v2466, %v2475
      %v2502 = vadd.f32 %v2467, %v2475
      %v2503 = vadd.f32 %v2468, %v2475
      %v2504 = vadd.f32 %v2469, %v2475
      %v2505 = vadd.f32 %v2470, %v2475
      %v2506 = vadd.f32 %v2471, %v2475
      %v2507 = vadd.f32 %v2472, %v2475
      %v2508 = vadd.f32 %v2473, %v2475
      %vm2509 = vcmask 146432
      %2510 = vst.msk [vmem:[%s374] sm:$0xff] %vm2509, %v2477
      %2511 = vst.msk [vmem:[%s374 + $0x8] sm:$0xff] %vm2509, %v2478
      %2512 = vst.msk [vmem:[%s374 + $0x10] sm:$0xff] %vm2509, %v2479
      %2513 = vst.msk [vmem:[%s374 + $0x18] sm:$0xff] %vm2509, %v2480
      %2514 = vst.msk [vmem:[%s374 + $0x20] sm:$0xff] %vm2509, %v2481
      %2515 = vst.msk [vmem:[%s374 + $0x28] sm:$0xff] %vm2509, %v2482
      %2516 = vst.msk [vmem:[%s374 + $0x30] sm:$0xff] %vm2509, %v2483
      %2517 = vst.msk [vmem:[%s374 + $0x38] sm:$0xff] %vm2509, %v2484
      %2518 = vst.msk [vmem:[%s374 + $0x40] sm:$0xff] %vm2509, %v2485
      %2519 = vst.msk [vmem:[%s374 + $0x48] sm:$0xff] %vm2509, %v2486
      %2520 = vst.msk [vmem:[%s374 + $0x50] sm:$0xff] %vm2509, %v2487
      %2521 = vst.msk [vmem:[%s374 + $0x58] sm:$0xff] %vm2509, %v2488
      %2522 = vst.msk [vmem:[%s374 + $0x60] sm:$0xff] %vm2509, %v2489
      %2523 = vst.msk [vmem:[%s374 + $0x68] sm:$0xff] %vm2509, %v2490
      %2524 = vst.msk [vmem:[%s374 + $0x70] sm:$0xff] %vm2509, %v2491
      %2525 = vst.msk [vmem:[%s374 + $0x78] sm:$0xff] %vm2509, %v2492
      %2526 = vst.msk [vmem:[%s374 + $0x80] sm:$0xff] %vm2509, %v2493
      %2527 = vst.msk [vmem:[%s374 + $0x88] sm:$0xff] %vm2509, %v2494
      %2528 = vst.msk [vmem:[%s374 + $0x90] sm:$0xff] %vm2509, %v2495
      %2529 = vst.msk [vmem:[%s374 + $0x98] sm:$0xff] %vm2509, %v2496
      %2530 = vst.msk [vmem:[%s374 + $0xa0] sm:$0xff] %vm2509, %v2497
      %2531 = vst.msk [vmem:[%s374 + $0xa8] sm:$0xff] %vm2509, %v2498
      %2532 = vst.msk [vmem:[%s374 + $0xb0] sm:$0xff] %vm2509, %v2499
      %2533 = vst.msk [vmem:[%s374 + $0xb8] sm:$0xff] %vm2509, %v2500
      %2534 = vst.msk [vmem:[%s374 + $0xc0] sm:$0xff] %vm2509, %v2501
      %2535 = vst.msk [vmem:[%s374 + $0xc8] sm:$0xff] %vm2509, %v2502
      %2536 = vst.msk [vmem:[%s374 + $0xd0] sm:$0xff] %vm2509, %v2503
      %2537 = vst.msk [vmem:[%s374 + $0xd8] sm:$0xff] %vm2509, %v2504
      %2538 = vst.msk [vmem:[%s374 + $0xe0] sm:$0xff] %vm2509, %v2505
      %2539 = vst.msk [vmem:[%s374 + $0xe8] sm:$0xff] %vm2509, %v2506
      %2540 = vst.msk [vmem:[%s374 + $0xf0] sm:$0xff] %vm2509, %v2507
      %2541 = vst.msk [vmem:[%s374 + $0xf8] sm:$0xff] %vm2509, %v2508
      %s2542 = smul.u32 16, %s24
      %p2543 = scmp.lt.s32.totalorder %s23, 1
      %s2544 = scalar_select %p2543, %s23, 1
      %p2545 = scmp.lt.s32.totalorder %s2542, 15
      %s2546 = scalar_select %p2545, %s2542, 15
      %s2547 = smul.addr %s2546, 2
      %s2548 = smul.addr %s2544, 32
      %s2549 = sadd.s32 %s2547, %s2548
      %s2550 = smul.addr %s2549, 4
      %s2551 = scalar_lea.vmem %s6, %s2550
      %s2552 = smul.u32 16, %s24
      %p2553 = scmp.lt.s32.totalorder %s23, 1
      %s2554 = scalar_select %p2553, %s23, 1
      %p2555 = scmp.lt.s32.totalorder %s2552, 15
      %s2556 = scalar_select %p2555, %s2552, 15
      %s2557 = smul.addr %s2556, 2
      %s2558 = smul.addr %s2554, 32
      %s2559 = sadd.s32 %s2557, %s2558
      %s2560 = smul.addr %s2559, 8
      %s2561 = scalar_lea.vmem %s7, %s2560
      // Predicated region
      $region45: #{dc_unet_block_forward.7} parent=43 // pred_check
        %p2562 = pneg %p191
      $region46: #{dc_unet_block_forward.7} parent=43 // pred_check_branch
        %2564 = sbr.rel (%p2562) target = $region48
      $region47: #{dc_unet_block_forward.7} parent=43 // pred_region
        %s2565 = smul.u32 16, %s24
      $region48: #{dc_unet_block_forward.7} parent=43 // pred_fallthru
        _
      // Predicated region
      $region49: #{dc_unet_block_forward.7} parent=43 // pred_check
        %p2566 = pneg %p219
      $region50: #{dc_unet_block_forward.7} parent=43 // pred_check_branch
        %2568 = sbr.rel (%p2566) target = $region52
      $region51: #{dc_unet_block_forward.7} parent=43 // pred_region
        %s2569 = smul.u32 16, %s24
      $region52: #{dc_unet_block_forward.7} parent=43 // pred_fallthru
        _
    $region44: #{dc_unet_block_forward.7} parent=5 // pred_fallthru
      _
    %p2570 = scmp.le.s32.totalorder 2, %s14
    // Predicated region
    $region53: #{dc_unet_block_forward.7} parent=5 // pred_check
      %p2571 = pneg %p2570
    $region54: #{dc_unet_block_forward.7} parent=5 // pred_check_branch
      %2573 = sbr.rel (%p2571) target = $region56
    $region55: #{dc_unet_block_forward.7} parent=5 // pred_region
      %s2574 = ssub.s32 %s14, 2
      // Predicated region
      $region57: #{dc_unet_block_forward.7} parent=55 // pred_check
        %p2575 = pneg %p197
      $region58: #{dc_unet_block_forward.7} parent=55 // pred_check_branch
        %2577 = sbr.rel (%p2575) target = $region60
      $region59: #{dc_unet_block_forward.7} parent=55 // pred_region
        %s2578 = smul.u32 16, %s26
        %p2579 = scmp.lt.s32.totalorder %s25, 1
        %s2580 = scalar_select %p2579, %s25, 1
        %p2581 = scmp.lt.s32.totalorder %s2578, 15
        %s2582 = scalar_select %p2581, %s2578, 15
        %s2583 = smul.addr %s2582, 2
        %s2584 = smul.addr %s2580, 32
        %s2585 = sadd.s32 %s2583, %s2584
        %s2586 = smul.addr %s2585, 4
        %s2587 = scalar_lea.vmem %s6, %s2586
      $region60: #{dc_unet_block_forward.7} parent=55 // pred_fallthru
        _
      // Predicated region
      $region61: #{dc_unet_block_forward.7} parent=55 // pred_check
        %p2588 = pneg %p225
      $region62: #{dc_unet_block_forward.7} parent=55 // pred_check_branch
        %2590 = sbr.rel (%p2588) target = $region64
      $region63: #{dc_unet_block_forward.7} parent=55 // pred_region
        %s2591 = smul.u32 16, %s26
        %p2592 = scmp.lt.s32.totalorder %s25, 1
        %s2593 = scalar_select %p2592, %s25, 1
        %p2594 = scmp.lt.s32.totalorder %s2591, 15
        %s2595 = scalar_select %p2594, %s2591, 15
        %s2596 = smul.addr %s2595, 2
        %s2597 = smul.addr %s2593, 32
        %s2598 = sadd.s32 %s2596, %s2597
        %s2599 = smul.addr %s2598, 8
        %s2600 = scalar_lea.vmem %s7, %s2599
      $region64: #{dc_unet_block_forward.7} parent=55 // pred_fallthru
        _
    $region56: #{dc_unet_block_forward.7} parent=5 // pred_fallthru
      _
  $region6: #{dc_unet_block_forward.7} parent=0 // loop_footer
    %s18 = sadd.s32 1, %s14
  $region7: #{dc_unet_block_forward.7} parent=0 // loop_footer_branch
    %13 = sbr.rel target = $region3
  $region8: #{dc_unet_block_forward.7} parent=0 // loop_exit
    _

</llo_original>
